<compile_context>
chip_gen: v7x
topology: tpu7x:2x2x1
jax: 0.10.0
libtpu: 0.0.40
codegen_flags: <defaults>
</compile_context>

<pallas_src>
import functools

import jax
import jax.numpy as jnp
from jax.experimental import pallas as pl
from jax.experimental.pallas import tpu as pltpu

NEG_INF = -1e9
_LN_EPS = 1e-5
_INV_SQRT2 = 0.7071067811865476


# ----------------------------------------------------------------------------
# helpers
# ----------------------------------------------------------------------------
def _row_tile(rows, target=256):
    """Largest multiple of 8 that evenly divides `rows`, capped so the grid has
    >= 2 programs when possible (v7x megacore) and tiles stay VMEM-friendly."""
    if rows % 8 != 0 or rows < 16:
        return rows
    cap = min(target, rows // 2)
    t = cap - (cap % 8)
    while t >= 8:
        if rows % t == 0:
            return t
        t -= 8
    return rows


def _ln_f32(x_f32, gamma_f32):
    mu = jnp.mean(x_f32, axis=-1, keepdims=True)
    var = jnp.mean((x_f32 - mu) ** 2, axis=-1, keepdims=True)
    return (x_f32 - mu) * jax.lax.rsqrt(var + _LN_EPS) * gamma_f32


def _gelu_f32(x_f32):
    # exact (erf) GELU, matching torch.nn.GELU() default
    return 0.5 * x_f32 * (1.0 + jax.lax.erf(x_f32 * _INV_SQRT2))


_PARALLEL_1D = pltpu.CompilerParams(
    dimension_semantics=("parallel",),
    vmem_limit_bytes=64 * 1024 * 1024,
)


# ----------------------------------------------------------------------------
# Pallas kernels
# ----------------------------------------------------------------------------
def _ln_qkv_kernel(x_ref, g_ref, wq_ref, wk_ref, wv_ref,
                   xn_ref, q_ref, k_ref, v_ref):
    xn = _ln_f32(x_ref[...].astype(jnp.float32), g_ref[...].astype(jnp.float32))
    xn_bf = xn.astype(jnp.bfloat16)
    xn_ref[...] = xn_bf.astype(xn_ref.dtype)          # residual = LN(x)
    q_ref[...] = jnp.dot(xn_bf, wq_ref[...],
                         preferred_element_type=jnp.float32).astype(q_ref.dtype)
    k_ref[...] = jnp.dot(xn_bf, wk_ref[...],
                         preferred_element_type=jnp.float32).astype(k_ref.dtype)
    v_ref[...] = jnp.dot(xn_bf, wv_ref[...],
                         preferred_element_type=jnp.float32).astype(v_ref.dtype)


def _kv_proj_kernel(x_ref, wk_ref, wv_ref, k_ref, v_ref):
    x = x_ref[...]
    k_ref[...] = jnp.dot(x, wk_ref[...],
                         preferred_element_type=jnp.float32).astype(k_ref.dtype)
    v_ref[...] = jnp.dot(x, wv_ref[...],
                         preferred_element_type=jnp.float32).astype(v_ref.dtype)


def _attn_kernel(*refs, heads, scale, causal, has_null, has_rel, has_post):
    # One batch element per grid step, ALL heads processed together (lane-dense
    # (Sq, D) output slab, single out-proj matmul, fused residual add, and an
    # optional fused "LN + next-Q projection" epilogue).
    q_ref, k_ref, v_ref, bias_ref, res_ref, wo_ref = refs[:6]
    idx = 6
    nk_ref = nv_ref = rel_ref = post_g_ref = post_w_ref = None
    if has_null:
        nk_ref, nv_ref = refs[idx], refs[idx + 1]
        idx += 2
    if has_rel:
        rel_ref = refs[idx]
        idx += 1
    if has_post:
        post_g_ref, post_w_ref = refs[idx], refs[idx + 1]
        idx += 2
    o_ref = refs[idx]
    idx += 1
    qn_ref = refs[idx] if has_post else None

    Sq, D = q_ref.shape[1], q_ref.shape[2]
    Skv = k_ref.shape[1]
    H = heads
    dh = D // H

    qh = q_ref[0].reshape(Sq, H, dh)                  # bf16
    kh = k_ref[0].reshape(Skv, H, dh)
    vh = v_ref[0].reshape(Skv, H, dh)

    # scores for all heads: (H, Sq, Skv), f32 accumulation on the MXU
    s = jnp.einsum('qhd,khd->hqk', qh, kh,
                   preferred_element_type=jnp.float32) * scale
    s = s + bias_ref[0][None, :, :]                   # key-padding bias (1, Skv)

    if causal:
        qi = jax.lax.broadcasted_iota(jnp.int32, (Sq, Skv), 0)
        kj = jax.lax.broadcasted_iota(jnp.int32, (Sq, Skv), 1)
        s = s + jnp.where(kj > qi, NEG_INF, 0.0).astype(jnp.float32)[None, :, :]
    if has_rel:
        s = s + rel_ref[...]                          # additive (H, Sq, Skv) bias

    m = jnp.max(s, axis=-1, keepdims=True)            # (H, Sq, 1)

    if has_null:                                      # learned null K/V, handled
        nk = nk_ref[...].astype(jnp.float32)          # analytically (no concat / HBM copy)
        nv = nv_ref[...].astype(jnp.float32)          # (H, dh)
        s_null = jnp.sum(qh.astype(jnp.float32) * nk[None, :, :], axis=-1)   # (Sq, H)
        s_null = jnp.swapaxes(s_null, 0, 1)[:, :, None] * scale              # (H, Sq, 1)
        m = jnp.maximum(m, s_null)

    p = jnp.exp(s - m)                                # (H, Sq, Skv)
    l = jnp.sum(p, axis=-1, keepdims=True)            # (H, Sq, 1)
    o = jnp.einsum('hqk,khd->hqd', p.astype(jnp.bfloat16), vh,
                   preferred_element_type=jnp.float32)               # (H, Sq, dh)

    if has_null:
        p_null = jnp.exp(s_null - m)                  # (H, Sq, 1)
        l = l + p_null
        o = o + p_null * nv[:, None, :]

    o = o * pl.reciprocal(l, approx=True)             # softmax normalize on the EUP
    o = jnp.transpose(o, (1, 0, 2)).reshape(Sq, D)    # heads back into the lane dim

    out = jnp.dot(o.astype(jnp.bfloat16), wo_ref[...],
                  preferred_element_type=jnp.float32)
    out = out + res_ref[0].astype(jnp.float32)        # fused residual add
    o_ref[0] = out.astype(o_ref.dtype)

    if has_post:                                      # fused LN + next-Q projection
        xn = _ln_f32(out, post_g_ref[...].astype(jnp.float32))
        qn_ref[0] = jnp.dot(xn.astype(jnp.bfloat16), post_w_ref[...],
                            preferred_element_type=jnp.float32).astype(qn_ref.dtype)


def _ffn_kernel(x_ref, w1_ref, g_in_ref, w2_ref, g_out_ref, o_ref):
    x = x_ref[...].astype(jnp.float32)                               # (rows, D) f32
    h = jnp.dot(x.astype(jnp.bfloat16), w1_ref[...],
                preferred_element_type=jnp.float32)                  # (rows, inner)
    h = _gelu_f32(h)
    h = _ln_f32(h, g_in_ref[...].astype(jnp.float32))                # inner LayerNorm
    y = jnp.dot(h.astype(jnp.bfloat16), w2_ref[...],
                preferred_element_type=jnp.float32)
    y = y + x                                                        # fused residual
    y = _ln_f32(y, g_out_ref[...].astype(jnp.float32))               # norm_out
    o_ref[...] = y.astype(o_ref.dtype)


def _film_ffn_kernel(x_ref, c_ref, gx_ref, gc_ref, wg_ref, wb_ref,
                     w1_ref, g_in_ref, w2_ref, g_out_ref, o_ref):
    x = x_ref[...].astype(jnp.float32)
    h = _ln_f32(x, gx_ref[...].astype(jnp.float32))                  # LN_film(x)
    c = _ln_f32(c_ref[...].astype(jnp.float32),
                gc_ref[...].astype(jnp.float32))                     # LN_film_context(ctx)
    c_bf = c.astype(jnp.bfloat16)
    gamma = jnp.dot(c_bf, wg_ref[...], preferred_element_type=jnp.float32)
    beta = jnp.dot(c_bf, wb_ref[...], preferred_element_type=jnp.float32)
    x = h * gamma + beta + x                                         # FiLM + residual
    # --- fused FFN on the FiLM output (4x-wide intermediate stays in VMEM) ---
    hh = jnp.dot(x.astype(jnp.bfloat16), w1_ref[...],
                 preferred_element_type=jnp.float32)
    hh = _gelu_f32(hh)
    hh = _ln_f32(hh, g_in_ref[...].astype(jnp.float32))              # inner LayerNorm
    y = jnp.dot(hh.astype(jnp.bfloat16), w2_ref[...],
                preferred_element_type=jnp.float32)
    y = y + x                                                        # fused residual
    y = _ln_f32(y, g_out_ref[...].astype(jnp.float32))               # norm_out
    o_ref[...] = y.astype(o_ref.dtype)


# ----------------------------------------------------------------------------
# Pallas wrappers (row-tiled grids, "parallel" semantics)
# ----------------------------------------------------------------------------
def ln_qkv_proj(x2d, gamma, wq, wk, wv):
    R, D = x2d.shape
    tr = _row_tile(R)
    outs = tuple(jax.ShapeDtypeStruct((R, D), x2d.dtype) for _ in range(4))
    return pl.pallas_call(
        _ln_qkv_kernel,
        out_shape=outs,
        grid=(R // tr,),
        in_specs=[pl.BlockSpec((tr, D), lambda i: (i, 0)),
                  pl.BlockSpec((1, D), lambda i: (0, 0)),
                  pl.BlockSpec((D, D), lambda i: (0, 0)),
                  pl.BlockSpec((D, D), lambda i: (0, 0)),
                  pl.BlockSpec((D, D), lambda i: (0, 0))],
        out_specs=tuple(pl.BlockSpec((tr, D), lambda i: (i, 0)) for _ in range(4)),
        compiler_params=_PARALLEL_1D,
    )(x2d, gamma, wq, wk, wv)


def kv_proj(x2d, wk, wv):
    R, D = x2d.shape
    tr = _row_tile(R)
    return pl.pallas_call(
        _kv_proj_kernel,
        out_shape=(jax.ShapeDtypeStruct((R, D), x2d.dtype),
                   jax.ShapeDtypeStruct((R, D), x2d.dtype)),
        grid=(R // tr,),
        in_specs=[pl.BlockSpec((tr, D), lambda i: (i, 0)),
                  pl.BlockSpec((D, D), lambda i: (0, 0)),
                  pl.BlockSpec((D, D), lambda i: (0, 0))],
        out_specs=(pl.BlockSpec((tr, D), lambda i: (i, 0)),
                   pl.BlockSpec((tr, D), lambda i: (i, 0))),
        compiler_params=_PARALLEL_1D,
    )(x2d, wk, wv)


def fused_attention(q, k, v, bias, residual, wo, *, heads, scale, causal,
                    null_k=None, null_v=None, rel_pos=None,
                    post_gamma=None, post_w=None):
    """q/residual: (B,Sq,D), k/v: (B,Skv,D), bias: (B,1,Skv) f32 (0 / -1e9).

    If post_gamma/post_w are given, also returns LN(out) @ post_w (the next
    attention's Q projection) as a fused second output."""
    B, Sq, D = q.shape
    Skv = k.shape[1]
    dh = D // heads
    has_null = null_k is not None
    has_rel = rel_pos is not None
    has_post = post_w is not None
    kern = functools.partial(_attn_kernel, heads=heads, scale=scale, causal=causal,
                             has_null=has_null, has_rel=has_rel, has_post=has_post)

    in_specs = [pl.BlockSpec((1, Sq, D), lambda b: (b, 0, 0)),
                pl.BlockSpec((1, Skv, D), lambda b: (b, 0, 0)),
                pl.BlockSpec((1, Skv, D), lambda b: (b, 0, 0)),
                pl.BlockSpec((1, 1, Skv), lambda b: (b, 0, 0)),
                pl.BlockSpec((1, Sq, D), lambda b: (b, 0, 0)),
                pl.BlockSpec((D, D), lambda b: (0, 0))]
    args = [q, k, v, bias, residual, wo]
    if has_null:
        in_specs += [pl.BlockSpec((heads, dh), lambda b: (0, 0)),
                     pl.BlockSpec((heads, dh), lambda b: (0, 0))]
        args += [null_k, null_v]
    if has_rel:
        in_specs.append(pl.BlockSpec((heads, Sq, Skv), lambda b: (0, 0, 0)))
        args.append(rel_pos.astype(jnp.float32))
    if has_post:
        in_specs += [pl.BlockSpec((1, D), lambda b: (0, 0)),
                     pl.BlockSpec((D, D), lambda b: (0, 0))]
        args += [post_gamma, post_w]

    x_shape = jax.ShapeDtypeStruct((B, Sq, D), q.dtype)
    x_spec = pl.BlockSpec((1, Sq, D), lambda b: (b, 0, 0))
    if has_post:
        out_shape = (x_shape, jax.ShapeDtypeStruct((B, Sq, D), q.dtype))
        out_specs = (x_spec, pl.BlockSpec((1, Sq, D), lambda b: (b, 0, 0)))
    else:
        out_shape = x_shape
        out_specs = x_spec

    return pl.pallas_call(
        kern,
        out_shape=out_shape,
        grid=(B,),
        in_specs=in_specs,
        out_specs=out_specs,
        compiler_params=_PARALLEL_1D,
    )(*args)


def ffn_fused(x2d, w1, g_in, w2, g_out):
    R, D = x2d.shape
    inner = w1.shape[1]
    tr = _row_tile(R)
    return pl.pallas_call(
        _ffn_kernel,
        out_shape=jax.ShapeDtypeStruct((R, D), x2d.dtype),
        grid=(R // tr,),
        in_specs=[pl.BlockSpec((tr, D), lambda i: (i, 0)),
                  pl.BlockSpec((D, inner), lambda i: (0, 0)),
                  pl.BlockSpec((1, inner), lambda i: (0, 0)),
                  pl.BlockSpec((inner, D), lambda i: (0, 0)),
                  pl.BlockSpec((1, D), lambda i: (0, 0))],
        out_specs=pl.BlockSpec((tr, D), lambda i: (i, 0)),
        compiler_params=_PARALLEL_1D,
    )(x2d, w1, g_in, w2, g_out)


def film_ffn_fused(x2d, c2d, g_x, g_c, w_gamma, w_beta, w1, g_in, w2, g_out):
    R, D = x2d.shape
    inner = w1.shape[1]
    tr = _row_tile(R)
    return pl.pallas_call(
        _film_ffn_kernel,
        out_shape=jax.ShapeDtypeStruct((R, D), x2d.dtype),
        grid=(R // tr,),
        in_specs=[pl.BlockSpec((tr, D), lambda i: (i, 0)),
                  pl.BlockSpec((tr, D), lambda i: (i, 0)),
                  pl.BlockSpec((1, D), lambda i: (0, 0)),
                  pl.BlockSpec((1, D), lambda i: (0, 0)),
                  pl.BlockSpec((D, D), lambda i: (0, 0)),
                  pl.BlockSpec((D, D), lambda i: (0, 0)),
                  pl.BlockSpec((D, inner), lambda i: (0, 0)),
                  pl.BlockSpec((1, inner), lambda i: (0, 0)),
                  pl.BlockSpec((inner, D), lambda i: (0, 0)),
                  pl.BlockSpec((1, D), lambda i: (0, 0))],
        out_specs=pl.BlockSpec((tr, D), lambda i: (i, 0)),
        compiler_params=_PARALLEL_1D,
    )(x2d, c2d, g_x, g_c, w_gamma, w_beta, w1, g_in, w2, g_out)


# ----------------------------------------------------------------------------
# Module logic
# ----------------------------------------------------------------------------
def transformer_block_forward(params, x, mask=None, context=None,
                              context_mask=None, film_context=None,
                              rel_pos=None, *, heads, causal=False):
    B, S, D = x.shape
    dh = D // heads
    scale = dh ** -0.5

    xb = x.astype(jnp.bfloat16)
    ctx2d = context.astype(jnp.bfloat16).reshape(-1, D)
    Sc = context.shape[1]
    fctx2d = (film_context.astype(jnp.bfloat16).reshape(-1, D)
              if film_context is not None else None)

    def pad_bias(m, skv):          # True = attend -> tiny per-batch additive bias
        if m is None:
            return jnp.zeros((B, 1, skv), jnp.float32)
        return jnp.where(m[:, None, :], 0.0, NEG_INF).astype(jnp.float32)

    self_bias = pad_bias(mask, S)
    cross_bias = pad_bias(context_mask, Sc)
    rel = rel_pos.astype(jnp.float32) if (causal and rel_pos is not None) else None

    x2d = xb.reshape(B * S, D)
    for lp in params["layers"]:
        ap, cp = lp["attn"], lp["cross"]

        # --- self-attention: fused LN_sa + QKV, then fused attn + out-proj + residual
        #     (+ fused LN_cross + cross-Q projection epilogue)
        xn2d, q2d, k2d, v2d = ln_qkv_proj(x2d, params["norm_sa"],
                                          ap["wq"], ap["wk"], ap["wv"])
        x3, qc3 = fused_attention(q2d.reshape(B, S, D), k2d.reshape(B, S, D),
                                  v2d.reshape(B, S, D), self_bias,
                                  xn2d.reshape(B, S, D), ap["wo"],
                                  heads=heads, scale=scale, causal=causal,
                                  rel_pos=rel,
                                  post_gamma=params["norm_cross"], post_w=cp["wq"])

        # --- cross-attention: K/V proj of raw context, fused attn + out-proj + residual
        kc2d, vc2d = kv_proj(ctx2d, cp["wk"], cp["wv"])
        x3 = fused_attention(qc3, kc2d.reshape(B, Sc, D), vc2d.reshape(B, Sc, D),
                             cross_bias, x3, cp["wo"],
                             heads=heads, scale=scale, causal=False,
                             null_k=cp["null_k"], null_v=cp["null_v"])
        x2d = x3.reshape(B * S, D)

        # --- fully fused [FiLM +] FFN + residuals + norm_out
        if lp["film"] is not None:
            x2d = film_ffn_fused(x2d, fctx2d, params["norm_film"],
                                 params["norm_film_context"],
                                 lp["film"]["w_gamma"], lp["film"]["w_beta"],
                                 lp["ff"]["w1"], lp["ff"]["ln_gamma"],
                                 lp["ff"]["w2"], params["norm_out"])
        else:
            x2d = ffn_fused(x2d, lp["ff"]["w1"], lp["ff"]["ln_gamma"],
                            lp["ff"]["w2"], params["norm_out"])

    return x2d.reshape(B, S, D).astype(jnp.float32)


# ----------------------------------------------------------------------------
# Deterministic parameter init (shapes implied by __init__); weights in bf16
# ----------------------------------------------------------------------------
class _KeyGen:
    def __init__(self, key):
        self._key = key

    def __call__(self):
        self._key, sub = jax.random.split(self._key)
        return sub


def init_params(key, *, dim, heads, depth, ff_mult, film_skip):
    kg = _KeyGen(key)
    inner = int(dim * ff_mult)
    dh = dim // heads

    def w(shape):
        return (jax.random.normal(kg(), shape, jnp.float32) * 0.02).astype(jnp.bfloat16)

    layers = []
    for d in range(depth):
        attn = dict(wq=w((dim, dim)), wk=w((dim, dim)),
                    wv=w((dim, dim)), wo=w((dim, dim)))
        cross = dict(wq=w((dim, dim)), wk=w((dim, dim)),
                     wv=w((dim, dim)), wo=w((dim, dim)),
                     null_k=w((heads, dh)), null_v=w((heads, dh)))
        use_film = (film_skip != 0) and (d % film_skip == 0) and (d != depth - 1)
        # FiLM's Linear(dim, 2*dim) split into the gamma / beta halves
        film = dict(w_gamma=w((dim, dim)), w_beta=w((dim, dim))) if use_film else None
        ff = dict(w1=w((dim, inner)),
                  ln_gamma=jnp.ones((1, inner), jnp.float32),
                  w2=w((inner, dim)))
        layers.append(dict(attn=attn, cross=cross, film=film, ff=ff))

    gam = lambda: jnp.ones((1, dim), jnp.float32)
    return dict(layers=layers, norm_sa=gam(), norm_cross=gam(), norm_film=gam(),
                norm_out=gam(), norm_film_context=gam())


# ----------------------------------------------------------------------------
if __name__ == "__main__":
    DIM, HEADS, DEPTH, FF_MULT, FILM_SKIP = 32, 4, 2, 4, 1
    B, S, SC = 2, 8, 8
    CAUSAL = False

    root = jax.random.PRNGKey(0)
    k_in, k_ctx, k_fctx, k_par = jax.random.split(root, 4)

    x = jax.random.normal(k_in, (B, S, DIM), jnp.float32)
    context = jax.random.normal(k_ctx, (B, SC, DIM), jnp.float32)
    film_context = jax.random.normal(k_fctx, (B, S, DIM), jnp.float32)
    mask = jnp.arange(S)[None, :] < jnp.array([[8], [6]])            # True = attend
    context_mask = jnp.arange(SC)[None, :] < jnp.array([[8], [5]])

    params = init_params(k_par, dim=DIM, heads=HEADS, depth=DEPTH,
                         ff_mult=FF_MULT, film_skip=FILM_SKIP)

    fwd = jax.jit(functools.partial(transformer_block_forward,
                                    heads=HEADS, causal=CAUSAL))
    out = fwd(params, x, mask=mask, context=context, context_mask=context_mask,
              film_context=film_context, rel_pos=None)
    out = jax.block_until_ready(out)
    assert out.shape == (B, S, DIM)
    assert bool(jnp.all(jnp.isfinite(out)))
    print("KERNEL_OK")
</pallas_src>

<mosaic_0001>
module attributes {stable_mosaic.version = 11 : i64} {
  func.func @_ln_qkv_kernel(%arg0: i32, %arg1: memref<8x32xbf16, #tpu.memory_space<vmem>>, %arg2: memref<1x32xf32, #tpu.memory_space<vmem>>, %arg3: memref<32x32xbf16, #tpu.memory_space<vmem>>, %arg4: memref<32x32xbf16, #tpu.memory_space<vmem>>, %arg5: memref<32x32xbf16, #tpu.memory_space<vmem>>, %arg6: memref<8x32xbf16, #tpu.memory_space<vmem>>, %arg7: memref<8x32xbf16, #tpu.memory_space<vmem>>, %arg8: memref<8x32xbf16, #tpu.memory_space<vmem>>, %arg9: memref<8x32xbf16, #tpu.memory_space<vmem>>) attributes {dimension_semantics = [#tpu.dimension_semantics<parallel>], iteration_bounds = array<i64: 2>, scalar_prefetch = 0 : i64, scratch_operands = 0 : i64, tpu.core_type = #tpu.core_type<tc>, window_params = [{transform_indices = @transform_0, window_bounds = array<i64: 8, 32>}, {pipeline_mode = #tpu.pipeline_mode<synchronous>, transform_indices = @transform_1, window_bounds = array<i64: 1, 32>}, {pipeline_mode = #tpu.pipeline_mode<synchronous>, transform_indices = @transform_2, window_bounds = array<i64: 32, 32>}, {pipeline_mode = #tpu.pipeline_mode<synchronous>, transform_indices = @transform_3, window_bounds = array<i64: 32, 32>}, {pipeline_mode = #tpu.pipeline_mode<synchronous>, transform_indices = @transform_4, window_bounds = array<i64: 32, 32>}, {transform_indices = @transform_5, window_bounds = array<i64: 8, 32>}, {transform_indices = @transform_6, window_bounds = array<i64: 8, 32>}, {transform_indices = @transform_7, window_bounds = array<i64: 8, 32>}, {transform_indices = @transform_8, window_bounds = array<i64: 8, 32>}]} {
    %c0 = arith.constant 0 : index
    %c0_0 = arith.constant 0 : index
    %0 = vector.load %arg1[%c0, %c0_0] : memref<8x32xbf16, #tpu.memory_space<vmem>>, vector<8x32xbf16>
    %1 = arith.extf %0 : vector<8x32xbf16> to vector<8x32xf32>
    %c0_1 = arith.constant 0 : index
    %c0_2 = arith.constant 0 : index
    %2 = vector.load %arg2[%c0_1, %c0_2] : memref<1x32xf32, #tpu.memory_space<vmem>>, vector<1x32xf32>
    %cst = arith.constant dense<0.000000e+00> : vector<8xf32>
    %3 = vector.multi_reduction <add>, %1, %cst [1] : vector<8x32xf32> to vector<8xf32>
    %4 = vector.shape_cast %3 : vector<8xf32> to vector<8x1xf32>
    %cst_3 = arith.constant 3.200000e+01 : f32
    %5 = vector.broadcast %cst_3 : f32 to vector<8x1xf32>
    %6 = arith.divf %4, %5 : vector<8x1xf32>
    %7 = vector.broadcast %6 : vector<8x1xf32> to vector<8x32xf32>
    %8 = arith.subf %1, %7 : vector<8x32xf32>
    %9 = arith.mulf %8, %8 : vector<8x32xf32>
    %cst_4 = arith.constant dense<0.000000e+00> : vector<8xf32>
    %10 = vector.multi_reduction <add>, %9, %cst_4 [1] : vector<8x32xf32> to vector<8xf32>
    %11 = vector.shape_cast %10 : vector<8xf32> to vector<8x1xf32>
    %cst_5 = arith.constant 3.200000e+01 : f32
    %12 = vector.broadcast %cst_5 : f32 to vector<8x1xf32>
    %13 = arith.divf %11, %12 : vector<8x1xf32>
    %14 = vector.broadcast %6 : vector<8x1xf32> to vector<8x32xf32>
    %15 = arith.subf %1, %14 : vector<8x32xf32>
    %cst_6 = arith.constant 9.99999974E-6 : f32
    %16 = vector.broadcast %cst_6 : f32 to vector<8x1xf32>
    %17 = arith.addf %13, %16 : vector<8x1xf32>
    %18 = math.rsqrt %17 : vector<8x1xf32>
    %19 = vector.broadcast %18 : vector<8x1xf32> to vector<8x32xf32>
    %20 = arith.mulf %15, %19 : vector<8x32xf32>
    %21 = vector.broadcast %2 : vector<1x32xf32> to vector<8x32xf32>
    %22 = arith.mulf %20, %21 : vector<8x32xf32>
    %23 = arith.truncf %22 : vector<8x32xf32> to vector<8x32xbf16>
    %c0_7 = arith.constant 0 : index
    %c0_8 = arith.constant 0 : index
    %24 = vector.load %arg6[%c0_7, %c0_8] : memref<8x32xbf16, #tpu.memory_space<vmem>>, vector<8x32xbf16>
    tpu.vector_store %arg6[%c0_7, %c0_8], %23 {strides = array<i32>} : memref<8x32xbf16, #tpu.memory_space<vmem>>, vector<8x32xbf16>,
    %c0_9 = arith.constant 0 : index
    %c0_10 = arith.constant 0 : index
    %25 = vector.load %arg3[%c0_9, %c0_10] : memref<32x32xbf16, #tpu.memory_space<vmem>>, vector<32x32xbf16>
    %cst_11 = arith.constant dense<0.000000e+00> : vector<8x32xf32>
    %26 = tpu.matmul %23, %25, %cst_11 {dimension_numbers = #tpu.dot_dimension_numbers<[1], [0], [0], [1], [0, 0, 1, 1], [], []>} : vector<8x32xbf16>, vector<32x32xbf16>, vector<8x32xf32> -> vector<8x32xf32>
    %27 = arith.truncf %26 : vector<8x32xf32> to vector<8x32xbf16>
    %c0_12 = arith.constant 0 : index
    %c0_13 = arith.constant 0 : index
    %28 = vector.load %arg7[%c0_12, %c0_13] : memref<8x32xbf16, #tpu.memory_space<vmem>>, vector<8x32xbf16>
    tpu.vector_store %arg7[%c0_12, %c0_13], %27 {strides = array<i32>} : memref<8x32xbf16, #tpu.memory_space<vmem>>, vector<8x32xbf16>,
    %c0_14 = arith.constant 0 : index
    %c0_15 = arith.constant 0 : index
    %29 = vector.load %arg4[%c0_14, %c0_15] : memref<32x32xbf16, #tpu.memory_space<vmem>>, vector<32x32xbf16>
    %cst_16 = arith.constant dense<0.000000e+00> : vector<8x32xf32>
    %30 = tpu.matmul %23, %29, %cst_16 {dimension_numbers = #tpu.dot_dimension_numbers<[1], [0], [0], [1], [0, 0, 1, 1], [], []>} : vector<8x32xbf16>, vector<32x32xbf16>, vector<8x32xf32> -> vector<8x32xf32>
    %31 = arith.truncf %30 : vector<8x32xf32> to vector<8x32xbf16>
    %c0_17 = arith.constant 0 : index
    %c0_18 = arith.constant 0 : index
    %32 = vector.load %arg8[%c0_17, %c0_18] : memref<8x32xbf16, #tpu.memory_space<vmem>>, vector<8x32xbf16>
    tpu.vector_store %arg8[%c0_17, %c0_18], %31 {strides = array<i32>} : memref<8x32xbf16, #tpu.memory_space<vmem>>, vector<8x32xbf16>,
    %c0_19 = arith.constant 0 : index
    %c0_20 = arith.constant 0 : index
    %33 = vector.load %arg5[%c0_19, %c0_20] : memref<32x32xbf16, #tpu.memory_space<vmem>>, vector<32x32xbf16>
    %cst_21 = arith.constant dense<0.000000e+00> : vector<8x32xf32>
    %34 = tpu.matmul %23, %33, %cst_21 {dimension_numbers = #tpu.dot_dimension_numbers<[1], [0], [0], [1], [0, 0, 1, 1], [], []>} : vector<8x32xbf16>, vector<32x32xbf16>, vector<8x32xf32> -> vector<8x32xf32>
    %35 = arith.truncf %34 : vector<8x32xf32> to vector<8x32xbf16>
    %c0_22 = arith.constant 0 : index
    %c0_23 = arith.constant 0 : index
    %36 = vector.load %arg9[%c0_22, %c0_23] : memref<8x32xbf16, #tpu.memory_space<vmem>>, vector<8x32xbf16>
    tpu.vector_store %arg9[%c0_22, %c0_23], %35 {strides = array<i32>} : memref<8x32xbf16, #tpu.memory_space<vmem>>, vector<8x32xbf16>,
    return
  }
  func.func @transform_0(%arg0: i32) -> (i32, i32) {
    %c0_i32 = arith.constant 0 : i32
    %c0_i32_0 = arith.constant 0 : i32
    return %arg0, %c0_i32 : i32, i32
  }
  func.func @transform_1(%arg0: i32) -> (i32, i32) {
    %c0_i32 = arith.constant 0 : i32
    %c0_i32_0 = arith.constant 0 : i32
    %c0_i32_1 = arith.constant 0 : i32
    return %c0_i32, %c0_i32_0 : i32, i32
  }
  func.func @transform_2(%arg0: i32) -> (i32, i32) {
    %c0_i32 = arith.constant 0 : i32
    %c0_i32_0 = arith.constant 0 : i32
    %c0_i32_1 = arith.constant 0 : i32
    return %c0_i32, %c0_i32_0 : i32, i32
  }
  func.func @transform_3(%arg0: i32) -> (i32, i32) {
    %c0_i32 = arith.constant 0 : i32
    %c0_i32_0 = arith.constant 0 : i32
    %c0_i32_1 = arith.constant 0 : i32
    return %c0_i32, %c0_i32_0 : i32, i32
  }
  func.func @transform_4(%arg0: i32) -> (i32, i32) {
    %c0_i32 = arith.constant 0 : i32
    %c0_i32_0 = arith.constant 0 : i32
    %c0_i32_1 = arith.constant 0 : i32
    return %c0_i32, %c0_i32_0 : i32, i32
  }
  func.func @transform_5(%arg0: i32) -> (i32, i32) {
    %c0_i32 = arith.constant 0 : i32
    %c0_i32_0 = arith.constant 0 : i32
    return %arg0, %c0_i32 : i32, i32
  }
  func.func @transform_6(%arg0: i32) -> (i32, i32) {
    %c0_i32 = arith.constant 0 : i32
    %c0_i32_0 = arith.constant 0 : i32
    return %arg0, %c0_i32 : i32, i32
  }
  func.func @transform_7(%arg0: i32) -> (i32, i32) {
    %c0_i32 = arith.constant 0 : i32
    %c0_i32_0 = arith.constant 0 : i32
    return %arg0, %c0_i32 : i32, i32
  }
  func.func @transform_8(%arg0: i32) -> (i32, i32) {
    %c0_i32 = arith.constant 0 : i32
    %c0_i32_0 = arith.constant 0 : i32
    return %arg0, %c0_i32 : i32, i32
  }
}

module attributes {stable_mosaic.version = 11 : i64} {
  func.func @_attn_kernel(%arg0: i32, %arg1: memref<1x8x32xbf16, #tpu.memory_space<vmem>>, %arg2: memref<1x8x32xbf16, #tpu.memory_space<vmem>>, %arg3: memref<1x8x32xbf16, #tpu.memory_space<vmem>>, %arg4: memref<1x1x8xf32, #tpu.memory_space<vmem>>, %arg5: memref<1x8x32xbf16, #tpu.memory_space<vmem>>, %arg6: memref<32x32xbf16, #tpu.memory_space<vmem>>, %arg7: memref<1x32xf32, #tpu.memory_space<vmem>>, %arg8: memref<32x32xbf16, #tpu.memory_space<vmem>>, %arg9: memref<1x8x32xbf16, #tpu.memory_space<vmem>>, %arg10: memref<1x8x32xbf16, #tpu.memory_space<vmem>>) attributes {dimension_semantics = [#tpu.dimension_semantics<parallel>], iteration_bounds = array<i64: 2>, scalar_prefetch = 0 : i64, scratch_operands = 0 : i64, tpu.core_type = #tpu.core_type<tc>, window_params = [{transform_indices = @transform_0, window_bounds = array<i64: 1, 8, 32>}, {transform_indices = @transform_1, window_bounds = array<i64: 1, 8, 32>}, {transform_indices = @transform_2, window_bounds = array<i64: 1, 8, 32>}, {transform_indices = @transform_3, window_bounds = array<i64: 1, 1, 8>}, {transform_indices = @transform_4, window_bounds = array<i64: 1, 8, 32>}, {pipeline_mode = #tpu.pipeline_mode<synchronous>, transform_indices = @transform_5, window_bounds = array<i64: 32, 32>}, {pipeline_mode = #tpu.pipeline_mode<synchronous>, transform_indices = @transform_6, window_bounds = array<i64: 1, 32>}, {pipeline_mode = #tpu.pipeline_mode<synchronous>, transform_indices = @transform_7, window_bounds = array<i64: 32, 32>}, {transform_indices = @transform_8, window_bounds = array<i64: 1, 8, 32>}, {transform_indices = @transform_9, window_bounds = array<i64: 1, 8, 32>}]} {
    %c0 = arith.constant 0 : index
    %c0_0 = arith.constant 0 : index
    %c0_1 = arith.constant 0 : index
    %0 = vector.load %arg1[%c0, %c0_0, %c0_1] : memref<1x8x32xbf16, #tpu.memory_space<vmem>>, vector<1x8x32xbf16>
    %1 = vector.shape_cast %0 : vector<1x8x32xbf16> to vector<8x32xbf16>
    %2 = vector.shape_cast %1 : vector<8x32xbf16> to vector<8x4x8xbf16>
    %c0_2 = arith.constant 0 : index
    %c0_3 = arith.constant 0 : index
    %c0_4 = arith.constant 0 : index
    %3 = vector.load %arg2[%c0_2, %c0_3, %c0_4] : memref<1x8x32xbf16, #tpu.memory_space<vmem>>, vector<1x8x32xbf16>
    %4 = vector.shape_cast %3 : vector<1x8x32xbf16> to vector<8x32xbf16>
    %5 = vector.shape_cast %4 : vector<8x32xbf16> to vector<8x4x8xbf16>
    %c0_5 = arith.constant 0 : index
    %c0_6 = arith.constant 0 : index
    %c0_7 = arith.constant 0 : index
    %6 = vector.load %arg3[%c0_5, %c0_6, %c0_7] : memref<1x8x32xbf16, #tpu.memory_space<vmem>>, vector<1x8x32xbf16>
    %7 = vector.shape_cast %6 : vector<1x8x32xbf16> to vector<8x32xbf16>
    %8 = vector.shape_cast %7 : vector<8x32xbf16> to vector<8x4x8xbf16>
    "tpu.trace_start"() <{level = 10 : i32, message = "qhd,khd->hqk"}> : () -> ()
    %cst = arith.constant dense<0.000000e+00> : vector<4x8x8xf32>
    %9 = tpu.matmul %2, %5, %cst {dimension_numbers = #tpu.dot_dimension_numbers<[2], [2], [0], [0], [0, 1, 0, 0, 1, 0], [1], [1]>} : vector<8x4x8xbf16>, vector<8x4x8xbf16>, vector<4x8x8xf32> -> vector<4x8x8xf32>
    "tpu.trace_stop"() : () -> ()
    %cst_8 = arith.constant 0.353553385 : f32
    %10 = vector.broadcast %cst_8 : f32 to vector<4x8x8xf32>
    %11 = arith.mulf %9, %10 : vector<4x8x8xf32>
    %c0_9 = arith.constant 0 : index
    %c0_10 = arith.constant 0 : index
    %c0_11 = arith.constant 0 : index
    %12 = vector.load %arg4[%c0_9, %c0_10, %c0_11] : memref<1x1x8xf32, #tpu.memory_space<vmem>>, vector<1x1x8xf32>
    %13 = vector.shape_cast %12 : vector<1x1x8xf32> to vector<1x8xf32>
    %14 = vector.shape_cast %13 : vector<1x8xf32> to vector<1x1x8xf32>
    %15 = vector.broadcast %14 : vector<1x1x8xf32> to vector<4x8x8xf32>
    %16 = arith.addf %11, %15 : vector<4x8x8xf32>
    %cst_12 = arith.constant dense<0xFF800000> : vector<4x8xf32>
    %17 = vector.multi_reduction <maximumf>, %16, %cst_12 [2] : vector<4x8x8xf32> to vector<4x8xf32>
    %18 = vector.shape_cast %17 : vector<4x8xf32> to vector<4x8x1xf32>
    %19 = vector.broadcast %18 : vector<4x8x1xf32> to vector<4x8x8xf32>
    %20 = arith.subf %16, %19 : vector<4x8x8xf32>
    %21 = math.exp %20 : vector<4x8x8xf32>
    %cst_13 = arith.constant dense<0.000000e+00> : vector<4x8xf32>
    %22 = vector.multi_reduction <add>, %21, %cst_13 [2] : vector<4x8x8xf32> to vector<4x8xf32>
    %23 = vector.shape_cast %22 : vector<4x8xf32> to vector<4x8x1xf32>
    %24 = arith.truncf %21 : vector<4x8x8xf32> to vector<4x8x8xbf16>
    "tpu.trace_start"() <{level = 10 : i32, message = "hqk,khd->hqd"}> : () -> ()
    %cst_14 = arith.constant dense<0.000000e+00> : vector<4x8x8xf32>
    %25 = tpu.matmul %24, %8, %cst_14 {dimension_numbers = #tpu.dot_dimension_numbers<[2], [0], [1], [2], [0, 0, 0, 1, 1, 2], [0], [1]>} : vector<4x8x8xbf16>, vector<8x4x8xbf16>, vector<4x8x8xf32> -> vector<4x8x8xf32>
    "tpu.trace_stop"() : () -> ()
    %26 = tpu.reciprocal %23 {approx = true} : vector<4x8x1xf32> -> vector<4x8x1xf32>
    %27 = vector.broadcast %26 : vector<4x8x1xf32> to vector<4x8x8xf32>
    %28 = arith.mulf %25, %27 : vector<4x8x8xf32>
    %29 = tpu.transpose %28, [1, 0, 2] : vector<4x8x8xf32> -> vector<8x4x8xf32>
    %30 = vector.shape_cast %29 : vector<8x4x8xf32> to vector<8x32xf32>
    %31 = arith.truncf %30 : vector<8x32xf32> to vector<8x32xbf16>
    %c0_15 = arith.constant 0 : index
    %c0_16 = arith.constant 0 : index
    %32 = vector.load %arg6[%c0_15, %c0_16] : memref<32x32xbf16, #tpu.memory_space<vmem>>, vector<32x32xbf16>
    %cst_17 = arith.constant dense<0.000000e+00> : vector<8x32xf32>
    %33 = tpu.matmul %31, %32, %cst_17 {dimension_numbers = #tpu.dot_dimension_numbers<[1], [0], [0], [1], [0, 0, 1, 1], [], []>} : vector<8x32xbf16>, vector<32x32xbf16>, vector<8x32xf32> -> vector<8x32xf32>
    %c0_18 = arith.constant 0 : index
    %c0_19 = arith.constant 0 : index
    %c0_20 = arith.constant 0 : index
    %34 = vector.load %arg5[%c0_18, %c0_19, %c0_20] : memref<1x8x32xbf16, #tpu.memory_space<vmem>>, vector<1x8x32xbf16>
    %35 = vector.shape_cast %34 : vector<1x8x32xbf16> to vector<8x32xbf16>
    %36 = arith.extf %35 : vector<8x32xbf16> to vector<8x32xf32>
    %37 = arith.addf %33, %36 : vector<8x32xf32>
    %38 = arith.truncf %37 : vector<8x32xf32> to vector<8x32xbf16>
    %c0_21 = arith.constant 0 : index
    %c0_22 = arith.constant 0 : index
    %c0_23 = arith.constant 0 : index
    %39 = vector.load %arg9[%c0_21, %c0_22, %c0_23] : memref<1x8x32xbf16, #tpu.memory_space<vmem>>, vector<1x8x32xbf16>
    %40 = vector.shape_cast %39 : vector<1x8x32xbf16> to vector<8x32xbf16>
    %41 = vector.shape_cast %38 : vector<8x32xbf16> to vector<1x8x32xbf16>
    tpu.vector_store %arg9[%c0_21, %c0_22, %c0_23], %41 {strides = array<i32>} : memref<1x8x32xbf16, #tpu.memory_space<vmem>>, vector<1x8x32xbf16>,
    %c0_24 = arith.constant 0 : index
    %c0_25 = arith.constant 0 : index
    %42 = vector.load %arg7[%c0_24, %c0_25] : memref<1x32xf32, #tpu.memory_space<vmem>>, vector<1x32xf32>
    %cst_26 = arith.constant dense<0.000000e+00> : vector<8xf32>
    %43 = vector.multi_reduction <add>, %37, %cst_26 [1] : vector<8x32xf32> to vector<8xf32>
    %44 = vector.shape_cast %43 : vector<8xf32> to vector<8x1xf32>
    %cst_27 = arith.constant 3.200000e+01 : f32
    %45 = vector.broadcast %cst_27 : f32 to vector<8x1xf32>
    %46 = arith.divf %44, %45 : vector<8x1xf32>
    %47 = vector.broadcast %46 : vector<8x1xf32> to vector<8x32xf32>
    %48 = arith.subf %37, %47 : vector<8x32xf32>
    %49 = arith.mulf %48, %48 : vector<8x32xf32>
    %cst_28 = arith.constant dense<0.000000e+00> : vector<8xf32>
    %50 = vector.multi_reduction <add>, %49, %cst_28 [1] : vector<8x32xf32> to vector<8xf32>
    %51 = vector.shape_cast %50 : vector<8xf32> to vector<8x1xf32>
    %cst_29 = arith.constant 3.200000e+01 : f32
    %52 = vector.broadcast %cst_29 : f32 to vector<8x1xf32>
    %53 = arith.divf %51, %52 : vector<8x1xf32>
    %54 = vector.broadcast %46 : vector<8x1xf32> to vector<8x32xf32>
    %55 = arith.subf %37, %54 : vector<8x32xf32>
    %cst_30 = arith.constant 9.99999974E-6 : f32
    %56 = vector.broadcast %cst_30 : f32 to vector<8x1xf32>
    %57 = arith.addf %53, %56 : vector<8x1xf32>
    %58 = math.rsqrt %57 : vector<8x1xf32>
    %59 = vector.broadcast %58 : vector<8x1xf32> to vector<8x32xf32>
    %60 = arith.mulf %55, %59 : vector<8x32xf32>
    %61 = vector.broadcast %42 : vector<1x32xf32> to vector<8x32xf32>
    %62 = arith.mulf %60, %61 : vector<8x32xf32>
    %63 = arith.truncf %62 : vector<8x32xf32> to vector<8x32xbf16>
    %c0_31 = arith.constant 0 : index
    %c0_32 = arith.constant 0 : index
    %64 = vector.load %arg8[%c0_31, %c0_32] : memref<32x32xbf16, #tpu.memory_space<vmem>>, vector<32x32xbf16>
    %cst_33 = arith.constant dense<0.000000e+00> : vector<8x32xf32>
    %65 = tpu.matmul %63, %64, %cst_33 {dimension_numbers = #tpu.dot_dimension_numbers<[1], [0], [0], [1], [0, 0, 1, 1], [], []>} : vector<8x32xbf16>, vector<32x32xbf16>, vector<8x32xf32> -> vector<8x32xf32>
    %66 = arith.truncf %65 : vector<8x32xf32> to vector<8x32xbf16>
    %c0_34 = arith.constant 0 : index
    %c0_35 = arith.constant 0 : index
    %c0_36 = arith.constant 0 : index
    %67 = vector.load %arg10[%c0_34, %c0_35, %c0_36] : memref<1x8x32xbf16, #tpu.memory_space<vmem>>, vector<1x8x32xbf16>
    %68 = vector.shape_cast %67 : vector<1x8x32xbf16> to vector<8x32xbf16>
    %69 = vector.shape_cast %66 : vector<8x32xbf16> to vector<1x8x32xbf16>
    tpu.vector_store %arg10[%c0_34, %c0_35, %c0_36], %69 {strides = array<i32>} : memref<1x8x32xbf16, #tpu.memory_space<vmem>>, vector<1x8x32xbf16>,
    return
  }
  func.func @transform_0(%arg0: i32) -> (i32, i32, i32) {
    %c0_i32 = arith.constant 0 : i32
    %c0_i32_0 = arith.constant 0 : i32
    %c0_i32_1 = arith.constant 0 : i32
    return %arg0, %c0_i32, %c0_i32_0 : i32, i32, i32
  }
  func.func @transform_1(%arg0: i32) -> (i32, i32, i32) {
    %c0_i32 = arith.constant 0 : i32
    %c0_i32_0 = arith.constant 0 : i32
    %c0_i32_1 = arith.constant 0 : i32
    return %arg0, %c0_i32, %c0_i32_0 : i32, i32, i32
  }
  func.func @transform_2(%arg0: i32) -> (i32, i32, i32) {
    %c0_i32 = arith.constant 0 : i32
    %c0_i32_0 = arith.constant 0 : i32
    %c0_i32_1 = arith.constant 0 : i32
    return %arg0, %c0_i32, %c0_i32_0 : i32, i32, i32
  }
  func.func @transform_3(%arg0: i32) -> (i32, i32, i32) {
    %c0_i32 = arith.constant 0 : i32
    %c0_i32_0 = arith.constant 0 : i32
    %c0_i32_1 = arith.constant 0 : i32
    return %arg0, %c0_i32, %c0_i32_0 : i32, i32, i32
  }
  func.func @transform_4(%arg0: i32) -> (i32, i32, i32) {
    %c0_i32 = arith.constant 0 : i32
    %c0_i32_0 = arith.constant 0 : i32
    %c0_i32_1 = arith.constant 0 : i32
    return %arg0, %c0_i32, %c0_i32_0 : i32, i32, i32
  }
  func.func @transform_5(%arg0: i32) -> (i32, i32) {
    %c0_i32 = arith.constant 0 : i32
    %c0_i32_0 = arith.constant 0 : i32
    %c0_i32_1 = arith.constant 0 : i32
    return %c0_i32, %c0_i32_0 : i32, i32
  }
  func.func @transform_6(%arg0: i32) -> (i32, i32) {
    %c0_i32 = arith.constant 0 : i32
    %c0_i32_0 = arith.constant 0 : i32
    %c0_i32_1 = arith.constant 0 : i32
    return %c0_i32, %c0_i32_0 : i32, i32
  }
  func.func @transform_7(%arg0: i32) -> (i32, i32) {
    %c0_i32 = arith.constant 0 : i32
    %c0_i32_0 = arith.constant 0 : i32
    %c0_i32_1 = arith.constant 0 : i32
    return %c0_i32, %c0_i32_0 : i32, i32
  }
  func.func @transform_8(%arg0: i32) -> (i32, i32, i32) {
    %c0_i32 = arith.constant 0 : i32
    %c0_i32_0 = arith.constant 0 : i32
    %c0_i32_1 = arith.constant 0 : i32
    return %arg0, %c0_i32, %c0_i32_0 : i32, i32, i32
  }
  func.func @transform_9(%arg0: i32) -> (i32, i32, i32) {
    %c0_i32 = arith.constant 0 : i32
    %c0_i32_0 = arith.constant 0 : i32
    %c0_i32_1 = arith.constant 0 : i32
    return %arg0, %c0_i32, %c0_i32_0 : i32, i32, i32
  }
}

module attributes {stable_mosaic.version = 11 : i64} {
  func.func @_kv_proj_kernel(%arg0: i32, %arg1: memref<8x32xbf16, #tpu.memory_space<vmem>>, %arg2: memref<32x32xbf16, #tpu.memory_space<vmem>>, %arg3: memref<32x32xbf16, #tpu.memory_space<vmem>>, %arg4: memref<8x32xbf16, #tpu.memory_space<vmem>>, %arg5: memref<8x32xbf16, #tpu.memory_space<vmem>>) attributes {dimension_semantics = [#tpu.dimension_semantics<parallel>], iteration_bounds = array<i64: 2>, scalar_prefetch = 0 : i64, scratch_operands = 0 : i64, tpu.core_type = #tpu.core_type<tc>, window_params = [{transform_indices = @transform_0, window_bounds = array<i64: 8, 32>}, {pipeline_mode = #tpu.pipeline_mode<synchronous>, transform_indices = @transform_1, window_bounds = array<i64: 32, 32>}, {pipeline_mode = #tpu.pipeline_mode<synchronous>, transform_indices = @transform_2, window_bounds = array<i64: 32, 32>}, {transform_indices = @transform_3, window_bounds = array<i64: 8, 32>}, {transform_indices = @transform_4, window_bounds = array<i64: 8, 32>}]} {
    %c0 = arith.constant 0 : index
    %c0_0 = arith.constant 0 : index
    %0 = vector.load %arg1[%c0, %c0_0] : memref<8x32xbf16, #tpu.memory_space<vmem>>, vector<8x32xbf16>
    %c0_1 = arith.constant 0 : index
    %c0_2 = arith.constant 0 : index
    %1 = vector.load %arg2[%c0_1, %c0_2] : memref<32x32xbf16, #tpu.memory_space<vmem>>, vector<32x32xbf16>
    %cst = arith.constant dense<0.000000e+00> : vector<8x32xf32>
    %2 = tpu.matmul %0, %1, %cst {dimension_numbers = #tpu.dot_dimension_numbers<[1], [0], [0], [1], [0, 0, 1, 1], [], []>} : vector<8x32xbf16>, vector<32x32xbf16>, vector<8x32xf32> -> vector<8x32xf32>
    %3 = arith.truncf %2 : vector<8x32xf32> to vector<8x32xbf16>
    %c0_3 = arith.constant 0 : index
    %c0_4 = arith.constant 0 : index
    %4 = vector.load %arg4[%c0_3, %c0_4] : memref<8x32xbf16, #tpu.memory_space<vmem>>, vector<8x32xbf16>
    tpu.vector_store %arg4[%c0_3, %c0_4], %3 {strides = array<i32>} : memref<8x32xbf16, #tpu.memory_space<vmem>>, vector<8x32xbf16>,
    %c0_5 = arith.constant 0 : index
    %c0_6 = arith.constant 0 : index
    %5 = vector.load %arg3[%c0_5, %c0_6] : memref<32x32xbf16, #tpu.memory_space<vmem>>, vector<32x32xbf16>
    %cst_7 = arith.constant dense<0.000000e+00> : vector<8x32xf32>
    %6 = tpu.matmul %0, %5, %cst_7 {dimension_numbers = #tpu.dot_dimension_numbers<[1], [0], [0], [1], [0, 0, 1, 1], [], []>} : vector<8x32xbf16>, vector<32x32xbf16>, vector<8x32xf32> -> vector<8x32xf32>
    %7 = arith.truncf %6 : vector<8x32xf32> to vector<8x32xbf16>
    %c0_8 = arith.constant 0 : index
    %c0_9 = arith.constant 0 : index
    %8 = vector.load %arg5[%c0_8, %c0_9] : memref<8x32xbf16, #tpu.memory_space<vmem>>, vector<8x32xbf16>
    tpu.vector_store %arg5[%c0_8, %c0_9], %7 {strides = array<i32>} : memref<8x32xbf16, #tpu.memory_space<vmem>>, vector<8x32xbf16>,
    return
  }
  func.func @transform_0(%arg0: i32) -> (i32, i32) {
    %c0_i32 = arith.constant 0 : i32
    %c0_i32_0 = arith.constant 0 : i32
    return %arg0, %c0_i32 : i32, i32
  }
  func.func @transform_1(%arg0: i32) -> (i32, i32) {
    %c0_i32 = arith.constant 0 : i32
    %c0_i32_0 = arith.constant 0 : i32
    %c0_i32_1 = arith.constant 0 : i32
    return %c0_i32, %c0_i32_0 : i32, i32
  }
  func.func @transform_2(%arg0: i32) -> (i32, i32) {
    %c0_i32 = arith.constant 0 : i32
    %c0_i32_0 = arith.constant 0 : i32
    %c0_i32_1 = arith.constant 0 : i32
    return %c0_i32, %c0_i32_0 : i32, i32
  }
  func.func @transform_3(%arg0: i32) -> (i32, i32) {
    %c0_i32 = arith.constant 0 : i32
    %c0_i32_0 = arith.constant 0 : i32
    return %arg0, %c0_i32 : i32, i32
  }
  func.func @transform_4(%arg0: i32) -> (i32, i32) {
    %c0_i32 = arith.constant 0 : i32
    %c0_i32_0 = arith.constant 0 : i32
    return %arg0, %c0_i32 : i32, i32
  }
}

module attributes {stable_mosaic.version = 11 : i64} {
  func.func @_attn_kernel(%arg0: i32, %arg1: memref<1x8x32xbf16, #tpu.memory_space<vmem>>, %arg2: memref<1x8x32xbf16, #tpu.memory_space<vmem>>, %arg3: memref<1x8x32xbf16, #tpu.memory_space<vmem>>, %arg4: memref<1x1x8xf32, #tpu.memory_space<vmem>>, %arg5: memref<1x8x32xbf16, #tpu.memory_space<vmem>>, %arg6: memref<32x32xbf16, #tpu.memory_space<vmem>>, %arg7: memref<4x8xbf16, #tpu.memory_space<vmem>>, %arg8: memref<4x8xbf16, #tpu.memory_space<vmem>>, %arg9: memref<1x8x32xbf16, #tpu.memory_space<vmem>>) attributes {dimension_semantics = [#tpu.dimension_semantics<parallel>], iteration_bounds = array<i64: 2>, scalar_prefetch = 0 : i64, scratch_operands = 0 : i64, tpu.core_type = #tpu.core_type<tc>, window_params = [{transform_indices = @transform_0, window_bounds = array<i64: 1, 8, 32>}, {transform_indices = @transform_1, window_bounds = array<i64: 1, 8, 32>}, {transform_indices = @transform_2, window_bounds = array<i64: 1, 8, 32>}, {transform_indices = @transform_3, window_bounds = array<i64: 1, 1, 8>}, {transform_indices = @transform_4, window_bounds = array<i64: 1, 8, 32>}, {pipeline_mode = #tpu.pipeline_mode<synchronous>, transform_indices = @transform_5, window_bounds = array<i64: 32, 32>}, {pipeline_mode = #tpu.pipeline_mode<synchronous>, transform_indices = @transform_6, window_bounds = array<i64: 4, 8>}, {pipeline_mode = #tpu.pipeline_mode<synchronous>, transform_indices = @transform_7, window_bounds = array<i64: 4, 8>}, {transform_indices = @transform_8, window_bounds = array<i64: 1, 8, 32>}]} {
    %c0 = arith.constant 0 : index
    %c0_0 = arith.constant 0 : index
    %c0_1 = arith.constant 0 : index
    %0 = vector.load %arg1[%c0, %c0_0, %c0_1] : memref<1x8x32xbf16, #tpu.memory_space<vmem>>, vector<1x8x32xbf16>
    %1 = vector.shape_cast %0 : vector<1x8x32xbf16> to vector<8x32xbf16>
    %2 = vector.shape_cast %1 : vector<8x32xbf16> to vector<8x4x8xbf16>
    %c0_2 = arith.constant 0 : index
    %c0_3 = arith.constant 0 : index
    %c0_4 = arith.constant 0 : index
    %3 = vector.load %arg2[%c0_2, %c0_3, %c0_4] : memref<1x8x32xbf16, #tpu.memory_space<vmem>>, vector<1x8x32xbf16>
    %4 = vector.shape_cast %3 : vector<1x8x32xbf16> to vector<8x32xbf16>
    %5 = vector.shape_cast %4 : vector<8x32xbf16> to vector<8x4x8xbf16>
    %c0_5 = arith.constant 0 : index
    %c0_6 = arith.constant 0 : index
    %c0_7 = arith.constant 0 : index
    %6 = vector.load %arg3[%c0_5, %c0_6, %c0_7] : memref<1x8x32xbf16, #tpu.memory_space<vmem>>, vector<1x8x32xbf16>
    %7 = vector.shape_cast %6 : vector<1x8x32xbf16> to vector<8x32xbf16>
    %8 = vector.shape_cast %7 : vector<8x32xbf16> to vector<8x4x8xbf16>
    "tpu.trace_start"() <{level = 10 : i32, message = "qhd,khd->hqk"}> : () -> ()
    %cst = arith.constant dense<0.000000e+00> : vector<4x8x8xf32>
    %9 = tpu.matmul %2, %5, %cst {dimension_numbers = #tpu.dot_dimension_numbers<[2], [2], [0], [0], [0, 1, 0, 0, 1, 0], [1], [1]>} : vector<8x4x8xbf16>, vector<8x4x8xbf16>, vector<4x8x8xf32> -> vector<4x8x8xf32>
    "tpu.trace_stop"() : () -> ()
    %cst_8 = arith.constant 0.353553385 : f32
    %10 = vector.broadcast %cst_8 : f32 to vector<4x8x8xf32>
    %11 = arith.mulf %9, %10 : vector<4x8x8xf32>
    %c0_9 = arith.constant 0 : index
    %c0_10 = arith.constant 0 : index
    %c0_11 = arith.constant 0 : index
    %12 = vector.load %arg4[%c0_9, %c0_10, %c0_11] : memref<1x1x8xf32, #tpu.memory_space<vmem>>, vector<1x1x8xf32>
    %13 = vector.shape_cast %12 : vector<1x1x8xf32> to vector<1x8xf32>
    %14 = vector.shape_cast %13 : vector<1x8xf32> to vector<1x1x8xf32>
    %15 = vector.broadcast %14 : vector<1x1x8xf32> to vector<4x8x8xf32>
    %16 = arith.addf %11, %15 : vector<4x8x8xf32>
    %cst_12 = arith.constant dense<0xFF800000> : vector<4x8xf32>
    %17 = vector.multi_reduction <maximumf>, %16, %cst_12 [2] : vector<4x8x8xf32> to vector<4x8xf32>
    %18 = vector.shape_cast %17 : vector<4x8xf32> to vector<4x8x1xf32>
    %c0_13 = arith.constant 0 : index
    %c0_14 = arith.constant 0 : index
    %19 = vector.load %arg7[%c0_13, %c0_14] : memref<4x8xbf16, #tpu.memory_space<vmem>>, vector<4x8xbf16>
    %20 = arith.extf %19 : vector<4x8xbf16> to vector<4x8xf32>
    %c0_15 = arith.constant 0 : index
    %c0_16 = arith.constant 0 : index
    %21 = vector.load %arg8[%c0_15, %c0_16] : memref<4x8xbf16, #tpu.memory_space<vmem>>, vector<4x8xbf16>
    %22 = arith.extf %21 : vector<4x8xbf16> to vector<4x8xf32>
    %23 = arith.extf %2 : vector<8x4x8xbf16> to vector<8x4x8xf32>
    %24 = vector.shape_cast %20 : vector<4x8xf32> to vector<1x4x8xf32>
    %25 = vector.broadcast %24 : vector<1x4x8xf32> to vector<8x4x8xf32>
    %26 = arith.mulf %23, %25 : vector<8x4x8xf32>
    %cst_17 = arith.constant dense<0.000000e+00> : vector<8x4xf32>
    %27 = vector.multi_reduction <add>, %26, %cst_17 [2] : vector<8x4x8xf32> to vector<8x4xf32>
    %28 = tpu.transpose %27, [1, 0] : vector<8x4xf32> -> vector<4x8xf32>
    %29 = vector.shape_cast %28 : vector<4x8xf32> to vector<4x8x1xf32>
    %cst_18 = arith.constant 0.353553385 : f32
    %30 = vector.broadcast %cst_18 : f32 to vector<4x8x1xf32>
    %31 = arith.mulf %29, %30 : vector<4x8x1xf32>
    %32 = arith.maximumf %18, %31 : vector<4x8x1xf32>
    %33 = vector.broadcast %32 : vector<4x8x1xf32> to vector<4x8x8xf32>
    %34 = arith.subf %16, %33 : vector<4x8x8xf32>
    %35 = math.exp %34 : vector<4x8x8xf32>
    %cst_19 = arith.constant dense<0.000000e+00> : vector<4x8xf32>
    %36 = vector.multi_reduction <add>, %35, %cst_19 [2] : vector<4x8x8xf32> to vector<4x8xf32>
    %37 = vector.shape_cast %36 : vector<4x8xf32> to vector<4x8x1xf32>
    %38 = arith.truncf %35 : vector<4x8x8xf32> to vector<4x8x8xbf16>
    "tpu.trace_start"() <{level = 10 : i32, message = "hqk,khd->hqd"}> : () -> ()
    %cst_20 = arith.constant dense<0.000000e+00> : vector<4x8x8xf32>
    %39 = tpu.matmul %38, %8, %cst_20 {dimension_numbers = #tpu.dot_dimension_numbers<[2], [0], [1], [2], [0, 0, 0, 1, 1, 2], [0], [1]>} : vector<4x8x8xbf16>, vector<8x4x8xbf16>, vector<4x8x8xf32> -> vector<4x8x8xf32>
    "tpu.trace_stop"() : () -> ()
    %40 = arith.subf %31, %32 : vector<4x8x1xf32>
    %41 = math.exp %40 : vector<4x8x1xf32>
    %42 = arith.addf %37, %41 : vector<4x8x1xf32>
    %43 = vector.shape_cast %22 : vector<4x8xf32> to vector<4x1x8xf32>
    %44 = vector.broadcast %41 : vector<4x8x1xf32> to vector<4x8x8xf32>
    %45 = vector.broadcast %43 : vector<4x1x8xf32> to vector<4x8x8xf32>
    %46 = arith.mulf %44, %45 : vector<4x8x8xf32>
    %47 = arith.addf %39, %46 : vector<4x8x8xf32>
    %48 = tpu.reciprocal %42 {approx = true} : vector<4x8x1xf32> -> vector<4x8x1xf32>
    %49 = vector.broadcast %48 : vector<4x8x1xf32> to vector<4x8x8xf32>
    %50 = arith.mulf %47, %49 : vector<4x8x8xf32>
    %51 = tpu.transpose %50, [1, 0, 2] : vector<4x8x8xf32> -> vector<8x4x8xf32>
    %52 = vector.shape_cast %51 : vector<8x4x8xf32> to vector<8x32xf32>
    %53 = arith.truncf %52 : vector<8x32xf32> to vector<8x32xbf16>
    %c0_21 = arith.constant 0 : index
    %c0_22 = arith.constant 0 : index
    %54 = vector.load %arg6[%c0_21, %c0_22] : memref<32x32xbf16, #tpu.memory_space<vmem>>, vector<32x32xbf16>
    %cst_23 = arith.constant dense<0.000000e+00> : vector<8x32xf32>
    %55 = tpu.matmul %53, %54, %cst_23 {dimension_numbers = #tpu.dot_dimension_numbers<[1], [0], [0], [1], [0, 0, 1, 1], [], []>} : vector<8x32xbf16>, vector<32x32xbf16>, vector<8x32xf32> -> vector<8x32xf32>
    %c0_24 = arith.constant 0 : index
    %c0_25 = arith.constant 0 : index
    %c0_26 = arith.constant 0 : index
    %56 = vector.load %arg5[%c0_24, %c0_25, %c0_26] : memref<1x8x32xbf16, #tpu.memory_space<vmem>>, vector<1x8x32xbf16>
    %57 = vector.shape_cast %56 : vector<1x8x32xbf16> to vector<8x32xbf16>
    %58 = arith.extf %57 : vector<8x32xbf16> to vector<8x32xf32>
    %59 = arith.addf %55, %58 : vector<8x32xf32>
    %60 = arith.truncf %59 : vector<8x32xf32> to vector<8x32xbf16>
    %c0_27 = arith.constant 0 : index
    %c0_28 = arith.constant 0 : index
    %c0_29 = arith.constant 0 : index
    %61 = vector.load %arg9[%c0_27, %c0_28, %c0_29] : memref<1x8x32xbf16, #tpu.memory_space<vmem>>, vector<1x8x32xbf16>
    %62 = vector.shape_cast %61 : vector<1x8x32xbf16> to vector<8x32xbf16>
    %63 = vector.shape_cast %60 : vector<8x32xbf16> to vector<1x8x32xbf16>
    tpu.vector_store %arg9[%c0_27, %c0_28, %c0_29], %63 {strides = array<i32>} : memref<1x8x32xbf16, #tpu.memory_space<vmem>>, vector<1x8x32xbf16>,
    return
  }
  func.func @transform_0(%arg0: i32) -> (i32, i32, i32) {
    %c0_i32 = arith.constant 0 : i32
    %c0_i32_0 = arith.constant 0 : i32
    %c0_i32_1 = arith.constant 0 : i32
    return %arg0, %c0_i32, %c0_i32_0 : i32, i32, i32
  }
  func.func @transform_1(%arg0: i32) -> (i32, i32, i32) {
    %c0_i32 = arith.constant 0 : i32
    %c0_i32_0 = arith.constant 0 : i32
    %c0_i32_1 = arith.constant 0 : i32
    return %arg0, %c0_i32, %c0_i32_0 : i32, i32, i32
  }
  func.func @transform_2(%arg0: i32) -> (i32, i32, i32) {
    %c0_i32 = arith.constant 0 : i32
    %c0_i32_0 = arith.constant 0 : i32
    %c0_i32_1 = arith.constant 0 : i32
    return %arg0, %c0_i32, %c0_i32_0 : i32, i32, i32
  }
  func.func @transform_3(%arg0: i32) -> (i32, i32, i32) {
    %c0_i32 = arith.constant 0 : i32
    %c0_i32_0 = arith.constant 0 : i32
    %c0_i32_1 = arith.constant 0 : i32
    return %arg0, %c0_i32, %c0_i32_0 : i32, i32, i32
  }
  func.func @transform_4(%arg0: i32) -> (i32, i32, i32) {
    %c0_i32 = arith.constant 0 : i32
    %c0_i32_0 = arith.constant 0 : i32
    %c0_i32_1 = arith.constant 0 : i32
    return %arg0, %c0_i32, %c0_i32_0 : i32, i32, i32
  }
  func.func @transform_5(%arg0: i32) -> (i32, i32) {
    %c0_i32 = arith.constant 0 : i32
    %c0_i32_0 = arith.constant 0 : i32
    %c0_i32_1 = arith.constant 0 : i32
    return %c0_i32, %c0_i32_0 : i32, i32
  }
  func.func @transform_6(%arg0: i32) -> (i32, i32) {
    %c0_i32 = arith.constant 0 : i32
    %c0_i32_0 = arith.constant 0 : i32
    %c0_i32_1 = arith.constant 0 : i32
    return %c0_i32, %c0_i32_0 : i32, i32
  }
  func.func @transform_7(%arg0: i32) -> (i32, i32) {
    %c0_i32 = arith.constant 0 : i32
    %c0_i32_0 = arith.constant 0 : i32
    %c0_i32_1 = arith.constant 0 : i32
    return %c0_i32, %c0_i32_0 : i32, i32
  }
  func.func @transform_8(%arg0: i32) -> (i32, i32, i32) {
    %c0_i32 = arith.constant 0 : i32
    %c0_i32_0 = arith.constant 0 : i32
    %c0_i32_1 = arith.constant 0 : i32
    return %arg0, %c0_i32, %c0_i32_0 : i32, i32, i32
  }
}

module attributes {stable_mosaic.version = 11 : i64} {
  func.func @_film_ffn_kernel(%arg0: i32, %arg1: memref<8x32xbf16, #tpu.memory_space<vmem>>, %arg2: memref<8x32xbf16, #tpu.memory_space<vmem>>, %arg3: memref<1x32xf32, #tpu.memory_space<vmem>>, %arg4: memref<1x32xf32, #tpu.memory_space<vmem>>, %arg5: memref<32x32xbf16, #tpu.memory_space<vmem>>, %arg6: memref<32x32xbf16, #tpu.memory_space<vmem>>, %arg7: memref<32x128xbf16, #tpu.memory_space<vmem>>, %arg8: memref<1x128xf32, #tpu.memory_space<vmem>>, %arg9: memref<128x32xbf16, #tpu.memory_space<vmem>>, %arg10: memref<1x32xf32, #tpu.memory_space<vmem>>, %arg11: memref<8x32xbf16, #tpu.memory_space<vmem>>) attributes {dimension_semantics = [#tpu.dimension_semantics<parallel>], iteration_bounds = array<i64: 2>, scalar_prefetch = 0 : i64, scratch_operands = 0 : i64, tpu.core_type = #tpu.core_type<tc>, window_params = [{transform_indices = @transform_0, window_bounds = array<i64: 8, 32>}, {transform_indices = @transform_1, window_bounds = array<i64: 8, 32>}, {pipeline_mode = #tpu.pipeline_mode<synchronous>, transform_indices = @transform_2, window_bounds = array<i64: 1, 32>}, {pipeline_mode = #tpu.pipeline_mode<synchronous>, transform_indices = @transform_3, window_bounds = array<i64: 1, 32>}, {pipeline_mode = #tpu.pipeline_mode<synchronous>, transform_indices = @transform_4, window_bounds = array<i64: 32, 32>}, {pipeline_mode = #tpu.pipeline_mode<synchronous>, transform_indices = @transform_5, window_bounds = array<i64: 32, 32>}, {pipeline_mode = #tpu.pipeline_mode<synchronous>, transform_indices = @transform_6, window_bounds = array<i64: 32, 128>}, {pipeline_mode = #tpu.pipeline_mode<synchronous>, transform_indices = @transform_7, window_bounds = array<i64: 1, 128>}, {pipeline_mode = #tpu.pipeline_mode<synchronous>, transform_indices = @transform_8, window_bounds = array<i64: 128, 32>}, {pipeline_mode = #tpu.pipeline_mode<synchronous>, transform_indices = @transform_9, window_bounds = array<i64: 1, 32>}, {transform_indices = @transform_10, window_bounds = array<i64: 8, 32>}]} {
    %c0 = arith.constant 0 : index
    %c0_0 = arith.constant 0 : index
    %0 = vector.load %arg1[%c0, %c0_0] : memref<8x32xbf16, #tpu.memory_space<vmem>>, vector<8x32xbf16>
    %1 = arith.extf %0 : vector<8x32xbf16> to vector<8x32xf32>
    %c0_1 = arith.constant 0 : index
    %c0_2 = arith.constant 0 : index
    %2 = vector.load %arg3[%c0_1, %c0_2] : memref<1x32xf32, #tpu.memory_space<vmem>>, vector<1x32xf32>
    %cst = arith.constant dense<0.000000e+00> : vector<8xf32>
    %3 = vector.multi_reduction <add>, %1, %cst [1] : vector<8x32xf32> to vector<8xf32>
    %4 = vector.shape_cast %3 : vector<8xf32> to vector<8x1xf32>
    %cst_3 = arith.constant 3.200000e+01 : f32
    %5 = vector.broadcast %cst_3 : f32 to vector<8x1xf32>
    %6 = arith.divf %4, %5 : vector<8x1xf32>
    %7 = vector.broadcast %6 : vector<8x1xf32> to vector<8x32xf32>
    %8 = arith.subf %1, %7 : vector<8x32xf32>
    %9 = arith.mulf %8, %8 : vector<8x32xf32>
    %cst_4 = arith.constant dense<0.000000e+00> : vector<8xf32>
    %10 = vector.multi_reduction <add>, %9, %cst_4 [1] : vector<8x32xf32> to vector<8xf32>
    %11 = vector.shape_cast %10 : vector<8xf32> to vector<8x1xf32>
    %cst_5 = arith.constant 3.200000e+01 : f32
    %12 = vector.broadcast %cst_5 : f32 to vector<8x1xf32>
    %13 = arith.divf %11, %12 : vector<8x1xf32>
    %14 = vector.broadcast %6 : vector<8x1xf32> to vector<8x32xf32>
    %15 = arith.subf %1, %14 : vector<8x32xf32>
    %cst_6 = arith.constant 9.99999974E-6 : f32
    %16 = vector.broadcast %cst_6 : f32 to vector<8x1xf32>
    %17 = arith.addf %13, %16 : vector<8x1xf32>
    %18 = math.rsqrt %17 : vector<8x1xf32>
    %19 = vector.broadcast %18 : vector<8x1xf32> to vector<8x32xf32>
    %20 = arith.mulf %15, %19 : vector<8x32xf32>
    %21 = vector.broadcast %2 : vector<1x32xf32> to vector<8x32xf32>
    %22 = arith.mulf %20, %21 : vector<8x32xf32>
    %c0_7 = arith.constant 0 : index
    %c0_8 = arith.constant 0 : index
    %23 = vector.load %arg2[%c0_7, %c0_8] : memref<8x32xbf16, #tpu.memory_space<vmem>>, vector<8x32xbf16>
    %24 = arith.extf %23 : vector<8x32xbf16> to vector<8x32xf32>
    %c0_9 = arith.constant 0 : index
    %c0_10 = arith.constant 0 : index
    %25 = vector.load %arg4[%c0_9, %c0_10] : memref<1x32xf32, #tpu.memory_space<vmem>>, vector<1x32xf32>
    %cst_11 = arith.constant dense<0.000000e+00> : vector<8xf32>
    %26 = vector.multi_reduction <add>, %24, %cst_11 [1] : vector<8x32xf32> to vector<8xf32>
    %27 = vector.shape_cast %26 : vector<8xf32> to vector<8x1xf32>
    %cst_12 = arith.constant 3.200000e+01 : f32
    %28 = vector.broadcast %cst_12 : f32 to vector<8x1xf32>
    %29 = arith.divf %27, %28 : vector<8x1xf32>
    %30 = vector.broadcast %29 : vector<8x1xf32> to vector<8x32xf32>
    %31 = arith.subf %24, %30 : vector<8x32xf32>
    %32 = arith.mulf %31, %31 : vector<8x32xf32>
    %cst_13 = arith.constant dense<0.000000e+00> : vector<8xf32>
    %33 = vector.multi_reduction <add>, %32, %cst_13 [1] : vector<8x32xf32> to vector<8xf32>
    %34 = vector.shape_cast %33 : vector<8xf32> to vector<8x1xf32>
    %cst_14 = arith.constant 3.200000e+01 : f32
    %35 = vector.broadcast %cst_14 : f32 to vector<8x1xf32>
    %36 = arith.divf %34, %35 : vector<8x1xf32>
    %37 = vector.broadcast %29 : vector<8x1xf32> to vector<8x32xf32>
    %38 = arith.subf %24, %37 : vector<8x32xf32>
    %cst_15 = arith.constant 9.99999974E-6 : f32
    %39 = vector.broadcast %cst_15 : f32 to vector<8x1xf32>
    %40 = arith.addf %36, %39 : vector<8x1xf32>
    %41 = math.rsqrt %40 : vector<8x1xf32>
    %42 = vector.broadcast %41 : vector<8x1xf32> to vector<8x32xf32>
    %43 = arith.mulf %38, %42 : vector<8x32xf32>
    %44 = vector.broadcast %25 : vector<1x32xf32> to vector<8x32xf32>
    %45 = arith.mulf %43, %44 : vector<8x32xf32>
    %46 = arith.truncf %45 : vector<8x32xf32> to vector<8x32xbf16>
    %c0_16 = arith.constant 0 : index
    %c0_17 = arith.constant 0 : index
    %47 = vector.load %arg5[%c0_16, %c0_17] : memref<32x32xbf16, #tpu.memory_space<vmem>>, vector<32x32xbf16>
    %cst_18 = arith.constant dense<0.000000e+00> : vector<8x32xf32>
    %48 = tpu.matmul %46, %47, %cst_18 {dimension_numbers = #tpu.dot_dimension_numbers<[1], [0], [0], [1], [0, 0, 1, 1], [], []>} : vector<8x32xbf16>, vector<32x32xbf16>, vector<8x32xf32> -> vector<8x32xf32>
    %c0_19 = arith.constant 0 : index
    %c0_20 = arith.constant 0 : index
    %49 = vector.load %arg6[%c0_19, %c0_20] : memref<32x32xbf16, #tpu.memory_space<vmem>>, vector<32x32xbf16>
    %cst_21 = arith.constant dense<0.000000e+00> : vector<8x32xf32>
    %50 = tpu.matmul %46, %49, %cst_21 {dimension_numbers = #tpu.dot_dimension_numbers<[1], [0], [0], [1], [0, 0, 1, 1], [], []>} : vector<8x32xbf16>, vector<32x32xbf16>, vector<8x32xf32> -> vector<8x32xf32>
    %51 = arith.mulf %22, %48 : vector<8x32xf32>
    %52 = arith.addf %51, %50 : vector<8x32xf32>
    %53 = arith.addf %52, %1 : vector<8x32xf32>
    %54 = arith.truncf %53 : vector<8x32xf32> to vector<8x32xbf16>
    %c0_22 = arith.constant 0 : index
    %c0_23 = arith.constant 0 : index
    %55 = vector.load %arg7[%c0_22, %c0_23] : memref<32x128xbf16, #tpu.memory_space<vmem>>, vector<32x128xbf16>
    %cst_24 = arith.constant dense<0.000000e+00> : vector<8x128xf32>
    %56 = tpu.matmul %54, %55, %cst_24 {dimension_numbers = #tpu.dot_dimension_numbers<[1], [0], [0], [1], [0, 0, 1, 1], [], []>} : vector<8x32xbf16>, vector<32x128xbf16>, vector<8x128xf32> -> vector<8x128xf32>
    %cst_25 = arith.constant 5.000000e-01 : f32
    %57 = vector.broadcast %cst_25 : f32 to vector<8x128xf32>
    %58 = arith.mulf %57, %56 : vector<8x128xf32>
    %cst_26 = arith.constant 0.707106769 : f32
    %59 = vector.broadcast %cst_26 : f32 to vector<8x128xf32>
    %60 = arith.mulf %56, %59 : vector<8x128xf32>
    %61 = math.erf %60 : vector<8x128xf32>
    %cst_27 = arith.constant 1.000000e+00 : f32
    %62 = vector.broadcast %cst_27 : f32 to vector<8x128xf32>
    %63 = arith.addf %62, %61 : vector<8x128xf32>
    %64 = arith.mulf %58, %63 : vector<8x128xf32>
    %c0_28 = arith.constant 0 : index
    %c0_29 = arith.constant 0 : index
    %65 = vector.load %arg8[%c0_28, %c0_29] : memref<1x128xf32, #tpu.memory_space<vmem>>, vector<1x128xf32>
    %cst_30 = arith.constant dense<0.000000e+00> : vector<8xf32>
    %66 = vector.multi_reduction <add>, %64, %cst_30 [1] : vector<8x128xf32> to vector<8xf32>
    %67 = vector.shape_cast %66 : vector<8xf32> to vector<8x1xf32>
    %cst_31 = arith.constant 1.280000e+02 : f32
    %68 = vector.broadcast %cst_31 : f32 to vector<8x1xf32>
    %69 = arith.divf %67, %68 : vector<8x1xf32>
    %70 = vector.broadcast %69 : vector<8x1xf32> to vector<8x128xf32>
    %71 = arith.subf %64, %70 : vector<8x128xf32>
    %72 = arith.mulf %71, %71 : vector<8x128xf32>
    %cst_32 = arith.constant dense<0.000000e+00> : vector<8xf32>
    %73 = vector.multi_reduction <add>, %72, %cst_32 [1] : vector<8x128xf32> to vector<8xf32>
    %74 = vector.shape_cast %73 : vector<8xf32> to vector<8x1xf32>
    %cst_33 = arith.constant 1.280000e+02 : f32
    %75 = vector.broadcast %cst_33 : f32 to vector<8x1xf32>
    %76 = arith.divf %74, %75 : vector<8x1xf32>
    %77 = vector.broadcast %69 : vector<8x1xf32> to vector<8x128xf32>
    %78 = arith.subf %64, %77 : vector<8x128xf32>
    %cst_34 = arith.constant 9.99999974E-6 : f32
    %79 = vector.broadcast %cst_34 : f32 to vector<8x1xf32>
    %80 = arith.addf %76, %79 : vector<8x1xf32>
    %81 = math.rsqrt %80 : vector<8x1xf32>
    %82 = vector.broadcast %81 : vector<8x1xf32> to vector<8x128xf32>
    %83 = arith.mulf %78, %82 : vector<8x128xf32>
    %84 = vector.broadcast %65 : vector<1x128xf32> to vector<8x128xf32>
    %85 = arith.mulf %83, %84 : vector<8x128xf32>
    %86 = arith.truncf %85 : vector<8x128xf32> to vector<8x128xbf16>
    %c0_35 = arith.constant 0 : index
    %c0_36 = arith.constant 0 : index
    %87 = vector.load %arg9[%c0_35, %c0_36] : memref<128x32xbf16, #tpu.memory_space<vmem>>, vector<128x32xbf16>
    %cst_37 = arith.constant dense<0.000000e+00> : vector<8x32xf32>
    %88 = tpu.matmul %86, %87, %cst_37 {dimension_numbers = #tpu.dot_dimension_numbers<[1], [0], [0], [1], [0, 0, 1, 1], [], []>} : vector<8x128xbf16>, vector<128x32xbf16>, vector<8x32xf32> -> vector<8x32xf32>
    %89 = arith.addf %88, %53 : vector<8x32xf32>
    %c0_38 = arith.constant 0 : index
    %c0_39 = arith.constant 0 : index
    %90 = vector.load %arg10[%c0_38, %c0_39] : memref<1x32xf32, #tpu.memory_space<vmem>>, vector<1x32xf32>
    %cst_40 = arith.constant dense<0.000000e+00> : vector<8xf32>
    %91 = vector.multi_reduction <add>, %89, %cst_40 [1] : vector<8x32xf32> to vector<8xf32>
    %92 = vector.shape_cast %91 : vector<8xf32> to vector<8x1xf32>
    %cst_41 = arith.constant 3.200000e+01 : f32
    %93 = vector.broadcast %cst_41 : f32 to vector<8x1xf32>
    %94 = arith.divf %92, %93 : vector<8x1xf32>
    %95 = vector.broadcast %94 : vector<8x1xf32> to vector<8x32xf32>
    %96 = arith.subf %89, %95 : vector<8x32xf32>
    %97 = arith.mulf %96, %96 : vector<8x32xf32>
    %cst_42 = arith.constant dense<0.000000e+00> : vector<8xf32>
    %98 = vector.multi_reduction <add>, %97, %cst_42 [1] : vector<8x32xf32> to vector<8xf32>
    %99 = vector.shape_cast %98 : vector<8xf32> to vector<8x1xf32>
    %cst_43 = arith.constant 3.200000e+01 : f32
    %100 = vector.broadcast %cst_43 : f32 to vector<8x1xf32>
    %101 = arith.divf %99, %100 : vector<8x1xf32>
    %102 = vector.broadcast %94 : vector<8x1xf32> to vector<8x32xf32>
    %103 = arith.subf %89, %102 : vector<8x32xf32>
    %cst_44 = arith.constant 9.99999974E-6 : f32
    %104 = vector.broadcast %cst_44 : f32 to vector<8x1xf32>
    %105 = arith.addf %101, %104 : vector<8x1xf32>
    %106 = math.rsqrt %105 : vector<8x1xf32>
    %107 = vector.broadcast %106 : vector<8x1xf32> to vector<8x32xf32>
    %108 = arith.mulf %103, %107 : vector<8x32xf32>
    %109 = vector.broadcast %90 : vector<1x32xf32> to vector<8x32xf32>
    %110 = arith.mulf %108, %109 : vector<8x32xf32>
    %111 = arith.truncf %110 : vector<8x32xf32> to vector<8x32xbf16>
    %c0_45 = arith.constant 0 : index
    %c0_46 = arith.constant 0 : index
    %112 = vector.load %arg11[%c0_45, %c0_46] : memref<8x32xbf16, #tpu.memory_space<vmem>>, vector<8x32xbf16>
    tpu.vector_store %arg11[%c0_45, %c0_46], %111 {strides = array<i32>} : memref<8x32xbf16, #tpu.memory_space<vmem>>, vector<8x32xbf16>,
    return
  }
  func.func @transform_0(%arg0: i32) -> (i32, i32) {
    %c0_i32 = arith.constant 0 : i32
    %c0_i32_0 = arith.constant 0 : i32
    return %arg0, %c0_i32 : i32, i32
  }
  func.func @transform_1(%arg0: i32) -> (i32, i32) {
    %c0_i32 = arith.constant 0 : i32
    %c0_i32_0 = arith.constant 0 : i32
    return %arg0, %c0_i32 : i32, i32
  }
  func.func @transform_2(%arg0: i32) -> (i32, i32) {
    %c0_i32 = arith.constant 0 : i32
    %c0_i32_0 = arith.constant 0 : i32
    %c0_i32_1 = arith.constant 0 : i32
    return %c0_i32, %c0_i32_0 : i32, i32
  }
  func.func @transform_3(%arg0: i32) -> (i32, i32) {
    %c0_i32 = arith.constant 0 : i32
    %c0_i32_0 = arith.constant 0 : i32
    %c0_i32_1 = arith.constant 0 : i32
    return %c0_i32, %c0_i32_0 : i32, i32
  }
  func.func @transform_4(%arg0: i32) -> (i32, i32) {
    %c0_i32 = arith.constant 0 : i32
    %c0_i32_0 = arith.constant 0 : i32
    %c0_i32_1 = arith.constant 0 : i32
    return %c0_i32, %c0_i32_0 : i32, i32
  }
  func.func @transform_5(%arg0: i32) -> (i32, i32) {
    %c0_i32 = arith.constant 0 : i32
    %c0_i32_0 = arith.constant 0 : i32
    %c0_i32_1 = arith.constant 0 : i32
    return %c0_i32, %c0_i32_0 : i32, i32
  }
  func.func @transform_6(%arg0: i32) -> (i32, i32) {
    %c0_i32 = arith.constant 0 : i32
    %c0_i32_0 = arith.constant 0 : i32
    %c0_i32_1 = arith.constant 0 : i32
    return %c0_i32, %c0_i32_0 : i32, i32
  }
  func.func @transform_7(%arg0: i32) -> (i32, i32) {
    %c0_i32 = arith.constant 0 : i32
    %c0_i32_0 = arith.constant 0 : i32
    %c0_i32_1 = arith.constant 0 : i32
    return %c0_i32, %c0_i32_0 : i32, i32
  }
  func.func @transform_8(%arg0: i32) -> (i32, i32) {
    %c0_i32 = arith.constant 0 : i32
    %c0_i32_0 = arith.constant 0 : i32
    %c0_i32_1 = arith.constant 0 : i32
    return %c0_i32, %c0_i32_0 : i32, i32
  }
  func.func @transform_9(%arg0: i32) -> (i32, i32) {
    %c0_i32 = arith.constant 0 : i32
    %c0_i32_0 = arith.constant 0 : i32
    %c0_i32_1 = arith.constant 0 : i32
    return %c0_i32, %c0_i32_0 : i32, i32
  }
  func.func @transform_10(%arg0: i32) -> (i32, i32) {
    %c0_i32 = arith.constant 0 : i32
    %c0_i32_0 = arith.constant 0 : i32
    return %arg0, %c0_i32 : i32, i32
  }
}

module attributes {stable_mosaic.version = 11 : i64} {
  func.func @_ffn_kernel(%arg0: i32, %arg1: memref<8x32xbf16, #tpu.memory_space<vmem>>, %arg2: memref<32x128xbf16, #tpu.memory_space<vmem>>, %arg3: memref<1x128xf32, #tpu.memory_space<vmem>>, %arg4: memref<128x32xbf16, #tpu.memory_space<vmem>>, %arg5: memref<1x32xf32, #tpu.memory_space<vmem>>, %arg6: memref<8x32xbf16, #tpu.memory_space<vmem>>) attributes {dimension_semantics = [#tpu.dimension_semantics<parallel>], iteration_bounds = array<i64: 2>, scalar_prefetch = 0 : i64, scratch_operands = 0 : i64, tpu.core_type = #tpu.core_type<tc>, window_params = [{transform_indices = @transform_0, window_bounds = array<i64: 8, 32>}, {pipeline_mode = #tpu.pipeline_mode<synchronous>, transform_indices = @transform_1, window_bounds = array<i64: 32, 128>}, {pipeline_mode = #tpu.pipeline_mode<synchronous>, transform_indices = @transform_2, window_bounds = array<i64: 1, 128>}, {pipeline_mode = #tpu.pipeline_mode<synchronous>, transform_indices = @transform_3, window_bounds = array<i64: 128, 32>}, {pipeline_mode = #tpu.pipeline_mode<synchronous>, transform_indices = @transform_4, window_bounds = array<i64: 1, 32>}, {transform_indices = @transform_5, window_bounds = array<i64: 8, 32>}]} {
    %c0 = arith.constant 0 : index
    %c0_0 = arith.constant 0 : index
    %0 = vector.load %arg1[%c0, %c0_0] : memref<8x32xbf16, #tpu.memory_space<vmem>>, vector<8x32xbf16>
    %1 = arith.extf %0 : vector<8x32xbf16> to vector<8x32xf32>
    %2 = arith.truncf %1 : vector<8x32xf32> to vector<8x32xbf16>
    %c0_1 = arith.constant 0 : index
    %c0_2 = arith.constant 0 : index
    %3 = vector.load %arg2[%c0_1, %c0_2] : memref<32x128xbf16, #tpu.memory_space<vmem>>, vector<32x128xbf16>
    %cst = arith.constant dense<0.000000e+00> : vector<8x128xf32>
    %4 = tpu.matmul %2, %3, %cst {dimension_numbers = #tpu.dot_dimension_numbers<[1], [0], [0], [1], [0, 0, 1, 1], [], []>} : vector<8x32xbf16>, vector<32x128xbf16>, vector<8x128xf32> -> vector<8x128xf32>
    %cst_3 = arith.constant 5.000000e-01 : f32
    %5 = vector.broadcast %cst_3 : f32 to vector<8x128xf32>
    %6 = arith.mulf %5, %4 : vector<8x128xf32>
    %cst_4 = arith.constant 0.707106769 : f32
    %7 = vector.broadcast %cst_4 : f32 to vector<8x128xf32>
    %8 = arith.mulf %4, %7 : vector<8x128xf32>
    %9 = math.erf %8 : vector<8x128xf32>
    %cst_5 = arith.constant 1.000000e+00 : f32
    %10 = vector.broadcast %cst_5 : f32 to vector<8x128xf32>
    %11 = arith.addf %10, %9 : vector<8x128xf32>
    %12 = arith.mulf %6, %11 : vector<8x128xf32>
    %c0_6 = arith.constant 0 : index
    %c0_7 = arith.constant 0 : index
    %13 = vector.load %arg3[%c0_6, %c0_7] : memref<1x128xf32, #tpu.memory_space<vmem>>, vector<1x128xf32>
    %cst_8 = arith.constant dense<0.000000e+00> : vector<8xf32>
    %14 = vector.multi_reduction <add>, %12, %cst_8 [1] : vector<8x128xf32> to vector<8xf32>
    %15 = vector.shape_cast %14 : vector<8xf32> to vector<8x1xf32>
    %cst_9 = arith.constant 1.280000e+02 : f32
    %16 = vector.broadcast %cst_9 : f32 to vector<8x1xf32>
    %17 = arith.divf %15, %16 : vector<8x1xf32>
    %18 = vector.broadcast %17 : vector<8x1xf32> to vector<8x128xf32>
    %19 = arith.subf %12, %18 : vector<8x128xf32>
    %20 = arith.mulf %19, %19 : vector<8x128xf32>
    %cst_10 = arith.constant dense<0.000000e+00> : vector<8xf32>
    %21 = vector.multi_reduction <add>, %20, %cst_10 [1] : vector<8x128xf32> to vector<8xf32>
    %22 = vector.shape_cast %21 : vector<8xf32> to vector<8x1xf32>
    %cst_11 = arith.constant 1.280000e+02 : f32
    %23 = vector.broadcast %cst_11 : f32 to vector<8x1xf32>
    %24 = arith.divf %22, %23 : vector<8x1xf32>
    %25 = vector.broadcast %17 : vector<8x1xf32> to vector<8x128xf32>
    %26 = arith.subf %12, %25 : vector<8x128xf32>
    %cst_12 = arith.constant 9.99999974E-6 : f32
    %27 = vector.broadcast %cst_12 : f32 to vector<8x1xf32>
    %28 = arith.addf %24, %27 : vector<8x1xf32>
    %29 = math.rsqrt %28 : vector<8x1xf32>
    %30 = vector.broadcast %29 : vector<8x1xf32> to vector<8x128xf32>
    %31 = arith.mulf %26, %30 : vector<8x128xf32>
    %32 = vector.broadcast %13 : vector<1x128xf32> to vector<8x128xf32>
    %33 = arith.mulf %31, %32 : vector<8x128xf32>
    %34 = arith.truncf %33 : vector<8x128xf32> to vector<8x128xbf16>
    %c0_13 = arith.constant 0 : index
    %c0_14 = arith.constant 0 : index
    %35 = vector.load %arg4[%c0_13, %c0_14] : memref<128x32xbf16, #tpu.memory_space<vmem>>, vector<128x32xbf16>
    %cst_15 = arith.constant dense<0.000000e+00> : vector<8x32xf32>
    %36 = tpu.matmul %34, %35, %cst_15 {dimension_numbers = #tpu.dot_dimension_numbers<[1], [0], [0], [1], [0, 0, 1, 1], [], []>} : vector<8x128xbf16>, vector<128x32xbf16>, vector<8x32xf32> -> vector<8x32xf32>
    %37 = arith.addf %36, %1 : vector<8x32xf32>
    %c0_16 = arith.constant 0 : index
    %c0_17 = arith.constant 0 : index
    %38 = vector.load %arg5[%c0_16, %c0_17] : memref<1x32xf32, #tpu.memory_space<vmem>>, vector<1x32xf32>
    %cst_18 = arith.constant dense<0.000000e+00> : vector<8xf32>
    %39 = vector.multi_reduction <add>, %37, %cst_18 [1] : vector<8x32xf32> to vector<8xf32>
    %40 = vector.shape_cast %39 : vector<8xf32> to vector<8x1xf32>
    %cst_19 = arith.constant 3.200000e+01 : f32
    %41 = vector.broadcast %cst_19 : f32 to vector<8x1xf32>
    %42 = arith.divf %40, %41 : vector<8x1xf32>
    %43 = vector.broadcast %42 : vector<8x1xf32> to vector<8x32xf32>
    %44 = arith.subf %37, %43 : vector<8x32xf32>
    %45 = arith.mulf %44, %44 : vector<8x32xf32>
    %cst_20 = arith.constant dense<0.000000e+00> : vector<8xf32>
    %46 = vector.multi_reduction <add>, %45, %cst_20 [1] : vector<8x32xf32> to vector<8xf32>
    %47 = vector.shape_cast %46 : vector<8xf32> to vector<8x1xf32>
    %cst_21 = arith.constant 3.200000e+01 : f32
    %48 = vector.broadcast %cst_21 : f32 to vector<8x1xf32>
    %49 = arith.divf %47, %48 : vector<8x1xf32>
    %50 = vector.broadcast %42 : vector<8x1xf32> to vector<8x32xf32>
    %51 = arith.subf %37, %50 : vector<8x32xf32>
    %cst_22 = arith.constant 9.99999974E-6 : f32
    %52 = vector.broadcast %cst_22 : f32 to vector<8x1xf32>
    %53 = arith.addf %49, %52 : vector<8x1xf32>
    %54 = math.rsqrt %53 : vector<8x1xf32>
    %55 = vector.broadcast %54 : vector<8x1xf32> to vector<8x32xf32>
    %56 = arith.mulf %51, %55 : vector<8x32xf32>
    %57 = vector.broadcast %38 : vector<1x32xf32> to vector<8x32xf32>
    %58 = arith.mulf %56, %57 : vector<8x32xf32>
    %59 = arith.truncf %58 : vector<8x32xf32> to vector<8x32xbf16>
    %c0_23 = arith.constant 0 : index
    %c0_24 = arith.constant 0 : index
    %60 = vector.load %arg6[%c0_23, %c0_24] : memref<8x32xbf16, #tpu.memory_space<vmem>>, vector<8x32xbf16>
    tpu.vector_store %arg6[%c0_23, %c0_24], %59 {strides = array<i32>} : memref<8x32xbf16, #tpu.memory_space<vmem>>, vector<8x32xbf16>,
    return
  }
  func.func @transform_0(%arg0: i32) -> (i32, i32) {
    %c0_i32 = arith.constant 0 : i32
    %c0_i32_0 = arith.constant 0 : i32
    return %arg0, %c0_i32 : i32, i32
  }
  func.func @transform_1(%arg0: i32) -> (i32, i32) {
    %c0_i32 = arith.constant 0 : i32
    %c0_i32_0 = arith.constant 0 : i32
    %c0_i32_1 = arith.constant 0 : i32
    return %c0_i32, %c0_i32_0 : i32, i32
  }
  func.func @transform_2(%arg0: i32) -> (i32, i32) {
    %c0_i32 = arith.constant 0 : i32
    %c0_i32_0 = arith.constant 0 : i32
    %c0_i32_1 = arith.constant 0 : i32
    return %c0_i32, %c0_i32_0 : i32, i32
  }
  func.func @transform_3(%arg0: i32) -> (i32, i32) {
    %c0_i32 = arith.constant 0 : i32
    %c0_i32_0 = arith.constant 0 : i32
    %c0_i32_1 = arith.constant 0 : i32
    return %c0_i32, %c0_i32_0 : i32, i32
  }
  func.func @transform_4(%arg0: i32) -> (i32, i32) {
    %c0_i32 = arith.constant 0 : i32
    %c0_i32_0 = arith.constant 0 : i32
    %c0_i32_1 = arith.constant 0 : i32
    return %c0_i32, %c0_i32_0 : i32, i32
  }
  func.func @transform_5(%arg0: i32) -> (i32, i32) {
    %c0_i32 = arith.constant 0 : i32
    %c0_i32_0 = arith.constant 0 : i32
    return %arg0, %c0_i32 : i32, i32
  }
}

</mosaic_0001>

<llo_original>
// kernel: transformer_block_forward.12
$region0: #{transformer_block_forward.12}
  #allocation0 [shape = 'u32[]', space=smem, size = 0x4, offset = 0x4, fixed_abs, tag = 'smem constant byte address 0x4 - core index']
  #allocation1 [shape = 'u32[144,128]{1,0:T(1,128)}', space=vmem, size = 0x12000, scoped, tag = 'internal scratch']
  %s0 = inlined_call_operand.hbm [shape: bf16[16,32], index: 0, kind: input, shape index: {}]
  %s1 = inlined_call_operand.hbm [shape: bf16[32,32], index: 1, kind: input, shape index: {}]
  %s2 = inlined_call_operand.hbm [shape: bf16[32,32], index: 2, kind: input, shape index: {}]
  %s3 = inlined_call_operand.hbm [shape: bf16[16,32], index: 3, kind: output, shape index: {0}]
  %s4 = inlined_call_operand.hbm [shape: bf16[16,32], index: 4, kind: output, shape index: {1}]
  %5 = xla_tuple %s3, %s4
  %s6 = sld [smem:[#allocation0]]
  $region65: #{transformer_block_forward.12} parent=0
    _
  %s8 = ssub.s32 1, %s6
  %s9 = scalar_select 0, %s8, %s6
  $region1: #{transformer_block_forward.12} parent=0
    #allocation2 [shape = 'u8[4096]{0}', space=vmem, size = 0x1000, scoped, tag = 'input window, operand 0']
    #allocation3 [shape = 's32[2]{0}', space=sflag, size = 0x8, scoped, tag = 'scoped memory for transformer_block_forward.12']
    #allocation4 [shape = 's32[2]{0}', space=sflag, size = 0x8, scoped, tag = 'scoped memory for transformer_block_forward.12']
    #allocation5 [shape = 'u8[8192]{0}', space=vmem, size = 0x2000, scoped, tag = 'input window, operand 1, single buffered']
    #allocation6 [shape = 's32[1]{0}', space=sflag, size = 0x4, scoped, tag = 'scoped memory for transformer_block_forward.12']
    #allocation7 [shape = 'u8[8192]{0}', space=vmem, size = 0x2000, scoped, tag = 'input window, operand 2, single buffered']
    #allocation8 [shape = 'u8[4096]{0}', space=vmem, size = 0x1000, scoped, tag = 'output window, operand 0']
    #allocation9 [shape = 'u8[4096]{0}', space=vmem, size = 0x1000, scoped, tag = 'output window, operand 1']
    #allocation10 [shape = 's32[2]{0}', space=sflag, size = 0x8, scoped, tag = 'scoped memory for transformer_block_forward.12']
    %10 = vsyncpa [#allocation3], 0
    %s11 = scalar_lea.sflag [#allocation3], 1
    %12 = vsyncpa %s11, 0
    %13 = vsyncpa [#allocation6], 0
    %14 = vsyncpa [#allocation4], 0
    %s15 = scalar_lea.sflag [#allocation4], 1
    %16 = vsyncpa %s15, 0
    %17 = vsyncpa [#allocation10], 0
    %s18 = scalar_lea.sflag [#allocation10], 1
    %19 = vsyncpa %s18, 0
    loop: start=0, step=1, limit=4
    $region2: #{transformer_block_forward.12} parent=1 // loop_pre_header
      _
    $region3: #{transformer_block_forward.12} parent=1 // loop_header
      %s21 = sphi 0, %s25
      %p22 = scmp.ge.s32.totalorder %s21, 4
      %s31 = sphi 0, %s33
      %s34 = sphi 0, %s31
      %s35 = sphi 0, %s34
      %s51 = sphi 0, %s35
      %s55 = sphi 0, %s55
      %s57 = sphi 0, %s55
      %s58 = sphi 0, %s57
      %s72 = sphi 0, %s58
      %s76 = sphi 0, %s76
      %s78 = sphi 0, %s76
      %s79 = sphi 0, %s78
      %s93 = sphi 0, %s79
      %s99 = sphi 0, %s101
      %s102 = sphi 0, %s99
      %s103 = sphi 0, %s102
      %s119 = sphi 0, %s103
      %s125 = sphi 0, %s127
      %s128 = sphi 0, %s125
      %s129 = sphi 0, %s128
      %s145 = sphi 0, %s129
    $region4: #{transformer_block_forward.12} parent=1 // loop_header_branch
      %24 = sbr.rel (%p22) target = $region8
    $region5: #{transformer_block_forward.12} parent=1 // loop_body
      %s26 = ssub.s32 %s21, 1
      %s27 = ssub.s32 %s21, 2
      %s28 = sadd.s32 %s21, 1
      %s29 = ssub.s32 %s21, %s28
      %p30 = scmp.eq.s32.totalorder %s29, 0
      %s32 = sadd.s32 %s31, 1
      %s33 = scalar_select %p30, %s31, %s32
      %p36 = pneg %p30
      %p37 = scmp.eq.s32.totalorder %s21, 1
      %p38 = por %p36, %p37
      %p39 = scmp.ne.s32.totalorder %s31, %s34
      %p40 = scmp.eq.s32.totalorder %s21, 0
      %p41 = por %p39, %p40
      %p42 = scmp.ne.s32.totalorder %s31, %s34
      %p43 = scmp.eq.s32.totalorder %s26, 1
      %p44 = por %p42, %p43
      %p45 = scmp.ne.s32.totalorder %s34, %s35
      %p46 = scmp.eq.s32.totalorder %s26, 0
      %p47 = por %p45, %p46
      %p48 = scmp.ne.s32.totalorder %s34, %s35
      %p49 = scmp.eq.s32.totalorder %s27, 1
      %p50 = por %p48, %p49
      %p52 = scmp.ne.s32.totalorder %s35, %s51
      %p53 = scmp.eq.s32.totalorder %s27, 0
      %p54 = por %p52, %p53
      %s56 = sadd.s32 %s55, 1
      %p59 = scmp.eq.s32.totalorder %s21, 1
      %p60 = scmp.ne.s32.totalorder %s55, %s57
      %p61 = scmp.eq.s32.totalorder %s21, 0
      %p62 = por %p60, %p61
      %p63 = scmp.ne.s32.totalorder %s55, %s57
      %p64 = scmp.eq.s32.totalorder %s26, 1
      %p65 = por %p63, %p64
      %p66 = scmp.ne.s32.totalorder %s57, %s58
      %p67 = scmp.eq.s32.totalorder %s26, 0
      %p68 = por %p66, %p67
      %p69 = scmp.ne.s32.totalorder %s57, %s58
      %p70 = scmp.eq.s32.totalorder %s27, 1
      %p71 = por %p69, %p70
      %p73 = scmp.ne.s32.totalorder %s58, %s72
      %p74 = scmp.eq.s32.totalorder %s27, 0
      %p75 = por %p73, %p74
      %s77 = sadd.s32 %s76, 1
      %p80 = scmp.eq.s32.totalorder %s21, 1
      %p81 = scmp.ne.s32.totalorder %s76, %s78
      %p82 = scmp.eq.s32.totalorder %s21, 0
      %p83 = por %p81, %p82
      %p84 = scmp.ne.s32.totalorder %s76, %s78
      %p85 = scmp.eq.s32.totalorder %s26, 1
      %p86 = por %p84, %p85
      %p87 = scmp.ne.s32.totalorder %s78, %s79
      %p88 = scmp.eq.s32.totalorder %s26, 0
      %p89 = por %p87, %p88
      %p90 = scmp.ne.s32.totalorder %s78, %s79
      %p91 = scmp.eq.s32.totalorder %s27, 1
      %p92 = por %p90, %p91
      %p94 = scmp.ne.s32.totalorder %s79, %s93
      %p95 = scmp.eq.s32.totalorder %s27, 0
      %p96 = por %p94, %p95
      %s97 = ssub.s32 %s21, %s28
      %p98 = scmp.eq.s32.totalorder %s97, 0
      %s100 = sadd.s32 %s99, 1
      %s101 = scalar_select %p98, %s99, %s100
      %p104 = pneg %p98
      %p105 = scmp.eq.s32.totalorder %s21, 1
      %p106 = por %p104, %p105
      %p107 = scmp.ne.s32.totalorder %s99, %s102
      %p108 = scmp.eq.s32.totalorder %s21, 0
      %p109 = por %p107, %p108
      %p110 = scmp.ne.s32.totalorder %s99, %s102
      %p111 = scmp.eq.s32.totalorder %s26, 1
      %p112 = por %p110, %p111
      %p113 = scmp.ne.s32.totalorder %s102, %s103
      %p114 = scmp.eq.s32.totalorder %s26, 0
      %p115 = por %p113, %p114
      %p116 = scmp.ne.s32.totalorder %s102, %s103
      %p117 = scmp.eq.s32.totalorder %s27, 1
      %p118 = por %p116, %p117
      %p120 = scmp.ne.s32.totalorder %s103, %s119
      %p121 = scmp.eq.s32.totalorder %s27, 0
      %p122 = por %p120, %p121
      %s123 = ssub.s32 %s21, %s28
      %p124 = scmp.eq.s32.totalorder %s123, 0
      %s126 = sadd.s32 %s125, 1
      %s127 = scalar_select %p124, %s125, %s126
      %p130 = pneg %p124
      %p131 = scmp.eq.s32.totalorder %s21, 1
      %p132 = por %p130, %p131
      %p133 = scmp.ne.s32.totalorder %s125, %s128
      %p134 = scmp.eq.s32.totalorder %s21, 0
      %p135 = por %p133, %p134
      %p136 = scmp.ne.s32.totalorder %s125, %s128
      %p137 = scmp.eq.s32.totalorder %s26, 1
      %p138 = por %p136, %p137
      %p139 = scmp.ne.s32.totalorder %s128, %s129
      %p140 = scmp.eq.s32.totalorder %s26, 0
      %p141 = por %p139, %p140
      %p142 = scmp.ne.s32.totalorder %s128, %s129
      %p143 = scmp.eq.s32.totalorder %s27, 1
      %p144 = por %p142, %p143
      %p146 = scmp.ne.s32.totalorder %s129, %s145
      %p147 = scmp.eq.s32.totalorder %s27, 0
      %p148 = por %p146, %p147
      %p149 = scmp.le.s32.totalorder 1, %s21
      %p150 = scmp.lt.s32.totalorder %s21, 3
      %p151 = pnand %p149, %p150
      %p152 = pneg %p151
      // Predicated region
      $region9: #{transformer_block_forward.12} parent=5 // pred_check
        _
      $region10: #{transformer_block_forward.12} parent=5 // pred_check_branch
        %154 = sbr.rel (%p151) target = $region12
      $region11: #{transformer_block_forward.12} parent=5 // pred_region
        %s155 = ssub.s32 %s21, 1
        // Predicated region
        $region13: #{transformer_block_forward.12} parent=11 // pred_check
          %p156 = pneg %p68
        $region14: #{transformer_block_forward.12} parent=11 // pred_check_branch
          %158 = sbr.rel (%p156) target = $region16
        $region15: #{transformer_block_forward.12} parent=11 // pred_region
          %s160 = ssub.s32 256, 256
          %161 = vsyncadd [#allocation6], %s160
          %s162 = sshll.u32 [#allocation5], 4
          %s163 = int_to_ptr.vmem [resolvable:$true] %s162
          %168 = dma.hbm_to_vmem [thread:$0]  %s1, 256, %s163, [#allocation6], 64, 64, 4
        $region16: #{transformer_block_forward.12} parent=11 // pred_fallthru
          _
        // Predicated region
        $region17: #{transformer_block_forward.12} parent=11 // pred_check
          %p169 = pneg %p89
        $region18: #{transformer_block_forward.12} parent=11 // pred_check_branch
          %171 = sbr.rel (%p169) target = $region20
        $region19: #{transformer_block_forward.12} parent=11 // pred_region
          %s173 = ssub.s32 256, 256
          %174 = vsyncadd [#allocation6], %s173
          %s175 = sshll.u32 [#allocation7], 4
          %s176 = int_to_ptr.vmem [resolvable:$true] %s175
          %181 = dma.hbm_to_vmem [thread:$0]  %s2, 256, %s176, [#allocation6], 64, 64, 4
        $region20: #{transformer_block_forward.12} parent=11 // pred_fallthru
          _
      $region12: #{transformer_block_forward.12} parent=5 // pred_fallthru
        _
      %p182 = scmp.lt.s32.totalorder %s21, 2
      // Predicated region
      $region21: #{transformer_block_forward.12} parent=5 // pred_check
        %p183 = pneg %p182
      $region22: #{transformer_block_forward.12} parent=5 // pred_check_branch
        %185 = sbr.rel (%p183) target = $region24
      $region23: #{transformer_block_forward.12} parent=5 // pred_region
        // Predicated region
        $region25: #{transformer_block_forward.12} parent=23 // pred_check
          %p186 = pneg %p41
        $region26: #{transformer_block_forward.12} parent=23 // pred_check_branch
          %188 = sbr.rel (%p186) target = $region28
        $region27: #{transformer_block_forward.12} parent=23 // pred_region
          %s189 = sand.u32 %s31, 1
          %s190 = scalar_lea.sflag [#allocation3], %s189
          %s191 = sand.u32 %s31, 1
          %s192 = smul.addr %s191, 4
          %s193 = scalar_lea.vmem [#allocation2], %s192
          %s195 = ssub.s32 64, 64
          %196 = vsyncadd %s190, %s195
          %s197 = smul.addr %s21, 64
          %s198 = scalar_lea.hbm %s0, %s197
          %s200 = sshll.u32 %s193, 4
          %s201 = int_to_ptr.vmem [resolvable:$true] %s200
          %203 = dma.hbm_to_vmem [thread:$0]  %s198, 64, %s201, %s190
        $region28: #{transformer_block_forward.12} parent=23 // pred_fallthru
          _
      $region24: #{transformer_block_forward.12} parent=5 // pred_fallthru
        _
      %p204 = scmp.le.s32.totalorder 1, %s21
      %p205 = scmp.lt.s32.totalorder %s21, 3
      %p206 = pnand %p204, %p205
      %p207 = pneg %p206
      // Predicated region
      $region29: #{transformer_block_forward.12} parent=5 // pred_check
        _
      $region30: #{transformer_block_forward.12} parent=5 // pred_check_branch
        %209 = sbr.rel (%p206) target = $region32
      $region31: #{transformer_block_forward.12} parent=5 // pred_region
        %s210 = ssub.s32 %s21, 1
        %s211 = sand.u32 %s34, 1
        %s212 = scalar_lea.sflag [#allocation3], %s211
        %s213 = sand.u32 %s34, 1
        %s214 = smul.addr %s213, 4
        %s215 = scalar_lea.vmem [#allocation2], %s214
        // Predicated region
        $region33: #{transformer_block_forward.12} parent=31 // pred_check
          %p216 = pneg %p47
        $region34: #{transformer_block_forward.12} parent=31 // pred_check_branch
          %218 = sbr.rel (%p216) target = $region36
        $region35: #{transformer_block_forward.12} parent=31 // pred_region
          %219 = dma.done %s212, 64
        $region36: #{transformer_block_forward.12} parent=31 // pred_fallthru
          _
        // Predicated region
        $region37: #{transformer_block_forward.12} parent=31 // pred_check
          %p220 = pneg %p68
        $region38: #{transformer_block_forward.12} parent=31 // pred_check_branch
          %222 = sbr.rel (%p220) target = $region40
        $region39: #{transformer_block_forward.12} parent=31 // pred_region
          %223 = dma.done [#allocation6], 256
        $region40: #{transformer_block_forward.12} parent=31 // pred_fallthru
          _
        // Predicated region
        $region41: #{transformer_block_forward.12} parent=31 // pred_check
          %p224 = pneg %p89
        $region42: #{transformer_block_forward.12} parent=31 // pred_check_branch
          %226 = sbr.rel (%p224) target = $region44
        $region43: #{transformer_block_forward.12} parent=31 // pred_region
          %227 = dma.done [#allocation6], 256
        $region44: #{transformer_block_forward.12} parent=31 // pred_fallthru
          _
        %s228 = sand.u32 %s34, 1
        %s229 = scalar_lea.sflag [#allocation3], %s228
        %s230 = sand.u32 %s34, 1
        %s231 = smul.addr %s230, 4
        %s232 = scalar_lea.vmem [#allocation2], %s231
        %p233 = pneg %p47
        %p234 = pneg %p44
        %p235 = pneg %p68
        %p236 = pneg %p65
        %p237 = pneg %p89
        %p238 = pneg %p86
        %p239 = pneg %p115
        %p240 = pneg %p112
        %s241 = sand.u32 %s102, 1
        %s242 = scalar_lea.sflag [#allocation4], %s241
        %s243 = sand.u32 %s102, 1
        %s244 = smul.addr %s243, 4
        %s245 = scalar_lea.vmem [#allocation8], %s244
        %p246 = pneg %p141
        %p247 = pneg %p138
        %s248 = sand.u32 %s128, 1
        %s249 = scalar_lea.sflag [#allocation10], %s248
        %s250 = sand.u32 %s128, 1
        %s251 = smul.addr %s250, 4
        %s252 = scalar_lea.vmem [#allocation9], %s251
        %v254 = vld [vmem:[%s215] sm:$0xf]
        %v255 = vld [vmem:[#allocation5] sm:$0xf]
        %v256 = vld [vmem:[#allocation5 + $0x4] sm:$0xf]
        %v257 = vld [vmem:[#allocation5 + $0x8] sm:$0xf]
        %v258 = vld [vmem:[#allocation5 + $0xc] sm:$0xf]
        %v263 = vunpack.c.l.b16 %v255
        %v264 = vunpack.c.l.b16 %v256
        %v265 = vunpack.c.l.b16 %v257
        %v266 = vunpack.c.l.b16 %v258
        %v267 = vpack.c.b16 %v264, %v263
        %v268 = vpack.c.b16 %v266, %v265
        %vm271 = vcmask 261120
        %v273 = vsel %vm271, %v254, 0
        %275 = vmatprep.subr.bf16.mxu0 0
        %276 = vmatpush1.bf16.msra.mxu0 %v267
        %277 = vmatprep.subr.bf16.mxu0 0
        %278 = vmatpush1.bf16.msra.mxu0 %v268
        %279 = vmatprep.subr.bf16.mxu0 0
        %280 = vmatpush1.bf16.msra.mxu0 0
        %281 = vmatprep.subr.bf16.mxu0 0
        %282 = vmatpush1.bf16.msra.mxu0 0
        %283 = vmatprep.subr.bf16.mxu0 0
        %284 = vmatpush1.bf16.msra.mxu0 0
        %285 = vmatprep.subr.bf16.mxu0 0
        %286 = vmatpush1.bf16.msra.mxu0 0
        %287 = vmatprep.subr.bf16.mxu0 0
        %288 = vmatpush1.bf16.msra.mxu0 0
        %289 = vmatprep.subr.bf16.mxu0 0
        %290 = vmatpush1.bf16.msra.mxu0 0
        %291 = vmatprep.subr.bf16.mxu0 0
        %292 = vmatpush1.bf16.msra.mxu0 0
        %293 = vmatprep.subr.bf16.mxu0 0
        %294 = vmatpush1.bf16.msra.mxu0 0
        %295 = vmatprep.subr.bf16.mxu0 0
        %296 = vmatpush1.bf16.msra.mxu0 0
        %297 = vmatprep.subr.bf16.mxu0 0
        %298 = vmatpush1.bf16.msra.mxu0 0
        %299 = vmatprep.subr.bf16.mxu0 0
        %300 = vmatpush1.bf16.msra.mxu0 0
        %301 = vmatprep.subr.bf16.mxu0 0
        %302 = vmatpush1.bf16.msra.mxu0 0
        %303 = vmatprep.subr.bf16.mxu0 0
        %304 = vmatpush1.bf16.msra.mxu0 0
        %305 = vmatprep.subr.bf16.mxu0 0
        %306 = vmatpush1.bf16.msra.mxu0 0
        %307 = vmatprep.mubr.bf16.mxu0 0
        %308 = vmatmul.mubr.bf16.gmra.mrb[0].mxu0 %v273
        %v309 = vpop.f32.mrb[0].mxu0
        %v310 = vadd.f32 0.0, %v309
        %v311 = vpop.f32.mrb[0].mxu0
        %v312 = vpop.f32.mrb[0].mxu0
        %v313 = vpop.f32.mrb[0].mxu0
        %314 = vdwg.mxu0
        %v315 = vpack.c.bf16 %v310, %v310
        %vm316 = vcmask 257024
        %317 = vst.msk [vmem:[%s245] sm:$0xf] %vm316, %v315
        %v318 = vld [vmem:[#allocation7] sm:$0xf]
        %v319 = vld [vmem:[#allocation7 + $0x4] sm:$0xf]
        %v320 = vld [vmem:[#allocation7 + $0x8] sm:$0xf]
        %v321 = vld [vmem:[#allocation7 + $0xc] sm:$0xf]
        %v326 = vunpack.c.l.b16 %v318
        %v327 = vunpack.c.l.b16 %v319
        %v328 = vunpack.c.l.b16 %v320
        %v329 = vunpack.c.l.b16 %v321
        %v330 = vpack.c.b16 %v327, %v326
        %v331 = vpack.c.b16 %v329, %v328
        %334 = vmatprep.subr.bf16.mxu0 0
        %335 = vmatpush1.bf16.msra.mxu0 %v330
        %336 = vmatprep.subr.bf16.mxu0 0
        %337 = vmatpush1.bf16.msra.mxu0 %v331
        %338 = vmatprep.subr.bf16.mxu0 0
        %339 = vmatpush1.bf16.msra.mxu0 0
        %340 = vmatprep.subr.bf16.mxu0 0
        %341 = vmatpush1.bf16.msra.mxu0 0
        %342 = vmatprep.subr.bf16.mxu0 0
        %343 = vmatpush1.bf16.msra.mxu0 0
        %344 = vmatprep.subr.bf16.mxu0 0
        %345 = vmatpush1.bf16.msra.mxu0 0
        %346 = vmatprep.subr.bf16.mxu0 0
        %347 = vmatpush1.bf16.msra.mxu0 0
        %348 = vmatprep.subr.bf16.mxu0 0
        %349 = vmatpush1.bf16.msra.mxu0 0
        %350 = vmatprep.subr.bf16.mxu0 0
        %351 = vmatpush1.bf16.msra.mxu0 0
        %352 = vmatprep.subr.bf16.mxu0 0
        %353 = vmatpush1.bf16.msra.mxu0 0
        %354 = vmatprep.subr.bf16.mxu0 0
        %355 = vmatpush1.bf16.msra.mxu0 0
        %356 = vmatprep.subr.bf16.mxu0 0
        %357 = vmatpush1.bf16.msra.mxu0 0
        %358 = vmatprep.subr.bf16.mxu0 0
        %359 = vmatpush1.bf16.msra.mxu0 0
        %360 = vmatprep.subr.bf16.mxu0 0
        %361 = vmatpush1.bf16.msra.mxu0 0
        %362 = vmatprep.subr.bf16.mxu0 0
        %363 = vmatpush1.bf16.msra.mxu0 0
        %364 = vmatprep.subr.bf16.mxu0 0
        %365 = vmatpush1.bf16.msra.mxu0 0
        %366 = vmatprep.mubr.bf16.mxu0 0
        %367 = vmatmul.mubr.bf16.gmra.mrb[0].mxu0 %v273
        %v368 = vpop.f32.mrb[0].mxu0
        %v369 = vadd.f32 0.0, %v368
        %v370 = vpop.f32.mrb[0].mxu0
        %v371 = vpop.f32.mrb[0].mxu0
        %v372 = vpop.f32.mrb[0].mxu0
        %373 = vdwg.mxu0
        %v374 = vpack.c.bf16 %v369, %v369
        %375 = vst.msk [vmem:[%s252] sm:$0xf] %vm316, %v374
        %s376 = sand.u32 %s102, 1
        %s377 = scalar_lea.sflag [#allocation4], %s376
        %s378 = sand.u32 %s102, 1
        %s379 = smul.addr %s378, 4
        %s380 = scalar_lea.vmem [#allocation8], %s379
        %s381 = sand.u32 %s128, 1
        %s382 = scalar_lea.sflag [#allocation10], %s381
        %s383 = sand.u32 %s128, 1
        %s384 = smul.addr %s383, 4
        %s385 = scalar_lea.vmem [#allocation9], %s384
        // Predicated region
        $region45: #{transformer_block_forward.12} parent=31 // pred_check
          %p386 = pneg %p112
        $region46: #{transformer_block_forward.12} parent=31 // pred_check_branch
          %388 = sbr.rel (%p386) target = $region48
        $region47: #{transformer_block_forward.12} parent=31 // pred_region
          %s390 = ssub.s32 64, 64
          %391 = vsyncadd %s377, %s390
          %s392 = smul.addr %s26, 64
          %s393 = scalar_lea.hbm %s3, %s392
          %s395 = sshll.u32 %s380, 4
          %s396 = int_to_ptr.vmem [resolvable:$true] %s395
          %398 = dma.vmem_to_hbm [thread:$0]  %s396, 64, %s393, %s377
        $region48: #{transformer_block_forward.12} parent=31 // pred_fallthru
          _
        // Predicated region
        $region49: #{transformer_block_forward.12} parent=31 // pred_check
          %p399 = pneg %p138
        $region50: #{transformer_block_forward.12} parent=31 // pred_check_branch
          %401 = sbr.rel (%p399) target = $region52
        $region51: #{transformer_block_forward.12} parent=31 // pred_region
          %s403 = ssub.s32 64, 64
          %404 = vsyncadd %s382, %s403
          %s405 = smul.addr %s26, 64
          %s406 = scalar_lea.hbm %s4, %s405
          %s408 = sshll.u32 %s385, 4
          %s409 = int_to_ptr.vmem [resolvable:$true] %s408
          %411 = dma.vmem_to_hbm [thread:$0]  %s409, 64, %s406, %s382
        $region52: #{transformer_block_forward.12} parent=31 // pred_fallthru
          _
      $region32: #{transformer_block_forward.12} parent=5 // pred_fallthru
        _
      %p412 = scmp.le.s32.totalorder 2, %s21
      // Predicated region
      $region53: #{transformer_block_forward.12} parent=5 // pred_check
        %p413 = pneg %p412
      $region54: #{transformer_block_forward.12} parent=5 // pred_check_branch
        %415 = sbr.rel (%p413) target = $region56
      $region55: #{transformer_block_forward.12} parent=5 // pred_region
        %s416 = ssub.s32 %s21, 2
        // Predicated region
        $region57: #{transformer_block_forward.12} parent=55 // pred_check
          %p417 = pneg %p118
        $region58: #{transformer_block_forward.12} parent=55 // pred_check_branch
          %419 = sbr.rel (%p417) target = $region60
        $region59: #{transformer_block_forward.12} parent=55 // pred_region
          %s420 = sand.u32 %s103, 1
          %s421 = scalar_lea.sflag [#allocation4], %s420
          %s422 = sand.u32 %s103, 1
          %s423 = smul.addr %s422, 4
          %s424 = scalar_lea.vmem [#allocation8], %s423
          %425 = dma.done %s421, 64
        $region60: #{transformer_block_forward.12} parent=55 // pred_fallthru
          _
        // Predicated region
        $region61: #{transformer_block_forward.12} parent=55 // pred_check
          %p426 = pneg %p144
        $region62: #{transformer_block_forward.12} parent=55 // pred_check_branch
          %428 = sbr.rel (%p426) target = $region64
        $region63: #{transformer_block_forward.12} parent=55 // pred_region
          %s429 = sand.u32 %s129, 1
          %s430 = scalar_lea.sflag [#allocation10], %s429
          %s431 = sand.u32 %s129, 1
          %s432 = smul.addr %s431, 4
          %s433 = scalar_lea.vmem [#allocation9], %s432
          %434 = dma.done %s430, 64
        $region64: #{transformer_block_forward.12} parent=55 // pred_fallthru
          _
      $region56: #{transformer_block_forward.12} parent=5 // pred_fallthru
        _
    $region6: #{transformer_block_forward.12} parent=1 // loop_footer
      %s25 = sadd.s32 1, %s21
    $region7: #{transformer_block_forward.12} parent=1 // loop_footer_branch
      %20 = sbr.rel target = $region3
    $region8: #{transformer_block_forward.12} parent=1 // loop_exit
      _
    %435 = vsyncpa [#allocation3], 1
    %s436 = scalar_lea.sflag [#allocation3], 1
    %437 = vsyncpa %s436, 1
    %438 = vsyncpa [#allocation6], 1
    %439 = vsyncpa [#allocation4], 1
    %s440 = scalar_lea.sflag [#allocation4], 1
    %441 = vsyncpa %s440, 1
    %442 = vsyncpa [#allocation10], 1
    %s443 = scalar_lea.sflag [#allocation10], 1
    %444 = vsyncpa %s443, 1

// kernel: transformer_block_forward.10
$region0: #{transformer_block_forward.10}
  #allocation0 [shape = 'u32[]', space=smem, size = 0x4, offset = 0x4, fixed_abs, tag = 'smem constant byte address 0x4 - core index']
  #allocation1 [shape = 'u32[144,128]{1,0:T(1,128)}', space=vmem, size = 0x12000, scoped, tag = 'internal scratch']
  %s0 = inlined_call_operand.hbm [shape: bf16[16,32], index: 0, kind: input, shape index: {}]
  %s1 = inlined_call_operand.hbm [shape: f32[1,32], index: 1, kind: input, shape index: {}]
  %s2 = inlined_call_operand.hbm [shape: bf16[32,32], index: 2, kind: input, shape index: {}]
  %s3 = inlined_call_operand.hbm [shape: bf16[32,32], index: 3, kind: input, shape index: {}]
  %s4 = inlined_call_operand.hbm [shape: bf16[32,32], index: 4, kind: input, shape index: {}]
  %s5 = inlined_call_operand.hbm [shape: bf16[16,32], index: 5, kind: output, shape index: {0}]
  %s6 = inlined_call_operand.hbm [shape: bf16[16,32], index: 6, kind: output, shape index: {1}]
  %s7 = inlined_call_operand.hbm [shape: bf16[16,32], index: 7, kind: output, shape index: {2}]
  %s8 = inlined_call_operand.hbm [shape: bf16[16,32], index: 8, kind: output, shape index: {3}]
  %9 = xla_tuple %s5, %s6, %s7, %s8
  %s10 = sld [smem:[#allocation0]]
  $region97: #{transformer_block_forward.10} parent=0
    _
  %s12 = ssub.s32 1, %s10
  %s13 = scalar_select 0, %s12, %s10
  $region1: #{transformer_block_forward.10} parent=0
    #allocation2 [shape = 'u8[4096]{0}', space=vmem, size = 0x1000, scoped, tag = 'input window, operand 0']
    #allocation3 [shape = 's32[2]{0}', space=sflag, size = 0x8, scoped, tag = 'scoped memory for transformer_block_forward.10']
    #allocation4 [shape = 's32[2]{0}', space=sflag, size = 0x8, scoped, tag = 'scoped memory for transformer_block_forward.10']
    #allocation5 [shape = 'u8[512]{0}', space=vmem, size = 0x400, scoped, tag = 'input window, operand 1, single buffered']
    #allocation6 [shape = 's32[1]{0}', space=sflag, size = 0x4, scoped, tag = 'scoped memory for transformer_block_forward.10']
    #allocation7 [shape = 'u8[8192]{0}', space=vmem, size = 0x2000, scoped, tag = 'input window, operand 2, single buffered']
    #allocation8 [shape = 'u8[8192]{0}', space=vmem, size = 0x2000, scoped, tag = 'input window, operand 3, single buffered']
    #allocation9 [shape = 's32[1]{0}', space=sflag, size = 0x4, scoped, tag = 'scoped memory for transformer_block_forward.10']
    #allocation10 [shape = 'u8[8192]{0}', space=vmem, size = 0x2000, scoped, tag = 'input window, operand 4, single buffered']
    #allocation11 [shape = 'u8[4096]{0}', space=vmem, size = 0x1000, scoped, tag = 'output window, operand 0']
    #allocation12 [shape = 'u8[4096]{0}', space=vmem, size = 0x1000, scoped, tag = 'output window, operand 1']
    #allocation13 [shape = 's32[2]{0}', space=sflag, size = 0x8, scoped, tag = 'scoped memory for transformer_block_forward.10']
    #allocation14 [shape = 'u8[4096]{0}', space=vmem, size = 0x1000, scoped, tag = 'output window, operand 2']
    #allocation15 [shape = 'u8[4096]{0}', space=vmem, size = 0x1000, scoped, tag = 'output window, operand 3']
    #allocation16 [shape = 's32[2]{0}', space=sflag, size = 0x8, scoped, tag = 'scoped memory for transformer_block_forward.10']
    %14 = vsyncpa [#allocation3], 0
    %s15 = scalar_lea.sflag [#allocation3], 1
    %16 = vsyncpa %s15, 0
    %17 = vsyncpa [#allocation6], 0
    %18 = vsyncpa [#allocation9], 0
    %19 = vsyncpa [#allocation4], 0
    %s20 = scalar_lea.sflag [#allocation4], 1
    %21 = vsyncpa %s20, 0
    %22 = vsyncpa [#allocation13], 0
    %s23 = scalar_lea.sflag [#allocation13], 1
    %24 = vsyncpa %s23, 0
    %25 = vsyncpa [#allocation16], 0
    %s26 = scalar_lea.sflag [#allocation16], 1
    %27 = vsyncpa %s26, 0
    loop: start=0, step=1, limit=4
    $region2: #{transformer_block_forward.10} parent=1 // loop_pre_header
      _
    $region3: #{transformer_block_forward.10} parent=1 // loop_header
      %s29 = sphi 0, %s33
      %p30 = scmp.ge.s32.totalorder %s29, 4
      %s39 = sphi 0, %s41
      %s42 = sphi 0, %s39
      %s43 = sphi 0, %s42
      %s59 = sphi 0, %s43
      %s63 = sphi 0, %s63
      %s65 = sphi 0, %s63
      %s66 = sphi 0, %s65
      %s80 = sphi 0, %s66
      %s84 = sphi 0, %s84
      %s86 = sphi 0, %s84
      %s87 = sphi 0, %s86
      %s101 = sphi 0, %s87
      %s105 = sphi 0, %s105
      %s107 = sphi 0, %s105
      %s108 = sphi 0, %s107
      %s122 = sphi 0, %s108
      %s126 = sphi 0, %s126
      %s128 = sphi 0, %s126
      %s129 = sphi 0, %s128
      %s143 = sphi 0, %s129
      %s149 = sphi 0, %s151
      %s152 = sphi 0, %s149
      %s153 = sphi 0, %s152
      %s169 = sphi 0, %s153
      %s175 = sphi 0, %s177
      %s178 = sphi 0, %s175
      %s179 = sphi 0, %s178
      %s195 = sphi 0, %s179
      %s201 = sphi 0, %s203
      %s204 = sphi 0, %s201
      %s205 = sphi 0, %s204
      %s221 = sphi 0, %s205
      %s227 = sphi 0, %s229
      %s230 = sphi 0, %s227
      %s231 = sphi 0, %s230
      %s247 = sphi 0, %s231
    $region4: #{transformer_block_forward.10} parent=1 // loop_header_branch
      %32 = sbr.rel (%p30) target = $region8
    $region5: #{transformer_block_forward.10} parent=1 // loop_body
      %s34 = ssub.s32 %s29, 1
      %s35 = ssub.s32 %s29, 2
      %s36 = sadd.s32 %s29, 1
      %s37 = ssub.s32 %s29, %s36
      %p38 = scmp.eq.s32.totalorder %s37, 0
      %s40 = sadd.s32 %s39, 1
      %s41 = scalar_select %p38, %s39, %s40
      %p44 = pneg %p38
      %p45 = scmp.eq.s32.totalorder %s29, 1
      %p46 = por %p44, %p45
      %p47 = scmp.ne.s32.totalorder %s39, %s42
      %p48 = scmp.eq.s32.totalorder %s29, 0
      %p49 = por %p47, %p48
      %p50 = scmp.ne.s32.totalorder %s39, %s42
      %p51 = scmp.eq.s32.totalorder %s34, 1
      %p52 = por %p50, %p51
      %p53 = scmp.ne.s32.totalorder %s42, %s43
      %p54 = scmp.eq.s32.totalorder %s34, 0
      %p55 = por %p53, %p54
      %p56 = scmp.ne.s32.totalorder %s42, %s43
      %p57 = scmp.eq.s32.totalorder %s35, 1
      %p58 = por %p56, %p57
      %p60 = scmp.ne.s32.totalorder %s43, %s59
      %p61 = scmp.eq.s32.totalorder %s35, 0
      %p62 = por %p60, %p61
      %s64 = sadd.s32 %s63, 1
      %p67 = scmp.eq.s32.totalorder %s29, 1
      %p68 = scmp.ne.s32.totalorder %s63, %s65
      %p69 = scmp.eq.s32.totalorder %s29, 0
      %p70 = por %p68, %p69
      %p71 = scmp.ne.s32.totalorder %s63, %s65
      %p72 = scmp.eq.s32.totalorder %s34, 1
      %p73 = por %p71, %p72
      %p74 = scmp.ne.s32.totalorder %s65, %s66
      %p75 = scmp.eq.s32.totalorder %s34, 0
      %p76 = por %p74, %p75
      %p77 = scmp.ne.s32.totalorder %s65, %s66
      %p78 = scmp.eq.s32.totalorder %s35, 1
      %p79 = por %p77, %p78
      %p81 = scmp.ne.s32.totalorder %s66, %s80
      %p82 = scmp.eq.s32.totalorder %s35, 0
      %p83 = por %p81, %p82
      %s85 = sadd.s32 %s84, 1
      %p88 = scmp.eq.s32.totalorder %s29, 1
      %p89 = scmp.ne.s32.totalorder %s84, %s86
      %p90 = scmp.eq.s32.totalorder %s29, 0
      %p91 = por %p89, %p90
      %p92 = scmp.ne.s32.totalorder %s84, %s86
      %p93 = scmp.eq.s32.totalorder %s34, 1
      %p94 = por %p92, %p93
      %p95 = scmp.ne.s32.totalorder %s86, %s87
      %p96 = scmp.eq.s32.totalorder %s34, 0
      %p97 = por %p95, %p96
      %p98 = scmp.ne.s32.totalorder %s86, %s87
      %p99 = scmp.eq.s32.totalorder %s35, 1
      %p100 = por %p98, %p99
      %p102 = scmp.ne.s32.totalorder %s87, %s101
      %p103 = scmp.eq.s32.totalorder %s35, 0
      %p104 = por %p102, %p103
      %s106 = sadd.s32 %s105, 1
      %p109 = scmp.eq.s32.totalorder %s29, 1
      %p110 = scmp.ne.s32.totalorder %s105, %s107
      %p111 = scmp.eq.s32.totalorder %s29, 0
      %p112 = por %p110, %p111
      %p113 = scmp.ne.s32.totalorder %s105, %s107
      %p114 = scmp.eq.s32.totalorder %s34, 1
      %p115 = por %p113, %p114
      %p116 = scmp.ne.s32.totalorder %s107, %s108
      %p117 = scmp.eq.s32.totalorder %s34, 0
      %p118 = por %p116, %p117
      %p119 = scmp.ne.s32.totalorder %s107, %s108
      %p120 = scmp.eq.s32.totalorder %s35, 1
      %p121 = por %p119, %p120
      %p123 = scmp.ne.s32.totalorder %s108, %s122
      %p124 = scmp.eq.s32.totalorder %s35, 0
      %p125 = por %p123, %p124
      %s127 = sadd.s32 %s126, 1
      %p130 = scmp.eq.s32.totalorder %s29, 1
      %p131 = scmp.ne.s32.totalorder %s126, %s128
      %p132 = scmp.eq.s32.totalorder %s29, 0
      %p133 = por %p131, %p132
      %p134 = scmp.ne.s32.totalorder %s126, %s128
      %p135 = scmp.eq.s32.totalorder %s34, 1
      %p136 = por %p134, %p135
      %p137 = scmp.ne.s32.totalorder %s128, %s129
      %p138 = scmp.eq.s32.totalorder %s34, 0
      %p139 = por %p137, %p138
      %p140 = scmp.ne.s32.totalorder %s128, %s129
      %p141 = scmp.eq.s32.totalorder %s35, 1
      %p142 = por %p140, %p141
      %p144 = scmp.ne.s32.totalorder %s129, %s143
      %p145 = scmp.eq.s32.totalorder %s35, 0
      %p146 = por %p144, %p145
      %s147 = ssub.s32 %s29, %s36
      %p148 = scmp.eq.s32.totalorder %s147, 0
      %s150 = sadd.s32 %s149, 1
      %s151 = scalar_select %p148, %s149, %s150
      %p154 = pneg %p148
      %p155 = scmp.eq.s32.totalorder %s29, 1
      %p156 = por %p154, %p155
      %p157 = scmp.ne.s32.totalorder %s149, %s152
      %p158 = scmp.eq.s32.totalorder %s29, 0
      %p159 = por %p157, %p158
      %p160 = scmp.ne.s32.totalorder %s149, %s152
      %p161 = scmp.eq.s32.totalorder %s34, 1
      %p162 = por %p160, %p161
      %p163 = scmp.ne.s32.totalorder %s152, %s153
      %p164 = scmp.eq.s32.totalorder %s34, 0
      %p165 = por %p163, %p164
      %p166 = scmp.ne.s32.totalorder %s152, %s153
      %p167 = scmp.eq.s32.totalorder %s35, 1
      %p168 = por %p166, %p167
      %p170 = scmp.ne.s32.totalorder %s153, %s169
      %p171 = scmp.eq.s32.totalorder %s35, 0
      %p172 = por %p170, %p171
      %s173 = ssub.s32 %s29, %s36
      %p174 = scmp.eq.s32.totalorder %s173, 0
      %s176 = sadd.s32 %s175, 1
      %s177 = scalar_select %p174, %s175, %s176
      %p180 = pneg %p174
      %p181 = scmp.eq.s32.totalorder %s29, 1
      %p182 = por %p180, %p181
      %p183 = scmp.ne.s32.totalorder %s175, %s178
      %p184 = scmp.eq.s32.totalorder %s29, 0
      %p185 = por %p183, %p184
      %p186 = scmp.ne.s32.totalorder %s175, %s178
      %p187 = scmp.eq.s32.totalorder %s34, 1
      %p188 = por %p186, %p187
      %p189 = scmp.ne.s32.totalorder %s178, %s179
      %p190 = scmp.eq.s32.totalorder %s34, 0
      %p191 = por %p189, %p190
      %p192 = scmp.ne.s32.totalorder %s178, %s179
      %p193 = scmp.eq.s32.totalorder %s35, 1
      %p194 = por %p192, %p193
      %p196 = scmp.ne.s32.totalorder %s179, %s195
      %p197 = scmp.eq.s32.totalorder %s35, 0
      %p198 = por %p196, %p197
      %s199 = ssub.s32 %s29, %s36
      %p200 = scmp.eq.s32.totalorder %s199, 0
      %s202 = sadd.s32 %s201, 1
      %s203 = scalar_select %p200, %s201, %s202
      %p206 = pneg %p200
      %p207 = scmp.eq.s32.totalorder %s29, 1
      %p208 = por %p206, %p207
      %p209 = scmp.ne.s32.totalorder %s201, %s204
      %p210 = scmp.eq.s32.totalorder %s29, 0
      %p211 = por %p209, %p210
      %p212 = scmp.ne.s32.totalorder %s201, %s204
      %p213 = scmp.eq.s32.totalorder %s34, 1
      %p214 = por %p212, %p213
      %p215 = scmp.ne.s32.totalorder %s204, %s205
      %p216 = scmp.eq.s32.totalorder %s34, 0
      %p217 = por %p215, %p216
      %p218 = scmp.ne.s32.totalorder %s204, %s205
      %p219 = scmp.eq.s32.totalorder %s35, 1
      %p220 = por %p218, %p219
      %p222 = scmp.ne.s32.totalorder %s205, %s221
      %p223 = scmp.eq.s32.totalorder %s35, 0
      %p224 = por %p222, %p223
      %s225 = ssub.s32 %s29, %s36
      %p226 = scmp.eq.s32.totalorder %s225, 0
      %s228 = sadd.s32 %s227, 1
      %s229 = scalar_select %p226, %s227, %s228
      %p232 = pneg %p226
      %p233 = scmp.eq.s32.totalorder %s29, 1
      %p234 = por %p232, %p233
      %p235 = scmp.ne.s32.totalorder %s227, %s230
      %p236 = scmp.eq.s32.totalorder %s29, 0
      %p237 = por %p235, %p236
      %p238 = scmp.ne.s32.totalorder %s227, %s230
      %p239 = scmp.eq.s32.totalorder %s34, 1
      %p240 = por %p238, %p239
      %p241 = scmp.ne.s32.totalorder %s230, %s231
      %p242 = scmp.eq.s32.totalorder %s34, 0
      %p243 = por %p241, %p242
      %p244 = scmp.ne.s32.totalorder %s230, %s231
      %p245 = scmp.eq.s32.totalorder %s35, 1
      %p246 = por %p244, %p245
      %p248 = scmp.ne.s32.totalorder %s231, %s247
      %p249 = scmp.eq.s32.totalorder %s35, 0
      %p250 = por %p248, %p249
      %p251 = scmp.le.s32.totalorder 1, %s29
      %p252 = scmp.lt.s32.totalorder %s29, 3
      %p253 = pnand %p251, %p252
      %p254 = pneg %p253
      // Predicated region
      $region9: #{transformer_block_forward.10} parent=5 // pred_check
        _
      $region10: #{transformer_block_forward.10} parent=5 // pred_check_branch
        %256 = sbr.rel (%p253) target = $region12
      $region11: #{transformer_block_forward.10} parent=5 // pred_region
        %s257 = ssub.s32 %s29, 1
        // Predicated region
        $region13: #{transformer_block_forward.10} parent=11 // pred_check
          %p258 = pneg %p76
        $region14: #{transformer_block_forward.10} parent=11 // pred_check_branch
          %260 = sbr.rel (%p258) target = $region16
        $region15: #{transformer_block_forward.10} parent=11 // pred_region
          %s262 = ssub.s32 16, 16
          %263 = vsyncadd [#allocation6], %s262
          %s265 = sshll.u32 [#allocation5], 4
          %s266 = int_to_ptr.vmem [resolvable:$true] %s265
          %268 = dma.hbm_to_vmem [thread:$0]  %s1, 16, %s266, [#allocation6]
        $region16: #{transformer_block_forward.10} parent=11 // pred_fallthru
          _
        // Predicated region
        $region17: #{transformer_block_forward.10} parent=11 // pred_check
          %p269 = pneg %p97
        $region18: #{transformer_block_forward.10} parent=11 // pred_check_branch
          %271 = sbr.rel (%p269) target = $region20
        $region19: #{transformer_block_forward.10} parent=11 // pred_region
          %s273 = ssub.s32 256, 256
          %274 = vsyncadd [#allocation6], %s273
          %s275 = sshll.u32 [#allocation7], 4
          %s276 = int_to_ptr.vmem [resolvable:$true] %s275
          %281 = dma.hbm_to_vmem [thread:$0]  %s2, 256, %s276, [#allocation6], 64, 64, 4
        $region20: #{transformer_block_forward.10} parent=11 // pred_fallthru
          _
        // Predicated region
        $region21: #{transformer_block_forward.10} parent=11 // pred_check
          %p282 = pneg %p118
        $region22: #{transformer_block_forward.10} parent=11 // pred_check_branch
          %284 = sbr.rel (%p282) target = $region24
        $region23: #{transformer_block_forward.10} parent=11 // pred_region
          %s286 = ssub.s32 256, 256
          %287 = vsyncadd [#allocation9], %s286
          %s288 = sshll.u32 [#allocation8], 4
          %s289 = int_to_ptr.vmem [resolvable:$true] %s288
          %294 = dma.hbm_to_vmem [thread:$0]  %s3, 256, %s289, [#allocation9], 64, 64, 4
        $region24: #{transformer_block_forward.10} parent=11 // pred_fallthru
          _
        // Predicated region
        $region25: #{transformer_block_forward.10} parent=11 // pred_check
          %p295 = pneg %p139
        $region26: #{transformer_block_forward.10} parent=11 // pred_check_branch
          %297 = sbr.rel (%p295) target = $region28
        $region27: #{transformer_block_forward.10} parent=11 // pred_region
          %s299 = ssub.s32 256, 256
          %300 = vsyncadd [#allocation9], %s299
          %s301 = sshll.u32 [#allocation10], 4
          %s302 = int_to_ptr.vmem [resolvable:$true] %s301
          %307 = dma.hbm_to_vmem [thread:$0]  %s4, 256, %s302, [#allocation9], 64, 64, 4
        $region28: #{transformer_block_forward.10} parent=11 // pred_fallthru
          _
      $region12: #{transformer_block_forward.10} parent=5 // pred_fallthru
        _
      %p308 = scmp.lt.s32.totalorder %s29, 2
      // Predicated region
      $region29: #{transformer_block_forward.10} parent=5 // pred_check
        %p309 = pneg %p308
      $region30: #{transformer_block_forward.10} parent=5 // pred_check_branch
        %311 = sbr.rel (%p309) target = $region32
      $region31: #{transformer_block_forward.10} parent=5 // pred_region
        // Predicated region
        $region33: #{transformer_block_forward.10} parent=31 // pred_check
          %p312 = pneg %p49
        $region34: #{transformer_block_forward.10} parent=31 // pred_check_branch
          %314 = sbr.rel (%p312) target = $region36
        $region35: #{transformer_block_forward.10} parent=31 // pred_region
          %s315 = sand.u32 %s39, 1
          %s316 = scalar_lea.sflag [#allocation3], %s315
          %s317 = sand.u32 %s39, 1
          %s318 = smul.addr %s317, 4
          %s319 = scalar_lea.vmem [#allocation2], %s318
          %s321 = ssub.s32 64, 64
          %322 = vsyncadd %s316, %s321
          %s323 = smul.addr %s29, 64
          %s324 = scalar_lea.hbm %s0, %s323
          %s326 = sshll.u32 %s319, 4
          %s327 = int_to_ptr.vmem [resolvable:$true] %s326
          %329 = dma.hbm_to_vmem [thread:$0]  %s324, 64, %s327, %s316
        $region36: #{transformer_block_forward.10} parent=31 // pred_fallthru
          _
      $region32: #{transformer_block_forward.10} parent=5 // pred_fallthru
        _
      %p330 = scmp.le.s32.totalorder 1, %s29
      %p331 = scmp.lt.s32.totalorder %s29, 3
      %p332 = pnand %p330, %p331
      %p333 = pneg %p332
      // Predicated region
      $region37: #{transformer_block_forward.10} parent=5 // pred_check
        _
      $region38: #{transformer_block_forward.10} parent=5 // pred_check_branch
        %335 = sbr.rel (%p332) target = $region40
      $region39: #{transformer_block_forward.10} parent=5 // pred_region
        %s336 = ssub.s32 %s29, 1
        %s337 = sand.u32 %s42, 1
        %s338 = scalar_lea.sflag [#allocation3], %s337
        %s339 = sand.u32 %s42, 1
        %s340 = smul.addr %s339, 4
        %s341 = scalar_lea.vmem [#allocation2], %s340
        // Predicated region
        $region41: #{transformer_block_forward.10} parent=39 // pred_check
          %p342 = pneg %p55
        $region42: #{transformer_block_forward.10} parent=39 // pred_check_branch
          %344 = sbr.rel (%p342) target = $region44
        $region43: #{transformer_block_forward.10} parent=39 // pred_region
          %345 = dma.done %s338, 64
        $region44: #{transformer_block_forward.10} parent=39 // pred_fallthru
          _
        // Predicated region
        $region45: #{transformer_block_forward.10} parent=39 // pred_check
          %p346 = pneg %p76
        $region46: #{transformer_block_forward.10} parent=39 // pred_check_branch
          %348 = sbr.rel (%p346) target = $region48
        $region47: #{transformer_block_forward.10} parent=39 // pred_region
          %349 = dma.done [#allocation6], 16
        $region48: #{transformer_block_forward.10} parent=39 // pred_fallthru
          _
        // Predicated region
        $region49: #{transformer_block_forward.10} parent=39 // pred_check
          %p350 = pneg %p97
        $region50: #{transformer_block_forward.10} parent=39 // pred_check_branch
          %352 = sbr.rel (%p350) target = $region52
        $region51: #{transformer_block_forward.10} parent=39 // pred_region
          %353 = dma.done [#allocation6], 256
        $region52: #{transformer_block_forward.10} parent=39 // pred_fallthru
          _
        // Predicated region
        $region53: #{transformer_block_forward.10} parent=39 // pred_check
          %p354 = pneg %p118
        $region54: #{transformer_block_forward.10} parent=39 // pred_check_branch
          %356 = sbr.rel (%p354) target = $region56
        $region55: #{transformer_block_forward.10} parent=39 // pred_region
          %357 = dma.done [#allocation9], 256
        $region56: #{transformer_block_forward.10} parent=39 // pred_fallthru
          _
        // Predicated region
        $region57: #{transformer_block_forward.10} parent=39 // pred_check
          %p358 = pneg %p139
        $region58: #{transformer_block_forward.10} parent=39 // pred_check_branch
          %360 = sbr.rel (%p358) target = $region60
        $region59: #{transformer_block_forward.10} parent=39 // pred_region
          %361 = dma.done [#allocation9], 256
        $region60: #{transformer_block_forward.10} parent=39 // pred_fallthru
          _
        %s362 = sand.u32 %s42, 1
        %s363 = scalar_lea.sflag [#allocation3], %s362
        %s364 = sand.u32 %s42, 1
        %s365 = smul.addr %s364, 4
        %s366 = scalar_lea.vmem [#allocation2], %s365
        %p367 = pneg %p55
        %p368 = pneg %p52
        %p369 = pneg %p76
        %p370 = pneg %p73
        %p371 = pneg %p97
        %p372 = pneg %p94
        %p373 = pneg %p118
        %p374 = pneg %p115
        %p375 = pneg %p139
        %p376 = pneg %p136
        %p377 = pneg %p165
        %p378 = pneg %p162
        %s379 = sand.u32 %s152, 1
        %s380 = scalar_lea.sflag [#allocation4], %s379
        %s381 = sand.u32 %s152, 1
        %s382 = smul.addr %s381, 4
        %s383 = scalar_lea.vmem [#allocation11], %s382
        %p384 = pneg %p191
        %p385 = pneg %p188
        %s386 = sand.u32 %s34, 1
        %s387 = scalar_lea.sflag [#allocation13], %s386
        %s388 = sand.u32 %s178, 1
        %s389 = smul.addr %s388, 4
        %s390 = scalar_lea.vmem [#allocation12], %s389
        %p391 = pneg %p217
        %p392 = pneg %p214
        %s393 = sand.u32 %s34, 1
        %s394 = scalar_lea.sflag [#allocation13], %s393
        %s395 = sand.u32 %s204, 1
        %s396 = smul.addr %s395, 4
        %s397 = scalar_lea.vmem [#allocation14], %s396
        %p398 = pneg %p243
        %p399 = pneg %p240
        %s400 = sand.u32 %s230, 1
        %s401 = scalar_lea.sflag [#allocation16], %s400
        %s402 = sand.u32 %s230, 1
        %s403 = smul.addr %s402, 4
        %s404 = scalar_lea.vmem [#allocation15], %s403
        %v406 = vld [vmem:[%s341] sm:$0xf]
        %v407 = vunpack.c.l.bf16 %v406
        %v408 = vld [vmem:[#allocation5] sm:$0x1]
        %vm409 = vcmask 261120
        %v410 = vsel %vm409, %v407, 0.0
        %411 = vadd.xlane.f32.xlu0 %v410
        %v412 = vpop.xlane.xlu0 %411
        %v413 = vrcp.pop 32.0
        %v414 = vmul.f32 %v412, %v413
        %v415 = vsub.f32 %v407, %v414
        %v416 = vmul.f32 %v415, %v415
        %v417 = vsel %vm409, %v416, 0.0
        %418 = vadd.xlane.f32.xlu0 %v417
        %v419 = vpop.xlane.xlu0 %418
        %v420 = vmul.f32 %v419, %v413
        %v421 = vadd.f32 %v420, 1e-05
        %v422 = vrsqrt.pop %v421
        %v423 = vmul.f32 %v415, %v422
        %v425 = vlaneseq
        %v426 = vshrl.u32 %v425, 7
        %v427 = vsub.s32 0, %v426
        %v428 = vrot.slane %v408, %v427
        %v430 = vmul.f32 %v423, %v428
        %v431 = vpack.c.bf16 %v430, %v430
        %vm432 = vcmask 257024
        %433 = vst.msk [vmem:[%s383] sm:$0xf] %vm432, %v431
        %v434 = vld [vmem:[#allocation7] sm:$0xf]
        %v435 = vld [vmem:[#allocation7 + $0x4] sm:$0xf]
        %v436 = vld [vmem:[#allocation7 + $0x8] sm:$0xf]
        %v437 = vld [vmem:[#allocation7 + $0xc] sm:$0xf]
        %v442 = vunpack.c.l.b16 %v434
        %v443 = vunpack.c.l.b16 %v435
        %v444 = vunpack.c.l.b16 %v436
        %v445 = vunpack.c.l.b16 %v437
        %v446 = vpack.c.b16 %v443, %v442
        %v447 = vpack.c.b16 %v445, %v444
        %v451 = vsel %vm409, %v431, 0
        %453 = vmatprep.subr.bf16.mxu0 0
        %454 = vmatpush1.bf16.msra.mxu0 %v446
        %455 = vmatprep.subr.bf16.mxu0 0
        %456 = vmatpush1.bf16.msra.mxu0 %v447
        %457 = vmatprep.subr.bf16.mxu0 0
        %458 = vmatpush1.bf16.msra.mxu0 0
        %459 = vmatprep.subr.bf16.mxu0 0
        %460 = vmatpush1.bf16.msra.mxu0 0
        %461 = vmatprep.subr.bf16.mxu0 0
        %462 = vmatpush1.bf16.msra.mxu0 0
        %463 = vmatprep.subr.bf16.mxu0 0
        %464 = vmatpush1.bf16.msra.mxu0 0
        %465 = vmatprep.subr.bf16.mxu0 0
        %466 = vmatpush1.bf16.msra.mxu0 0
        %467 = vmatprep.subr.bf16.mxu0 0
        %468 = vmatpush1.bf16.msra.mxu0 0
        %469 = vmatprep.subr.bf16.mxu0 0
        %470 = vmatpush1.bf16.msra.mxu0 0
        %471 = vmatprep.subr.bf16.mxu0 0
        %472 = vmatpush1.bf16.msra.mxu0 0
        %473 = vmatprep.subr.bf16.mxu0 0
        %474 = vmatpush1.bf16.msra.mxu0 0
        %475 = vmatprep.subr.bf16.mxu0 0
        %476 = vmatpush1.bf16.msra.mxu0 0
        %477 = vmatprep.subr.bf16.mxu0 0
        %478 = vmatpush1.bf16.msra.mxu0 0
        %479 = vmatprep.subr.bf16.mxu0 0
        %480 = vmatpush1.bf16.msra.mxu0 0
        %481 = vmatprep.subr.bf16.mxu0 0
        %482 = vmatpush1.bf16.msra.mxu0 0
        %483 = vmatprep.subr.bf16.mxu0 0
        %484 = vmatpush1.bf16.msra.mxu0 0
        %485 = vmatprep.mubr.bf16.mxu0 0
        %486 = vmatmul.mubr.bf16.gmra.mrb[0].mxu0 %v451
        %v487 = vpop.f32.mrb[0].mxu0
        %v488 = vadd.f32 0.0, %v487
        %v489 = vpop.f32.mrb[0].mxu0
        %v490 = vpop.f32.mrb[0].mxu0
        %v491 = vpop.f32.mrb[0].mxu0
        %492 = vdwg.mxu0
        %v493 = vpack.c.bf16 %v488, %v488
        %494 = vst.msk [vmem:[%s390] sm:$0xf] %vm432, %v493
        %v495 = vld [vmem:[#allocation8] sm:$0xf]
        %v496 = vld [vmem:[#allocation8 + $0x4] sm:$0xf]
        %v497 = vld [vmem:[#allocation8 + $0x8] sm:$0xf]
        %v498 = vld [vmem:[#allocation8 + $0xc] sm:$0xf]
        %v503 = vunpack.c.l.b16 %v495
        %v504 = vunpack.c.l.b16 %v496
        %v505 = vunpack.c.l.b16 %v497
        %v506 = vunpack.c.l.b16 %v498
        %v507 = vpack.c.b16 %v504, %v503
        %v508 = vpack.c.b16 %v506, %v505
        %511 = vmatprep.subr.bf16.mxu0 0
        %512 = vmatpush1.bf16.msra.mxu0 %v507
        %513 = vmatprep.subr.bf16.mxu0 0
        %514 = vmatpush1.bf16.msra.mxu0 %v508
        %515 = vmatprep.subr.bf16.mxu0 0
        %516 = vmatpush1.bf16.msra.mxu0 0
        %517 = vmatprep.subr.bf16.mxu0 0
        %518 = vmatpush1.bf16.msra.mxu0 0
        %519 = vmatprep.subr.bf16.mxu0 0
        %520 = vmatpush1.bf16.msra.mxu0 0
        %521 = vmatprep.subr.bf16.mxu0 0
        %522 = vmatpush1.bf16.msra.mxu0 0
        %523 = vmatprep.subr.bf16.mxu0 0
        %524 = vmatpush1.bf16.msra.mxu0 0
        %525 = vmatprep.subr.bf16.mxu0 0
        %526 = vmatpush1.bf16.msra.mxu0 0
        %527 = vmatprep.subr.bf16.mxu0 0
        %528 = vmatpush1.bf16.msra.mxu0 0
        %529 = vmatprep.subr.bf16.mxu0 0
        %530 = vmatpush1.bf16.msra.mxu0 0
        %531 = vmatprep.subr.bf16.mxu0 0
        %532 = vmatpush1.bf16.msra.mxu0 0
        %533 = vmatprep.subr.bf16.mxu0 0
        %534 = vmatpush1.bf16.msra.mxu0 0
        %535 = vmatprep.subr.bf16.mxu0 0
        %536 = vmatpush1.bf16.msra.mxu0 0
        %537 = vmatprep.subr.bf16.mxu0 0
        %538 = vmatpush1.bf16.msra.mxu0 0
        %539 = vmatprep.subr.bf16.mxu0 0
        %540 = vmatpush1.bf16.msra.mxu0 0
        %541 = vmatprep.subr.bf16.mxu0 0
        %542 = vmatpush1.bf16.msra.mxu0 0
        %543 = vmatprep.mubr.bf16.mxu0 0
        %544 = vmatmul.mubr.bf16.gmra.mrb[0].mxu0 %v451
        %v545 = vpop.f32.mrb[0].mxu0
        %v546 = vadd.f32 0.0, %v545
        %v547 = vpop.f32.mrb[0].mxu0
        %v548 = vpop.f32.mrb[0].mxu0
        %v549 = vpop.f32.mrb[0].mxu0
        %550 = vdwg.mxu0
        %v551 = vpack.c.bf16 %v546, %v546
        %552 = vst.msk [vmem:[%s397] sm:$0xf] %vm432, %v551
        %v553 = vld [vmem:[#allocation10] sm:$0xf]
        %v554 = vld [vmem:[#allocation10 + $0x4] sm:$0xf]
        %v555 = vld [vmem:[#allocation10 + $0x8] sm:$0xf]
        %v556 = vld [vmem:[#allocation10 + $0xc] sm:$0xf]
        %v561 = vunpack.c.l.b16 %v553
        %v562 = vunpack.c.l.b16 %v554
        %v563 = vunpack.c.l.b16 %v555
        %v564 = vunpack.c.l.b16 %v556
        %v565 = vpack.c.b16 %v562, %v561
        %v566 = vpack.c.b16 %v564, %v563
        %569 = vmatprep.subr.bf16.mxu0 0
        %570 = vmatpush1.bf16.msra.mxu0 %v565
        %571 = vmatprep.subr.bf16.mxu0 0
        %572 = vmatpush1.bf16.msra.mxu0 %v566
        %573 = vmatprep.subr.bf16.mxu0 0
        %574 = vmatpush1.bf16.msra.mxu0 0
        %575 = vmatprep.subr.bf16.mxu0 0
        %576 = vmatpush1.bf16.msra.mxu0 0
        %577 = vmatprep.subr.bf16.mxu0 0
        %578 = vmatpush1.bf16.msra.mxu0 0
        %579 = vmatprep.subr.bf16.mxu0 0
        %580 = vmatpush1.bf16.msra.mxu0 0
        %581 = vmatprep.subr.bf16.mxu0 0
        %582 = vmatpush1.bf16.msra.mxu0 0
        %583 = vmatprep.subr.bf16.mxu0 0
        %584 = vmatpush1.bf16.msra.mxu0 0
        %585 = vmatprep.subr.bf16.mxu0 0
        %586 = vmatpush1.bf16.msra.mxu0 0
        %587 = vmatprep.subr.bf16.mxu0 0
        %588 = vmatpush1.bf16.msra.mxu0 0
        %589 = vmatprep.subr.bf16.mxu0 0
        %590 = vmatpush1.bf16.msra.mxu0 0
        %591 = vmatprep.subr.bf16.mxu0 0
        %592 = vmatpush1.bf16.msra.mxu0 0
        %593 = vmatprep.subr.bf16.mxu0 0
        %594 = vmatpush1.bf16.msra.mxu0 0
        %595 = vmatprep.subr.bf16.mxu0 0
        %596 = vmatpush1.bf16.msra.mxu0 0
        %597 = vmatprep.subr.bf16.mxu0 0
        %598 = vmatpush1.bf16.msra.mxu0 0
        %599 = vmatprep.subr.bf16.mxu0 0
        %600 = vmatpush1.bf16.msra.mxu0 0
        %601 = vmatprep.mubr.bf16.mxu0 0
        %602 = vmatmul.mubr.bf16.gmra.mrb[0].mxu0 %v451
        %v603 = vpop.f32.mrb[0].mxu0
        %v604 = vadd.f32 0.0, %v603
        %v605 = vpop.f32.mrb[0].mxu0
        %v606 = vpop.f32.mrb[0].mxu0
        %v607 = vpop.f32.mrb[0].mxu0
        %608 = vdwg.mxu0
        %v609 = vpack.c.bf16 %v604, %v604
        %610 = vst.msk [vmem:[%s404] sm:$0xf] %vm432, %v609
        %s611 = sand.u32 %s152, 1
        %s612 = scalar_lea.sflag [#allocation4], %s611
        %s613 = sand.u32 %s152, 1
        %s614 = smul.addr %s613, 4
        %s615 = scalar_lea.vmem [#allocation11], %s614
        %s616 = sand.u32 %s34, 1
        %s617 = scalar_lea.sflag [#allocation13], %s616
        %s618 = sand.u32 %s178, 1
        %s619 = smul.addr %s618, 4
        %s620 = scalar_lea.vmem [#allocation12], %s619
        %s621 = sand.u32 %s34, 1
        %s622 = scalar_lea.sflag [#allocation13], %s621
        %s623 = sand.u32 %s204, 1
        %s624 = smul.addr %s623, 4
        %s625 = scalar_lea.vmem [#allocation14], %s624
        %s626 = sand.u32 %s230, 1
        %s627 = scalar_lea.sflag [#allocation16], %s626
        %s628 = sand.u32 %s230, 1
        %s629 = smul.addr %s628, 4
        %s630 = scalar_lea.vmem [#allocation15], %s629
        // Predicated region
        $region61: #{transformer_block_forward.10} parent=39 // pred_check
          %p631 = pneg %p162
        $region62: #{transformer_block_forward.10} parent=39 // pred_check_branch
          %633 = sbr.rel (%p631) target = $region64
        $region63: #{transformer_block_forward.10} parent=39 // pred_region
          %s635 = ssub.s32 64, 64
          %636 = vsyncadd %s612, %s635
          %s637 = smul.addr %s34, 64
          %s638 = scalar_lea.hbm %s5, %s637
          %s640 = sshll.u32 %s615, 4
          %s641 = int_to_ptr.vmem [resolvable:$true] %s640
          %643 = dma.vmem_to_hbm [thread:$0]  %s641, 64, %s638, %s612
        $region64: #{transformer_block_forward.10} parent=39 // pred_fallthru
          _
        // Predicated region
        $region65: #{transformer_block_forward.10} parent=39 // pred_check
          %p644 = pneg %p188
        $region66: #{transformer_block_forward.10} parent=39 // pred_check_branch
          %646 = sbr.rel (%p644) target = $region68
        $region67: #{transformer_block_forward.10} parent=39 // pred_region
          %s648 = ssub.s32 64, 64
          %649 = vsyncadd %s617, %s648
          %s650 = smul.addr %s34, 64
          %s651 = scalar_lea.hbm %s6, %s650
          %s653 = sshll.u32 %s620, 4
          %s654 = int_to_ptr.vmem [resolvable:$true] %s653
          %656 = dma.vmem_to_hbm [thread:$0]  %s654, 64, %s651, %s617
        $region68: #{transformer_block_forward.10} parent=39 // pred_fallthru
          _
        // Predicated region
        $region69: #{transformer_block_forward.10} parent=39 // pred_check
          %p657 = pneg %p214
        $region70: #{transformer_block_forward.10} parent=39 // pred_check_branch
          %659 = sbr.rel (%p657) target = $region72
        $region71: #{transformer_block_forward.10} parent=39 // pred_region
          %s661 = ssub.s32 64, 64
          %662 = vsyncadd %s622, %s661
          %s663 = smul.addr %s34, 64
          %s664 = scalar_lea.hbm %s7, %s663
          %s666 = sshll.u32 %s625, 4
          %s667 = int_to_ptr.vmem [resolvable:$true] %s666
          %669 = dma.vmem_to_hbm [thread:$0]  %s667, 64, %s664, %s622
        $region72: #{transformer_block_forward.10} parent=39 // pred_fallthru
          _
        // Predicated region
        $region73: #{transformer_block_forward.10} parent=39 // pred_check
          %p670 = pneg %p240
        $region74: #{transformer_block_forward.10} parent=39 // pred_check_branch
          %672 = sbr.rel (%p670) target = $region76
        $region75: #{transformer_block_forward.10} parent=39 // pred_region
          %s674 = ssub.s32 64, 64
          %675 = vsyncadd %s627, %s674
          %s676 = smul.addr %s34, 64
          %s677 = scalar_lea.hbm %s8, %s676
          %s679 = sshll.u32 %s630, 4
          %s680 = int_to_ptr.vmem [resolvable:$true] %s679
          %682 = dma.vmem_to_hbm [thread:$0]  %s680, 64, %s677, %s627
        $region76: #{transformer_block_forward.10} parent=39 // pred_fallthru
          _
      $region40: #{transformer_block_forward.10} parent=5 // pred_fallthru
        _
      %p683 = scmp.le.s32.totalorder 2, %s29
      // Predicated region
      $region77: #{transformer_block_forward.10} parent=5 // pred_check
        %p684 = pneg %p683
      $region78: #{transformer_block_forward.10} parent=5 // pred_check_branch
        %686 = sbr.rel (%p684) target = $region80
      $region79: #{transformer_block_forward.10} parent=5 // pred_region
        %s687 = ssub.s32 %s29, 2
        // Predicated region
        $region81: #{transformer_block_forward.10} parent=79 // pred_check
          %p688 = pneg %p168
        $region82: #{transformer_block_forward.10} parent=79 // pred_check_branch
          %690 = sbr.rel (%p688) target = $region84
        $region83: #{transformer_block_forward.10} parent=79 // pred_region
          %s691 = sand.u32 %s153, 1
          %s692 = scalar_lea.sflag [#allocation4], %s691
          %s693 = sand.u32 %s153, 1
          %s694 = smul.addr %s693, 4
          %s695 = scalar_lea.vmem [#allocation11], %s694
          %696 = dma.done %s692, 64
        $region84: #{transformer_block_forward.10} parent=79 // pred_fallthru
          _
        // Predicated region
        $region85: #{transformer_block_forward.10} parent=79 // pred_check
          %p697 = pneg %p194
        $region86: #{transformer_block_forward.10} parent=79 // pred_check_branch
          %699 = sbr.rel (%p697) target = $region88
        $region87: #{transformer_block_forward.10} parent=79 // pred_region
          %s700 = sand.u32 %s35, 1
          %s701 = scalar_lea.sflag [#allocation13], %s700
          %s702 = sand.u32 %s179, 1
          %s703 = smul.addr %s702, 4
          %s704 = scalar_lea.vmem [#allocation12], %s703
          %705 = dma.done %s701, 64
        $region88: #{transformer_block_forward.10} parent=79 // pred_fallthru
          _
        // Predicated region
        $region89: #{transformer_block_forward.10} parent=79 // pred_check
          %p706 = pneg %p220
        $region90: #{transformer_block_forward.10} parent=79 // pred_check_branch
          %708 = sbr.rel (%p706) target = $region92
        $region91: #{transformer_block_forward.10} parent=79 // pred_region
          %s709 = sand.u32 %s35, 1
          %s710 = scalar_lea.sflag [#allocation13], %s709
          %s711 = sand.u32 %s205, 1
          %s712 = smul.addr %s711, 4
          %s713 = scalar_lea.vmem [#allocation14], %s712
          %714 = dma.done %s710, 64
        $region92: #{transformer_block_forward.10} parent=79 // pred_fallthru
          _
        // Predicated region
        $region93: #{transformer_block_forward.10} parent=79 // pred_check
          %p715 = pneg %p246
        $region94: #{transformer_block_forward.10} parent=79 // pred_check_branch
          %717 = sbr.rel (%p715) target = $region96
        $region95: #{transformer_block_forward.10} parent=79 // pred_region
          %s718 = sand.u32 %s231, 1
          %s719 = scalar_lea.sflag [#allocation16], %s718
          %s720 = sand.u32 %s231, 1
          %s721 = smul.addr %s720, 4
          %s722 = scalar_lea.vmem [#allocation15], %s721
          %723 = dma.done %s719, 64
        $region96: #{transformer_block_forward.10} parent=79 // pred_fallthru
          _
      $region80: #{transformer_block_forward.10} parent=5 // pred_fallthru
        _
    $region6: #{transformer_block_forward.10} parent=1 // loop_footer
      %s33 = sadd.s32 1, %s29
    $region7: #{transformer_block_forward.10} parent=1 // loop_footer_branch
      %28 = sbr.rel target = $region3
    $region8: #{transformer_block_forward.10} parent=1 // loop_exit
      _
    %724 = vsyncpa [#allocation3], 1
    %s725 = scalar_lea.sflag [#allocation3], 1
    %726 = vsyncpa %s725, 1
    %727 = vsyncpa [#allocation6], 1
    %728 = vsyncpa [#allocation9], 1
    %729 = vsyncpa [#allocation4], 1
    %s730 = scalar_lea.sflag [#allocation4], 1
    %731 = vsyncpa %s730, 1
    %732 = vsyncpa [#allocation13], 1
    %s733 = scalar_lea.sflag [#allocation13], 1
    %734 = vsyncpa %s733, 1
    %735 = vsyncpa [#allocation16], 1
    %s736 = scalar_lea.sflag [#allocation16], 1
    %737 = vsyncpa %s736, 1

// kernel: transformer_block_forward.11
$region0: #{transformer_block_forward.11}
  #allocation0 [shape = 'u32[]', space=smem, size = 0x4, offset = 0x4, fixed_abs, tag = 'smem constant byte address 0x4 - core index']
  #allocation1 [shape = 'u32[144,128]{1,0:T(1,128)}', space=vmem, size = 0x12000, scoped, tag = 'internal scratch']
  %s0 = inlined_call_operand.hbm [shape: bf16[2,8,32], index: 0, kind: input, shape index: {}]
  %s1 = inlined_call_operand.hbm [shape: bf16[2,8,32], index: 1, kind: input, shape index: {}]
  %s2 = inlined_call_operand.hbm [shape: bf16[2,8,32], index: 2, kind: input, shape index: {}]
  %s3 = inlined_call_operand.hbm [shape: f32[2,1,8], index: 3, kind: input, shape index: {}]
  %s4 = inlined_call_operand.hbm [shape: bf16[2,8,32], index: 4, kind: input, shape index: {}]
  %s5 = inlined_call_operand.hbm [shape: bf16[32,32], index: 5, kind: input, shape index: {}]
  %s6 = inlined_call_operand.hbm [shape: f32[1,32], index: 6, kind: input, shape index: {}]
  %s7 = inlined_call_operand.hbm [shape: bf16[32,32], index: 7, kind: input, shape index: {}]
  %s8 = inlined_call_operand.hbm [shape: bf16[2,8,32], index: 8, kind: output, shape index: {0}]
  %s9 = inlined_call_operand.hbm [shape: bf16[2,8,32], index: 9, kind: output, shape index: {1}]
  %10 = xla_tuple %s8, %s9
  %s11 = sld [smem:[#allocation0]]
  $region105: #{transformer_block_forward.11} parent=0
    _
  %s13 = ssub.s32 1, %s11
  %s14 = scalar_select 0, %s13, %s11
  $region1: #{transformer_block_forward.11} parent=0
    #allocation2 [shape = 'u8[4096]{0}', space=vmem, size = 0x1000, scoped, tag = 'input window, operand 0']
    #allocation3 [shape = 's32[2]{0}', space=sflag, size = 0x8, scoped, tag = 'scoped memory for transformer_block_forward.11']
    #allocation4 [shape = 's32[2]{0}', space=sflag, size = 0x8, scoped, tag = 'scoped memory for transformer_block_forward.11']
    #allocation5 [shape = 'u8[4096]{0}', space=vmem, size = 0x1000, scoped, tag = 'input window, operand 1']
    #allocation6 [shape = 's32[2]{0}', space=sflag, size = 0x8, scoped, tag = 'scoped memory for transformer_block_forward.11']
    #allocation7 [shape = 'u8[4096]{0}', space=vmem, size = 0x1000, scoped, tag = 'input window, operand 2']
    #allocation8 [shape = 'u8[1024]{0}', space=vmem, size = 0x400, scoped, tag = 'input window, operand 3']
    #allocation9 [shape = 's32[2]{0}', space=sflag, size = 0x8, scoped, tag = 'scoped memory for transformer_block_forward.11']
    #allocation10 [shape = 'u8[4096]{0}', space=vmem, size = 0x1000, scoped, tag = 'input window, operand 4']
    #allocation11 [shape = 'u8[8192]{0}', space=vmem, size = 0x2000, scoped, tag = 'input window, operand 5, single buffered']
    #allocation12 [shape = 's32[1]{0}', space=sflag, size = 0x4, scoped, tag = 'scoped memory for transformer_block_forward.11']
    #allocation13 [shape = 'u8[512]{0}', space=vmem, size = 0x400, scoped, tag = 'input window, operand 6, single buffered']
    #allocation14 [shape = 'u8[8192]{0}', space=vmem, size = 0x2000, scoped, tag = 'input window, operand 7, single buffered']
    #allocation15 [shape = 's32[1]{0}', space=sflag, size = 0x4, scoped, tag = 'scoped memory for transformer_block_forward.11']
    #allocation16 [shape = 'u8[4096]{0}', space=vmem, size = 0x1000, scoped, tag = 'output window, operand 0']
    #allocation17 [shape = 'u8[4096]{0}', space=vmem, size = 0x1000, scoped, tag = 'output window, operand 1']
    #allocation18 [shape = 's32[2]{0}', space=sflag, size = 0x8, scoped, tag = 'scoped memory for transformer_block_forward.11']
    %15 = vsyncpa [#allocation3], 0
    %s16 = scalar_lea.sflag [#allocation3], 1
    %17 = vsyncpa %s16, 0
    %18 = vsyncpa [#allocation6], 0
    %s19 = scalar_lea.sflag [#allocation6], 1
    %20 = vsyncpa %s19, 0
    %21 = vsyncpa [#allocation9], 0
    %s22 = scalar_lea.sflag [#allocation9], 1
    %23 = vsyncpa %s22, 0
    %24 = vsyncpa [#allocation12], 0
    %25 = vsyncpa [#allocation15], 0
    %26 = vsyncpa [#allocation4], 0
    %s27 = scalar_lea.sflag [#allocation4], 1
    %28 = vsyncpa %s27, 0
    %29 = vsyncpa [#allocation18], 0
    %s30 = scalar_lea.sflag [#allocation18], 1
    %31 = vsyncpa %s30, 0
    loop: start=0, step=1, limit=4
    $region2: #{transformer_block_forward.11} parent=1 // loop_pre_header
      _
    $region3: #{transformer_block_forward.11} parent=1 // loop_header
      %s33 = sphi 0, %s37
      %p34 = scmp.ge.s32.totalorder %s33, 4
      %s43 = sphi 0, %s45
      %s46 = sphi 0, %s43
      %s47 = sphi 0, %s46
      %s63 = sphi 0, %s47
      %s69 = sphi 0, %s71
      %s72 = sphi 0, %s69
      %s73 = sphi 0, %s72
      %s89 = sphi 0, %s73
      %s95 = sphi 0, %s97
      %s98 = sphi 0, %s95
      %s99 = sphi 0, %s98
      %s115 = sphi 0, %s99
      %s121 = sphi 0, %s123
      %s124 = sphi 0, %s121
      %s125 = sphi 0, %s124
      %s141 = sphi 0, %s125
      %s147 = sphi 0, %s149
      %s150 = sphi 0, %s147
      %s151 = sphi 0, %s150
      %s167 = sphi 0, %s151
      %s171 = sphi 0, %s171
      %s173 = sphi 0, %s171
      %s174 = sphi 0, %s173
      %s188 = sphi 0, %s174
      %s192 = sphi 0, %s192
      %s194 = sphi 0, %s192
      %s195 = sphi 0, %s194
      %s209 = sphi 0, %s195
      %s213 = sphi 0, %s213
      %s215 = sphi 0, %s213
      %s216 = sphi 0, %s215
      %s230 = sphi 0, %s216
      %s236 = sphi 0, %s238
      %s239 = sphi 0, %s236
      %s240 = sphi 0, %s239
      %s256 = sphi 0, %s240
      %s262 = sphi 0, %s264
      %s265 = sphi 0, %s262
      %s266 = sphi 0, %s265
      %s282 = sphi 0, %s266
    $region4: #{transformer_block_forward.11} parent=1 // loop_header_branch
      %36 = sbr.rel (%p34) target = $region8
    $region5: #{transformer_block_forward.11} parent=1 // loop_body
      %s38 = ssub.s32 %s33, 1
      %s39 = ssub.s32 %s33, 2
      %s40 = sadd.s32 %s33, 1
      %s41 = ssub.s32 %s33, %s40
      %p42 = scmp.eq.s32.totalorder %s41, 0
      %s44 = sadd.s32 %s43, 1
      %s45 = scalar_select %p42, %s43, %s44
      %p48 = pneg %p42
      %p49 = scmp.eq.s32.totalorder %s33, 1
      %p50 = por %p48, %p49
      %p51 = scmp.ne.s32.totalorder %s43, %s46
      %p52 = scmp.eq.s32.totalorder %s33, 0
      %p53 = por %p51, %p52
      %p54 = scmp.ne.s32.totalorder %s43, %s46
      %p55 = scmp.eq.s32.totalorder %s38, 1
      %p56 = por %p54, %p55
      %p57 = scmp.ne.s32.totalorder %s46, %s47
      %p58 = scmp.eq.s32.totalorder %s38, 0
      %p59 = por %p57, %p58
      %p60 = scmp.ne.s32.totalorder %s46, %s47
      %p61 = scmp.eq.s32.totalorder %s39, 1
      %p62 = por %p60, %p61
      %p64 = scmp.ne.s32.totalorder %s47, %s63
      %p65 = scmp.eq.s32.totalorder %s39, 0
      %p66 = por %p64, %p65
      %s67 = ssub.s32 %s33, %s40
      %p68 = scmp.eq.s32.totalorder %s67, 0
      %s70 = sadd.s32 %s69, 1
      %s71 = scalar_select %p68, %s69, %s70
      %p74 = pneg %p68
      %p75 = scmp.eq.s32.totalorder %s33, 1
      %p76 = por %p74, %p75
      %p77 = scmp.ne.s32.totalorder %s69, %s72
      %p78 = scmp.eq.s32.totalorder %s33, 0
      %p79 = por %p77, %p78
      %p80 = scmp.ne.s32.totalorder %s69, %s72
      %p81 = scmp.eq.s32.totalorder %s38, 1
      %p82 = por %p80, %p81
      %p83 = scmp.ne.s32.totalorder %s72, %s73
      %p84 = scmp.eq.s32.totalorder %s38, 0
      %p85 = por %p83, %p84
      %p86 = scmp.ne.s32.totalorder %s72, %s73
      %p87 = scmp.eq.s32.totalorder %s39, 1
      %p88 = por %p86, %p87
      %p90 = scmp.ne.s32.totalorder %s73, %s89
      %p91 = scmp.eq.s32.totalorder %s39, 0
      %p92 = por %p90, %p91
      %s93 = ssub.s32 %s33, %s40
      %p94 = scmp.eq.s32.totalorder %s93, 0
      %s96 = sadd.s32 %s95, 1
      %s97 = scalar_select %p94, %s95, %s96
      %p100 = pneg %p94
      %p101 = scmp.eq.s32.totalorder %s33, 1
      %p102 = por %p100, %p101
      %p103 = scmp.ne.s32.totalorder %s95, %s98
      %p104 = scmp.eq.s32.totalorder %s33, 0
      %p105 = por %p103, %p104
      %p106 = scmp.ne.s32.totalorder %s95, %s98
      %p107 = scmp.eq.s32.totalorder %s38, 1
      %p108 = por %p106, %p107
      %p109 = scmp.ne.s32.totalorder %s98, %s99
      %p110 = scmp.eq.s32.totalorder %s38, 0
      %p111 = por %p109, %p110
      %p112 = scmp.ne.s32.totalorder %s98, %s99
      %p113 = scmp.eq.s32.totalorder %s39, 1
      %p114 = por %p112, %p113
      %p116 = scmp.ne.s32.totalorder %s99, %s115
      %p117 = scmp.eq.s32.totalorder %s39, 0
      %p118 = por %p116, %p117
      %s119 = ssub.s32 %s33, %s40
      %p120 = scmp.eq.s32.totalorder %s119, 0
      %s122 = sadd.s32 %s121, 1
      %s123 = scalar_select %p120, %s121, %s122
      %p126 = pneg %p120
      %p127 = scmp.eq.s32.totalorder %s33, 1
      %p128 = por %p126, %p127
      %p129 = scmp.ne.s32.totalorder %s121, %s124
      %p130 = scmp.eq.s32.totalorder %s33, 0
      %p131 = por %p129, %p130
      %p132 = scmp.ne.s32.totalorder %s121, %s124
      %p133 = scmp.eq.s32.totalorder %s38, 1
      %p134 = por %p132, %p133
      %p135 = scmp.ne.s32.totalorder %s124, %s125
      %p136 = scmp.eq.s32.totalorder %s38, 0
      %p137 = por %p135, %p136
      %p138 = scmp.ne.s32.totalorder %s124, %s125
      %p139 = scmp.eq.s32.totalorder %s39, 1
      %p140 = por %p138, %p139
      %p142 = scmp.ne.s32.totalorder %s125, %s141
      %p143 = scmp.eq.s32.totalorder %s39, 0
      %p144 = por %p142, %p143
      %s145 = ssub.s32 %s33, %s40
      %p146 = scmp.eq.s32.totalorder %s145, 0
      %s148 = sadd.s32 %s147, 1
      %s149 = scalar_select %p146, %s147, %s148
      %p152 = pneg %p146
      %p153 = scmp.eq.s32.totalorder %s33, 1
      %p154 = por %p152, %p153
      %p155 = scmp.ne.s32.totalorder %s147, %s150
      %p156 = scmp.eq.s32.totalorder %s33, 0
      %p157 = por %p155, %p156
      %p158 = scmp.ne.s32.totalorder %s147, %s150
      %p159 = scmp.eq.s32.totalorder %s38, 1
      %p160 = por %p158, %p159
      %p161 = scmp.ne.s32.totalorder %s150, %s151
      %p162 = scmp.eq.s32.totalorder %s38, 0
      %p163 = por %p161, %p162
      %p164 = scmp.ne.s32.totalorder %s150, %s151
      %p165 = scmp.eq.s32.totalorder %s39, 1
      %p166 = por %p164, %p165
      %p168 = scmp.ne.s32.totalorder %s151, %s167
      %p169 = scmp.eq.s32.totalorder %s39, 0
      %p170 = por %p168, %p169
      %s172 = sadd.s32 %s171, 1
      %p175 = scmp.eq.s32.totalorder %s33, 1
      %p176 = scmp.ne.s32.totalorder %s171, %s173
      %p177 = scmp.eq.s32.totalorder %s33, 0
      %p178 = por %p176, %p177
      %p179 = scmp.ne.s32.totalorder %s171, %s173
      %p180 = scmp.eq.s32.totalorder %s38, 1
      %p181 = por %p179, %p180
      %p182 = scmp.ne.s32.totalorder %s173, %s174
      %p183 = scmp.eq.s32.totalorder %s38, 0
      %p184 = por %p182, %p183
      %p185 = scmp.ne.s32.totalorder %s173, %s174
      %p186 = scmp.eq.s32.totalorder %s39, 1
      %p187 = por %p185, %p186
      %p189 = scmp.ne.s32.totalorder %s174, %s188
      %p190 = scmp.eq.s32.totalorder %s39, 0
      %p191 = por %p189, %p190
      %s193 = sadd.s32 %s192, 1
      %p196 = scmp.eq.s32.totalorder %s33, 1
      %p197 = scmp.ne.s32.totalorder %s192, %s194
      %p198 = scmp.eq.s32.totalorder %s33, 0
      %p199 = por %p197, %p198
      %p200 = scmp.ne.s32.totalorder %s192, %s194
      %p201 = scmp.eq.s32.totalorder %s38, 1
      %p202 = por %p200, %p201
      %p203 = scmp.ne.s32.totalorder %s194, %s195
      %p204 = scmp.eq.s32.totalorder %s38, 0
      %p205 = por %p203, %p204
      %p206 = scmp.ne.s32.totalorder %s194, %s195
      %p207 = scmp.eq.s32.totalorder %s39, 1
      %p208 = por %p206, %p207
      %p210 = scmp.ne.s32.totalorder %s195, %s209
      %p211 = scmp.eq.s32.totalorder %s39, 0
      %p212 = por %p210, %p211
      %s214 = sadd.s32 %s213, 1
      %p217 = scmp.eq.s32.totalorder %s33, 1
      %p218 = scmp.ne.s32.totalorder %s213, %s215
      %p219 = scmp.eq.s32.totalorder %s33, 0
      %p220 = por %p218, %p219
      %p221 = scmp.ne.s32.totalorder %s213, %s215
      %p222 = scmp.eq.s32.totalorder %s38, 1
      %p223 = por %p221, %p222
      %p224 = scmp.ne.s32.totalorder %s215, %s216
      %p225 = scmp.eq.s32.totalorder %s38, 0
      %p226 = por %p224, %p225
      %p227 = scmp.ne.s32.totalorder %s215, %s216
      %p228 = scmp.eq.s32.totalorder %s39, 1
      %p229 = por %p227, %p228
      %p231 = scmp.ne.s32.totalorder %s216, %s230
      %p232 = scmp.eq.s32.totalorder %s39, 0
      %p233 = por %p231, %p232
      %s234 = ssub.s32 %s33, %s40
      %p235 = scmp.eq.s32.totalorder %s234, 0
      %s237 = sadd.s32 %s236, 1
      %s238 = scalar_select %p235, %s236, %s237
      %p241 = pneg %p235
      %p242 = scmp.eq.s32.totalorder %s33, 1
      %p243 = por %p241, %p242
      %p244 = scmp.ne.s32.totalorder %s236, %s239
      %p245 = scmp.eq.s32.totalorder %s33, 0
      %p246 = por %p244, %p245
      %p247 = scmp.ne.s32.totalorder %s236, %s239
      %p248 = scmp.eq.s32.totalorder %s38, 1
      %p249 = por %p247, %p248
      %p250 = scmp.ne.s32.totalorder %s239, %s240
      %p251 = scmp.eq.s32.totalorder %s38, 0
      %p252 = por %p250, %p251
      %p253 = scmp.ne.s32.totalorder %s239, %s240
      %p254 = scmp.eq.s32.totalorder %s39, 1
      %p255 = por %p253, %p254
      %p257 = scmp.ne.s32.totalorder %s240, %s256
      %p258 = scmp.eq.s32.totalorder %s39, 0
      %p259 = por %p257, %p258
      %s260 = ssub.s32 %s33, %s40
      %p261 = scmp.eq.s32.totalorder %s260, 0
      %s263 = sadd.s32 %s262, 1
      %s264 = scalar_select %p261, %s262, %s263
      %p267 = pneg %p261
      %p268 = scmp.eq.s32.totalorder %s33, 1
      %p269 = por %p267, %p268
      %p270 = scmp.ne.s32.totalorder %s262, %s265
      %p271 = scmp.eq.s32.totalorder %s33, 0
      %p272 = por %p270, %p271
      %p273 = scmp.ne.s32.totalorder %s262, %s265
      %p274 = scmp.eq.s32.totalorder %s38, 1
      %p275 = por %p273, %p274
      %p276 = scmp.ne.s32.totalorder %s265, %s266
      %p277 = scmp.eq.s32.totalorder %s38, 0
      %p278 = por %p276, %p277
      %p279 = scmp.ne.s32.totalorder %s265, %s266
      %p280 = scmp.eq.s32.totalorder %s39, 1
      %p281 = por %p279, %p280
      %p283 = scmp.ne.s32.totalorder %s266, %s282
      %p284 = scmp.eq.s32.totalorder %s39, 0
      %p285 = por %p283, %p284
      %p286 = scmp.le.s32.totalorder 1, %s33
      %p287 = scmp.lt.s32.totalorder %s33, 3
      %p288 = pnand %p286, %p287
      %p289 = pneg %p288
      // Predicated region
      $region9: #{transformer_block_forward.11} parent=5 // pred_check
        _
      $region10: #{transformer_block_forward.11} parent=5 // pred_check_branch
        %291 = sbr.rel (%p288) target = $region12
      $region11: #{transformer_block_forward.11} parent=5 // pred_region
        %s292 = ssub.s32 %s33, 1
        // Predicated region
        $region13: #{transformer_block_forward.11} parent=11 // pred_check
          %p293 = pneg %p184
        $region14: #{transformer_block_forward.11} parent=11 // pred_check_branch
          %295 = sbr.rel (%p293) target = $region16
        $region15: #{transformer_block_forward.11} parent=11 // pred_region
          %s297 = ssub.s32 256, 256
          %298 = vsyncadd [#allocation12], %s297
          %s299 = sshll.u32 [#allocation11], 4
          %s300 = int_to_ptr.vmem [resolvable:$true] %s299
          %305 = dma.hbm_to_vmem [thread:$0]  %s5, 256, %s300, [#allocation12], 64, 64, 4
        $region16: #{transformer_block_forward.11} parent=11 // pred_fallthru
          _
        // Predicated region
        $region17: #{transformer_block_forward.11} parent=11 // pred_check
          %p306 = pneg %p205
        $region18: #{transformer_block_forward.11} parent=11 // pred_check_branch
          %308 = sbr.rel (%p306) target = $region20
        $region19: #{transformer_block_forward.11} parent=11 // pred_region
          %s310 = ssub.s32 16, 16
          %311 = vsyncadd [#allocation12], %s310
          %s313 = sshll.u32 [#allocation13], 4
          %s314 = int_to_ptr.vmem [resolvable:$true] %s313
          %316 = dma.hbm_to_vmem [thread:$0]  %s6, 16, %s314, [#allocation12]
        $region20: #{transformer_block_forward.11} parent=11 // pred_fallthru
          _
        // Predicated region
        $region21: #{transformer_block_forward.11} parent=11 // pred_check
          %p317 = pneg %p226
        $region22: #{transformer_block_forward.11} parent=11 // pred_check_branch
          %319 = sbr.rel (%p317) target = $region24
        $region23: #{transformer_block_forward.11} parent=11 // pred_region
          %s321 = ssub.s32 256, 256
          %322 = vsyncadd [#allocation15], %s321
          %s323 = sshll.u32 [#allocation14], 4
          %s324 = int_to_ptr.vmem [resolvable:$true] %s323
          %329 = dma.hbm_to_vmem [thread:$0]  %s7, 256, %s324, [#allocation15], 64, 64, 4
        $region24: #{transformer_block_forward.11} parent=11 // pred_fallthru
          _
      $region12: #{transformer_block_forward.11} parent=5 // pred_fallthru
        _
      %p330 = scmp.lt.s32.totalorder %s33, 2
      // Predicated region
      $region25: #{transformer_block_forward.11} parent=5 // pred_check
        %p331 = pneg %p330
      $region26: #{transformer_block_forward.11} parent=5 // pred_check_branch
        %333 = sbr.rel (%p331) target = $region28
      $region27: #{transformer_block_forward.11} parent=5 // pred_region
        // Predicated region
        $region29: #{transformer_block_forward.11} parent=27 // pred_check
          %p334 = pneg %p53
        $region30: #{transformer_block_forward.11} parent=27 // pred_check_branch
          %336 = sbr.rel (%p334) target = $region32
        $region31: #{transformer_block_forward.11} parent=27 // pred_region
          %s337 = sand.u32 %s43, 1
          %s338 = scalar_lea.sflag [#allocation3], %s337
          %s339 = sand.u32 %s43, 1
          %s340 = smul.addr %s339, 4
          %s341 = scalar_lea.vmem [#allocation2], %s340
          %s343 = ssub.s32 64, 64
          %344 = vsyncadd %s338, %s343
          %s345 = smul.addr %s33, 64
          %s346 = scalar_lea.hbm %s0, %s345
          %s348 = sshll.u32 %s341, 4
          %s349 = int_to_ptr.vmem [resolvable:$true] %s348
          %351 = dma.hbm_to_vmem [thread:$0]  %s346, 64, %s349, %s338
        $region32: #{transformer_block_forward.11} parent=27 // pred_fallthru
          _
        // Predicated region
        $region33: #{transformer_block_forward.11} parent=27 // pred_check
          %p352 = pneg %p79
        $region34: #{transformer_block_forward.11} parent=27 // pred_check_branch
          %354 = sbr.rel (%p352) target = $region36
        $region35: #{transformer_block_forward.11} parent=27 // pred_region
          %s355 = sand.u32 %s33, 1
          %s356 = scalar_lea.sflag [#allocation6], %s355
          %s357 = sand.u32 %s69, 1
          %s358 = smul.addr %s357, 4
          %s359 = scalar_lea.vmem [#allocation5], %s358
          %s361 = ssub.s32 64, 64
          %362 = vsyncadd %s356, %s361
          %s363 = smul.addr %s33, 64
          %s364 = scalar_lea.hbm %s1, %s363
          %s366 = sshll.u32 %s359, 4
          %s367 = int_to_ptr.vmem [resolvable:$true] %s366
          %369 = dma.hbm_to_vmem [thread:$0]  %s364, 64, %s367, %s356
        $region36: #{transformer_block_forward.11} parent=27 // pred_fallthru
          _
        // Predicated region
        $region37: #{transformer_block_forward.11} parent=27 // pred_check
          %p370 = pneg %p105
        $region38: #{transformer_block_forward.11} parent=27 // pred_check_branch
          %372 = sbr.rel (%p370) target = $region40
        $region39: #{transformer_block_forward.11} parent=27 // pred_region
          %s373 = sand.u32 %s33, 1
          %s374 = scalar_lea.sflag [#allocation6], %s373
          %s375 = sand.u32 %s95, 1
          %s376 = smul.addr %s375, 4
          %s377 = scalar_lea.vmem [#allocation7], %s376
          %s379 = ssub.s32 64, 64
          %380 = vsyncadd %s374, %s379
          %s381 = smul.addr %s33, 64
          %s382 = scalar_lea.hbm %s2, %s381
          %s384 = sshll.u32 %s377, 4
          %s385 = int_to_ptr.vmem [resolvable:$true] %s384
          %387 = dma.hbm_to_vmem [thread:$0]  %s382, 64, %s385, %s374
        $region40: #{transformer_block_forward.11} parent=27 // pred_fallthru
          _
        // Predicated region
        $region41: #{transformer_block_forward.11} parent=27 // pred_check
          %p388 = pneg %p131
        $region42: #{transformer_block_forward.11} parent=27 // pred_check_branch
          %390 = sbr.rel (%p388) target = $region44
        $region43: #{transformer_block_forward.11} parent=27 // pred_region
          %s391 = sand.u32 %s33, 1
          %s392 = scalar_lea.sflag [#allocation9], %s391
          %s393 = sand.u32 %s121, 1
          %s394 = scalar_lea.vmem [#allocation8], %s393
          %s396 = ssub.s32 16, 16
          %397 = vsyncadd %s392, %s396
          %s398 = smul.addr %s33, 16
          %s399 = scalar_lea.hbm %s3, %s398
          %s401 = sshll.u32 %s394, 4
          %s402 = int_to_ptr.vmem [resolvable:$true] %s401
          %404 = dma.hbm_to_vmem [thread:$0]  %s399, 16, %s402, %s392
        $region44: #{transformer_block_forward.11} parent=27 // pred_fallthru
          _
        // Predicated region
        $region45: #{transformer_block_forward.11} parent=27 // pred_check
          %p405 = pneg %p157
        $region46: #{transformer_block_forward.11} parent=27 // pred_check_branch
          %407 = sbr.rel (%p405) target = $region48
        $region47: #{transformer_block_forward.11} parent=27 // pred_region
          %s408 = sand.u32 %s33, 1
          %s409 = scalar_lea.sflag [#allocation9], %s408
          %s410 = sand.u32 %s147, 1
          %s411 = smul.addr %s410, 4
          %s412 = scalar_lea.vmem [#allocation10], %s411
          %s414 = ssub.s32 64, 64
          %415 = vsyncadd %s409, %s414
          %s416 = smul.addr %s33, 64
          %s417 = scalar_lea.hbm %s4, %s416
          %s419 = sshll.u32 %s412, 4
          %s420 = int_to_ptr.vmem [resolvable:$true] %s419
          %422 = dma.hbm_to_vmem [thread:$0]  %s417, 64, %s420, %s409
        $region48: #{transformer_block_forward.11} parent=27 // pred_fallthru
          _
      $region28: #{transformer_block_forward.11} parent=5 // pred_fallthru
        _
      %p423 = scmp.le.s32.totalorder 1, %s33
      %p424 = scmp.lt.s32.totalorder %s33, 3
      %p425 = pnand %p423, %p424
      %p426 = pneg %p425
      // Predicated region
      $region49: #{transformer_block_forward.11} parent=5 // pred_check
        _
      $region50: #{transformer_block_forward.11} parent=5 // pred_check_branch
        %428 = sbr.rel (%p425) target = $region52
      $region51: #{transformer_block_forward.11} parent=5 // pred_region
        %s429 = ssub.s32 %s33, 1
        %s430 = sand.u32 %s46, 1
        %s431 = scalar_lea.sflag [#allocation3], %s430
        %s432 = sand.u32 %s46, 1
        %s433 = smul.addr %s432, 4
        %s434 = scalar_lea.vmem [#allocation2], %s433
        // Predicated region
        $region53: #{transformer_block_forward.11} parent=51 // pred_check
          %p435 = pneg %p59
        $region54: #{transformer_block_forward.11} parent=51 // pred_check_branch
          %437 = sbr.rel (%p435) target = $region56
        $region55: #{transformer_block_forward.11} parent=51 // pred_region
          %438 = dma.done %s431, 64
        $region56: #{transformer_block_forward.11} parent=51 // pred_fallthru
          _
        %s439 = sand.u32 %s38, 1
        %s440 = scalar_lea.sflag [#allocation6], %s439
        %s441 = sand.u32 %s72, 1
        %s442 = smul.addr %s441, 4
        %s443 = scalar_lea.vmem [#allocation5], %s442
        // Predicated region
        $region57: #{transformer_block_forward.11} parent=51 // pred_check
          %p444 = pneg %p85
        $region58: #{transformer_block_forward.11} parent=51 // pred_check_branch
          %446 = sbr.rel (%p444) target = $region60
        $region59: #{transformer_block_forward.11} parent=51 // pred_region
          %447 = dma.done %s440, 64
        $region60: #{transformer_block_forward.11} parent=51 // pred_fallthru
          _
        %s448 = sand.u32 %s38, 1
        %s449 = scalar_lea.sflag [#allocation6], %s448
        %s450 = sand.u32 %s98, 1
        %s451 = smul.addr %s450, 4
        %s452 = scalar_lea.vmem [#allocation7], %s451
        // Predicated region
        $region61: #{transformer_block_forward.11} parent=51 // pred_check
          %p453 = pneg %p111
        $region62: #{transformer_block_forward.11} parent=51 // pred_check_branch
          %455 = sbr.rel (%p453) target = $region64
        $region63: #{transformer_block_forward.11} parent=51 // pred_region
          %456 = dma.done %s449, 64
        $region64: #{transformer_block_forward.11} parent=51 // pred_fallthru
          _
        %s457 = sand.u32 %s38, 1
        %s458 = scalar_lea.sflag [#allocation9], %s457
        %s459 = sand.u32 %s124, 1
        %s460 = scalar_lea.vmem [#allocation8], %s459
        // Predicated region
        $region65: #{transformer_block_forward.11} parent=51 // pred_check
          %p461 = pneg %p137
        $region66: #{transformer_block_forward.11} parent=51 // pred_check_branch
          %463 = sbr.rel (%p461) target = $region68
        $region67: #{transformer_block_forward.11} parent=51 // pred_region
          %464 = dma.done %s458, 16
        $region68: #{transformer_block_forward.11} parent=51 // pred_fallthru
          _
        %s465 = sand.u32 %s38, 1
        %s466 = scalar_lea.sflag [#allocation9], %s465
        %s467 = sand.u32 %s150, 1
        %s468 = smul.addr %s467, 4
        %s469 = scalar_lea.vmem [#allocation10], %s468
        // Predicated region
        $region69: #{transformer_block_forward.11} parent=51 // pred_check
          %p470 = pneg %p163
        $region70: #{transformer_block_forward.11} parent=51 // pred_check_branch
          %472 = sbr.rel (%p470) target = $region72
        $region71: #{transformer_block_forward.11} parent=51 // pred_region
          %473 = dma.done %s466, 64
        $region72: #{transformer_block_forward.11} parent=51 // pred_fallthru
          _
        // Predicated region
        $region73: #{transformer_block_forward.11} parent=51 // pred_check
          %p474 = pneg %p184
        $region74: #{transformer_block_forward.11} parent=51 // pred_check_branch
          %476 = sbr.rel (%p474) target = $region76
        $region75: #{transformer_block_forward.11} parent=51 // pred_region
          %477 = dma.done [#allocation12], 256
        $region76: #{transformer_block_forward.11} parent=51 // pred_fallthru
          _
        // Predicated region
        $region77: #{transformer_block_forward.11} parent=51 // pred_check
          %p478 = pneg %p205
        $region78: #{transformer_block_forward.11} parent=51 // pred_check_branch
          %480 = sbr.rel (%p478) target = $region80
        $region79: #{transformer_block_forward.11} parent=51 // pred_region
          %481 = dma.done [#allocation12], 16
        $region80: #{transformer_block_forward.11} parent=51 // pred_fallthru
          _
        // Predicated region
        $region81: #{transformer_block_forward.11} parent=51 // pred_check
          %p482 = pneg %p226
        $region82: #{transformer_block_forward.11} parent=51 // pred_check_branch
          %484 = sbr.rel (%p482) target = $region84
        $region83: #{transformer_block_forward.11} parent=51 // pred_region
          %485 = dma.done [#allocation15], 256
        $region84: #{transformer_block_forward.11} parent=51 // pred_fallthru
          _
        %s486 = sand.u32 %s46, 1
        %s487 = scalar_lea.sflag [#allocation3], %s486
        %s488 = sand.u32 %s46, 1
        %s489 = smul.addr %s488, 4
        %s490 = scalar_lea.vmem [#allocation2], %s489
        %p491 = pneg %p59
        %p492 = pneg %p56
        %s493 = sand.u32 %s38, 1
        %s494 = scalar_lea.sflag [#allocation6], %s493
        %s495 = sand.u32 %s72, 1
        %s496 = smul.addr %s495, 4
        %s497 = scalar_lea.vmem [#allocation5], %s496
        %p498 = pneg %p85
        %p499 = pneg %p82
        %s500 = sand.u32 %s38, 1
        %s501 = scalar_lea.sflag [#allocation6], %s500
        %s502 = sand.u32 %s98, 1
        %s503 = smul.addr %s502, 4
        %s504 = scalar_lea.vmem [#allocation7], %s503
        %p505 = pneg %p111
        %p506 = pneg %p108
        %s507 = sand.u32 %s38, 1
        %s508 = scalar_lea.sflag [#allocation9], %s507
        %s509 = sand.u32 %s124, 1
        %s510 = scalar_lea.vmem [#allocation8], %s509
        %p511 = pneg %p137
        %p512 = pneg %p134
        %s513 = sand.u32 %s38, 1
        %s514 = scalar_lea.sflag [#allocation9], %s513
        %s515 = sand.u32 %s150, 1
        %s516 = smul.addr %s515, 4
        %s517 = scalar_lea.vmem [#allocation10], %s516
        %p518 = pneg %p163
        %p519 = pneg %p160
        %p520 = pneg %p184
        %p521 = pneg %p181
        %p522 = pneg %p205
        %p523 = pneg %p202
        %p524 = pneg %p226
        %p525 = pneg %p223
        %p526 = pneg %p252
        %p527 = pneg %p249
        %s528 = sand.u32 %s239, 1
        %s529 = scalar_lea.sflag [#allocation4], %s528
        %s530 = sand.u32 %s239, 1
        %s531 = smul.addr %s530, 4
        %s532 = scalar_lea.vmem [#allocation16], %s531
        %p533 = pneg %p278
        %p534 = pneg %p275
        %s535 = sand.u32 %s265, 1
        %s536 = scalar_lea.sflag [#allocation18], %s535
        %s537 = sand.u32 %s265, 1
        %s538 = smul.addr %s537, 4
        %s539 = scalar_lea.vmem [#allocation17], %s538
        %v541 = vld [vmem:[%s434] sm:$0xf]
        %543 = vrot.lane.b32.xlu0 %v541, 120
        %v544 = vpop.permute.xlu0 %543
        %545 = vrot.lane.b32.xlu0 %v541, 112
        %v546 = vpop.permute.xlu0 %545
        %547 = vrot.lane.b32.xlu0 %v541, 104
        %v548 = vpop.permute.xlu0 %547
        %v551 = vpack.i.b16 %v544, %v541
        %v552 = vshrl.u32 %v541, 16
        %v553 = vshrl.u32 %v544, 16
        %v554 = vpack.i.b16 %v553, %v552
        %v557 = vpack.i.b16 %v548, %v546
        %v558 = vshrl.u32 %v546, 16
        %v559 = vshrl.u32 %v548, 16
        %v560 = vpack.i.b16 %v559, %v558
        %v563 = vunpack.c.l.s4 1983009808
        %v564 = vunpack.c.0.s8 %v563
        %v565 = vlaneseq
        %v566 = vshrl.u32 %v565, 7
        %v567 = vsub.s32 %v564, %v566
        %v568 = vrot.slane %v551, %v567
        %v571 = vunpack.c.l.s4 1983009808
        %v572 = vunpack.c.0.s8 %v571
        %v573 = vlaneseq
        %v574 = vshrl.u32 %v573, 7
        %v575 = vsub.s32 %v572, %v574
        %v576 = vrot.slane %v557, %v575
        %v577 = vcombine.low %v568, %v576
        %v578 = vcombine.high %v568, %v576
        %v580 = vunpack.c.l.s4 1934713408
        %v581 = vunpack.c.0.s8 %v580
        %v582 = vlaneseq
        %v583 = vshrl.u32 %v582, 7
        %v584 = vsub.s32 %v581, %v583
        %v585 = vrot.slane %v577, %v584
        %v587 = vunpack.c.l.s4 1934713408
        %v588 = vunpack.c.0.s8 %v587
        %v589 = vlaneseq
        %v590 = vshrl.u32 %v589, 7
        %v591 = vsub.s32 %v588, %v590
        %v592 = vrot.slane %v578, %v591
        %v593 = vcombine.high %v585, 0
        %v594 = vcombine.high %v592, 0
        %v597 = vunpack.c.l.s4 1983009808
        %v598 = vunpack.c.0.s8 %v597
        %v599 = vlaneseq
        %v600 = vshrl.u32 %v599, 7
        %v601 = vsub.s32 %v598, %v600
        %v602 = vrot.slane %v554, %v601
        %v605 = vunpack.c.l.s4 1983009808
        %v606 = vunpack.c.0.s8 %v605
        %v607 = vlaneseq
        %v608 = vshrl.u32 %v607, 7
        %v609 = vsub.s32 %v606, %v608
        %v610 = vrot.slane %v560, %v609
        %v611 = vcombine.low %v602, %v610
        %v612 = vcombine.high %v602, %v610
        %v614 = vunpack.c.l.s4 1934713408
        %v615 = vunpack.c.0.s8 %v614
        %v616 = vlaneseq
        %v617 = vshrl.u32 %v616, 7
        %v618 = vsub.s32 %v615, %v617
        %v619 = vrot.slane %v611, %v618
        %v621 = vunpack.c.l.s4 1934713408
        %v622 = vunpack.c.0.s8 %v621
        %v623 = vlaneseq
        %v624 = vshrl.u32 %v623, 7
        %v625 = vsub.s32 %v622, %v624
        %v626 = vrot.slane %v612, %v625
        %v627 = vcombine.high %v619, 0
        %v628 = vcombine.high %v626, 0
        %v629 = vld [vmem:[%s443] sm:$0xf]
        %631 = vrot.lane.b32.xlu0 %v629, 120
        %v632 = vpop.permute.xlu0 %631
        %633 = vrot.lane.b32.xlu0 %v629, 112
        %v634 = vpop.permute.xlu0 %633
        %635 = vrot.lane.b32.xlu0 %v629, 104
        %v636 = vpop.permute.xlu0 %635
        %v639 = vpack.i.b16 %v632, %v629
        %v640 = vshrl.u32 %v629, 16
        %v641 = vshrl.u32 %v632, 16
        %v642 = vpack.i.b16 %v641, %v640
        %v645 = vpack.i.b16 %v636, %v634
        %v646 = vshrl.u32 %v634, 16
        %v647 = vshrl.u32 %v636, 16
        %v648 = vpack.i.b16 %v647, %v646
        %v651 = vunpack.c.l.s4 1983009808
        %v652 = vunpack.c.0.s8 %v651
        %v653 = vlaneseq
        %v654 = vshrl.u32 %v653, 7
        %v655 = vsub.s32 %v652, %v654
        %v656 = vrot.slane %v639, %v655
        %v659 = vunpack.c.l.s4 1983009808
        %v660 = vunpack.c.0.s8 %v659
        %v661 = vlaneseq
        %v662 = vshrl.u32 %v661, 7
        %v663 = vsub.s32 %v660, %v662
        %v664 = vrot.slane %v645, %v663
        %v665 = vcombine.low %v656, %v664
        %v666 = vcombine.high %v656, %v664
        %v668 = vunpack.c.l.s4 1934713408
        %v669 = vunpack.c.0.s8 %v668
        %v670 = vlaneseq
        %v671 = vshrl.u32 %v670, 7
        %v672 = vsub.s32 %v669, %v671
        %v673 = vrot.slane %v665, %v672
        %v675 = vunpack.c.l.s4 1934713408
        %v676 = vunpack.c.0.s8 %v675
        %v677 = vlaneseq
        %v678 = vshrl.u32 %v677, 7
        %v679 = vsub.s32 %v676, %v678
        %v680 = vrot.slane %v666, %v679
        %v681 = vcombine.high %v673, 0
        %v682 = vcombine.high %v680, 0
        %v685 = vunpack.c.l.s4 1983009808
        %v686 = vunpack.c.0.s8 %v685
        %v687 = vlaneseq
        %v688 = vshrl.u32 %v687, 7
        %v689 = vsub.s32 %v686, %v688
        %v690 = vrot.slane %v642, %v689
        %v693 = vunpack.c.l.s4 1983009808
        %v694 = vunpack.c.0.s8 %v693
        %v695 = vlaneseq
        %v696 = vshrl.u32 %v695, 7
        %v697 = vsub.s32 %v694, %v696
        %v698 = vrot.slane %v648, %v697
        %v699 = vcombine.low %v690, %v698
        %v700 = vcombine.high %v690, %v698
        %v702 = vunpack.c.l.s4 1934713408
        %v703 = vunpack.c.0.s8 %v702
        %v704 = vlaneseq
        %v705 = vshrl.u32 %v704, 7
        %v706 = vsub.s32 %v703, %v705
        %v707 = vrot.slane %v699, %v706
        %v709 = vunpack.c.l.s4 1934713408
        %v710 = vunpack.c.0.s8 %v709
        %v711 = vlaneseq
        %v712 = vshrl.u32 %v711, 7
        %v713 = vsub.s32 %v710, %v712
        %v714 = vrot.slane %v700, %v713
        %v715 = vcombine.high %v707, 0
        %v716 = vcombine.high %v714, 0
        %v717 = vld [vmem:[%s452] sm:$0xf]
        %719 = vrot.lane.b32.xlu0 %v717, 120
        %v720 = vpop.permute.xlu0 %719
        %721 = vrot.lane.b32.xlu0 %v717, 112
        %v722 = vpop.permute.xlu0 %721
        %723 = vrot.lane.b32.xlu0 %v717, 104
        %v724 = vpop.permute.xlu0 %723
        %v727 = vpack.i.b16 %v720, %v717
        %v728 = vshrl.u32 %v717, 16
        %v729 = vshrl.u32 %v720, 16
        %v730 = vpack.i.b16 %v729, %v728
        %v733 = vpack.i.b16 %v724, %v722
        %v734 = vshrl.u32 %v722, 16
        %v735 = vshrl.u32 %v724, 16
        %v736 = vpack.i.b16 %v735, %v734
        %v739 = vunpack.c.l.s4 1983009808
        %v740 = vunpack.c.0.s8 %v739
        %v741 = vlaneseq
        %v742 = vshrl.u32 %v741, 7
        %v743 = vsub.s32 %v740, %v742
        %v744 = vrot.slane %v727, %v743
        %v747 = vunpack.c.l.s4 1983009808
        %v748 = vunpack.c.0.s8 %v747
        %v749 = vlaneseq
        %v750 = vshrl.u32 %v749, 7
        %v751 = vsub.s32 %v748, %v750
        %v752 = vrot.slane %v733, %v751
        %v753 = vcombine.low %v744, %v752
        %v754 = vcombine.high %v744, %v752
        %v756 = vunpack.c.l.s4 1934713408
        %v757 = vunpack.c.0.s8 %v756
        %v758 = vlaneseq
        %v759 = vshrl.u32 %v758, 7
        %v760 = vsub.s32 %v757, %v759
        %v761 = vrot.slane %v753, %v760
        %v763 = vunpack.c.l.s4 1934713408
        %v764 = vunpack.c.0.s8 %v763
        %v765 = vlaneseq
        %v766 = vshrl.u32 %v765, 7
        %v767 = vsub.s32 %v764, %v766
        %v768 = vrot.slane %v754, %v767
        %v769 = vcombine.high %v761, 0
        %v770 = vcombine.high %v768, 0
        %v773 = vunpack.c.l.s4 1983009808
        %v774 = vunpack.c.0.s8 %v773
        %v775 = vlaneseq
        %v776 = vshrl.u32 %v775, 7
        %v777 = vsub.s32 %v774, %v776
        %v778 = vrot.slane %v730, %v777
        %v781 = vunpack.c.l.s4 1983009808
        %v782 = vunpack.c.0.s8 %v781
        %v783 = vlaneseq
        %v784 = vshrl.u32 %v783, 7
        %v785 = vsub.s32 %v782, %v784
        %v786 = vrot.slane %v736, %v785
        %v787 = vcombine.low %v778, %v786
        %v788 = vcombine.high %v778, %v786
        %v790 = vunpack.c.l.s4 1934713408
        %v791 = vunpack.c.0.s8 %v790
        %v792 = vlaneseq
        %v793 = vshrl.u32 %v792, 7
        %v794 = vsub.s32 %v791, %v793
        %v795 = vrot.slane %v787, %v794
        %v797 = vunpack.c.l.s4 1934713408
        %v798 = vunpack.c.0.s8 %v797
        %v799 = vlaneseq
        %v800 = vshrl.u32 %v799, 7
        %v801 = vsub.s32 %v798, %v800
        %v802 = vrot.slane %v788, %v801
        %v803 = vcombine.high %v795, 0
        %v804 = vcombine.high %v802, 0
        %v805 = vcombine.low %v585, %v592
        %v807 = vunpack.c.l.s4 1983009808
        %v808 = vunpack.c.0.s8 %v807
        %v809 = vlaneseq
        %v810 = vshrl.u32 %v809, 7
        %v811 = vsub.s32 %v808, %v810
        %v812 = vrot.slane %v805, %v811
        %v813 = vcombine.low %v593, %v594
        %v815 = vunpack.c.l.s4 1983009808
        %v816 = vunpack.c.0.s8 %v815
        %v817 = vlaneseq
        %v818 = vshrl.u32 %v817, 7
        %v819 = vsub.s32 %v816, %v818
        %v820 = vrot.slane %v813, %v819
        %v821 = vcombine.low %v812, %v820
        %v823 = vunpack.c.l.s4 1934713408
        %v824 = vunpack.c.0.s8 %v823
        %v825 = vlaneseq
        %v826 = vshrl.u32 %v825, 7
        %v827 = vsub.s32 %v824, %v826
        %v828 = vrot.slane %v821, %v827
        %v829 = vcombine.high %v828, 0
        %v830 = vcombine.low %v619, %v626
        %v832 = vunpack.c.l.s4 1983009808
        %v833 = vunpack.c.0.s8 %v832
        %v834 = vlaneseq
        %v835 = vshrl.u32 %v834, 7
        %v836 = vsub.s32 %v833, %v835
        %v837 = vrot.slane %v830, %v836
        %v838 = vcombine.low %v627, %v628
        %v840 = vunpack.c.l.s4 1983009808
        %v841 = vunpack.c.0.s8 %v840
        %v842 = vlaneseq
        %v843 = vshrl.u32 %v842, 7
        %v844 = vsub.s32 %v841, %v843
        %v845 = vrot.slane %v838, %v844
        %v846 = vcombine.low %v837, %v845
        %v848 = vunpack.c.l.s4 1934713408
        %v849 = vunpack.c.0.s8 %v848
        %v850 = vlaneseq
        %v851 = vshrl.u32 %v850, 7
        %v852 = vsub.s32 %v849, %v851
        %v853 = vrot.slane %v846, %v852
        %v854 = vcombine.high %v853, 0
        %v857 = vpack.i.b16 %v853, %v828
        %v858 = vshrl.u32 %v828, 16
        %v859 = vshrl.u32 %v853, 16
        %v860 = vpack.i.b16 %v859, %v858
        %v863 = vpack.i.b16 %v854, %v829
        %v864 = vshrl.u32 %v829, 16
        %v865 = vshrl.u32 %v854, 16
        %v866 = vpack.i.b16 %v865, %v864
        %867 = vxpose.xlu0.c.b16.start [1/8] %v673, 128
        %868 = vxpose.xlu0.c.b16.cont [2/8] 0, 128
        %869 = vxpose.xlu0.c.b16.cont [3/8] 0, 128
        %870 = vxpose.xlu0.c.b16.cont [4/8] 0, 128
        %871 = vxpose.xlu0.c.b16.cont [5/8] 0, 128
        %872 = vxpose.xlu0.c.b16.cont [6/8] 0, 128
        %873 = vxpose.xlu0.c.b16.cont [7/8] 0, 128
        %874 = vxpose.xlu0.c.b16.end [8/8] 0, 128
        %v875 = vpop.trf.xlu0
        %v876 = vpop.trf.xlu0
        %v877 = vpop.trf.xlu0
        %v878 = vpop.trf.xlu0
        %v879 = vpop.trf.xlu0
        %v880 = vpop.trf.xlu0
        %v881 = vpop.trf.xlu0
        %v882 = vpop.trf.xlu0
        %883 = vxpose.xlu0.c.b16.start [1/8] %v707, 128
        %884 = vxpose.xlu0.c.b16.cont [2/8] 0, 128
        %885 = vxpose.xlu0.c.b16.cont [3/8] 0, 128
        %886 = vxpose.xlu0.c.b16.cont [4/8] 0, 128
        %887 = vxpose.xlu0.c.b16.cont [5/8] 0, 128
        %888 = vxpose.xlu0.c.b16.cont [6/8] 0, 128
        %889 = vxpose.xlu0.c.b16.cont [7/8] 0, 128
        %890 = vxpose.xlu0.c.b16.end [8/8] 0, 128
        %v891 = vpop.trf.xlu0
        %v892 = vpop.trf.xlu0
        %v893 = vpop.trf.xlu0
        %v894 = vpop.trf.xlu0
        %v895 = vpop.trf.xlu0
        %v896 = vpop.trf.xlu0
        %v897 = vpop.trf.xlu0
        %v898 = vpop.trf.xlu0
        %899 = vxpose.xlu0.c.b16.start [1/8] %v681, 128
        %900 = vxpose.xlu0.c.b16.cont [2/8] 0, 128
        %901 = vxpose.xlu0.c.b16.cont [3/8] 0, 128
        %902 = vxpose.xlu0.c.b16.cont [4/8] 0, 128
        %903 = vxpose.xlu0.c.b16.cont [5/8] 0, 128
        %904 = vxpose.xlu0.c.b16.cont [6/8] 0, 128
        %905 = vxpose.xlu0.c.b16.cont [7/8] 0, 128
        %906 = vxpose.xlu0.c.b16.end [8/8] 0, 128
        %v907 = vpop.trf.xlu0
        %v908 = vpop.trf.xlu0
        %v909 = vpop.trf.xlu0
        %v910 = vpop.trf.xlu0
        %v911 = vpop.trf.xlu0
        %v912 = vpop.trf.xlu0
        %v913 = vpop.trf.xlu0
        %v914 = vpop.trf.xlu0
        %915 = vxpose.xlu0.c.b16.start [1/8] %v715, 128
        %916 = vxpose.xlu0.c.b16.cont [2/8] 0, 128
        %917 = vxpose.xlu0.c.b16.cont [3/8] 0, 128
        %918 = vxpose.xlu0.c.b16.cont [4/8] 0, 128
        %919 = vxpose.xlu0.c.b16.cont [5/8] 0, 128
        %920 = vxpose.xlu0.c.b16.cont [6/8] 0, 128
        %921 = vxpose.xlu0.c.b16.cont [7/8] 0, 128
        %922 = vxpose.xlu0.c.b16.end [8/8] 0, 128
        %v923 = vpop.trf.xlu0
        %v924 = vpop.trf.xlu0
        %v925 = vpop.trf.xlu0
        %v926 = vpop.trf.xlu0
        %v927 = vpop.trf.xlu0
        %v928 = vpop.trf.xlu0
        %v929 = vpop.trf.xlu0
        %v930 = vpop.trf.xlu0
        %931 = vxpose.xlu0.c.b16.start [1/8] %v680, 128
        %932 = vxpose.xlu0.c.b16.cont [2/8] 0, 128
        %933 = vxpose.xlu0.c.b16.cont [3/8] 0, 128
        %934 = vxpose.xlu0.c.b16.cont [4/8] 0, 128
        %935 = vxpose.xlu0.c.b16.cont [5/8] 0, 128
        %936 = vxpose.xlu0.c.b16.cont [6/8] 0, 128
        %937 = vxpose.xlu0.c.b16.cont [7/8] 0, 128
        %938 = vxpose.xlu0.c.b16.end [8/8] 0, 128
        %v939 = vpop.trf.xlu0
        %v940 = vpop.trf.xlu0
        %v941 = vpop.trf.xlu0
        %v942 = vpop.trf.xlu0
        %v943 = vpop.trf.xlu0
        %v944 = vpop.trf.xlu0
        %v945 = vpop.trf.xlu0
        %v946 = vpop.trf.xlu0
        %947 = vxpose.xlu0.c.b16.start [1/8] %v714, 128
        %948 = vxpose.xlu0.c.b16.cont [2/8] 0, 128
        %949 = vxpose.xlu0.c.b16.cont [3/8] 0, 128
        %950 = vxpose.xlu0.c.b16.cont [4/8] 0, 128
        %951 = vxpose.xlu0.c.b16.cont [5/8] 0, 128
        %952 = vxpose.xlu0.c.b16.cont [6/8] 0, 128
        %953 = vxpose.xlu0.c.b16.cont [7/8] 0, 128
        %954 = vxpose.xlu0.c.b16.end [8/8] 0, 128
        %v955 = vpop.trf.xlu0
        %v956 = vpop.trf.xlu0
        %v957 = vpop.trf.xlu0
        %v958 = vpop.trf.xlu0
        %v959 = vpop.trf.xlu0
        %v960 = vpop.trf.xlu0
        %v961 = vpop.trf.xlu0
        %v962 = vpop.trf.xlu0
        %963 = vxpose.xlu0.c.b16.start [1/8] %v682, 128
        %964 = vxpose.xlu0.c.b16.cont [2/8] 0, 128
        %965 = vxpose.xlu0.c.b16.cont [3/8] 0, 128
        %966 = vxpose.xlu0.c.b16.cont [4/8] 0, 128
        %967 = vxpose.xlu0.c.b16.cont [5/8] 0, 128
        %968 = vxpose.xlu0.c.b16.cont [6/8] 0, 128
        %969 = vxpose.xlu0.c.b16.cont [7/8] 0, 128
        %970 = vxpose.xlu0.c.b16.end [8/8] 0, 128
        %v971 = vpop.trf.xlu0
        %v972 = vpop.trf.xlu0
        %v973 = vpop.trf.xlu0
        %v974 = vpop.trf.xlu0
        %v975 = vpop.trf.xlu0
        %v976 = vpop.trf.xlu0
        %v977 = vpop.trf.xlu0
        %v978 = vpop.trf.xlu0
        %979 = vxpose.xlu0.c.b16.start [1/8] %v716, 128
        %980 = vxpose.xlu0.c.b16.cont [2/8] 0, 128
        %981 = vxpose.xlu0.c.b16.cont [3/8] 0, 128
        %982 = vxpose.xlu0.c.b16.cont [4/8] 0, 128
        %983 = vxpose.xlu0.c.b16.cont [5/8] 0, 128
        %984 = vxpose.xlu0.c.b16.cont [6/8] 0, 128
        %985 = vxpose.xlu0.c.b16.cont [7/8] 0, 128
        %986 = vxpose.xlu0.c.b16.end [8/8] 0, 128
        %v987 = vpop.trf.xlu0
        %v988 = vpop.trf.xlu0
        %v989 = vpop.trf.xlu0
        %v990 = vpop.trf.xlu0
        %v991 = vpop.trf.xlu0
        %v992 = vpop.trf.xlu0
        %v993 = vpop.trf.xlu0
        %v994 = vpop.trf.xlu0
        %v995 = vcombine.low %v875, %v939
        %v997 = vunpack.c.l.s4 1983009808
        %v998 = vunpack.c.0.s8 %v997
        %v999 = vlaneseq
        %v1000 = vshrl.u32 %v999, 7
        %v1001 = vsub.s32 %v998, %v1000
        %v1002 = vrot.slane %v995, %v1001
        %v1003 = vcombine.low %v907, %v971
        %v1005 = vunpack.c.l.s4 1983009808
        %v1006 = vunpack.c.0.s8 %v1005
        %v1007 = vlaneseq
        %v1008 = vshrl.u32 %v1007, 7
        %v1009 = vsub.s32 %v1006, %v1008
        %v1010 = vrot.slane %v1003, %v1009
        %v1011 = vcombine.low %v1002, %v1010
        %v1012 = vcombine.high %v1002, %v1010
        %v1014 = vunpack.c.l.s4 1934713408
        %v1015 = vunpack.c.0.s8 %v1014
        %v1016 = vlaneseq
        %v1017 = vshrl.u32 %v1016, 7
        %v1018 = vsub.s32 %v1015, %v1017
        %v1019 = vrot.slane %v1011, %v1018
        %v1021 = vunpack.c.l.s4 1934713408
        %v1022 = vunpack.c.0.s8 %v1021
        %v1023 = vlaneseq
        %v1024 = vshrl.u32 %v1023, 7
        %v1025 = vsub.s32 %v1022, %v1024
        %v1026 = vrot.slane %v1012, %v1025
        %v1027 = vcombine.high %v1019, 0
        %v1028 = vcombine.high %v1026, 0
        %v1029 = vcombine.low %v891, %v955
        %v1031 = vunpack.c.l.s4 1983009808
        %v1032 = vunpack.c.0.s8 %v1031
        %v1033 = vlaneseq
        %v1034 = vshrl.u32 %v1033, 7
        %v1035 = vsub.s32 %v1032, %v1034
        %v1036 = vrot.slane %v1029, %v1035
        %v1037 = vcombine.low %v923, %v987
        %v1039 = vunpack.c.l.s4 1983009808
        %v1040 = vunpack.c.0.s8 %v1039
        %v1041 = vlaneseq
        %v1042 = vshrl.u32 %v1041, 7
        %v1043 = vsub.s32 %v1040, %v1042
        %v1044 = vrot.slane %v1037, %v1043
        %v1045 = vcombine.low %v1036, %v1044
        %v1046 = vcombine.high %v1036, %v1044
        %v1048 = vunpack.c.l.s4 1934713408
        %v1049 = vunpack.c.0.s8 %v1048
        %v1050 = vlaneseq
        %v1051 = vshrl.u32 %v1050, 7
        %v1052 = vsub.s32 %v1049, %v1051
        %v1053 = vrot.slane %v1045, %v1052
        %v1055 = vunpack.c.l.s4 1934713408
        %v1056 = vunpack.c.0.s8 %v1055
        %v1057 = vlaneseq
        %v1058 = vshrl.u32 %v1057, 7
        %v1059 = vsub.s32 %v1056, %v1058
        %v1060 = vrot.slane %v1046, %v1059
        %v1061 = vcombine.high %v1053, 0
        %v1062 = vcombine.high %v1060, 0
        %v1065 = vpack.i.b16 %v1053, %v1019
        %v1067 = vshrl.u32 %v1019, 16
        %v1068 = vshrl.u32 %v1053, 16
        %v1069 = vpack.i.b16 %v1068, %v1067
        %v1073 = vpack.i.b16 %v1061, %v1027
        %v1075 = vshrl.u32 %v1027, 16
        %v1076 = vshrl.u32 %v1061, 16
        %v1077 = vpack.i.b16 %v1076, %v1075
        %v1081 = vpack.i.b16 %v1060, %v1026
        %v1083 = vshrl.u32 %v1026, 16
        %v1084 = vshrl.u32 %v1060, 16
        %v1085 = vpack.i.b16 %v1084, %v1083
        %v1089 = vpack.i.b16 %v1062, %v1028
        %v1091 = vshrl.u32 %v1028, 16
        %v1092 = vshrl.u32 %v1062, 16
        %v1093 = vpack.i.b16 %v1092, %v1091
        %1095 = vxpose.xlu0.c.b16.start [1/8] %v1065, 128
        %1096 = vxpose.xlu0.c.b16.cont [2/8] 0, 128
        %1097 = vxpose.xlu0.c.b16.cont [3/8] 0, 128
        %1098 = vxpose.xlu0.c.b16.cont [4/8] 0, 128
        %1099 = vxpose.xlu0.c.b16.cont [5/8] 0, 128
        %1100 = vxpose.xlu0.c.b16.cont [6/8] 0, 128
        %1101 = vxpose.xlu0.c.b16.cont [7/8] 0, 128
        %1102 = vxpose.xlu0.c.b16.end [8/8] 0, 128
        %v1103 = vpop.trf.xlu0
        %v1104 = vpop.trf.xlu0
        %v1105 = vpop.trf.xlu0
        %v1106 = vpop.trf.xlu0
        %v1107 = vpop.trf.xlu0
        %v1108 = vpop.trf.xlu0
        %v1109 = vpop.trf.xlu0
        %v1110 = vpop.trf.xlu0
        %1111 = vxpose.xlu0.c.b16.start [1/8] %v1069, 128
        %1112 = vxpose.xlu0.c.b16.cont [2/8] 0, 128
        %1113 = vxpose.xlu0.c.b16.cont [3/8] 0, 128
        %1114 = vxpose.xlu0.c.b16.cont [4/8] 0, 128
        %1115 = vxpose.xlu0.c.b16.cont [5/8] 0, 128
        %1116 = vxpose.xlu0.c.b16.cont [6/8] 0, 128
        %1117 = vxpose.xlu0.c.b16.cont [7/8] 0, 128
        %1118 = vxpose.xlu0.c.b16.end [8/8] 0, 128
        %v1119 = vpop.trf.xlu0
        %v1120 = vpop.trf.xlu0
        %v1121 = vpop.trf.xlu0
        %v1122 = vpop.trf.xlu0
        %v1123 = vpop.trf.xlu0
        %v1124 = vpop.trf.xlu0
        %v1125 = vpop.trf.xlu0
        %v1126 = vpop.trf.xlu0
        %1127 = vxpose.xlu0.c.b16.start [1/8] %v1073, 128
        %1128 = vxpose.xlu0.c.b16.cont [2/8] 0, 128
        %1129 = vxpose.xlu0.c.b16.cont [3/8] 0, 128
        %1130 = vxpose.xlu0.c.b16.cont [4/8] 0, 128
        %1131 = vxpose.xlu0.c.b16.cont [5/8] 0, 128
        %1132 = vxpose.xlu0.c.b16.cont [6/8] 0, 128
        %1133 = vxpose.xlu0.c.b16.cont [7/8] 0, 128
        %1134 = vxpose.xlu0.c.b16.end [8/8] 0, 128
        %v1135 = vpop.trf.xlu0
        %v1136 = vpop.trf.xlu0
        %v1137 = vpop.trf.xlu0
        %v1138 = vpop.trf.xlu0
        %v1139 = vpop.trf.xlu0
        %v1140 = vpop.trf.xlu0
        %v1141 = vpop.trf.xlu0
        %v1142 = vpop.trf.xlu0
        %1143 = vxpose.xlu0.c.b16.start [1/8] %v1077, 128
        %1144 = vxpose.xlu0.c.b16.cont [2/8] 0, 128
        %1145 = vxpose.xlu0.c.b16.cont [3/8] 0, 128
        %1146 = vxpose.xlu0.c.b16.cont [4/8] 0, 128
        %1147 = vxpose.xlu0.c.b16.cont [5/8] 0, 128
        %1148 = vxpose.xlu0.c.b16.cont [6/8] 0, 128
        %1149 = vxpose.xlu0.c.b16.cont [7/8] 0, 128
        %1150 = vxpose.xlu0.c.b16.end [8/8] 0, 128
        %v1151 = vpop.trf.xlu0
        %v1152 = vpop.trf.xlu0
        %v1153 = vpop.trf.xlu0
        %v1154 = vpop.trf.xlu0
        %v1155 = vpop.trf.xlu0
        %v1156 = vpop.trf.xlu0
        %v1157 = vpop.trf.xlu0
        %v1158 = vpop.trf.xlu0
        %1159 = vxpose.xlu0.c.b16.start [1/8] %v1081, 128
        %1160 = vxpose.xlu0.c.b16.cont [2/8] 0, 128
        %1161 = vxpose.xlu0.c.b16.cont [3/8] 0, 128
        %1162 = vxpose.xlu0.c.b16.cont [4/8] 0, 128
        %1163 = vxpose.xlu0.c.b16.cont [5/8] 0, 128
        %1164 = vxpose.xlu0.c.b16.cont [6/8] 0, 128
        %1165 = vxpose.xlu0.c.b16.cont [7/8] 0, 128
        %1166 = vxpose.xlu0.c.b16.end [8/8] 0, 128
        %v1167 = vpop.trf.xlu0
        %v1168 = vpop.trf.xlu0
        %v1169 = vpop.trf.xlu0
        %v1170 = vpop.trf.xlu0
        %v1171 = vpop.trf.xlu0
        %v1172 = vpop.trf.xlu0
        %v1173 = vpop.trf.xlu0
        %v1174 = vpop.trf.xlu0
        %1175 = vxpose.xlu0.c.b16.start [1/8] %v1085, 128
        %1176 = vxpose.xlu0.c.b16.cont [2/8] 0, 128
        %1177 = vxpose.xlu0.c.b16.cont [3/8] 0, 128
        %1178 = vxpose.xlu0.c.b16.cont [4/8] 0, 128
        %1179 = vxpose.xlu0.c.b16.cont [5/8] 0, 128
        %1180 = vxpose.xlu0.c.b16.cont [6/8] 0, 128
        %1181 = vxpose.xlu0.c.b16.cont [7/8] 0, 128
        %1182 = vxpose.xlu0.c.b16.end [8/8] 0, 128
        %v1183 = vpop.trf.xlu0
        %v1184 = vpop.trf.xlu0
        %v1185 = vpop.trf.xlu0
        %v1186 = vpop.trf.xlu0
        %v1187 = vpop.trf.xlu0
        %v1188 = vpop.trf.xlu0
        %v1189 = vpop.trf.xlu0
        %v1190 = vpop.trf.xlu0
        %1191 = vxpose.xlu0.c.b16.start [1/8] %v1089, 128
        %1192 = vxpose.xlu0.c.b16.cont [2/8] 0, 128
        %1193 = vxpose.xlu0.c.b16.cont [3/8] 0, 128
        %1194 = vxpose.xlu0.c.b16.cont [4/8] 0, 128
        %1195 = vxpose.xlu0.c.b16.cont [5/8] 0, 128
        %1196 = vxpose.xlu0.c.b16.cont [6/8] 0, 128
        %1197 = vxpose.xlu0.c.b16.cont [7/8] 0, 128
        %1198 = vxpose.xlu0.c.b16.end [8/8] 0, 128
        %v1199 = vpop.trf.xlu0
        %v1200 = vpop.trf.xlu0
        %v1201 = vpop.trf.xlu0
        %v1202 = vpop.trf.xlu0
        %v1203 = vpop.trf.xlu0
        %v1204 = vpop.trf.xlu0
        %v1205 = vpop.trf.xlu0
        %v1206 = vpop.trf.xlu0
        %1207 = vxpose.xlu0.c.b16.start [1/8] %v1093, 128
        %1208 = vxpose.xlu0.c.b16.cont [2/8] 0, 128
        %1209 = vxpose.xlu0.c.b16.cont [3/8] 0, 128
        %1210 = vxpose.xlu0.c.b16.cont [4/8] 0, 128
        %1211 = vxpose.xlu0.c.b16.cont [5/8] 0, 128
        %1212 = vxpose.xlu0.c.b16.cont [6/8] 0, 128
        %1213 = vxpose.xlu0.c.b16.cont [7/8] 0, 128
        %1214 = vxpose.xlu0.c.b16.end [8/8] 0, 128
        %v1215 = vpop.trf.xlu0
        %v1216 = vpop.trf.xlu0
        %v1217 = vpop.trf.xlu0
        %v1218 = vpop.trf.xlu0
        %v1219 = vpop.trf.xlu0
        %v1220 = vpop.trf.xlu0
        %v1221 = vpop.trf.xlu0
        %v1222 = vpop.trf.xlu0
        %v1223 = vcombine.low %v1103, %v1167
        %v1225 = vunpack.c.l.s4 1983009808
        %v1226 = vunpack.c.0.s8 %v1225
        %v1227 = vlaneseq
        %v1228 = vshrl.u32 %v1227, 7
        %v1229 = vsub.s32 %v1226, %v1228
        %v1230 = vrot.slane %v1223, %v1229
        %v1231 = vcombine.low %v1135, %v1199
        %v1233 = vunpack.c.l.s4 1983009808
        %v1234 = vunpack.c.0.s8 %v1233
        %v1235 = vlaneseq
        %v1236 = vshrl.u32 %v1235, 7
        %v1237 = vsub.s32 %v1234, %v1236
        %v1238 = vrot.slane %v1231, %v1237
        %v1239 = vcombine.low %v1230, %v1238
        %v1241 = vunpack.c.l.s4 1934713408
        %v1242 = vunpack.c.0.s8 %v1241
        %v1243 = vlaneseq
        %v1244 = vshrl.u32 %v1243, 7
        %v1245 = vsub.s32 %v1242, %v1244
        %v1246 = vrot.slane %v1239, %v1245
        %v1247 = vcombine.high %v1246, 0
        %v1248 = vcombine.low %v1119, %v1183
        %v1250 = vunpack.c.l.s4 1983009808
        %v1251 = vunpack.c.0.s8 %v1250
        %v1252 = vlaneseq
        %v1253 = vshrl.u32 %v1252, 7
        %v1254 = vsub.s32 %v1251, %v1253
        %v1255 = vrot.slane %v1248, %v1254
        %v1256 = vcombine.low %v1151, %v1215
        %v1258 = vunpack.c.l.s4 1983009808
        %v1259 = vunpack.c.0.s8 %v1258
        %v1260 = vlaneseq
        %v1261 = vshrl.u32 %v1260, 7
        %v1262 = vsub.s32 %v1259, %v1261
        %v1263 = vrot.slane %v1256, %v1262
        %v1264 = vcombine.low %v1255, %v1263
        %v1266 = vunpack.c.l.s4 1934713408
        %v1267 = vunpack.c.0.s8 %v1266
        %v1268 = vlaneseq
        %v1269 = vshrl.u32 %v1268, 7
        %v1270 = vsub.s32 %v1267, %v1269
        %v1271 = vrot.slane %v1264, %v1270
        %v1272 = vcombine.high %v1271, 0
        %v1275 = vpack.i.b16 %v1271, %v1246
        %v1276 = vshrl.u32 %v1246, 16
        %v1277 = vshrl.u32 %v1271, 16
        %v1278 = vpack.i.b16 %v1277, %v1276
        %v1281 = vpack.i.b16 %v1272, %v1247
        %v1282 = vshrl.u32 %v1247, 16
        %v1283 = vshrl.u32 %v1272, 16
        %v1284 = vpack.i.b16 %v1283, %v1282
        %vm1285 = vcmask 64512
        %v1287 = vsel %vm1285, %v857, 0
        %vm1289 = vcmask 1043456
        %v1291 = vsel %vm1289, %v1275, 0
        %1293 = vmatprep.subr.bf16.mxu0 0
        %1294 = vmatpush1.bf16.msra.mxu0 %v1291
        %1295 = vmatprep.subr.bf16.mxu0 0
        %1296 = vmatpush1.bf16.msra.mxu0 0
        %1297 = vmatprep.subr.bf16.mxu0 0
        %1298 = vmatpush1.bf16.msra.mxu0 0
        %1299 = vmatprep.subr.bf16.mxu0 0
        %1300 = vmatpush1.bf16.msra.mxu0 0
        %1301 = vmatprep.subr.bf16.mxu0 0
        %1302 = vmatpush1.bf16.msra.mxu0 0
        %1303 = vmatprep.subr.bf16.mxu0 0
        %1304 = vmatpush1.bf16.msra.mxu0 0
        %1305 = vmatprep.subr.bf16.mxu0 0
        %1306 = vmatpush1.bf16.msra.mxu0 0
        %1307 = vmatprep.subr.bf16.mxu0 0
        %1308 = vmatpush1.bf16.msra.mxu0 0
        %1309 = vmatprep.subr.bf16.mxu0 0
        %1310 = vmatpush1.bf16.msra.mxu0 0
        %1311 = vmatprep.subr.bf16.mxu0 0
        %1312 = vmatpush1.bf16.msra.mxu0 0
        %1313 = vmatprep.subr.bf16.mxu0 0
        %1314 = vmatpush1.bf16.msra.mxu0 0
        %1315 = vmatprep.subr.bf16.mxu0 0
        %1316 = vmatpush1.bf16.msra.mxu0 0
        %1317 = vmatprep.subr.bf16.mxu0 0
        %1318 = vmatpush1.bf16.msra.mxu0 0
        %1319 = vmatprep.subr.bf16.mxu0 0
        %1320 = vmatpush1.bf16.msra.mxu0 0
        %1321 = vmatprep.subr.bf16.mxu0 0
        %1322 = vmatpush1.bf16.msra.mxu0 0
        %1323 = vmatprep.subr.bf16.mxu0 0
        %1324 = vmatpush1.bf16.msra.mxu0 0
        %1325 = vmatprep.mubr.bf16.mxu0 0
        %1326 = vmatmul.mubr.bf16.gmra.mrb[0].mxu0 %v1287
        %v1327 = vpop.f32.mrb[0].mxu0
        %v1328 = vadd.f32 0.0, %v1327
        %v1329 = vpop.f32.mrb[0].mxu0
        %v1330 = vpop.f32.mrb[0].mxu0
        %v1331 = vpop.f32.mrb[0].mxu0
        %1332 = vdwg.mxu0
        %v1334 = vsel %vm1285, %v860, 0
        %v1337 = vsel %vm1289, %v1278, 0
        %1339 = vmatprep.subr.bf16.mxu0 0
        %1340 = vmatpush1.bf16.msra.mxu0 %v1337
        %1341 = vmatprep.subr.bf16.mxu0 0
        %1342 = vmatpush1.bf16.msra.mxu0 0
        %1343 = vmatprep.subr.bf16.mxu0 0
        %1344 = vmatpush1.bf16.msra.mxu0 0
        %1345 = vmatprep.subr.bf16.mxu0 0
        %1346 = vmatpush1.bf16.msra.mxu0 0
        %1347 = vmatprep.subr.bf16.mxu0 0
        %1348 = vmatpush1.bf16.msra.mxu0 0
        %1349 = vmatprep.subr.bf16.mxu0 0
        %1350 = vmatpush1.bf16.msra.mxu0 0
        %1351 = vmatprep.subr.bf16.mxu0 0
        %1352 = vmatpush1.bf16.msra.mxu0 0
        %1353 = vmatprep.subr.bf16.mxu0 0
        %1354 = vmatpush1.bf16.msra.mxu0 0
        %1355 = vmatprep.subr.bf16.mxu0 0
        %1356 = vmatpush1.bf16.msra.mxu0 0
        %1357 = vmatprep.subr.bf16.mxu0 0
        %1358 = vmatpush1.bf16.msra.mxu0 0
        %1359 = vmatprep.subr.bf16.mxu0 0
        %1360 = vmatpush1.bf16.msra.mxu0 0
        %1361 = vmatprep.subr.bf16.mxu0 0
        %1362 = vmatpush1.bf16.msra.mxu0 0
        %1363 = vmatprep.subr.bf16.mxu0 0
        %1364 = vmatpush1.bf16.msra.mxu0 0
        %1365 = vmatprep.subr.bf16.mxu0 0
        %1366 = vmatpush1.bf16.msra.mxu0 0
        %1367 = vmatprep.subr.bf16.mxu0 0
        %1368 = vmatpush1.bf16.msra.mxu0 0
        %1369 = vmatprep.subr.bf16.mxu0 0
        %1370 = vmatpush1.bf16.msra.mxu0 0
        %1371 = vmatprep.mubr.bf16.mxu0 0
        %1372 = vmatmul.mubr.bf16.gmra.mrb[0].mxu0 %v1334
        %v1373 = vpop.f32.mrb[0].mxu0
        %v1374 = vadd.f32 0.0, %v1373
        %v1375 = vpop.f32.mrb[0].mxu0
        %v1376 = vpop.f32.mrb[0].mxu0
        %v1377 = vpop.f32.mrb[0].mxu0
        %1378 = vdwg.mxu0
        %v1380 = vsel %vm1285, %v863, 0
        %v1383 = vsel %vm1289, %v1281, 0
        %1385 = vmatprep.subr.bf16.mxu0 0
        %1386 = vmatpush1.bf16.msra.mxu0 %v1383
        %1387 = vmatprep.subr.bf16.mxu0 0
        %1388 = vmatpush1.bf16.msra.mxu0 0
        %1389 = vmatprep.subr.bf16.mxu0 0
        %1390 = vmatpush1.bf16.msra.mxu0 0
        %1391 = vmatprep.subr.bf16.mxu0 0
        %1392 = vmatpush1.bf16.msra.mxu0 0
        %1393 = vmatprep.subr.bf16.mxu0 0
        %1394 = vmatpush1.bf16.msra.mxu0 0
        %1395 = vmatprep.subr.bf16.mxu0 0
        %1396 = vmatpush1.bf16.msra.mxu0 0
        %1397 = vmatprep.subr.bf16.mxu0 0
        %1398 = vmatpush1.bf16.msra.mxu0 0
        %1399 = vmatprep.subr.bf16.mxu0 0
        %1400 = vmatpush1.bf16.msra.mxu0 0
        %1401 = vmatprep.subr.bf16.mxu0 0
        %1402 = vmatpush1.bf16.msra.mxu0 0
        %1403 = vmatprep.subr.bf16.mxu0 0
        %1404 = vmatpush1.bf16.msra.mxu0 0
        %1405 = vmatprep.subr.bf16.mxu0 0
        %1406 = vmatpush1.bf16.msra.mxu0 0
        %1407 = vmatprep.subr.bf16.mxu0 0
        %1408 = vmatpush1.bf16.msra.mxu0 0
        %1409 = vmatprep.subr.bf16.mxu0 0
        %1410 = vmatpush1.bf16.msra.mxu0 0
        %1411 = vmatprep.subr.bf16.mxu0 0
        %1412 = vmatpush1.bf16.msra.mxu0 0
        %1413 = vmatprep.subr.bf16.mxu0 0
        %1414 = vmatpush1.bf16.msra.mxu0 0
        %1415 = vmatprep.subr.bf16.mxu0 0
        %1416 = vmatpush1.bf16.msra.mxu0 0
        %1417 = vmatprep.mubr.bf16.mxu0 0
        %1418 = vmatmul.mubr.bf16.gmra.mrb[0].mxu0 %v1380
        %v1419 = vpop.f32.mrb[0].mxu0
        %v1420 = vadd.f32 0.0, %v1419
        %v1421 = vpop.f32.mrb[0].mxu0
        %v1422 = vpop.f32.mrb[0].mxu0
        %v1423 = vpop.f32.mrb[0].mxu0
        %1424 = vdwg.mxu0
        %v1426 = vsel %vm1285, %v866, 0
        %v1429 = vsel %vm1289, %v1284, 0
        %1431 = vmatprep.subr.bf16.mxu0 0
        %1432 = vmatpush1.bf16.msra.mxu0 %v1429
        %1433 = vmatprep.subr.bf16.mxu0 0
        %1434 = vmatpush1.bf16.msra.mxu0 0
        %1435 = vmatprep.subr.bf16.mxu0 0
        %1436 = vmatpush1.bf16.msra.mxu0 0
        %1437 = vmatprep.subr.bf16.mxu0 0
        %1438 = vmatpush1.bf16.msra.mxu0 0
        %1439 = vmatprep.subr.bf16.mxu0 0
        %1440 = vmatpush1.bf16.msra.mxu0 0
        %1441 = vmatprep.subr.bf16.mxu0 0
        %1442 = vmatpush1.bf16.msra.mxu0 0
        %1443 = vmatprep.subr.bf16.mxu0 0
        %1444 = vmatpush1.bf16.msra.mxu0 0
        %1445 = vmatprep.subr.bf16.mxu0 0
        %1446 = vmatpush1.bf16.msra.mxu0 0
        %1447 = vmatprep.subr.bf16.mxu0 0
        %1448 = vmatpush1.bf16.msra.mxu0 0
        %1449 = vmatprep.subr.bf16.mxu0 0
        %1450 = vmatpush1.bf16.msra.mxu0 0
        %1451 = vmatprep.subr.bf16.mxu0 0
        %1452 = vmatpush1.bf16.msra.mxu0 0
        %1453 = vmatprep.subr.bf16.mxu0 0
        %1454 = vmatpush1.bf16.msra.mxu0 0
        %1455 = vmatprep.subr.bf16.mxu0 0
        %1456 = vmatpush1.bf16.msra.mxu0 0
        %1457 = vmatprep.subr.bf16.mxu0 0
        %1458 = vmatpush1.bf16.msra.mxu0 0
        %1459 = vmatprep.subr.bf16.mxu0 0
        %1460 = vmatpush1.bf16.msra.mxu0 0
        %1461 = vmatprep.subr.bf16.mxu0 0
        %1462 = vmatpush1.bf16.msra.mxu0 0
        %1463 = vmatprep.mubr.bf16.mxu0 0
        %1464 = vmatmul.mubr.bf16.gmra.mrb[0].mxu0 %v1426
        %v1465 = vpop.f32.mrb[0].mxu0
        %v1466 = vadd.f32 0.0, %v1465
        %v1467 = vpop.f32.mrb[0].mxu0
        %v1468 = vpop.f32.mrb[0].mxu0
        %v1469 = vpop.f32.mrb[0].mxu0
        %1470 = vdwg.mxu0
        %v1471 = vmul.f32 %v1328, 0.35355338
        %v1472 = vmul.f32 %v1374, 0.35355338
        %v1473 = vmul.f32 %v1420, 0.35355338
        %v1474 = vmul.f32 %v1466, 0.35355338
        %v1475 = vld [vmem:[%s460] sm:$0x1]
        %v1477 = vlaneseq
        %v1478 = vshrl.u32 %v1477, 7
        %v1479 = vsub.s32 0, %v1478
        %v1480 = vrot.slane %v1475, %v1479
        %v1482 = vadd.f32 %v1471, %v1480
        %v1483 = vadd.f32 %v1472, %v1480
        %v1484 = vadd.f32 %v1473, %v1480
        %v1485 = vadd.f32 %v1474, %v1480
        %v1486 = vsel %vm1285, %v1482, -inf
        %1487 = vmax.xlane.f32.xlu0 %v1486
        %v1488 = vpop.xlane.xlu0 %1487
        %v1489 = vsel %vm1285, %v1483, -inf
        %1490 = vmax.xlane.f32.xlu0 %v1489
        %v1491 = vpop.xlane.xlu0 %1490
        %v1492 = vsel %vm1285, %v1484, -inf
        %1493 = vmax.xlane.f32.xlu0 %v1492
        %v1494 = vpop.xlane.xlu0 %1493
        %v1495 = vsel %vm1285, %v1485, -inf
        %1496 = vmax.xlane.f32.xlu0 %v1495
        %v1497 = vpop.xlane.xlu0 %1496
        %v1498 = vsub.f32 %v1482, %v1488
        %v1499 = vsub.f32 %v1483, %v1491
        %v1500 = vsub.f32 %v1484, %v1494
        %v1501 = vsub.f32 %v1485, %v1497
        %v1502 = vmul.f32 %v1498, 1.442695
        %v1503 = vpow.pop %v1502
        %v1504 = vmul.f32 %v1499, 1.442695
        %v1505 = vpow.pop %v1504
        %v1506 = vmul.f32 %v1500, 1.442695
        %v1507 = vpow.pop %v1506
        %v1508 = vmul.f32 %v1501, 1.442695
        %v1509 = vpow.pop %v1508
        %v1510 = vsel %vm1285, %v1503, 0.0
        %1511 = vadd.xlane.f32.xlu0 %v1510
        %v1512 = vpop.xlane.xlu0 %1511
        %v1513 = vsel %vm1285, %v1505, 0.0
        %1514 = vadd.xlane.f32.xlu0 %v1513
        %v1515 = vpop.xlane.xlu0 %1514
        %v1516 = vsel %vm1285, %v1507, 0.0
        %1517 = vadd.xlane.f32.xlu0 %v1516
        %v1518 = vpop.xlane.xlu0 %1517
        %v1519 = vsel %vm1285, %v1509, 0.0
        %1520 = vadd.xlane.f32.xlu0 %v1519
        %v1521 = vpop.xlane.xlu0 %1520
        %v1522 = vpack.c.bf16 %v1503, %v1503
        %v1523 = vpack.c.bf16 %v1505, %v1505
        %v1524 = vpack.c.bf16 %v1507, %v1507
        %v1525 = vpack.c.bf16 %v1509, %v1509
        %v1526 = vcombine.low %v761, %v768
        %v1528 = vunpack.c.l.s4 1983009808
        %v1529 = vunpack.c.0.s8 %v1528
        %v1530 = vlaneseq
        %v1531 = vshrl.u32 %v1530, 7
        %v1532 = vsub.s32 %v1529, %v1531
        %v1533 = vrot.slane %v1526, %v1532
        %v1534 = vcombine.low %v769, %v770
        %v1536 = vunpack.c.l.s4 1983009808
        %v1537 = vunpack.c.0.s8 %v1536
        %v1538 = vlaneseq
        %v1539 = vshrl.u32 %v1538, 7
        %v1540 = vsub.s32 %v1537, %v1539
        %v1541 = vrot.slane %v1534, %v1540
        %v1542 = vcombine.low %v1533, %v1541
        %v1544 = vunpack.c.l.s4 1934713408
        %v1545 = vunpack.c.0.s8 %v1544
        %v1546 = vlaneseq
        %v1547 = vshrl.u32 %v1546, 7
        %v1548 = vsub.s32 %v1545, %v1547
        %v1549 = vrot.slane %v1542, %v1548
        %v1550 = vcombine.high %v1549, 0
        %v1551 = vcombine.low %v795, %v802
        %v1553 = vunpack.c.l.s4 1983009808
        %v1554 = vunpack.c.0.s8 %v1553
        %v1555 = vlaneseq
        %v1556 = vshrl.u32 %v1555, 7
        %v1557 = vsub.s32 %v1554, %v1556
        %v1558 = vrot.slane %v1551, %v1557
        %v1559 = vcombine.low %v803, %v804
        %v1561 = vunpack.c.l.s4 1983009808
        %v1562 = vunpack.c.0.s8 %v1561
        %v1563 = vlaneseq
        %v1564 = vshrl.u32 %v1563, 7
        %v1565 = vsub.s32 %v1562, %v1564
        %v1566 = vrot.slane %v1559, %v1565
        %v1567 = vcombine.low %v1558, %v1566
        %v1569 = vunpack.c.l.s4 1934713408
        %v1570 = vunpack.c.0.s8 %v1569
        %v1571 = vlaneseq
        %v1572 = vshrl.u32 %v1571, 7
        %v1573 = vsub.s32 %v1570, %v1572
        %v1574 = vrot.slane %v1567, %v1573
        %v1575 = vcombine.high %v1574, 0
        %v1578 = vpack.i.b16 %v1574, %v1549
        %v1579 = vshrl.u32 %v1549, 16
        %v1580 = vshrl.u32 %v1574, 16
        %v1581 = vpack.i.b16 %v1580, %v1579
        %v1584 = vpack.i.b16 %v1575, %v1550
        %v1585 = vshrl.u32 %v1550, 16
        %v1586 = vshrl.u32 %v1575, 16
        %v1587 = vpack.i.b16 %v1586, %v1585
        %v1589 = vsel %vm1285, %v1522, 0
        %v1592 = vsel %vm1289, %v1578, 0
        %1594 = vmatprep.subr.bf16.mxu0 0
        %1595 = vmatpush1.bf16.msra.mxu0 %v1592
        %1596 = vmatprep.subr.bf16.mxu0 0
        %1597 = vmatpush1.bf16.msra.mxu0 0
        %1598 = vmatprep.subr.bf16.mxu0 0
        %1599 = vmatpush1.bf16.msra.mxu0 0
        %1600 = vmatprep.subr.bf16.mxu0 0
        %1601 = vmatpush1.bf16.msra.mxu0 0
        %1602 = vmatprep.subr.bf16.mxu0 0
        %1603 = vmatpush1.bf16.msra.mxu0 0
        %1604 = vmatprep.subr.bf16.mxu0 0
        %1605 = vmatpush1.bf16.msra.mxu0 0
        %1606 = vmatprep.subr.bf16.mxu0 0
        %1607 = vmatpush1.bf16.msra.mxu0 0
        %1608 = vmatprep.subr.bf16.mxu0 0
        %1609 = vmatpush1.bf16.msra.mxu0 0
        %1610 = vmatprep.subr.bf16.mxu0 0
        %1611 = vmatpush1.bf16.msra.mxu0 0
        %1612 = vmatprep.subr.bf16.mxu0 0
        %1613 = vmatpush1.bf16.msra.mxu0 0
        %1614 = vmatprep.subr.bf16.mxu0 0
        %1615 = vmatpush1.bf16.msra.mxu0 0
        %1616 = vmatprep.subr.bf16.mxu0 0
        %1617 = vmatpush1.bf16.msra.mxu0 0
        %1618 = vmatprep.subr.bf16.mxu0 0
        %1619 = vmatpush1.bf16.msra.mxu0 0
        %1620 = vmatprep.subr.bf16.mxu0 0
        %1621 = vmatpush1.bf16.msra.mxu0 0
        %1622 = vmatprep.subr.bf16.mxu0 0
        %1623 = vmatpush1.bf16.msra.mxu0 0
        %1624 = vmatprep.subr.bf16.mxu0 0
        %1625 = vmatpush1.bf16.msra.mxu0 0
        %1626 = vmatprep.mubr.bf16.mxu0 0
        %1627 = vmatmul.mubr.bf16.gmra.mrb[0].mxu0 %v1589
        %v1628 = vpop.f32.mrb[0].mxu0
        %v1629 = vadd.f32 0.0, %v1628
        %v1630 = vpop.f32.mrb[0].mxu0
        %v1631 = vpop.f32.mrb[0].mxu0
        %v1632 = vpop.f32.mrb[0].mxu0
        %1633 = vdwg.mxu0
        %v1635 = vsel %vm1285, %v1523, 0
        %v1638 = vsel %vm1289, %v1581, 0
        %1640 = vmatprep.subr.bf16.mxu0 0
        %1641 = vmatpush1.bf16.msra.mxu0 %v1638
        %1642 = vmatprep.subr.bf16.mxu0 0
        %1643 = vmatpush1.bf16.msra.mxu0 0
        %1644 = vmatprep.subr.bf16.mxu0 0
        %1645 = vmatpush1.bf16.msra.mxu0 0
        %1646 = vmatprep.subr.bf16.mxu0 0
        %1647 = vmatpush1.bf16.msra.mxu0 0
        %1648 = vmatprep.subr.bf16.mxu0 0
        %1649 = vmatpush1.bf16.msra.mxu0 0
        %1650 = vmatprep.subr.bf16.mxu0 0
        %1651 = vmatpush1.bf16.msra.mxu0 0
        %1652 = vmatprep.subr.bf16.mxu0 0
        %1653 = vmatpush1.bf16.msra.mxu0 0
        %1654 = vmatprep.subr.bf16.mxu0 0
        %1655 = vmatpush1.bf16.msra.mxu0 0
        %1656 = vmatprep.subr.bf16.mxu0 0
        %1657 = vmatpush1.bf16.msra.mxu0 0
        %1658 = vmatprep.subr.bf16.mxu0 0
        %1659 = vmatpush1.bf16.msra.mxu0 0
        %1660 = vmatprep.subr.bf16.mxu0 0
        %1661 = vmatpush1.bf16.msra.mxu0 0
        %1662 = vmatprep.subr.bf16.mxu0 0
        %1663 = vmatpush1.bf16.msra.mxu0 0
        %1664 = vmatprep.subr.bf16.mxu0 0
        %1665 = vmatpush1.bf16.msra.mxu0 0
        %1666 = vmatprep.subr.bf16.mxu0 0
        %1667 = vmatpush1.bf16.msra.mxu0 0
        %1668 = vmatprep.subr.bf16.mxu0 0
        %1669 = vmatpush1.bf16.msra.mxu0 0
        %1670 = vmatprep.subr.bf16.mxu0 0
        %1671 = vmatpush1.bf16.msra.mxu0 0
        %1672 = vmatprep.mubr.bf16.mxu0 0
        %1673 = vmatmul.mubr.bf16.gmra.mrb[0].mxu0 %v1635
        %v1674 = vpop.f32.mrb[0].mxu0
        %v1675 = vadd.f32 0.0, %v1674
        %v1676 = vpop.f32.mrb[0].mxu0
        %v1677 = vpop.f32.mrb[0].mxu0
        %v1678 = vpop.f32.mrb[0].mxu0
        %1679 = vdwg.mxu0
        %v1681 = vsel %vm1285, %v1524, 0
        %v1684 = vsel %vm1289, %v1584, 0
        %1686 = vmatprep.subr.bf16.mxu0 0
        %1687 = vmatpush1.bf16.msra.mxu0 %v1684
        %1688 = vmatprep.subr.bf16.mxu0 0
        %1689 = vmatpush1.bf16.msra.mxu0 0
        %1690 = vmatprep.subr.bf16.mxu0 0
        %1691 = vmatpush1.bf16.msra.mxu0 0
        %1692 = vmatprep.subr.bf16.mxu0 0
        %1693 = vmatpush1.bf16.msra.mxu0 0
        %1694 = vmatprep.subr.bf16.mxu0 0
        %1695 = vmatpush1.bf16.msra.mxu0 0
        %1696 = vmatprep.subr.bf16.mxu0 0
        %1697 = vmatpush1.bf16.msra.mxu0 0
        %1698 = vmatprep.subr.bf16.mxu0 0
        %1699 = vmatpush1.bf16.msra.mxu0 0
        %1700 = vmatprep.subr.bf16.mxu0 0
        %1701 = vmatpush1.bf16.msra.mxu0 0
        %1702 = vmatprep.subr.bf16.mxu0 0
        %1703 = vmatpush1.bf16.msra.mxu0 0
        %1704 = vmatprep.subr.bf16.mxu0 0
        %1705 = vmatpush1.bf16.msra.mxu0 0
        %1706 = vmatprep.subr.bf16.mxu0 0
        %1707 = vmatpush1.bf16.msra.mxu0 0
        %1708 = vmatprep.subr.bf16.mxu0 0
        %1709 = vmatpush1.bf16.msra.mxu0 0
        %1710 = vmatprep.subr.bf16.mxu0 0
        %1711 = vmatpush1.bf16.msra.mxu0 0
        %1712 = vmatprep.subr.bf16.mxu0 0
        %1713 = vmatpush1.bf16.msra.mxu0 0
        %1714 = vmatprep.subr.bf16.mxu0 0
        %1715 = vmatpush1.bf16.msra.mxu0 0
        %1716 = vmatprep.subr.bf16.mxu0 0
        %1717 = vmatpush1.bf16.msra.mxu0 0
        %1718 = vmatprep.mubr.bf16.mxu0 0
        %1719 = vmatmul.mubr.bf16.gmra.mrb[0].mxu0 %v1681
        %v1720 = vpop.f32.mrb[0].mxu0
        %v1721 = vadd.f32 0.0, %v1720
        %v1722 = vpop.f32.mrb[0].mxu0
        %v1723 = vpop.f32.mrb[0].mxu0
        %v1724 = vpop.f32.mrb[0].mxu0
        %1725 = vdwg.mxu0
        %v1727 = vsel %vm1285, %v1525, 0
        %v1730 = vsel %vm1289, %v1587, 0
        %1732 = vmatprep.subr.bf16.mxu0 0
        %1733 = vmatpush1.bf16.msra.mxu0 %v1730
        %1734 = vmatprep.subr.bf16.mxu0 0
        %1735 = vmatpush1.bf16.msra.mxu0 0
        %1736 = vmatprep.subr.bf16.mxu0 0
        %1737 = vmatpush1.bf16.msra.mxu0 0
        %1738 = vmatprep.subr.bf16.mxu0 0
        %1739 = vmatpush1.bf16.msra.mxu0 0
        %1740 = vmatprep.subr.bf16.mxu0 0
        %1741 = vmatpush1.bf16.msra.mxu0 0
        %1742 = vmatprep.subr.bf16.mxu0 0
        %1743 = vmatpush1.bf16.msra.mxu0 0
        %1744 = vmatprep.subr.bf16.mxu0 0
        %1745 = vmatpush1.bf16.msra.mxu0 0
        %1746 = vmatprep.subr.bf16.mxu0 0
        %1747 = vmatpush1.bf16.msra.mxu0 0
        %1748 = vmatprep.subr.bf16.mxu0 0
        %1749 = vmatpush1.bf16.msra.mxu0 0
        %1750 = vmatprep.subr.bf16.mxu0 0
        %1751 = vmatpush1.bf16.msra.mxu0 0
        %1752 = vmatprep.subr.bf16.mxu0 0
        %1753 = vmatpush1.bf16.msra.mxu0 0
        %1754 = vmatprep.subr.bf16.mxu0 0
        %1755 = vmatpush1.bf16.msra.mxu0 0
        %1756 = vmatprep.subr.bf16.mxu0 0
        %1757 = vmatpush1.bf16.msra.mxu0 0
        %1758 = vmatprep.subr.bf16.mxu0 0
        %1759 = vmatpush1.bf16.msra.mxu0 0
        %1760 = vmatprep.subr.bf16.mxu0 0
        %1761 = vmatpush1.bf16.msra.mxu0 0
        %1762 = vmatprep.subr.bf16.mxu0 0
        %1763 = vmatpush1.bf16.msra.mxu0 0
        %1764 = vmatprep.mubr.bf16.mxu0 0
        %1765 = vmatmul.mubr.bf16.gmra.mrb[0].mxu0 %v1727
        %v1766 = vpop.f32.mrb[0].mxu0
        %v1767 = vadd.f32 0.0, %v1766
        %v1768 = vpop.f32.mrb[0].mxu0
        %v1769 = vpop.f32.mrb[0].mxu0
        %v1770 = vpop.f32.mrb[0].mxu0
        %1771 = vdwg.mxu0
        %v1772 = vrcp.pop %v1512
        %v1773 = vrcp.pop %v1515
        %v1774 = vrcp.pop %v1518
        %v1775 = vrcp.pop %v1521
        %v1776 = vmul.f32 %v1629, %v1772
        %v1777 = vmul.f32 %v1675, %v1773
        %v1778 = vmul.f32 %v1721, %v1774
        %v1779 = vmul.f32 %v1767, %v1775
        %v1780 = vcombine.low %v1776, %v1778
        %v1781 = vcombine.high %v1776, %v1778
        %v1783 = vunpack.c.l.s4 1983009808
        %v1784 = vunpack.c.0.s8 %v1783
        %v1785 = vlaneseq
        %v1786 = vshrl.u32 %v1785, 7
        %v1787 = vsub.s32 %v1784, %v1786
        %v1788 = vrot.slane %v1780, %v1787
        %v1790 = vunpack.c.l.s4 1983009808
        %v1791 = vunpack.c.0.s8 %v1790
        %v1792 = vlaneseq
        %v1793 = vshrl.u32 %v1792, 7
        %v1794 = vsub.s32 %v1791, %v1793
        %v1795 = vrot.slane %v1781, %v1794
        %v1796 = vcombine.low %v1777, %v1779
        %v1797 = vcombine.high %v1777, %v1779
        %v1799 = vunpack.c.l.s4 1983009808
        %v1800 = vunpack.c.0.s8 %v1799
        %v1801 = vlaneseq
        %v1802 = vshrl.u32 %v1801, 7
        %v1803 = vsub.s32 %v1800, %v1802
        %v1804 = vrot.slane %v1796, %v1803
        %v1806 = vunpack.c.l.s4 1983009808
        %v1807 = vunpack.c.0.s8 %v1806
        %v1808 = vlaneseq
        %v1809 = vshrl.u32 %v1808, 7
        %v1810 = vsub.s32 %v1807, %v1809
        %v1811 = vrot.slane %v1797, %v1810
        %v1812 = vcombine.low %v1788, %v1804
        %v1813 = vcombine.high %v1788, %v1804
        %v1815 = vunpack.c.l.s4 1934713408
        %v1816 = vunpack.c.0.s8 %v1815
        %v1817 = vlaneseq
        %v1818 = vshrl.u32 %v1817, 7
        %v1819 = vsub.s32 %v1816, %v1818
        %v1820 = vrot.slane %v1812, %v1819
        %v1822 = vunpack.c.l.s4 1934713408
        %v1823 = vunpack.c.0.s8 %v1822
        %v1824 = vlaneseq
        %v1825 = vshrl.u32 %v1824, 7
        %v1826 = vsub.s32 %v1823, %v1825
        %v1827 = vrot.slane %v1813, %v1826
        %v1828 = vcombine.low %v1795, %v1811
        %v1829 = vcombine.high %v1795, %v1811
        %v1831 = vunpack.c.l.s4 1934713408
        %v1832 = vunpack.c.0.s8 %v1831
        %v1833 = vlaneseq
        %v1834 = vshrl.u32 %v1833, 7
        %v1835 = vsub.s32 %v1832, %v1834
        %v1836 = vrot.slane %v1828, %v1835
        %v1838 = vunpack.c.l.s4 1934713408
        %v1839 = vunpack.c.0.s8 %v1838
        %v1840 = vlaneseq
        %v1841 = vshrl.u32 %v1840, 7
        %v1842 = vsub.s32 %v1839, %v1841
        %v1843 = vrot.slane %v1829, %v1842
        %v1844 = vcombine.high %v1820, 0.0
        %v1845 = vcombine.high %v1827, 0.0
        %v1846 = vcombine.high %v1836, 0.0
        %v1847 = vcombine.high %v1843, 0.0
        %v1848 = vcombine.low %v1820, %v1827
        %v1850 = vunpack.c.l.s4 1983009808
        %v1851 = vunpack.c.0.s8 %v1850
        %v1852 = vlaneseq
        %v1853 = vshrl.u32 %v1852, 7
        %v1854 = vsub.s32 %v1851, %v1853
        %v1855 = vrot.slane %v1848, %v1854
        %v1856 = vcombine.low %v1844, %v1845
        %v1858 = vunpack.c.l.s4 1983009808
        %v1859 = vunpack.c.0.s8 %v1858
        %v1860 = vlaneseq
        %v1861 = vshrl.u32 %v1860, 7
        %v1862 = vsub.s32 %v1859, %v1861
        %v1863 = vrot.slane %v1856, %v1862
        %v1864 = vcombine.low %v1836, %v1843
        %v1866 = vunpack.c.l.s4 1983009808
        %v1867 = vunpack.c.0.s8 %v1866
        %v1868 = vlaneseq
        %v1869 = vshrl.u32 %v1868, 7
        %v1870 = vsub.s32 %v1867, %v1869
        %v1871 = vrot.slane %v1864, %v1870
        %v1872 = vcombine.low %v1846, %v1847
        %v1874 = vunpack.c.l.s4 1983009808
        %v1875 = vunpack.c.0.s8 %v1874
        %v1876 = vlaneseq
        %v1877 = vshrl.u32 %v1876, 7
        %v1878 = vsub.s32 %v1875, %v1877
        %v1879 = vrot.slane %v1872, %v1878
        %v1880 = vcombine.low %v1855, %v1863
        %v1881 = vcombine.high %v1855, %v1863
        %v1883 = vunpack.c.l.s4 1934713408
        %v1884 = vunpack.c.0.s8 %v1883
        %v1885 = vlaneseq
        %v1886 = vshrl.u32 %v1885, 7
        %v1887 = vsub.s32 %v1884, %v1886
        %v1888 = vrot.slane %v1880, %v1887
        %v1890 = vunpack.c.l.s4 1934713408
        %v1891 = vunpack.c.0.s8 %v1890
        %v1892 = vlaneseq
        %v1893 = vshrl.u32 %v1892, 7
        %v1894 = vsub.s32 %v1891, %v1893
        %v1895 = vrot.slane %v1881, %v1894
        %v1896 = vcombine.low %v1871, %v1879
        %v1897 = vcombine.high %v1871, %v1879
        %v1899 = vunpack.c.l.s4 1934713408
        %v1900 = vunpack.c.0.s8 %v1899
        %v1901 = vlaneseq
        %v1902 = vshrl.u32 %v1901, 7
        %v1903 = vsub.s32 %v1900, %v1902
        %v1904 = vrot.slane %v1896, %v1903
        %v1906 = vunpack.c.l.s4 1934713408
        %v1907 = vunpack.c.0.s8 %v1906
        %v1908 = vlaneseq
        %v1909 = vshrl.u32 %v1908, 7
        %v1910 = vsub.s32 %v1907, %v1909
        %v1911 = vrot.slane %v1897, %v1910
        %v1912 = vcombine.low %v1888, %v1904
        %v1913 = vcombine.high %v1888, %v1904
        %v1914 = vcombine.low %v1895, %v1911
        %v1915 = vcombine.high %v1895, %v1911
        %1917 = vrot.lane.b32.xlu0 %v1913, 8
        %v1918 = vpop.permute.xlu0 %1917
        %1921 = vrot.lane.b32.xlu0 %v1914, 16
        %v1922 = vpop.permute.xlu0 %1921
        %1925 = vrot.lane.b32.xlu0 %v1915, 24
        %v1926 = vpop.permute.xlu0 %1925
        %v1928 = vsel %vm1285, %v1912, %v1918
        %vm1929 = vcmask 130048
        %v1930 = vsel %vm1929, %v1928, %v1922
        %vm1931 = vcmask 195584
        %v1932 = vsel %vm1931, %v1930, %v1926
        %v1933 = vpack.c.bf16 %v1932, %v1932
        %v1934 = vld [vmem:[#allocation11] sm:$0xf]
        %v1935 = vld [vmem:[#allocation11 + $0x4] sm:$0xf]
        %v1936 = vld [vmem:[#allocation11 + $0x8] sm:$0xf]
        %v1937 = vld [vmem:[#allocation11 + $0xc] sm:$0xf]
        %v1938 = vld [vmem:[%s469] sm:$0xf]
        %v1939 = vunpack.c.l.bf16 %v1938
        %v1944 = vunpack.c.l.b16 %v1934
        %v1945 = vunpack.c.l.b16 %v1935
        %v1946 = vunpack.c.l.b16 %v1936
        %v1947 = vunpack.c.l.b16 %v1937
        %v1948 = vpack.c.b16 %v1945, %v1944
        %v1949 = vpack.c.b16 %v1947, %v1946
        %vm1952 = vcmask 261120
        %v1954 = vsel %vm1952, %v1933, 0
        %1956 = vmatprep.subr.bf16.mxu0 0
        %1957 = vmatpush1.bf16.msra.mxu0 %v1948
        %1958 = vmatprep.subr.bf16.mxu0 0
        %1959 = vmatpush1.bf16.msra.mxu0 %v1949
        %1960 = vmatprep.subr.bf16.mxu0 0
        %1961 = vmatpush1.bf16.msra.mxu0 0
        %1962 = vmatprep.subr.bf16.mxu0 0
        %1963 = vmatpush1.bf16.msra.mxu0 0
        %1964 = vmatprep.subr.bf16.mxu0 0
        %1965 = vmatpush1.bf16.msra.mxu0 0
        %1966 = vmatprep.subr.bf16.mxu0 0
        %1967 = vmatpush1.bf16.msra.mxu0 0
        %1968 = vmatprep.subr.bf16.mxu0 0
        %1969 = vmatpush1.bf16.msra.mxu0 0
        %1970 = vmatprep.subr.bf16.mxu0 0
        %1971 = vmatpush1.bf16.msra.mxu0 0
        %1972 = vmatprep.subr.bf16.mxu0 0
        %1973 = vmatpush1.bf16.msra.mxu0 0
        %1974 = vmatprep.subr.bf16.mxu0 0
        %1975 = vmatpush1.bf16.msra.mxu0 0
        %1976 = vmatprep.subr.bf16.mxu0 0
        %1977 = vmatpush1.bf16.msra.mxu0 0
        %1978 = vmatprep.subr.bf16.mxu0 0
        %1979 = vmatpush1.bf16.msra.mxu0 0
        %1980 = vmatprep.subr.bf16.mxu0 0
        %1981 = vmatpush1.bf16.msra.mxu0 0
        %1982 = vmatprep.subr.bf16.mxu0 0
        %1983 = vmatpush1.bf16.msra.mxu0 0
        %1984 = vmatprep.subr.bf16.mxu0 0
        %1985 = vmatpush1.bf16.msra.mxu0 0
        %1986 = vmatprep.subr.bf16.mxu0 0
        %1987 = vmatpush1.bf16.msra.mxu0 0
        %1988 = vmatprep.mubr.bf16.mxu0 0
        %1989 = vmatmul.mubr.bf16.gmra.mrb[0].mxu0 %v1954
        %v1990 = vpop.f32.mrb[0].mxu0
        %v1991 = vadd.f32 %v1939, %v1990
        %v1992 = vpop.f32.mrb[0].mxu0
        %v1993 = vpop.f32.mrb[0].mxu0
        %v1994 = vpop.f32.mrb[0].mxu0
        %1995 = vdwg.mxu0
        %v1996 = vpack.c.bf16 %v1991, %v1991
        %vm1997 = vcmask 257024
        %1998 = vst.msk [vmem:[%s532] sm:$0xf] %vm1997, %v1996
        %v1999 = vld [vmem:[#allocation13] sm:$0x1]
        %v2000 = vsel %vm1952, %v1991, 0.0
        %2001 = vadd.xlane.f32.xlu0 %v2000
        %v2002 = vpop.xlane.xlu0 %2001
        %v2003 = vrcp.pop 32.0
        %v2004 = vmul.f32 %v2002, %v2003
        %v2005 = vsub.f32 %v1991, %v2004
        %v2006 = vmul.f32 %v2005, %v2005
        %v2007 = vsel %vm1952, %v2006, 0.0
        %2008 = vadd.xlane.f32.xlu0 %v2007
        %v2009 = vpop.xlane.xlu0 %2008
        %v2010 = vmul.f32 %v2009, %v2003
        %v2011 = vadd.f32 %v2010, 1e-05
        %v2012 = vrsqrt.pop %v2011
        %v2013 = vmul.f32 %v2005, %v2012
        %v2015 = vlaneseq
        %v2016 = vshrl.u32 %v2015, 7
        %v2017 = vsub.s32 0, %v2016
        %v2018 = vrot.slane %v1999, %v2017
        %v2020 = vmul.f32 %v2013, %v2018
        %v2021 = vpack.c.bf16 %v2020, %v2020
        %v2022 = vld [vmem:[#allocation14] sm:$0xf]
        %v2023 = vld [vmem:[#allocation14 + $0x4] sm:$0xf]
        %v2024 = vld [vmem:[#allocation14 + $0x8] sm:$0xf]
        %v2025 = vld [vmem:[#allocation14 + $0xc] sm:$0xf]
        %v2030 = vunpack.c.l.b16 %v2022
        %v2031 = vunpack.c.l.b16 %v2023
        %v2032 = vunpack.c.l.b16 %v2024
        %v2033 = vunpack.c.l.b16 %v2025
        %v2034 = vpack.c.b16 %v2031, %v2030
        %v2035 = vpack.c.b16 %v2033, %v2032
        %v2039 = vsel %vm1952, %v2021, 0
        %2041 = vmatprep.subr.bf16.mxu0 0
        %2042 = vmatpush1.bf16.msra.mxu0 %v2034
        %2043 = vmatprep.subr.bf16.mxu0 0
        %2044 = vmatpush1.bf16.msra.mxu0 %v2035
        %2045 = vmatprep.subr.bf16.mxu0 0
        %2046 = vmatpush1.bf16.msra.mxu0 0
        %2047 = vmatprep.subr.bf16.mxu0 0
        %2048 = vmatpush1.bf16.msra.mxu0 0
        %2049 = vmatprep.subr.bf16.mxu0 0
        %2050 = vmatpush1.bf16.msra.mxu0 0
        %2051 = vmatprep.subr.bf16.mxu0 0
        %2052 = vmatpush1.bf16.msra.mxu0 0
        %2053 = vmatprep.subr.bf16.mxu0 0
        %2054 = vmatpush1.bf16.msra.mxu0 0
        %2055 = vmatprep.subr.bf16.mxu0 0
        %2056 = vmatpush1.bf16.msra.mxu0 0
        %2057 = vmatprep.subr.bf16.mxu0 0
        %2058 = vmatpush1.bf16.msra.mxu0 0
        %2059 = vmatprep.subr.bf16.mxu0 0
        %2060 = vmatpush1.bf16.msra.mxu0 0
        %2061 = vmatprep.subr.bf16.mxu0 0
        %2062 = vmatpush1.bf16.msra.mxu0 0
        %2063 = vmatprep.subr.bf16.mxu0 0
        %2064 = vmatpush1.bf16.msra.mxu0 0
        %2065 = vmatprep.subr.bf16.mxu0 0
        %2066 = vmatpush1.bf16.msra.mxu0 0
        %2067 = vmatprep.subr.bf16.mxu0 0
        %2068 = vmatpush1.bf16.msra.mxu0 0
        %2069 = vmatprep.subr.bf16.mxu0 0
        %2070 = vmatpush1.bf16.msra.mxu0 0
        %2071 = vmatprep.subr.bf16.mxu0 0
        %2072 = vmatpush1.bf16.msra.mxu0 0
        %2073 = vmatprep.mubr.bf16.mxu0 0
        %2074 = vmatmul.mubr.bf16.gmra.mrb[0].mxu0 %v2039
        %v2075 = vpop.f32.mrb[0].mxu0
        %v2076 = vadd.f32 0.0, %v2075
        %v2077 = vpop.f32.mrb[0].mxu0
        %v2078 = vpop.f32.mrb[0].mxu0
        %v2079 = vpop.f32.mrb[0].mxu0
        %2080 = vdwg.mxu0
        %v2081 = vpack.c.bf16 %v2076, %v2076
        %2082 = vst.msk [vmem:[%s539] sm:$0xf] %vm1997, %v2081
        %s2083 = sand.u32 %s239, 1
        %s2084 = scalar_lea.sflag [#allocation4], %s2083
        %s2085 = sand.u32 %s239, 1
        %s2086 = smul.addr %s2085, 4
        %s2087 = scalar_lea.vmem [#allocation16], %s2086
        %s2088 = sand.u32 %s265, 1
        %s2089 = scalar_lea.sflag [#allocation18], %s2088
        %s2090 = sand.u32 %s265, 1
        %s2091 = smul.addr %s2090, 4
        %s2092 = scalar_lea.vmem [#allocation17], %s2091
        // Predicated region
        $region85: #{transformer_block_forward.11} parent=51 // pred_check
          %p2093 = pneg %p249
        $region86: #{transformer_block_forward.11} parent=51 // pred_check_branch
          %2095 = sbr.rel (%p2093) target = $region88
        $region87: #{transformer_block_forward.11} parent=51 // pred_region
          %s2097 = ssub.s32 64, 64
          %2098 = vsyncadd %s2084, %s2097
          %s2099 = smul.addr %s38, 64
          %s2100 = scalar_lea.hbm %s8, %s2099
          %s2102 = sshll.u32 %s2087, 4
          %s2103 = int_to_ptr.vmem [resolvable:$true] %s2102
          %2105 = dma.vmem_to_hbm [thread:$0]  %s2103, 64, %s2100, %s2084
        $region88: #{transformer_block_forward.11} parent=51 // pred_fallthru
          _
        // Predicated region
        $region89: #{transformer_block_forward.11} parent=51 // pred_check
          %p2106 = pneg %p275
        $region90: #{transformer_block_forward.11} parent=51 // pred_check_branch
          %2108 = sbr.rel (%p2106) target = $region92
        $region91: #{transformer_block_forward.11} parent=51 // pred_region
          %s2110 = ssub.s32 64, 64
          %2111 = vsyncadd %s2089, %s2110
          %s2112 = smul.addr %s38, 64
          %s2113 = scalar_lea.hbm %s9, %s2112
          %s2115 = sshll.u32 %s2092, 4
          %s2116 = int_to_ptr.vmem [resolvable:$true] %s2115
          %2118 = dma.vmem_to_hbm [thread:$0]  %s2116, 64, %s2113, %s2089
        $region92: #{transformer_block_forward.11} parent=51 // pred_fallthru
          _
      $region52: #{transformer_block_forward.11} parent=5 // pred_fallthru
        _
      %p2119 = scmp.le.s32.totalorder 2, %s33
      // Predicated region
      $region93: #{transformer_block_forward.11} parent=5 // pred_check
        %p2120 = pneg %p2119
      $region94: #{transformer_block_forward.11} parent=5 // pred_check_branch
        %2122 = sbr.rel (%p2120) target = $region96
      $region95: #{transformer_block_forward.11} parent=5 // pred_region
        %s2123 = ssub.s32 %s33, 2
        // Predicated region
        $region97: #{transformer_block_forward.11} parent=95 // pred_check
          %p2124 = pneg %p255
        $region98: #{transformer_block_forward.11} parent=95 // pred_check_branch
          %2126 = sbr.rel (%p2124) target = $region100
        $region99: #{transformer_block_forward.11} parent=95 // pred_region
          %s2127 = sand.u32 %s240, 1
          %s2128 = scalar_lea.sflag [#allocation4], %s2127
          %s2129 = sand.u32 %s240, 1
          %s2130 = smul.addr %s2129, 4
          %s2131 = scalar_lea.vmem [#allocation16], %s2130
          %2132 = dma.done %s2128, 64
        $region100: #{transformer_block_forward.11} parent=95 // pred_fallthru
          _
        // Predicated region
        $region101: #{transformer_block_forward.11} parent=95 // pred_check
          %p2133 = pneg %p281
        $region102: #{transformer_block_forward.11} parent=95 // pred_check_branch
          %2135 = sbr.rel (%p2133) target = $region104
        $region103: #{transformer_block_forward.11} parent=95 // pred_region
          %s2136 = sand.u32 %s266, 1
          %s2137 = scalar_lea.sflag [#allocation18], %s2136
          %s2138 = sand.u32 %s266, 1
          %s2139 = smul.addr %s2138, 4
          %s2140 = scalar_lea.vmem [#allocation17], %s2139
          %2141 = dma.done %s2137, 64
        $region104: #{transformer_block_forward.11} parent=95 // pred_fallthru
          _
      $region96: #{transformer_block_forward.11} parent=5 // pred_fallthru
        _
    $region6: #{transformer_block_forward.11} parent=1 // loop_footer
      %s37 = sadd.s32 1, %s33
    $region7: #{transformer_block_forward.11} parent=1 // loop_footer_branch
      %32 = sbr.rel target = $region3
    $region8: #{transformer_block_forward.11} parent=1 // loop_exit
      _
    %2142 = vsyncpa [#allocation3], 1
    %s2143 = scalar_lea.sflag [#allocation3], 1
    %2144 = vsyncpa %s2143, 1
    %2145 = vsyncpa [#allocation6], 1
    %s2146 = scalar_lea.sflag [#allocation6], 1
    %2147 = vsyncpa %s2146, 1
    %2148 = vsyncpa [#allocation9], 1
    %s2149 = scalar_lea.sflag [#allocation9], 1
    %2150 = vsyncpa %s2149, 1
    %2151 = vsyncpa [#allocation12], 1
    %2152 = vsyncpa [#allocation15], 1
    %2153 = vsyncpa [#allocation4], 1
    %s2154 = scalar_lea.sflag [#allocation4], 1
    %2155 = vsyncpa %s2154, 1
    %2156 = vsyncpa [#allocation18], 1
    %s2157 = scalar_lea.sflag [#allocation18], 1
    %2158 = vsyncpa %s2157, 1

// kernel: transformer_block_forward.13
$region0: #{transformer_block_forward.13}
  #allocation0 [shape = 'u32[]', space=smem, size = 0x4, offset = 0x4, fixed_abs, tag = 'smem constant byte address 0x4 - core index']
  #allocation1 [shape = 'u32[144,128]{1,0:T(1,128)}', space=vmem, size = 0x12000, scoped, tag = 'internal scratch']
  %s0 = inlined_call_operand.hbm [shape: bf16[2,8,32], index: 0, kind: input, shape index: {}]
  %s1 = inlined_call_operand.hbm [shape: bf16[2,8,32], index: 1, kind: input, shape index: {}]
  %s2 = inlined_call_operand.hbm [shape: bf16[2,8,32], index: 2, kind: input, shape index: {}]
  %s3 = inlined_call_operand.hbm [shape: f32[2,1,8], index: 3, kind: input, shape index: {}]
  %s4 = inlined_call_operand.hbm [shape: bf16[2,8,32], index: 4, kind: input, shape index: {}]
  %s5 = inlined_call_operand.hbm [shape: bf16[32,32], index: 5, kind: input, shape index: {}]
  %s6 = inlined_call_operand.hbm [shape: bf16[4,8], index: 6, kind: input, shape index: {}]
  %s7 = inlined_call_operand.hbm [shape: bf16[4,8], index: 7, kind: input, shape index: {}]
  %s8 = inlined_call_operand.hbm [shape: bf16[2,8,32], index: 8, kind: output, shape index: {}]
  %s9 = sld [smem:[#allocation0]]
  $region97: #{transformer_block_forward.13} parent=0
    _
  %s11 = ssub.s32 1, %s9
  %s12 = scalar_select 0, %s11, %s9
  $region1: #{transformer_block_forward.13} parent=0
    #allocation2 [shape = 'u8[4096]{0}', space=vmem, size = 0x1000, scoped, tag = 'input window, operand 0']
    #allocation3 [shape = 's32[2]{0}', space=sflag, size = 0x8, scoped, tag = 'scoped memory for transformer_block_forward.13']
    #allocation4 [shape = 's32[2]{0}', space=sflag, size = 0x8, scoped, tag = 'scoped memory for transformer_block_forward.13']
    #allocation5 [shape = 'u8[4096]{0}', space=vmem, size = 0x1000, scoped, tag = 'input window, operand 1']
    #allocation6 [shape = 's32[2]{0}', space=sflag, size = 0x8, scoped, tag = 'scoped memory for transformer_block_forward.13']
    #allocation7 [shape = 'u8[4096]{0}', space=vmem, size = 0x1000, scoped, tag = 'input window, operand 2']
    #allocation8 [shape = 'u8[1024]{0}', space=vmem, size = 0x400, scoped, tag = 'input window, operand 3']
    #allocation9 [shape = 's32[2]{0}', space=sflag, size = 0x8, scoped, tag = 'scoped memory for transformer_block_forward.13']
    #allocation10 [shape = 'u8[4096]{0}', space=vmem, size = 0x1000, scoped, tag = 'input window, operand 4']
    #allocation11 [shape = 'u8[8192]{0}', space=vmem, size = 0x2000, scoped, tag = 'input window, operand 5, single buffered']
    #allocation12 [shape = 's32[1]{0}', space=sflag, size = 0x4, scoped, tag = 'scoped memory for transformer_block_forward.13']
    #allocation13 [shape = 'u8[1024]{0}', space=vmem, size = 0x400, scoped, tag = 'input window, operand 6, single buffered']
    #allocation14 [shape = 'u8[1024]{0}', space=vmem, size = 0x400, scoped, tag = 'input window, operand 7, single buffered']
    #allocation15 [shape = 's32[1]{0}', space=sflag, size = 0x4, scoped, tag = 'scoped memory for transformer_block_forward.13']
    #allocation16 [shape = 'u8[4096]{0}', space=vmem, size = 0x1000, scoped, tag = 'output window, operand 0']
    %13 = vsyncpa [#allocation3], 0
    %s14 = scalar_lea.sflag [#allocation3], 1
    %15 = vsyncpa %s14, 0
    %16 = vsyncpa [#allocation6], 0
    %s17 = scalar_lea.sflag [#allocation6], 1
    %18 = vsyncpa %s17, 0
    %19 = vsyncpa [#allocation9], 0
    %s20 = scalar_lea.sflag [#allocation9], 1
    %21 = vsyncpa %s20, 0
    %22 = vsyncpa [#allocation12], 0
    %23 = vsyncpa [#allocation15], 0
    %24 = vsyncpa [#allocation4], 0
    %s25 = scalar_lea.sflag [#allocation4], 1
    %26 = vsyncpa %s25, 0
    loop: start=0, step=1, limit=4
    $region2: #{transformer_block_forward.13} parent=1 // loop_pre_header
      _
    $region3: #{transformer_block_forward.13} parent=1 // loop_header
      %s28 = sphi 0, %s32
      %p29 = scmp.ge.s32.totalorder %s28, 4
      %s38 = sphi 0, %s40
      %s41 = sphi 0, %s38
      %s42 = sphi 0, %s41
      %s58 = sphi 0, %s42
      %s64 = sphi 0, %s66
      %s67 = sphi 0, %s64
      %s68 = sphi 0, %s67
      %s84 = sphi 0, %s68
      %s90 = sphi 0, %s92
      %s93 = sphi 0, %s90
      %s94 = sphi 0, %s93
      %s110 = sphi 0, %s94
      %s116 = sphi 0, %s118
      %s119 = sphi 0, %s116
      %s120 = sphi 0, %s119
      %s136 = sphi 0, %s120
      %s142 = sphi 0, %s144
      %s145 = sphi 0, %s142
      %s146 = sphi 0, %s145
      %s162 = sphi 0, %s146
      %s166 = sphi 0, %s166
      %s168 = sphi 0, %s166
      %s169 = sphi 0, %s168
      %s183 = sphi 0, %s169
      %s187 = sphi 0, %s187
      %s189 = sphi 0, %s187
      %s190 = sphi 0, %s189
      %s204 = sphi 0, %s190
      %s208 = sphi 0, %s208
      %s210 = sphi 0, %s208
      %s211 = sphi 0, %s210
      %s225 = sphi 0, %s211
      %s231 = sphi 0, %s233
      %s234 = sphi 0, %s231
      %s235 = sphi 0, %s234
      %s251 = sphi 0, %s235
    $region4: #{transformer_block_forward.13} parent=1 // loop_header_branch
      %31 = sbr.rel (%p29) target = $region8
    $region5: #{transformer_block_forward.13} parent=1 // loop_body
      %s33 = ssub.s32 %s28, 1
      %s34 = ssub.s32 %s28, 2
      %s35 = sadd.s32 %s28, 1
      %s36 = ssub.s32 %s28, %s35
      %p37 = scmp.eq.s32.totalorder %s36, 0
      %s39 = sadd.s32 %s38, 1
      %s40 = scalar_select %p37, %s38, %s39
      %p43 = pneg %p37
      %p44 = scmp.eq.s32.totalorder %s28, 1
      %p45 = por %p43, %p44
      %p46 = scmp.ne.s32.totalorder %s38, %s41
      %p47 = scmp.eq.s32.totalorder %s28, 0
      %p48 = por %p46, %p47
      %p49 = scmp.ne.s32.totalorder %s38, %s41
      %p50 = scmp.eq.s32.totalorder %s33, 1
      %p51 = por %p49, %p50
      %p52 = scmp.ne.s32.totalorder %s41, %s42
      %p53 = scmp.eq.s32.totalorder %s33, 0
      %p54 = por %p52, %p53
      %p55 = scmp.ne.s32.totalorder %s41, %s42
      %p56 = scmp.eq.s32.totalorder %s34, 1
      %p57 = por %p55, %p56
      %p59 = scmp.ne.s32.totalorder %s42, %s58
      %p60 = scmp.eq.s32.totalorder %s34, 0
      %p61 = por %p59, %p60
      %s62 = ssub.s32 %s28, %s35
      %p63 = scmp.eq.s32.totalorder %s62, 0
      %s65 = sadd.s32 %s64, 1
      %s66 = scalar_select %p63, %s64, %s65
      %p69 = pneg %p63
      %p70 = scmp.eq.s32.totalorder %s28, 1
      %p71 = por %p69, %p70
      %p72 = scmp.ne.s32.totalorder %s64, %s67
      %p73 = scmp.eq.s32.totalorder %s28, 0
      %p74 = por %p72, %p73
      %p75 = scmp.ne.s32.totalorder %s64, %s67
      %p76 = scmp.eq.s32.totalorder %s33, 1
      %p77 = por %p75, %p76
      %p78 = scmp.ne.s32.totalorder %s67, %s68
      %p79 = scmp.eq.s32.totalorder %s33, 0
      %p80 = por %p78, %p79
      %p81 = scmp.ne.s32.totalorder %s67, %s68
      %p82 = scmp.eq.s32.totalorder %s34, 1
      %p83 = por %p81, %p82
      %p85 = scmp.ne.s32.totalorder %s68, %s84
      %p86 = scmp.eq.s32.totalorder %s34, 0
      %p87 = por %p85, %p86
      %s88 = ssub.s32 %s28, %s35
      %p89 = scmp.eq.s32.totalorder %s88, 0
      %s91 = sadd.s32 %s90, 1
      %s92 = scalar_select %p89, %s90, %s91
      %p95 = pneg %p89
      %p96 = scmp.eq.s32.totalorder %s28, 1
      %p97 = por %p95, %p96
      %p98 = scmp.ne.s32.totalorder %s90, %s93
      %p99 = scmp.eq.s32.totalorder %s28, 0
      %p100 = por %p98, %p99
      %p101 = scmp.ne.s32.totalorder %s90, %s93
      %p102 = scmp.eq.s32.totalorder %s33, 1
      %p103 = por %p101, %p102
      %p104 = scmp.ne.s32.totalorder %s93, %s94
      %p105 = scmp.eq.s32.totalorder %s33, 0
      %p106 = por %p104, %p105
      %p107 = scmp.ne.s32.totalorder %s93, %s94
      %p108 = scmp.eq.s32.totalorder %s34, 1
      %p109 = por %p107, %p108
      %p111 = scmp.ne.s32.totalorder %s94, %s110
      %p112 = scmp.eq.s32.totalorder %s34, 0
      %p113 = por %p111, %p112
      %s114 = ssub.s32 %s28, %s35
      %p115 = scmp.eq.s32.totalorder %s114, 0
      %s117 = sadd.s32 %s116, 1
      %s118 = scalar_select %p115, %s116, %s117
      %p121 = pneg %p115
      %p122 = scmp.eq.s32.totalorder %s28, 1
      %p123 = por %p121, %p122
      %p124 = scmp.ne.s32.totalorder %s116, %s119
      %p125 = scmp.eq.s32.totalorder %s28, 0
      %p126 = por %p124, %p125
      %p127 = scmp.ne.s32.totalorder %s116, %s119
      %p128 = scmp.eq.s32.totalorder %s33, 1
      %p129 = por %p127, %p128
      %p130 = scmp.ne.s32.totalorder %s119, %s120
      %p131 = scmp.eq.s32.totalorder %s33, 0
      %p132 = por %p130, %p131
      %p133 = scmp.ne.s32.totalorder %s119, %s120
      %p134 = scmp.eq.s32.totalorder %s34, 1
      %p135 = por %p133, %p134
      %p137 = scmp.ne.s32.totalorder %s120, %s136
      %p138 = scmp.eq.s32.totalorder %s34, 0
      %p139 = por %p137, %p138
      %s140 = ssub.s32 %s28, %s35
      %p141 = scmp.eq.s32.totalorder %s140, 0
      %s143 = sadd.s32 %s142, 1
      %s144 = scalar_select %p141, %s142, %s143
      %p147 = pneg %p141
      %p148 = scmp.eq.s32.totalorder %s28, 1
      %p149 = por %p147, %p148
      %p150 = scmp.ne.s32.totalorder %s142, %s145
      %p151 = scmp.eq.s32.totalorder %s28, 0
      %p152 = por %p150, %p151
      %p153 = scmp.ne.s32.totalorder %s142, %s145
      %p154 = scmp.eq.s32.totalorder %s33, 1
      %p155 = por %p153, %p154
      %p156 = scmp.ne.s32.totalorder %s145, %s146
      %p157 = scmp.eq.s32.totalorder %s33, 0
      %p158 = por %p156, %p157
      %p159 = scmp.ne.s32.totalorder %s145, %s146
      %p160 = scmp.eq.s32.totalorder %s34, 1
      %p161 = por %p159, %p160
      %p163 = scmp.ne.s32.totalorder %s146, %s162
      %p164 = scmp.eq.s32.totalorder %s34, 0
      %p165 = por %p163, %p164
      %s167 = sadd.s32 %s166, 1
      %p170 = scmp.eq.s32.totalorder %s28, 1
      %p171 = scmp.ne.s32.totalorder %s166, %s168
      %p172 = scmp.eq.s32.totalorder %s28, 0
      %p173 = por %p171, %p172
      %p174 = scmp.ne.s32.totalorder %s166, %s168
      %p175 = scmp.eq.s32.totalorder %s33, 1
      %p176 = por %p174, %p175
      %p177 = scmp.ne.s32.totalorder %s168, %s169
      %p178 = scmp.eq.s32.totalorder %s33, 0
      %p179 = por %p177, %p178
      %p180 = scmp.ne.s32.totalorder %s168, %s169
      %p181 = scmp.eq.s32.totalorder %s34, 1
      %p182 = por %p180, %p181
      %p184 = scmp.ne.s32.totalorder %s169, %s183
      %p185 = scmp.eq.s32.totalorder %s34, 0
      %p186 = por %p184, %p185
      %s188 = sadd.s32 %s187, 1
      %p191 = scmp.eq.s32.totalorder %s28, 1
      %p192 = scmp.ne.s32.totalorder %s187, %s189
      %p193 = scmp.eq.s32.totalorder %s28, 0
      %p194 = por %p192, %p193
      %p195 = scmp.ne.s32.totalorder %s187, %s189
      %p196 = scmp.eq.s32.totalorder %s33, 1
      %p197 = por %p195, %p196
      %p198 = scmp.ne.s32.totalorder %s189, %s190
      %p199 = scmp.eq.s32.totalorder %s33, 0
      %p200 = por %p198, %p199
      %p201 = scmp.ne.s32.totalorder %s189, %s190
      %p202 = scmp.eq.s32.totalorder %s34, 1
      %p203 = por %p201, %p202
      %p205 = scmp.ne.s32.totalorder %s190, %s204
      %p206 = scmp.eq.s32.totalorder %s34, 0
      %p207 = por %p205, %p206
      %s209 = sadd.s32 %s208, 1
      %p212 = scmp.eq.s32.totalorder %s28, 1
      %p213 = scmp.ne.s32.totalorder %s208, %s210
      %p214 = scmp.eq.s32.totalorder %s28, 0
      %p215 = por %p213, %p214
      %p216 = scmp.ne.s32.totalorder %s208, %s210
      %p217 = scmp.eq.s32.totalorder %s33, 1
      %p218 = por %p216, %p217
      %p219 = scmp.ne.s32.totalorder %s210, %s211
      %p220 = scmp.eq.s32.totalorder %s33, 0
      %p221 = por %p219, %p220
      %p222 = scmp.ne.s32.totalorder %s210, %s211
      %p223 = scmp.eq.s32.totalorder %s34, 1
      %p224 = por %p222, %p223
      %p226 = scmp.ne.s32.totalorder %s211, %s225
      %p227 = scmp.eq.s32.totalorder %s34, 0
      %p228 = por %p226, %p227
      %s229 = ssub.s32 %s28, %s35
      %p230 = scmp.eq.s32.totalorder %s229, 0
      %s232 = sadd.s32 %s231, 1
      %s233 = scalar_select %p230, %s231, %s232
      %p236 = pneg %p230
      %p237 = scmp.eq.s32.totalorder %s28, 1
      %p238 = por %p236, %p237
      %p239 = scmp.ne.s32.totalorder %s231, %s234
      %p240 = scmp.eq.s32.totalorder %s28, 0
      %p241 = por %p239, %p240
      %p242 = scmp.ne.s32.totalorder %s231, %s234
      %p243 = scmp.eq.s32.totalorder %s33, 1
      %p244 = por %p242, %p243
      %p245 = scmp.ne.s32.totalorder %s234, %s235
      %p246 = scmp.eq.s32.totalorder %s33, 0
      %p247 = por %p245, %p246
      %p248 = scmp.ne.s32.totalorder %s234, %s235
      %p249 = scmp.eq.s32.totalorder %s34, 1
      %p250 = por %p248, %p249
      %p252 = scmp.ne.s32.totalorder %s235, %s251
      %p253 = scmp.eq.s32.totalorder %s34, 0
      %p254 = por %p252, %p253
      %p255 = scmp.le.s32.totalorder 1, %s28
      %p256 = scmp.lt.s32.totalorder %s28, 3
      %p257 = pnand %p255, %p256
      %p258 = pneg %p257
      // Predicated region
      $region9: #{transformer_block_forward.13} parent=5 // pred_check
        _
      $region10: #{transformer_block_forward.13} parent=5 // pred_check_branch
        %260 = sbr.rel (%p257) target = $region12
      $region11: #{transformer_block_forward.13} parent=5 // pred_region
        %s261 = ssub.s32 %s28, 1
        // Predicated region
        $region13: #{transformer_block_forward.13} parent=11 // pred_check
          %p262 = pneg %p179
        $region14: #{transformer_block_forward.13} parent=11 // pred_check_branch
          %264 = sbr.rel (%p262) target = $region16
        $region15: #{transformer_block_forward.13} parent=11 // pred_region
          %s266 = ssub.s32 256, 256
          %267 = vsyncadd [#allocation12], %s266
          %s268 = sshll.u32 [#allocation11], 4
          %s269 = int_to_ptr.vmem [resolvable:$true] %s268
          %274 = dma.hbm_to_vmem [thread:$0]  %s5, 256, %s269, [#allocation12], 64, 64, 4
        $region16: #{transformer_block_forward.13} parent=11 // pred_fallthru
          _
        // Predicated region
        $region17: #{transformer_block_forward.13} parent=11 // pred_check
          %p275 = pneg %p200
        $region18: #{transformer_block_forward.13} parent=11 // pred_check_branch
          %277 = sbr.rel (%p275) target = $region20
        $region19: #{transformer_block_forward.13} parent=11 // pred_region
          %s279 = ssub.s32 32, 32
          %280 = vsyncadd [#allocation12], %s279
          %s282 = sshll.u32 [#allocation13], 4
          %s283 = int_to_ptr.vmem [resolvable:$true] %s282
          %285 = dma.hbm_to_vmem [thread:$0]  %s6, 32, %s283, [#allocation12]
        $region20: #{transformer_block_forward.13} parent=11 // pred_fallthru
          _
        // Predicated region
        $region21: #{transformer_block_forward.13} parent=11 // pred_check
          %p286 = pneg %p221
        $region22: #{transformer_block_forward.13} parent=11 // pred_check_branch
          %288 = sbr.rel (%p286) target = $region24
        $region23: #{transformer_block_forward.13} parent=11 // pred_region
          %s290 = ssub.s32 32, 32
          %291 = vsyncadd [#allocation15], %s290
          %s293 = sshll.u32 [#allocation14], 4
          %s294 = int_to_ptr.vmem [resolvable:$true] %s293
          %296 = dma.hbm_to_vmem [thread:$0]  %s7, 32, %s294, [#allocation15]
        $region24: #{transformer_block_forward.13} parent=11 // pred_fallthru
          _
      $region12: #{transformer_block_forward.13} parent=5 // pred_fallthru
        _
      %p297 = scmp.lt.s32.totalorder %s28, 2
      // Predicated region
      $region25: #{transformer_block_forward.13} parent=5 // pred_check
        %p298 = pneg %p297
      $region26: #{transformer_block_forward.13} parent=5 // pred_check_branch
        %300 = sbr.rel (%p298) target = $region28
      $region27: #{transformer_block_forward.13} parent=5 // pred_region
        // Predicated region
        $region29: #{transformer_block_forward.13} parent=27 // pred_check
          %p301 = pneg %p48
        $region30: #{transformer_block_forward.13} parent=27 // pred_check_branch
          %303 = sbr.rel (%p301) target = $region32
        $region31: #{transformer_block_forward.13} parent=27 // pred_region
          %s304 = sand.u32 %s38, 1
          %s305 = scalar_lea.sflag [#allocation3], %s304
          %s306 = sand.u32 %s38, 1
          %s307 = smul.addr %s306, 4
          %s308 = scalar_lea.vmem [#allocation2], %s307
          %s310 = ssub.s32 64, 64
          %311 = vsyncadd %s305, %s310
          %s312 = smul.addr %s28, 64
          %s313 = scalar_lea.hbm %s0, %s312
          %s315 = sshll.u32 %s308, 4
          %s316 = int_to_ptr.vmem [resolvable:$true] %s315
          %318 = dma.hbm_to_vmem [thread:$0]  %s313, 64, %s316, %s305
        $region32: #{transformer_block_forward.13} parent=27 // pred_fallthru
          _
        // Predicated region
        $region33: #{transformer_block_forward.13} parent=27 // pred_check
          %p319 = pneg %p74
        $region34: #{transformer_block_forward.13} parent=27 // pred_check_branch
          %321 = sbr.rel (%p319) target = $region36
        $region35: #{transformer_block_forward.13} parent=27 // pred_region
          %s322 = sand.u32 %s28, 1
          %s323 = scalar_lea.sflag [#allocation6], %s322
          %s324 = sand.u32 %s64, 1
          %s325 = smul.addr %s324, 4
          %s326 = scalar_lea.vmem [#allocation5], %s325
          %s328 = ssub.s32 64, 64
          %329 = vsyncadd %s323, %s328
          %s330 = smul.addr %s28, 64
          %s331 = scalar_lea.hbm %s1, %s330
          %s333 = sshll.u32 %s326, 4
          %s334 = int_to_ptr.vmem [resolvable:$true] %s333
          %336 = dma.hbm_to_vmem [thread:$0]  %s331, 64, %s334, %s323
        $region36: #{transformer_block_forward.13} parent=27 // pred_fallthru
          _
        // Predicated region
        $region37: #{transformer_block_forward.13} parent=27 // pred_check
          %p337 = pneg %p100
        $region38: #{transformer_block_forward.13} parent=27 // pred_check_branch
          %339 = sbr.rel (%p337) target = $region40
        $region39: #{transformer_block_forward.13} parent=27 // pred_region
          %s340 = sand.u32 %s28, 1
          %s341 = scalar_lea.sflag [#allocation6], %s340
          %s342 = sand.u32 %s90, 1
          %s343 = smul.addr %s342, 4
          %s344 = scalar_lea.vmem [#allocation7], %s343
          %s346 = ssub.s32 64, 64
          %347 = vsyncadd %s341, %s346
          %s348 = smul.addr %s28, 64
          %s349 = scalar_lea.hbm %s2, %s348
          %s351 = sshll.u32 %s344, 4
          %s352 = int_to_ptr.vmem [resolvable:$true] %s351
          %354 = dma.hbm_to_vmem [thread:$0]  %s349, 64, %s352, %s341
        $region40: #{transformer_block_forward.13} parent=27 // pred_fallthru
          _
        // Predicated region
        $region41: #{transformer_block_forward.13} parent=27 // pred_check
          %p355 = pneg %p126
        $region42: #{transformer_block_forward.13} parent=27 // pred_check_branch
          %357 = sbr.rel (%p355) target = $region44
        $region43: #{transformer_block_forward.13} parent=27 // pred_region
          %s358 = sand.u32 %s28, 1
          %s359 = scalar_lea.sflag [#allocation9], %s358
          %s360 = sand.u32 %s116, 1
          %s361 = scalar_lea.vmem [#allocation8], %s360
          %s363 = ssub.s32 16, 16
          %364 = vsyncadd %s359, %s363
          %s365 = smul.addr %s28, 16
          %s366 = scalar_lea.hbm %s3, %s365
          %s368 = sshll.u32 %s361, 4
          %s369 = int_to_ptr.vmem [resolvable:$true] %s368
          %371 = dma.hbm_to_vmem [thread:$0]  %s366, 16, %s369, %s359
        $region44: #{transformer_block_forward.13} parent=27 // pred_fallthru
          _
        // Predicated region
        $region45: #{transformer_block_forward.13} parent=27 // pred_check
          %p372 = pneg %p152
        $region46: #{transformer_block_forward.13} parent=27 // pred_check_branch
          %374 = sbr.rel (%p372) target = $region48
        $region47: #{transformer_block_forward.13} parent=27 // pred_region
          %s375 = sand.u32 %s28, 1
          %s376 = scalar_lea.sflag [#allocation9], %s375
          %s377 = sand.u32 %s142, 1
          %s378 = smul.addr %s377, 4
          %s379 = scalar_lea.vmem [#allocation10], %s378
          %s381 = ssub.s32 64, 64
          %382 = vsyncadd %s376, %s381
          %s383 = smul.addr %s28, 64
          %s384 = scalar_lea.hbm %s4, %s383
          %s386 = sshll.u32 %s379, 4
          %s387 = int_to_ptr.vmem [resolvable:$true] %s386
          %389 = dma.hbm_to_vmem [thread:$0]  %s384, 64, %s387, %s376
        $region48: #{transformer_block_forward.13} parent=27 // pred_fallthru
          _
      $region28: #{transformer_block_forward.13} parent=5 // pred_fallthru
        _
      %p390 = scmp.le.s32.totalorder 1, %s28
      %p391 = scmp.lt.s32.totalorder %s28, 3
      %p392 = pnand %p390, %p391
      %p393 = pneg %p392
      // Predicated region
      $region49: #{transformer_block_forward.13} parent=5 // pred_check
        _
      $region50: #{transformer_block_forward.13} parent=5 // pred_check_branch
        %395 = sbr.rel (%p392) target = $region52
      $region51: #{transformer_block_forward.13} parent=5 // pred_region
        %s396 = ssub.s32 %s28, 1
        %s397 = sand.u32 %s41, 1
        %s398 = scalar_lea.sflag [#allocation3], %s397
        %s399 = sand.u32 %s41, 1
        %s400 = smul.addr %s399, 4
        %s401 = scalar_lea.vmem [#allocation2], %s400
        // Predicated region
        $region53: #{transformer_block_forward.13} parent=51 // pred_check
          %p402 = pneg %p54
        $region54: #{transformer_block_forward.13} parent=51 // pred_check_branch
          %404 = sbr.rel (%p402) target = $region56
        $region55: #{transformer_block_forward.13} parent=51 // pred_region
          %405 = dma.done %s398, 64
        $region56: #{transformer_block_forward.13} parent=51 // pred_fallthru
          _
        %s406 = sand.u32 %s33, 1
        %s407 = scalar_lea.sflag [#allocation6], %s406
        %s408 = sand.u32 %s67, 1
        %s409 = smul.addr %s408, 4
        %s410 = scalar_lea.vmem [#allocation5], %s409
        // Predicated region
        $region57: #{transformer_block_forward.13} parent=51 // pred_check
          %p411 = pneg %p80
        $region58: #{transformer_block_forward.13} parent=51 // pred_check_branch
          %413 = sbr.rel (%p411) target = $region60
        $region59: #{transformer_block_forward.13} parent=51 // pred_region
          %414 = dma.done %s407, 64
        $region60: #{transformer_block_forward.13} parent=51 // pred_fallthru
          _
        %s415 = sand.u32 %s33, 1
        %s416 = scalar_lea.sflag [#allocation6], %s415
        %s417 = sand.u32 %s93, 1
        %s418 = smul.addr %s417, 4
        %s419 = scalar_lea.vmem [#allocation7], %s418
        // Predicated region
        $region61: #{transformer_block_forward.13} parent=51 // pred_check
          %p420 = pneg %p106
        $region62: #{transformer_block_forward.13} parent=51 // pred_check_branch
          %422 = sbr.rel (%p420) target = $region64
        $region63: #{transformer_block_forward.13} parent=51 // pred_region
          %423 = dma.done %s416, 64
        $region64: #{transformer_block_forward.13} parent=51 // pred_fallthru
          _
        %s424 = sand.u32 %s33, 1
        %s425 = scalar_lea.sflag [#allocation9], %s424
        %s426 = sand.u32 %s119, 1
        %s427 = scalar_lea.vmem [#allocation8], %s426
        // Predicated region
        $region65: #{transformer_block_forward.13} parent=51 // pred_check
          %p428 = pneg %p132
        $region66: #{transformer_block_forward.13} parent=51 // pred_check_branch
          %430 = sbr.rel (%p428) target = $region68
        $region67: #{transformer_block_forward.13} parent=51 // pred_region
          %431 = dma.done %s425, 16
        $region68: #{transformer_block_forward.13} parent=51 // pred_fallthru
          _
        %s432 = sand.u32 %s33, 1
        %s433 = scalar_lea.sflag [#allocation9], %s432
        %s434 = sand.u32 %s145, 1
        %s435 = smul.addr %s434, 4
        %s436 = scalar_lea.vmem [#allocation10], %s435
        // Predicated region
        $region69: #{transformer_block_forward.13} parent=51 // pred_check
          %p437 = pneg %p158
        $region70: #{transformer_block_forward.13} parent=51 // pred_check_branch
          %439 = sbr.rel (%p437) target = $region72
        $region71: #{transformer_block_forward.13} parent=51 // pred_region
          %440 = dma.done %s433, 64
        $region72: #{transformer_block_forward.13} parent=51 // pred_fallthru
          _
        // Predicated region
        $region73: #{transformer_block_forward.13} parent=51 // pred_check
          %p441 = pneg %p179
        $region74: #{transformer_block_forward.13} parent=51 // pred_check_branch
          %443 = sbr.rel (%p441) target = $region76
        $region75: #{transformer_block_forward.13} parent=51 // pred_region
          %444 = dma.done [#allocation12], 256
        $region76: #{transformer_block_forward.13} parent=51 // pred_fallthru
          _
        // Predicated region
        $region77: #{transformer_block_forward.13} parent=51 // pred_check
          %p445 = pneg %p200
        $region78: #{transformer_block_forward.13} parent=51 // pred_check_branch
          %447 = sbr.rel (%p445) target = $region80
        $region79: #{transformer_block_forward.13} parent=51 // pred_region
          %448 = dma.done [#allocation12], 32
        $region80: #{transformer_block_forward.13} parent=51 // pred_fallthru
          _
        // Predicated region
        $region81: #{transformer_block_forward.13} parent=51 // pred_check
          %p449 = pneg %p221
        $region82: #{transformer_block_forward.13} parent=51 // pred_check_branch
          %451 = sbr.rel (%p449) target = $region84
        $region83: #{transformer_block_forward.13} parent=51 // pred_region
          %452 = dma.done [#allocation15], 32
        $region84: #{transformer_block_forward.13} parent=51 // pred_fallthru
          _
        %s453 = sand.u32 %s41, 1
        %s454 = scalar_lea.sflag [#allocation3], %s453
        %s455 = sand.u32 %s41, 1
        %s456 = smul.addr %s455, 4
        %s457 = scalar_lea.vmem [#allocation2], %s456
        %p458 = pneg %p54
        %p459 = pneg %p51
        %s460 = sand.u32 %s33, 1
        %s461 = scalar_lea.sflag [#allocation6], %s460
        %s462 = sand.u32 %s67, 1
        %s463 = smul.addr %s462, 4
        %s464 = scalar_lea.vmem [#allocation5], %s463
        %p465 = pneg %p80
        %p466 = pneg %p77
        %s467 = sand.u32 %s33, 1
        %s468 = scalar_lea.sflag [#allocation6], %s467
        %s469 = sand.u32 %s93, 1
        %s470 = smul.addr %s469, 4
        %s471 = scalar_lea.vmem [#allocation7], %s470
        %p472 = pneg %p106
        %p473 = pneg %p103
        %s474 = sand.u32 %s33, 1
        %s475 = scalar_lea.sflag [#allocation9], %s474
        %s476 = sand.u32 %s119, 1
        %s477 = scalar_lea.vmem [#allocation8], %s476
        %p478 = pneg %p132
        %p479 = pneg %p129
        %s480 = sand.u32 %s33, 1
        %s481 = scalar_lea.sflag [#allocation9], %s480
        %s482 = sand.u32 %s145, 1
        %s483 = smul.addr %s482, 4
        %s484 = scalar_lea.vmem [#allocation10], %s483
        %p485 = pneg %p158
        %p486 = pneg %p155
        %p487 = pneg %p179
        %p488 = pneg %p176
        %p489 = pneg %p200
        %p490 = pneg %p197
        %p491 = pneg %p221
        %p492 = pneg %p218
        %p493 = pneg %p247
        %p494 = pneg %p244
        %s495 = sand.u32 %s234, 1
        %s496 = scalar_lea.sflag [#allocation4], %s495
        %s497 = sand.u32 %s234, 1
        %s498 = smul.addr %s497, 4
        %s499 = scalar_lea.vmem [#allocation16], %s498
        %v501 = vld [vmem:[%s401] sm:$0xf]
        %503 = vrot.lane.b32.xlu0 %v501, 120
        %v504 = vpop.permute.xlu0 %503
        %505 = vrot.lane.b32.xlu0 %v501, 112
        %v506 = vpop.permute.xlu0 %505
        %507 = vrot.lane.b32.xlu0 %v501, 104
        %v508 = vpop.permute.xlu0 %507
        %v511 = vpack.i.b16 %v504, %v501
        %v512 = vshrl.u32 %v501, 16
        %v513 = vshrl.u32 %v504, 16
        %v514 = vpack.i.b16 %v513, %v512
        %v517 = vpack.i.b16 %v508, %v506
        %v518 = vshrl.u32 %v506, 16
        %v519 = vshrl.u32 %v508, 16
        %v520 = vpack.i.b16 %v519, %v518
        %v523 = vunpack.c.l.s4 1983009808
        %v524 = vunpack.c.0.s8 %v523
        %v525 = vlaneseq
        %v526 = vshrl.u32 %v525, 7
        %v527 = vsub.s32 %v524, %v526
        %v528 = vrot.slane %v511, %v527
        %v531 = vunpack.c.l.s4 1983009808
        %v532 = vunpack.c.0.s8 %v531
        %v533 = vlaneseq
        %v534 = vshrl.u32 %v533, 7
        %v535 = vsub.s32 %v532, %v534
        %v536 = vrot.slane %v517, %v535
        %v537 = vcombine.low %v528, %v536
        %v538 = vcombine.high %v528, %v536
        %v540 = vunpack.c.l.s4 1934713408
        %v541 = vunpack.c.0.s8 %v540
        %v542 = vlaneseq
        %v543 = vshrl.u32 %v542, 7
        %v544 = vsub.s32 %v541, %v543
        %v545 = vrot.slane %v537, %v544
        %v547 = vunpack.c.l.s4 1934713408
        %v548 = vunpack.c.0.s8 %v547
        %v549 = vlaneseq
        %v550 = vshrl.u32 %v549, 7
        %v551 = vsub.s32 %v548, %v550
        %v552 = vrot.slane %v538, %v551
        %v553 = vcombine.high %v545, 0
        %v554 = vcombine.high %v552, 0
        %v557 = vunpack.c.l.s4 1983009808
        %v558 = vunpack.c.0.s8 %v557
        %v559 = vlaneseq
        %v560 = vshrl.u32 %v559, 7
        %v561 = vsub.s32 %v558, %v560
        %v562 = vrot.slane %v514, %v561
        %v565 = vunpack.c.l.s4 1983009808
        %v566 = vunpack.c.0.s8 %v565
        %v567 = vlaneseq
        %v568 = vshrl.u32 %v567, 7
        %v569 = vsub.s32 %v566, %v568
        %v570 = vrot.slane %v520, %v569
        %v571 = vcombine.low %v562, %v570
        %v572 = vcombine.high %v562, %v570
        %v574 = vunpack.c.l.s4 1934713408
        %v575 = vunpack.c.0.s8 %v574
        %v576 = vlaneseq
        %v577 = vshrl.u32 %v576, 7
        %v578 = vsub.s32 %v575, %v577
        %v579 = vrot.slane %v571, %v578
        %v581 = vunpack.c.l.s4 1934713408
        %v582 = vunpack.c.0.s8 %v581
        %v583 = vlaneseq
        %v584 = vshrl.u32 %v583, 7
        %v585 = vsub.s32 %v582, %v584
        %v586 = vrot.slane %v572, %v585
        %v587 = vcombine.high %v579, 0
        %v588 = vcombine.high %v586, 0
        %v589 = vld [vmem:[%s410] sm:$0xf]
        %591 = vrot.lane.b32.xlu0 %v589, 120
        %v592 = vpop.permute.xlu0 %591
        %593 = vrot.lane.b32.xlu0 %v589, 112
        %v594 = vpop.permute.xlu0 %593
        %595 = vrot.lane.b32.xlu0 %v589, 104
        %v596 = vpop.permute.xlu0 %595
        %v599 = vpack.i.b16 %v592, %v589
        %v600 = vshrl.u32 %v589, 16
        %v601 = vshrl.u32 %v592, 16
        %v602 = vpack.i.b16 %v601, %v600
        %v605 = vpack.i.b16 %v596, %v594
        %v606 = vshrl.u32 %v594, 16
        %v607 = vshrl.u32 %v596, 16
        %v608 = vpack.i.b16 %v607, %v606
        %v611 = vunpack.c.l.s4 1983009808
        %v612 = vunpack.c.0.s8 %v611
        %v613 = vlaneseq
        %v614 = vshrl.u32 %v613, 7
        %v615 = vsub.s32 %v612, %v614
        %v616 = vrot.slane %v599, %v615
        %v619 = vunpack.c.l.s4 1983009808
        %v620 = vunpack.c.0.s8 %v619
        %v621 = vlaneseq
        %v622 = vshrl.u32 %v621, 7
        %v623 = vsub.s32 %v620, %v622
        %v624 = vrot.slane %v605, %v623
        %v625 = vcombine.low %v616, %v624
        %v626 = vcombine.high %v616, %v624
        %v628 = vunpack.c.l.s4 1934713408
        %v629 = vunpack.c.0.s8 %v628
        %v630 = vlaneseq
        %v631 = vshrl.u32 %v630, 7
        %v632 = vsub.s32 %v629, %v631
        %v633 = vrot.slane %v625, %v632
        %v635 = vunpack.c.l.s4 1934713408
        %v636 = vunpack.c.0.s8 %v635
        %v637 = vlaneseq
        %v638 = vshrl.u32 %v637, 7
        %v639 = vsub.s32 %v636, %v638
        %v640 = vrot.slane %v626, %v639
        %v641 = vcombine.high %v633, 0
        %v642 = vcombine.high %v640, 0
        %v645 = vunpack.c.l.s4 1983009808
        %v646 = vunpack.c.0.s8 %v645
        %v647 = vlaneseq
        %v648 = vshrl.u32 %v647, 7
        %v649 = vsub.s32 %v646, %v648
        %v650 = vrot.slane %v602, %v649
        %v653 = vunpack.c.l.s4 1983009808
        %v654 = vunpack.c.0.s8 %v653
        %v655 = vlaneseq
        %v656 = vshrl.u32 %v655, 7
        %v657 = vsub.s32 %v654, %v656
        %v658 = vrot.slane %v608, %v657
        %v659 = vcombine.low %v650, %v658
        %v660 = vcombine.high %v650, %v658
        %v662 = vunpack.c.l.s4 1934713408
        %v663 = vunpack.c.0.s8 %v662
        %v664 = vlaneseq
        %v665 = vshrl.u32 %v664, 7
        %v666 = vsub.s32 %v663, %v665
        %v667 = vrot.slane %v659, %v666
        %v669 = vunpack.c.l.s4 1934713408
        %v670 = vunpack.c.0.s8 %v669
        %v671 = vlaneseq
        %v672 = vshrl.u32 %v671, 7
        %v673 = vsub.s32 %v670, %v672
        %v674 = vrot.slane %v660, %v673
        %v675 = vcombine.high %v667, 0
        %v676 = vcombine.high %v674, 0
        %v677 = vld [vmem:[%s419] sm:$0xf]
        %679 = vrot.lane.b32.xlu0 %v677, 120
        %v680 = vpop.permute.xlu0 %679
        %681 = vrot.lane.b32.xlu0 %v677, 112
        %v682 = vpop.permute.xlu0 %681
        %683 = vrot.lane.b32.xlu0 %v677, 104
        %v684 = vpop.permute.xlu0 %683
        %v687 = vpack.i.b16 %v680, %v677
        %v688 = vshrl.u32 %v677, 16
        %v689 = vshrl.u32 %v680, 16
        %v690 = vpack.i.b16 %v689, %v688
        %v693 = vpack.i.b16 %v684, %v682
        %v694 = vshrl.u32 %v682, 16
        %v695 = vshrl.u32 %v684, 16
        %v696 = vpack.i.b16 %v695, %v694
        %v699 = vunpack.c.l.s4 1983009808
        %v700 = vunpack.c.0.s8 %v699
        %v701 = vlaneseq
        %v702 = vshrl.u32 %v701, 7
        %v703 = vsub.s32 %v700, %v702
        %v704 = vrot.slane %v687, %v703
        %v707 = vunpack.c.l.s4 1983009808
        %v708 = vunpack.c.0.s8 %v707
        %v709 = vlaneseq
        %v710 = vshrl.u32 %v709, 7
        %v711 = vsub.s32 %v708, %v710
        %v712 = vrot.slane %v693, %v711
        %v713 = vcombine.low %v704, %v712
        %v714 = vcombine.high %v704, %v712
        %v716 = vunpack.c.l.s4 1934713408
        %v717 = vunpack.c.0.s8 %v716
        %v718 = vlaneseq
        %v719 = vshrl.u32 %v718, 7
        %v720 = vsub.s32 %v717, %v719
        %v721 = vrot.slane %v713, %v720
        %v723 = vunpack.c.l.s4 1934713408
        %v724 = vunpack.c.0.s8 %v723
        %v725 = vlaneseq
        %v726 = vshrl.u32 %v725, 7
        %v727 = vsub.s32 %v724, %v726
        %v728 = vrot.slane %v714, %v727
        %v729 = vcombine.high %v721, 0
        %v730 = vcombine.high %v728, 0
        %v733 = vunpack.c.l.s4 1983009808
        %v734 = vunpack.c.0.s8 %v733
        %v735 = vlaneseq
        %v736 = vshrl.u32 %v735, 7
        %v737 = vsub.s32 %v734, %v736
        %v738 = vrot.slane %v690, %v737
        %v741 = vunpack.c.l.s4 1983009808
        %v742 = vunpack.c.0.s8 %v741
        %v743 = vlaneseq
        %v744 = vshrl.u32 %v743, 7
        %v745 = vsub.s32 %v742, %v744
        %v746 = vrot.slane %v696, %v745
        %v747 = vcombine.low %v738, %v746
        %v748 = vcombine.high %v738, %v746
        %v750 = vunpack.c.l.s4 1934713408
        %v751 = vunpack.c.0.s8 %v750
        %v752 = vlaneseq
        %v753 = vshrl.u32 %v752, 7
        %v754 = vsub.s32 %v751, %v753
        %v755 = vrot.slane %v747, %v754
        %v757 = vunpack.c.l.s4 1934713408
        %v758 = vunpack.c.0.s8 %v757
        %v759 = vlaneseq
        %v760 = vshrl.u32 %v759, 7
        %v761 = vsub.s32 %v758, %v760
        %v762 = vrot.slane %v748, %v761
        %v763 = vcombine.high %v755, 0
        %v764 = vcombine.high %v762, 0
        %v765 = vcombine.low %v545, %v552
        %v767 = vunpack.c.l.s4 1983009808
        %v768 = vunpack.c.0.s8 %v767
        %v769 = vlaneseq
        %v770 = vshrl.u32 %v769, 7
        %v771 = vsub.s32 %v768, %v770
        %v772 = vrot.slane %v765, %v771
        %v773 = vcombine.low %v553, %v554
        %v775 = vunpack.c.l.s4 1983009808
        %v776 = vunpack.c.0.s8 %v775
        %v777 = vlaneseq
        %v778 = vshrl.u32 %v777, 7
        %v779 = vsub.s32 %v776, %v778
        %v780 = vrot.slane %v773, %v779
        %v781 = vcombine.low %v772, %v780
        %v783 = vunpack.c.l.s4 1934713408
        %v784 = vunpack.c.0.s8 %v783
        %v785 = vlaneseq
        %v786 = vshrl.u32 %v785, 7
        %v787 = vsub.s32 %v784, %v786
        %v788 = vrot.slane %v781, %v787
        %v789 = vcombine.high %v788, 0
        %v790 = vcombine.low %v579, %v586
        %v792 = vunpack.c.l.s4 1983009808
        %v793 = vunpack.c.0.s8 %v792
        %v794 = vlaneseq
        %v795 = vshrl.u32 %v794, 7
        %v796 = vsub.s32 %v793, %v795
        %v797 = vrot.slane %v790, %v796
        %v798 = vcombine.low %v587, %v588
        %v800 = vunpack.c.l.s4 1983009808
        %v801 = vunpack.c.0.s8 %v800
        %v802 = vlaneseq
        %v803 = vshrl.u32 %v802, 7
        %v804 = vsub.s32 %v801, %v803
        %v805 = vrot.slane %v798, %v804
        %v806 = vcombine.low %v797, %v805
        %v808 = vunpack.c.l.s4 1934713408
        %v809 = vunpack.c.0.s8 %v808
        %v810 = vlaneseq
        %v811 = vshrl.u32 %v810, 7
        %v812 = vsub.s32 %v809, %v811
        %v813 = vrot.slane %v806, %v812
        %v814 = vcombine.high %v813, 0
        %v817 = vpack.i.b16 %v813, %v788
        %v818 = vshrl.u32 %v788, 16
        %v819 = vshrl.u32 %v813, 16
        %v820 = vpack.i.b16 %v819, %v818
        %v823 = vpack.i.b16 %v814, %v789
        %v824 = vshrl.u32 %v789, 16
        %v825 = vshrl.u32 %v814, 16
        %v826 = vpack.i.b16 %v825, %v824
        %827 = vxpose.xlu0.c.b16.start [1/8] %v633, 128
        %828 = vxpose.xlu0.c.b16.cont [2/8] 0, 128
        %829 = vxpose.xlu0.c.b16.cont [3/8] 0, 128
        %830 = vxpose.xlu0.c.b16.cont [4/8] 0, 128
        %831 = vxpose.xlu0.c.b16.cont [5/8] 0, 128
        %832 = vxpose.xlu0.c.b16.cont [6/8] 0, 128
        %833 = vxpose.xlu0.c.b16.cont [7/8] 0, 128
        %834 = vxpose.xlu0.c.b16.end [8/8] 0, 128
        %v835 = vpop.trf.xlu0
        %v836 = vpop.trf.xlu0
        %v837 = vpop.trf.xlu0
        %v838 = vpop.trf.xlu0
        %v839 = vpop.trf.xlu0
        %v840 = vpop.trf.xlu0
        %v841 = vpop.trf.xlu0
        %v842 = vpop.trf.xlu0
        %843 = vxpose.xlu0.c.b16.start [1/8] %v667, 128
        %844 = vxpose.xlu0.c.b16.cont [2/8] 0, 128
        %845 = vxpose.xlu0.c.b16.cont [3/8] 0, 128
        %846 = vxpose.xlu0.c.b16.cont [4/8] 0, 128
        %847 = vxpose.xlu0.c.b16.cont [5/8] 0, 128
        %848 = vxpose.xlu0.c.b16.cont [6/8] 0, 128
        %849 = vxpose.xlu0.c.b16.cont [7/8] 0, 128
        %850 = vxpose.xlu0.c.b16.end [8/8] 0, 128
        %v851 = vpop.trf.xlu0
        %v852 = vpop.trf.xlu0
        %v853 = vpop.trf.xlu0
        %v854 = vpop.trf.xlu0
        %v855 = vpop.trf.xlu0
        %v856 = vpop.trf.xlu0
        %v857 = vpop.trf.xlu0
        %v858 = vpop.trf.xlu0
        %859 = vxpose.xlu0.c.b16.start [1/8] %v641, 128
        %860 = vxpose.xlu0.c.b16.cont [2/8] 0, 128
        %861 = vxpose.xlu0.c.b16.cont [3/8] 0, 128
        %862 = vxpose.xlu0.c.b16.cont [4/8] 0, 128
        %863 = vxpose.xlu0.c.b16.cont [5/8] 0, 128
        %864 = vxpose.xlu0.c.b16.cont [6/8] 0, 128
        %865 = vxpose.xlu0.c.b16.cont [7/8] 0, 128
        %866 = vxpose.xlu0.c.b16.end [8/8] 0, 128
        %v867 = vpop.trf.xlu0
        %v868 = vpop.trf.xlu0
        %v869 = vpop.trf.xlu0
        %v870 = vpop.trf.xlu0
        %v871 = vpop.trf.xlu0
        %v872 = vpop.trf.xlu0
        %v873 = vpop.trf.xlu0
        %v874 = vpop.trf.xlu0
        %875 = vxpose.xlu0.c.b16.start [1/8] %v675, 128
        %876 = vxpose.xlu0.c.b16.cont [2/8] 0, 128
        %877 = vxpose.xlu0.c.b16.cont [3/8] 0, 128
        %878 = vxpose.xlu0.c.b16.cont [4/8] 0, 128
        %879 = vxpose.xlu0.c.b16.cont [5/8] 0, 128
        %880 = vxpose.xlu0.c.b16.cont [6/8] 0, 128
        %881 = vxpose.xlu0.c.b16.cont [7/8] 0, 128
        %882 = vxpose.xlu0.c.b16.end [8/8] 0, 128
        %v883 = vpop.trf.xlu0
        %v884 = vpop.trf.xlu0
        %v885 = vpop.trf.xlu0
        %v886 = vpop.trf.xlu0
        %v887 = vpop.trf.xlu0
        %v888 = vpop.trf.xlu0
        %v889 = vpop.trf.xlu0
        %v890 = vpop.trf.xlu0
        %891 = vxpose.xlu0.c.b16.start [1/8] %v640, 128
        %892 = vxpose.xlu0.c.b16.cont [2/8] 0, 128
        %893 = vxpose.xlu0.c.b16.cont [3/8] 0, 128
        %894 = vxpose.xlu0.c.b16.cont [4/8] 0, 128
        %895 = vxpose.xlu0.c.b16.cont [5/8] 0, 128
        %896 = vxpose.xlu0.c.b16.cont [6/8] 0, 128
        %897 = vxpose.xlu0.c.b16.cont [7/8] 0, 128
        %898 = vxpose.xlu0.c.b16.end [8/8] 0, 128
        %v899 = vpop.trf.xlu0
        %v900 = vpop.trf.xlu0
        %v901 = vpop.trf.xlu0
        %v902 = vpop.trf.xlu0
        %v903 = vpop.trf.xlu0
        %v904 = vpop.trf.xlu0
        %v905 = vpop.trf.xlu0
        %v906 = vpop.trf.xlu0
        %907 = vxpose.xlu0.c.b16.start [1/8] %v674, 128
        %908 = vxpose.xlu0.c.b16.cont [2/8] 0, 128
        %909 = vxpose.xlu0.c.b16.cont [3/8] 0, 128
        %910 = vxpose.xlu0.c.b16.cont [4/8] 0, 128
        %911 = vxpose.xlu0.c.b16.cont [5/8] 0, 128
        %912 = vxpose.xlu0.c.b16.cont [6/8] 0, 128
        %913 = vxpose.xlu0.c.b16.cont [7/8] 0, 128
        %914 = vxpose.xlu0.c.b16.end [8/8] 0, 128
        %v915 = vpop.trf.xlu0
        %v916 = vpop.trf.xlu0
        %v917 = vpop.trf.xlu0
        %v918 = vpop.trf.xlu0
        %v919 = vpop.trf.xlu0
        %v920 = vpop.trf.xlu0
        %v921 = vpop.trf.xlu0
        %v922 = vpop.trf.xlu0
        %923 = vxpose.xlu0.c.b16.start [1/8] %v642, 128
        %924 = vxpose.xlu0.c.b16.cont [2/8] 0, 128
        %925 = vxpose.xlu0.c.b16.cont [3/8] 0, 128
        %926 = vxpose.xlu0.c.b16.cont [4/8] 0, 128
        %927 = vxpose.xlu0.c.b16.cont [5/8] 0, 128
        %928 = vxpose.xlu0.c.b16.cont [6/8] 0, 128
        %929 = vxpose.xlu0.c.b16.cont [7/8] 0, 128
        %930 = vxpose.xlu0.c.b16.end [8/8] 0, 128
        %v931 = vpop.trf.xlu0
        %v932 = vpop.trf.xlu0
        %v933 = vpop.trf.xlu0
        %v934 = vpop.trf.xlu0
        %v935 = vpop.trf.xlu0
        %v936 = vpop.trf.xlu0
        %v937 = vpop.trf.xlu0
        %v938 = vpop.trf.xlu0
        %939 = vxpose.xlu0.c.b16.start [1/8] %v676, 128
        %940 = vxpose.xlu0.c.b16.cont [2/8] 0, 128
        %941 = vxpose.xlu0.c.b16.cont [3/8] 0, 128
        %942 = vxpose.xlu0.c.b16.cont [4/8] 0, 128
        %943 = vxpose.xlu0.c.b16.cont [5/8] 0, 128
        %944 = vxpose.xlu0.c.b16.cont [6/8] 0, 128
        %945 = vxpose.xlu0.c.b16.cont [7/8] 0, 128
        %946 = vxpose.xlu0.c.b16.end [8/8] 0, 128
        %v947 = vpop.trf.xlu0
        %v948 = vpop.trf.xlu0
        %v949 = vpop.trf.xlu0
        %v950 = vpop.trf.xlu0
        %v951 = vpop.trf.xlu0
        %v952 = vpop.trf.xlu0
        %v953 = vpop.trf.xlu0
        %v954 = vpop.trf.xlu0
        %v955 = vcombine.low %v835, %v899
        %v957 = vunpack.c.l.s4 1983009808
        %v958 = vunpack.c.0.s8 %v957
        %v959 = vlaneseq
        %v960 = vshrl.u32 %v959, 7
        %v961 = vsub.s32 %v958, %v960
        %v962 = vrot.slane %v955, %v961
        %v963 = vcombine.low %v867, %v931
        %v965 = vunpack.c.l.s4 1983009808
        %v966 = vunpack.c.0.s8 %v965
        %v967 = vlaneseq
        %v968 = vshrl.u32 %v967, 7
        %v969 = vsub.s32 %v966, %v968
        %v970 = vrot.slane %v963, %v969
        %v971 = vcombine.low %v962, %v970
        %v972 = vcombine.high %v962, %v970
        %v974 = vunpack.c.l.s4 1934713408
        %v975 = vunpack.c.0.s8 %v974
        %v976 = vlaneseq
        %v977 = vshrl.u32 %v976, 7
        %v978 = vsub.s32 %v975, %v977
        %v979 = vrot.slane %v971, %v978
        %v981 = vunpack.c.l.s4 1934713408
        %v982 = vunpack.c.0.s8 %v981
        %v983 = vlaneseq
        %v984 = vshrl.u32 %v983, 7
        %v985 = vsub.s32 %v982, %v984
        %v986 = vrot.slane %v972, %v985
        %v987 = vcombine.high %v979, 0
        %v988 = vcombine.high %v986, 0
        %v989 = vcombine.low %v851, %v915
        %v991 = vunpack.c.l.s4 1983009808
        %v992 = vunpack.c.0.s8 %v991
        %v993 = vlaneseq
        %v994 = vshrl.u32 %v993, 7
        %v995 = vsub.s32 %v992, %v994
        %v996 = vrot.slane %v989, %v995
        %v997 = vcombine.low %v883, %v947
        %v999 = vunpack.c.l.s4 1983009808
        %v1000 = vunpack.c.0.s8 %v999
        %v1001 = vlaneseq
        %v1002 = vshrl.u32 %v1001, 7
        %v1003 = vsub.s32 %v1000, %v1002
        %v1004 = vrot.slane %v997, %v1003
        %v1005 = vcombine.low %v996, %v1004
        %v1006 = vcombine.high %v996, %v1004
        %v1008 = vunpack.c.l.s4 1934713408
        %v1009 = vunpack.c.0.s8 %v1008
        %v1010 = vlaneseq
        %v1011 = vshrl.u32 %v1010, 7
        %v1012 = vsub.s32 %v1009, %v1011
        %v1013 = vrot.slane %v1005, %v1012
        %v1015 = vunpack.c.l.s4 1934713408
        %v1016 = vunpack.c.0.s8 %v1015
        %v1017 = vlaneseq
        %v1018 = vshrl.u32 %v1017, 7
        %v1019 = vsub.s32 %v1016, %v1018
        %v1020 = vrot.slane %v1006, %v1019
        %v1021 = vcombine.high %v1013, 0
        %v1022 = vcombine.high %v1020, 0
        %v1025 = vpack.i.b16 %v1013, %v979
        %v1027 = vshrl.u32 %v979, 16
        %v1028 = vshrl.u32 %v1013, 16
        %v1029 = vpack.i.b16 %v1028, %v1027
        %v1033 = vpack.i.b16 %v1021, %v987
        %v1035 = vshrl.u32 %v987, 16
        %v1036 = vshrl.u32 %v1021, 16
        %v1037 = vpack.i.b16 %v1036, %v1035
        %v1041 = vpack.i.b16 %v1020, %v986
        %v1043 = vshrl.u32 %v986, 16
        %v1044 = vshrl.u32 %v1020, 16
        %v1045 = vpack.i.b16 %v1044, %v1043
        %v1049 = vpack.i.b16 %v1022, %v988
        %v1051 = vshrl.u32 %v988, 16
        %v1052 = vshrl.u32 %v1022, 16
        %v1053 = vpack.i.b16 %v1052, %v1051
        %1055 = vxpose.xlu0.c.b16.start [1/8] %v1025, 128
        %1056 = vxpose.xlu0.c.b16.cont [2/8] 0, 128
        %1057 = vxpose.xlu0.c.b16.cont [3/8] 0, 128
        %1058 = vxpose.xlu0.c.b16.cont [4/8] 0, 128
        %1059 = vxpose.xlu0.c.b16.cont [5/8] 0, 128
        %1060 = vxpose.xlu0.c.b16.cont [6/8] 0, 128
        %1061 = vxpose.xlu0.c.b16.cont [7/8] 0, 128
        %1062 = vxpose.xlu0.c.b16.end [8/8] 0, 128
        %v1063 = vpop.trf.xlu0
        %v1064 = vpop.trf.xlu0
        %v1065 = vpop.trf.xlu0
        %v1066 = vpop.trf.xlu0
        %v1067 = vpop.trf.xlu0
        %v1068 = vpop.trf.xlu0
        %v1069 = vpop.trf.xlu0
        %v1070 = vpop.trf.xlu0
        %1071 = vxpose.xlu0.c.b16.start [1/8] %v1029, 128
        %1072 = vxpose.xlu0.c.b16.cont [2/8] 0, 128
        %1073 = vxpose.xlu0.c.b16.cont [3/8] 0, 128
        %1074 = vxpose.xlu0.c.b16.cont [4/8] 0, 128
        %1075 = vxpose.xlu0.c.b16.cont [5/8] 0, 128
        %1076 = vxpose.xlu0.c.b16.cont [6/8] 0, 128
        %1077 = vxpose.xlu0.c.b16.cont [7/8] 0, 128
        %1078 = vxpose.xlu0.c.b16.end [8/8] 0, 128
        %v1079 = vpop.trf.xlu0
        %v1080 = vpop.trf.xlu0
        %v1081 = vpop.trf.xlu0
        %v1082 = vpop.trf.xlu0
        %v1083 = vpop.trf.xlu0
        %v1084 = vpop.trf.xlu0
        %v1085 = vpop.trf.xlu0
        %v1086 = vpop.trf.xlu0
        %1087 = vxpose.xlu0.c.b16.start [1/8] %v1033, 128
        %1088 = vxpose.xlu0.c.b16.cont [2/8] 0, 128
        %1089 = vxpose.xlu0.c.b16.cont [3/8] 0, 128
        %1090 = vxpose.xlu0.c.b16.cont [4/8] 0, 128
        %1091 = vxpose.xlu0.c.b16.cont [5/8] 0, 128
        %1092 = vxpose.xlu0.c.b16.cont [6/8] 0, 128
        %1093 = vxpose.xlu0.c.b16.cont [7/8] 0, 128
        %1094 = vxpose.xlu0.c.b16.end [8/8] 0, 128
        %v1095 = vpop.trf.xlu0
        %v1096 = vpop.trf.xlu0
        %v1097 = vpop.trf.xlu0
        %v1098 = vpop.trf.xlu0
        %v1099 = vpop.trf.xlu0
        %v1100 = vpop.trf.xlu0
        %v1101 = vpop.trf.xlu0
        %v1102 = vpop.trf.xlu0
        %1103 = vxpose.xlu0.c.b16.start [1/8] %v1037, 128
        %1104 = vxpose.xlu0.c.b16.cont [2/8] 0, 128
        %1105 = vxpose.xlu0.c.b16.cont [3/8] 0, 128
        %1106 = vxpose.xlu0.c.b16.cont [4/8] 0, 128
        %1107 = vxpose.xlu0.c.b16.cont [5/8] 0, 128
        %1108 = vxpose.xlu0.c.b16.cont [6/8] 0, 128
        %1109 = vxpose.xlu0.c.b16.cont [7/8] 0, 128
        %1110 = vxpose.xlu0.c.b16.end [8/8] 0, 128
        %v1111 = vpop.trf.xlu0
        %v1112 = vpop.trf.xlu0
        %v1113 = vpop.trf.xlu0
        %v1114 = vpop.trf.xlu0
        %v1115 = vpop.trf.xlu0
        %v1116 = vpop.trf.xlu0
        %v1117 = vpop.trf.xlu0
        %v1118 = vpop.trf.xlu0
        %1119 = vxpose.xlu0.c.b16.start [1/8] %v1041, 128
        %1120 = vxpose.xlu0.c.b16.cont [2/8] 0, 128
        %1121 = vxpose.xlu0.c.b16.cont [3/8] 0, 128
        %1122 = vxpose.xlu0.c.b16.cont [4/8] 0, 128
        %1123 = vxpose.xlu0.c.b16.cont [5/8] 0, 128
        %1124 = vxpose.xlu0.c.b16.cont [6/8] 0, 128
        %1125 = vxpose.xlu0.c.b16.cont [7/8] 0, 128
        %1126 = vxpose.xlu0.c.b16.end [8/8] 0, 128
        %v1127 = vpop.trf.xlu0
        %v1128 = vpop.trf.xlu0
        %v1129 = vpop.trf.xlu0
        %v1130 = vpop.trf.xlu0
        %v1131 = vpop.trf.xlu0
        %v1132 = vpop.trf.xlu0
        %v1133 = vpop.trf.xlu0
        %v1134 = vpop.trf.xlu0
        %1135 = vxpose.xlu0.c.b16.start [1/8] %v1045, 128
        %1136 = vxpose.xlu0.c.b16.cont [2/8] 0, 128
        %1137 = vxpose.xlu0.c.b16.cont [3/8] 0, 128
        %1138 = vxpose.xlu0.c.b16.cont [4/8] 0, 128
        %1139 = vxpose.xlu0.c.b16.cont [5/8] 0, 128
        %1140 = vxpose.xlu0.c.b16.cont [6/8] 0, 128
        %1141 = vxpose.xlu0.c.b16.cont [7/8] 0, 128
        %1142 = vxpose.xlu0.c.b16.end [8/8] 0, 128
        %v1143 = vpop.trf.xlu0
        %v1144 = vpop.trf.xlu0
        %v1145 = vpop.trf.xlu0
        %v1146 = vpop.trf.xlu0
        %v1147 = vpop.trf.xlu0
        %v1148 = vpop.trf.xlu0
        %v1149 = vpop.trf.xlu0
        %v1150 = vpop.trf.xlu0
        %1151 = vxpose.xlu0.c.b16.start [1/8] %v1049, 128
        %1152 = vxpose.xlu0.c.b16.cont [2/8] 0, 128
        %1153 = vxpose.xlu0.c.b16.cont [3/8] 0, 128
        %1154 = vxpose.xlu0.c.b16.cont [4/8] 0, 128
        %1155 = vxpose.xlu0.c.b16.cont [5/8] 0, 128
        %1156 = vxpose.xlu0.c.b16.cont [6/8] 0, 128
        %1157 = vxpose.xlu0.c.b16.cont [7/8] 0, 128
        %1158 = vxpose.xlu0.c.b16.end [8/8] 0, 128
        %v1159 = vpop.trf.xlu0
        %v1160 = vpop.trf.xlu0
        %v1161 = vpop.trf.xlu0
        %v1162 = vpop.trf.xlu0
        %v1163 = vpop.trf.xlu0
        %v1164 = vpop.trf.xlu0
        %v1165 = vpop.trf.xlu0
        %v1166 = vpop.trf.xlu0
        %1167 = vxpose.xlu0.c.b16.start [1/8] %v1053, 128
        %1168 = vxpose.xlu0.c.b16.cont [2/8] 0, 128
        %1169 = vxpose.xlu0.c.b16.cont [3/8] 0, 128
        %1170 = vxpose.xlu0.c.b16.cont [4/8] 0, 128
        %1171 = vxpose.xlu0.c.b16.cont [5/8] 0, 128
        %1172 = vxpose.xlu0.c.b16.cont [6/8] 0, 128
        %1173 = vxpose.xlu0.c.b16.cont [7/8] 0, 128
        %1174 = vxpose.xlu0.c.b16.end [8/8] 0, 128
        %v1175 = vpop.trf.xlu0
        %v1176 = vpop.trf.xlu0
        %v1177 = vpop.trf.xlu0
        %v1178 = vpop.trf.xlu0
        %v1179 = vpop.trf.xlu0
        %v1180 = vpop.trf.xlu0
        %v1181 = vpop.trf.xlu0
        %v1182 = vpop.trf.xlu0
        %v1183 = vcombine.low %v1063, %v1127
        %v1185 = vunpack.c.l.s4 1983009808
        %v1186 = vunpack.c.0.s8 %v1185
        %v1187 = vlaneseq
        %v1188 = vshrl.u32 %v1187, 7
        %v1189 = vsub.s32 %v1186, %v1188
        %v1190 = vrot.slane %v1183, %v1189
        %v1191 = vcombine.low %v1095, %v1159
        %v1193 = vunpack.c.l.s4 1983009808
        %v1194 = vunpack.c.0.s8 %v1193
        %v1195 = vlaneseq
        %v1196 = vshrl.u32 %v1195, 7
        %v1197 = vsub.s32 %v1194, %v1196
        %v1198 = vrot.slane %v1191, %v1197
        %v1199 = vcombine.low %v1190, %v1198
        %v1201 = vunpack.c.l.s4 1934713408
        %v1202 = vunpack.c.0.s8 %v1201
        %v1203 = vlaneseq
        %v1204 = vshrl.u32 %v1203, 7
        %v1205 = vsub.s32 %v1202, %v1204
        %v1206 = vrot.slane %v1199, %v1205
        %v1207 = vcombine.high %v1206, 0
        %v1208 = vcombine.low %v1079, %v1143
        %v1210 = vunpack.c.l.s4 1983009808
        %v1211 = vunpack.c.0.s8 %v1210
        %v1212 = vlaneseq
        %v1213 = vshrl.u32 %v1212, 7
        %v1214 = vsub.s32 %v1211, %v1213
        %v1215 = vrot.slane %v1208, %v1214
        %v1216 = vcombine.low %v1111, %v1175
        %v1218 = vunpack.c.l.s4 1983009808
        %v1219 = vunpack.c.0.s8 %v1218
        %v1220 = vlaneseq
        %v1221 = vshrl.u32 %v1220, 7
        %v1222 = vsub.s32 %v1219, %v1221
        %v1223 = vrot.slane %v1216, %v1222
        %v1224 = vcombine.low %v1215, %v1223
        %v1226 = vunpack.c.l.s4 1934713408
        %v1227 = vunpack.c.0.s8 %v1226
        %v1228 = vlaneseq
        %v1229 = vshrl.u32 %v1228, 7
        %v1230 = vsub.s32 %v1227, %v1229
        %v1231 = vrot.slane %v1224, %v1230
        %v1232 = vcombine.high %v1231, 0
        %v1235 = vpack.i.b16 %v1231, %v1206
        %v1236 = vshrl.u32 %v1206, 16
        %v1237 = vshrl.u32 %v1231, 16
        %v1238 = vpack.i.b16 %v1237, %v1236
        %v1241 = vpack.i.b16 %v1232, %v1207
        %v1242 = vshrl.u32 %v1207, 16
        %v1243 = vshrl.u32 %v1232, 16
        %v1244 = vpack.i.b16 %v1243, %v1242
        %vm1245 = vcmask 64512
        %v1247 = vsel %vm1245, %v817, 0
        %vm1249 = vcmask 1043456
        %v1251 = vsel %vm1249, %v1235, 0
        %1253 = vmatprep.subr.bf16.mxu0 0
        %1254 = vmatpush1.bf16.msra.mxu0 %v1251
        %1255 = vmatprep.subr.bf16.mxu0 0
        %1256 = vmatpush1.bf16.msra.mxu0 0
        %1257 = vmatprep.subr.bf16.mxu0 0
        %1258 = vmatpush1.bf16.msra.mxu0 0
        %1259 = vmatprep.subr.bf16.mxu0 0
        %1260 = vmatpush1.bf16.msra.mxu0 0
        %1261 = vmatprep.subr.bf16.mxu0 0
        %1262 = vmatpush1.bf16.msra.mxu0 0
        %1263 = vmatprep.subr.bf16.mxu0 0
        %1264 = vmatpush1.bf16.msra.mxu0 0
        %1265 = vmatprep.subr.bf16.mxu0 0
        %1266 = vmatpush1.bf16.msra.mxu0 0
        %1267 = vmatprep.subr.bf16.mxu0 0
        %1268 = vmatpush1.bf16.msra.mxu0 0
        %1269 = vmatprep.subr.bf16.mxu0 0
        %1270 = vmatpush1.bf16.msra.mxu0 0
        %1271 = vmatprep.subr.bf16.mxu0 0
        %1272 = vmatpush1.bf16.msra.mxu0 0
        %1273 = vmatprep.subr.bf16.mxu0 0
        %1274 = vmatpush1.bf16.msra.mxu0 0
        %1275 = vmatprep.subr.bf16.mxu0 0
        %1276 = vmatpush1.bf16.msra.mxu0 0
        %1277 = vmatprep.subr.bf16.mxu0 0
        %1278 = vmatpush1.bf16.msra.mxu0 0
        %1279 = vmatprep.subr.bf16.mxu0 0
        %1280 = vmatpush1.bf16.msra.mxu0 0
        %1281 = vmatprep.subr.bf16.mxu0 0
        %1282 = vmatpush1.bf16.msra.mxu0 0
        %1283 = vmatprep.subr.bf16.mxu0 0
        %1284 = vmatpush1.bf16.msra.mxu0 0
        %1285 = vmatprep.mubr.bf16.mxu0 0
        %1286 = vmatmul.mubr.bf16.gmra.mrb[0].mxu0 %v1247
        %v1287 = vpop.f32.mrb[0].mxu0
        %v1288 = vadd.f32 0.0, %v1287
        %v1289 = vpop.f32.mrb[0].mxu0
        %v1290 = vpop.f32.mrb[0].mxu0
        %v1291 = vpop.f32.mrb[0].mxu0
        %1292 = vdwg.mxu0
        %v1294 = vsel %vm1245, %v820, 0
        %v1297 = vsel %vm1249, %v1238, 0
        %1299 = vmatprep.subr.bf16.mxu0 0
        %1300 = vmatpush1.bf16.msra.mxu0 %v1297
        %1301 = vmatprep.subr.bf16.mxu0 0
        %1302 = vmatpush1.bf16.msra.mxu0 0
        %1303 = vmatprep.subr.bf16.mxu0 0
        %1304 = vmatpush1.bf16.msra.mxu0 0
        %1305 = vmatprep.subr.bf16.mxu0 0
        %1306 = vmatpush1.bf16.msra.mxu0 0
        %1307 = vmatprep.subr.bf16.mxu0 0
        %1308 = vmatpush1.bf16.msra.mxu0 0
        %1309 = vmatprep.subr.bf16.mxu0 0
        %1310 = vmatpush1.bf16.msra.mxu0 0
        %1311 = vmatprep.subr.bf16.mxu0 0
        %1312 = vmatpush1.bf16.msra.mxu0 0
        %1313 = vmatprep.subr.bf16.mxu0 0
        %1314 = vmatpush1.bf16.msra.mxu0 0
        %1315 = vmatprep.subr.bf16.mxu0 0
        %1316 = vmatpush1.bf16.msra.mxu0 0
        %1317 = vmatprep.subr.bf16.mxu0 0
        %1318 = vmatpush1.bf16.msra.mxu0 0
        %1319 = vmatprep.subr.bf16.mxu0 0
        %1320 = vmatpush1.bf16.msra.mxu0 0
        %1321 = vmatprep.subr.bf16.mxu0 0
        %1322 = vmatpush1.bf16.msra.mxu0 0
        %1323 = vmatprep.subr.bf16.mxu0 0
        %1324 = vmatpush1.bf16.msra.mxu0 0
        %1325 = vmatprep.subr.bf16.mxu0 0
        %1326 = vmatpush1.bf16.msra.mxu0 0
        %1327 = vmatprep.subr.bf16.mxu0 0
        %1328 = vmatpush1.bf16.msra.mxu0 0
        %1329 = vmatprep.subr.bf16.mxu0 0
        %1330 = vmatpush1.bf16.msra.mxu0 0
        %1331 = vmatprep.mubr.bf16.mxu0 0
        %1332 = vmatmul.mubr.bf16.gmra.mrb[0].mxu0 %v1294
        %v1333 = vpop.f32.mrb[0].mxu0
        %v1334 = vadd.f32 0.0, %v1333
        %v1335 = vpop.f32.mrb[0].mxu0
        %v1336 = vpop.f32.mrb[0].mxu0
        %v1337 = vpop.f32.mrb[0].mxu0
        %1338 = vdwg.mxu0
        %v1340 = vsel %vm1245, %v823, 0
        %v1343 = vsel %vm1249, %v1241, 0
        %1345 = vmatprep.subr.bf16.mxu0 0
        %1346 = vmatpush1.bf16.msra.mxu0 %v1343
        %1347 = vmatprep.subr.bf16.mxu0 0
        %1348 = vmatpush1.bf16.msra.mxu0 0
        %1349 = vmatprep.subr.bf16.mxu0 0
        %1350 = vmatpush1.bf16.msra.mxu0 0
        %1351 = vmatprep.subr.bf16.mxu0 0
        %1352 = vmatpush1.bf16.msra.mxu0 0
        %1353 = vmatprep.subr.bf16.mxu0 0
        %1354 = vmatpush1.bf16.msra.mxu0 0
        %1355 = vmatprep.subr.bf16.mxu0 0
        %1356 = vmatpush1.bf16.msra.mxu0 0
        %1357 = vmatprep.subr.bf16.mxu0 0
        %1358 = vmatpush1.bf16.msra.mxu0 0
        %1359 = vmatprep.subr.bf16.mxu0 0
        %1360 = vmatpush1.bf16.msra.mxu0 0
        %1361 = vmatprep.subr.bf16.mxu0 0
        %1362 = vmatpush1.bf16.msra.mxu0 0
        %1363 = vmatprep.subr.bf16.mxu0 0
        %1364 = vmatpush1.bf16.msra.mxu0 0
        %1365 = vmatprep.subr.bf16.mxu0 0
        %1366 = vmatpush1.bf16.msra.mxu0 0
        %1367 = vmatprep.subr.bf16.mxu0 0
        %1368 = vmatpush1.bf16.msra.mxu0 0
        %1369 = vmatprep.subr.bf16.mxu0 0
        %1370 = vmatpush1.bf16.msra.mxu0 0
        %1371 = vmatprep.subr.bf16.mxu0 0
        %1372 = vmatpush1.bf16.msra.mxu0 0
        %1373 = vmatprep.subr.bf16.mxu0 0
        %1374 = vmatpush1.bf16.msra.mxu0 0
        %1375 = vmatprep.subr.bf16.mxu0 0
        %1376 = vmatpush1.bf16.msra.mxu0 0
        %1377 = vmatprep.mubr.bf16.mxu0 0
        %1378 = vmatmul.mubr.bf16.gmra.mrb[0].mxu0 %v1340
        %v1379 = vpop.f32.mrb[0].mxu0
        %v1380 = vadd.f32 0.0, %v1379
        %v1381 = vpop.f32.mrb[0].mxu0
        %v1382 = vpop.f32.mrb[0].mxu0
        %v1383 = vpop.f32.mrb[0].mxu0
        %1384 = vdwg.mxu0
        %v1386 = vsel %vm1245, %v826, 0
        %v1389 = vsel %vm1249, %v1244, 0
        %1391 = vmatprep.subr.bf16.mxu0 0
        %1392 = vmatpush1.bf16.msra.mxu0 %v1389
        %1393 = vmatprep.subr.bf16.mxu0 0
        %1394 = vmatpush1.bf16.msra.mxu0 0
        %1395 = vmatprep.subr.bf16.mxu0 0
        %1396 = vmatpush1.bf16.msra.mxu0 0
        %1397 = vmatprep.subr.bf16.mxu0 0
        %1398 = vmatpush1.bf16.msra.mxu0 0
        %1399 = vmatprep.subr.bf16.mxu0 0
        %1400 = vmatpush1.bf16.msra.mxu0 0
        %1401 = vmatprep.subr.bf16.mxu0 0
        %1402 = vmatpush1.bf16.msra.mxu0 0
        %1403 = vmatprep.subr.bf16.mxu0 0
        %1404 = vmatpush1.bf16.msra.mxu0 0
        %1405 = vmatprep.subr.bf16.mxu0 0
        %1406 = vmatpush1.bf16.msra.mxu0 0
        %1407 = vmatprep.subr.bf16.mxu0 0
        %1408 = vmatpush1.bf16.msra.mxu0 0
        %1409 = vmatprep.subr.bf16.mxu0 0
        %1410 = vmatpush1.bf16.msra.mxu0 0
        %1411 = vmatprep.subr.bf16.mxu0 0
        %1412 = vmatpush1.bf16.msra.mxu0 0
        %1413 = vmatprep.subr.bf16.mxu0 0
        %1414 = vmatpush1.bf16.msra.mxu0 0
        %1415 = vmatprep.subr.bf16.mxu0 0
        %1416 = vmatpush1.bf16.msra.mxu0 0
        %1417 = vmatprep.subr.bf16.mxu0 0
        %1418 = vmatpush1.bf16.msra.mxu0 0
        %1419 = vmatprep.subr.bf16.mxu0 0
        %1420 = vmatpush1.bf16.msra.mxu0 0
        %1421 = vmatprep.subr.bf16.mxu0 0
        %1422 = vmatpush1.bf16.msra.mxu0 0
        %1423 = vmatprep.mubr.bf16.mxu0 0
        %1424 = vmatmul.mubr.bf16.gmra.mrb[0].mxu0 %v1386
        %v1425 = vpop.f32.mrb[0].mxu0
        %v1426 = vadd.f32 0.0, %v1425
        %v1427 = vpop.f32.mrb[0].mxu0
        %v1428 = vpop.f32.mrb[0].mxu0
        %v1429 = vpop.f32.mrb[0].mxu0
        %1430 = vdwg.mxu0
        %v1431 = vmul.f32 %v1288, 0.35355338
        %v1432 = vmul.f32 %v1334, 0.35355338
        %v1433 = vmul.f32 %v1380, 0.35355338
        %v1434 = vmul.f32 %v1426, 0.35355338
        %v1435 = vld [vmem:[%s427] sm:$0x1]
        %v1437 = vlaneseq
        %v1438 = vshrl.u32 %v1437, 7
        %v1439 = vsub.s32 0, %v1438
        %v1440 = vrot.slane %v1435, %v1439
        %v1442 = vadd.f32 %v1431, %v1440
        %v1443 = vadd.f32 %v1432, %v1440
        %v1444 = vadd.f32 %v1433, %v1440
        %v1445 = vadd.f32 %v1434, %v1440
        %v1446 = vsel %vm1245, %v1442, -inf
        %1447 = vmax.xlane.f32.xlu0 %v1446
        %v1448 = vpop.xlane.xlu0 %1447
        %v1449 = vsel %vm1245, %v1443, -inf
        %1450 = vmax.xlane.f32.xlu0 %v1449
        %v1451 = vpop.xlane.xlu0 %1450
        %v1452 = vsel %vm1245, %v1444, -inf
        %1453 = vmax.xlane.f32.xlu0 %v1452
        %v1454 = vpop.xlane.xlu0 %1453
        %v1455 = vsel %vm1245, %v1445, -inf
        %1456 = vmax.xlane.f32.xlu0 %v1455
        %v1457 = vpop.xlane.xlu0 %1456
        %v1458 = vld [vmem:[#allocation13] sm:$0x3]
        %v1459 = vunpack.c.l.bf16 %v1458
        %v1460 = vld [vmem:[#allocation14] sm:$0x3]
        %v1461 = vunpack.c.l.bf16 %v1460
        %v1462 = vunpack.c.l.bf16 %v545
        %v1463 = vunpack.c.l.bf16 %v579
        %v1464 = vunpack.c.l.bf16 %v553
        %v1465 = vunpack.c.l.bf16 %v587
        %v1466 = vunpack.c.l.bf16 %v552
        %v1467 = vunpack.c.l.bf16 %v586
        %v1468 = vunpack.c.l.bf16 %v554
        %v1469 = vunpack.c.l.bf16 %v588
        %v1470 = vmul.f32 %v1462, %v1459
        %v1471 = vmul.f32 %v1463, %v1459
        %v1472 = vmul.f32 %v1464, %v1459
        %v1473 = vmul.f32 %v1465, %v1459
        %v1474 = vmul.f32 %v1466, %v1459
        %v1475 = vmul.f32 %v1467, %v1459
        %v1476 = vmul.f32 %v1468, %v1459
        %v1477 = vmul.f32 %v1469, %v1459
        %vm1478 = vcmask 60416
        %v1479 = vsel %vm1478, %v1470, 0.0
        %1480 = vadd.xlane.f32.xlu0 %v1479
        %v1481 = vpop.xlane.xlu0 %1480
        %v1482 = vsel %vm1478, %v1471, 0.0
        %1483 = vadd.xlane.f32.xlu0 %v1482
        %v1484 = vpop.xlane.xlu0 %1483
        %v1485 = vsel %vm1478, %v1472, 0.0
        %1486 = vadd.xlane.f32.xlu0 %v1485
        %v1487 = vpop.xlane.xlu0 %1486
        %v1488 = vsel %vm1478, %v1473, 0.0
        %1489 = vadd.xlane.f32.xlu0 %v1488
        %v1490 = vpop.xlane.xlu0 %1489
        %v1491 = vsel %vm1478, %v1474, 0.0
        %1492 = vadd.xlane.f32.xlu0 %v1491
        %v1493 = vpop.xlane.xlu0 %1492
        %v1494 = vsel %vm1478, %v1475, 0.0
        %1495 = vadd.xlane.f32.xlu0 %v1494
        %v1496 = vpop.xlane.xlu0 %1495
        %v1497 = vsel %vm1478, %v1476, 0.0
        %1498 = vadd.xlane.f32.xlu0 %v1497
        %v1499 = vpop.xlane.xlu0 %1498
        %v1500 = vsel %vm1478, %v1477, 0.0
        %1501 = vadd.xlane.f32.xlu0 %v1500
        %v1502 = vpop.xlane.xlu0 %1501
        %v1511 = vlaneseq
        %v1512 = vand.u32 %v1511, 127
        %v1513 = vlaneseq
        %v1514 = vshrl.u32 %v1513, 7
        %v1515 = vsub.s32 %v1512, %v1514
        %v1516 = vrot.slane %v1481, %v1515
        %v1517 = vlaneseq
        %v1518 = vshrl.u32 %v1517, 7
        %v1519 = vsub.s32 %v1512, %v1518
        %v1520 = vrot.slane %v1484, %v1519
        %v1521 = vlaneseq
        %v1522 = vshrl.u32 %v1521, 7
        %v1523 = vsub.s32 %v1512, %v1522
        %v1524 = vrot.slane %v1487, %v1523
        %v1525 = vlaneseq
        %v1526 = vshrl.u32 %v1525, 7
        %v1527 = vsub.s32 %v1512, %v1526
        %v1528 = vrot.slane %v1490, %v1527
        %v1529 = vlaneseq
        %v1530 = vshrl.u32 %v1529, 7
        %v1531 = vsub.s32 %v1512, %v1530
        %v1532 = vrot.slane %v1493, %v1531
        %v1533 = vlaneseq
        %v1534 = vshrl.u32 %v1533, 7
        %v1535 = vsub.s32 %v1512, %v1534
        %v1536 = vrot.slane %v1496, %v1535
        %v1537 = vlaneseq
        %v1538 = vshrl.u32 %v1537, 7
        %v1539 = vsub.s32 %v1512, %v1538
        %v1540 = vrot.slane %v1499, %v1539
        %v1541 = vlaneseq
        %v1542 = vshrl.u32 %v1541, 7
        %v1543 = vsub.s32 %v1512, %v1542
        %v1544 = vrot.slane %v1502, %v1543
        %vm1545 = vcmask 1041409
        %v1546 = vsel %vm1545, %v1520, %v1516
        %vm1547 = vcmask 1042434
        %v1548 = vsel %vm1547, %v1524, %v1546
        %vm1549 = vcmask 1043459
        %v1550 = vsel %vm1549, %v1528, %v1548
        %vm1551 = vcmask 1044484
        %v1552 = vsel %vm1551, %v1532, %v1550
        %vm1553 = vcmask 1045509
        %v1554 = vsel %vm1553, %v1536, %v1552
        %vm1555 = vcmask 1046534
        %v1556 = vsel %vm1555, %v1540, %v1554
        %vm1557 = vcmask 1047559
        %v1558 = vsel %vm1557, %v1544, %v1556
        %1560 = vxpose.xlu0.b32.start [1/16] %v1558, 128
        %1561 = vxpose.xlu0.b32.cont [2/16] 0.0, 128
        %1562 = vxpose.xlu0.b32.cont [3/16] 0.0, 128
        %1563 = vxpose.xlu0.b32.cont [4/16] 0.0, 128
        %1564 = vxpose.xlu0.b32.cont [5/16] 0.0, 128
        %1565 = vxpose.xlu0.b32.cont [6/16] 0.0, 128
        %1566 = vxpose.xlu0.b32.cont [7/16] 0.0, 128
        %1567 = vxpose.xlu0.b32.cont [8/16] 0.0, 128
        %1568 = vxpose.xlu0.b32.cont [9/16] 0.0, 128
        %1569 = vxpose.xlu0.b32.cont [10/16] 0.0, 128
        %1570 = vxpose.xlu0.b32.cont [11/16] 0.0, 128
        %1571 = vxpose.xlu0.b32.cont [12/16] 0.0, 128
        %1572 = vxpose.xlu0.b32.cont [13/16] 0.0, 128
        %1573 = vxpose.xlu0.b32.cont [14/16] 0.0, 128
        %1574 = vxpose.xlu0.b32.cont [15/16] 0.0, 128
        %1575 = vxpose.xlu0.b32.end [16/16] 0.0, 128
        %v1576 = vpop.trf.xlu0
        %v1577 = vpop.trf.xlu0
        %v1578 = vpop.trf.xlu0
        %v1579 = vpop.trf.xlu0
        %v1580 = vpop.trf.xlu0
        %v1581 = vpop.trf.xlu0
        %v1582 = vpop.trf.xlu0
        %v1583 = vpop.trf.xlu0
        %v1584 = vpop.trf.xlu0
        %v1585 = vpop.trf.xlu0
        %v1586 = vpop.trf.xlu0
        %v1587 = vpop.trf.xlu0
        %v1588 = vpop.trf.xlu0
        %v1589 = vpop.trf.xlu0
        %v1590 = vpop.trf.xlu0
        %v1591 = vpop.trf.xlu0
        %v1592 = vlaneseq
        %v1593 = vshrl.u32 %v1592, 7
        %v1594 = vsub.s32 0, %v1593
        %v1595 = vrot.slane %v1576, %v1594
        %1597 = vbcast.lane.b32.xlu0 %v1595, 256
        %v1598 = vpop.permute.xlu0 %1597
        %v1599 = vlaneseq
        %v1600 = vshrl.u32 %v1599, 7
        %v1601 = vsub.s32 1, %v1600
        %v1602 = vrot.slane %v1576, %v1601
        %1604 = vbcast.lane.b32.xlu0 %v1602, 256
        %v1605 = vpop.permute.xlu0 %1604
        %v1606 = vlaneseq
        %v1607 = vshrl.u32 %v1606, 7
        %v1608 = vsub.s32 2, %v1607
        %v1609 = vrot.slane %v1576, %v1608
        %1611 = vbcast.lane.b32.xlu0 %v1609, 256
        %v1612 = vpop.permute.xlu0 %1611
        %v1613 = vlaneseq
        %v1614 = vshrl.u32 %v1613, 7
        %v1615 = vsub.s32 3, %v1614
        %v1616 = vrot.slane %v1576, %v1615
        %1618 = vbcast.lane.b32.xlu0 %v1616, 256
        %v1619 = vpop.permute.xlu0 %1618
        %v1620 = vmul.f32 %v1598, 0.35355338
        %v1621 = vmul.f32 %v1605, 0.35355338
        %v1622 = vmul.f32 %v1612, 0.35355338
        %v1623 = vmul.f32 %v1619, 0.35355338
        %v1624 = vmax.f32 %v1448, %v1620
        %v1625 = vmax.f32 %v1451, %v1621
        %v1626 = vmax.f32 %v1454, %v1622
        %v1627 = vmax.f32 %v1457, %v1623
        %v1628 = vsub.f32 %v1442, %v1624
        %v1629 = vsub.f32 %v1443, %v1625
        %v1630 = vsub.f32 %v1444, %v1626
        %v1631 = vsub.f32 %v1445, %v1627
        %v1632 = vmul.f32 %v1628, 1.442695
        %v1633 = vpow.pop %v1632
        %v1634 = vmul.f32 %v1629, 1.442695
        %v1635 = vpow.pop %v1634
        %v1636 = vmul.f32 %v1630, 1.442695
        %v1637 = vpow.pop %v1636
        %v1638 = vmul.f32 %v1631, 1.442695
        %v1639 = vpow.pop %v1638
        %v1640 = vsel %vm1245, %v1633, 0.0
        %1641 = vadd.xlane.f32.xlu0 %v1640
        %v1642 = vpop.xlane.xlu0 %1641
        %v1643 = vsel %vm1245, %v1635, 0.0
        %1644 = vadd.xlane.f32.xlu0 %v1643
        %v1645 = vpop.xlane.xlu0 %1644
        %v1646 = vsel %vm1245, %v1637, 0.0
        %1647 = vadd.xlane.f32.xlu0 %v1646
        %v1648 = vpop.xlane.xlu0 %1647
        %v1649 = vsel %vm1245, %v1639, 0.0
        %1650 = vadd.xlane.f32.xlu0 %v1649
        %v1651 = vpop.xlane.xlu0 %1650
        %v1652 = vpack.c.bf16 %v1633, %v1633
        %v1653 = vpack.c.bf16 %v1635, %v1635
        %v1654 = vpack.c.bf16 %v1637, %v1637
        %v1655 = vpack.c.bf16 %v1639, %v1639
        %v1656 = vsub.f32 %v1620, %v1624
        %v1657 = vsub.f32 %v1621, %v1625
        %v1658 = vsub.f32 %v1622, %v1626
        %v1659 = vsub.f32 %v1623, %v1627
        %v1660 = vmul.f32 %v1656, 1.442695
        %v1661 = vpow.pop %v1660
        %v1662 = vmul.f32 %v1657, 1.442695
        %v1663 = vpow.pop %v1662
        %v1664 = vmul.f32 %v1658, 1.442695
        %v1665 = vpow.pop %v1664
        %v1666 = vmul.f32 %v1659, 1.442695
        %v1667 = vpow.pop %v1666
        %v1668 = vadd.f32 %v1642, %v1661
        %v1669 = vadd.f32 %v1645, %v1663
        %v1670 = vadd.f32 %v1648, %v1665
        %v1671 = vadd.f32 %v1651, %v1667
        %v1674 = vunpack.c.l.s4 1966171168
        %v1675 = vunpack.c.0.s8 %v1674
        %v1676 = vlaneseq
        %v1677 = vshrl.u32 %v1676, 7
        %v1678 = vsub.s32 %v1675, %v1677
        %v1679 = vrot.slane %v1461, %v1678
        %v1680 = vcombine.high %v1679, %v1679
        %v1682 = vunpack.c.l.s4 1966171168
        %v1683 = vunpack.c.0.s8 %v1682
        %v1684 = vlaneseq
        %v1685 = vshrl.u32 %v1684, 7
        %v1686 = vsub.s32 %v1683, %v1685
        %v1687 = vrot.slane %v1679, %v1686
        %v1689 = vunpack.c.l.s4 1966171168
        %v1690 = vunpack.c.0.s8 %v1689
        %v1691 = vlaneseq
        %v1692 = vshrl.u32 %v1691, 7
        %v1693 = vsub.s32 %v1690, %v1692
        %v1694 = vrot.slane %v1680, %v1693
        %v1695 = vcombine.high %v1687, %v1687
        %v1696 = vcombine.high %v1694, %v1694
        %v1697 = vlaneseq
        %v1698 = vshrl.u32 %v1697, 7
        %v1699 = vsub.s32 0, %v1698
        %v1700 = vrot.slane %v1687, %v1699
        %v1701 = vlaneseq
        %v1702 = vshrl.u32 %v1701, 7
        %v1703 = vsub.s32 0, %v1702
        %v1704 = vrot.slane %v1694, %v1703
        %v1705 = vlaneseq
        %v1706 = vshrl.u32 %v1705, 7
        %v1707 = vsub.s32 0, %v1706
        %v1708 = vrot.slane %v1695, %v1707
        %v1709 = vlaneseq
        %v1710 = vshrl.u32 %v1709, 7
        %v1711 = vsub.s32 0, %v1710
        %v1712 = vrot.slane %v1696, %v1711
        %v1717 = vmul.f32 %v1661, %v1700
        %v1718 = vmul.f32 %v1663, %v1704
        %v1719 = vmul.f32 %v1665, %v1708
        %v1720 = vmul.f32 %v1667, %v1712
        %v1721 = vcombine.low %v721, %v728
        %v1723 = vunpack.c.l.s4 1983009808
        %v1724 = vunpack.c.0.s8 %v1723
        %v1725 = vlaneseq
        %v1726 = vshrl.u32 %v1725, 7
        %v1727 = vsub.s32 %v1724, %v1726
        %v1728 = vrot.slane %v1721, %v1727
        %v1729 = vcombine.low %v729, %v730
        %v1731 = vunpack.c.l.s4 1983009808
        %v1732 = vunpack.c.0.s8 %v1731
        %v1733 = vlaneseq
        %v1734 = vshrl.u32 %v1733, 7
        %v1735 = vsub.s32 %v1732, %v1734
        %v1736 = vrot.slane %v1729, %v1735
        %v1737 = vcombine.low %v1728, %v1736
        %v1739 = vunpack.c.l.s4 1934713408
        %v1740 = vunpack.c.0.s8 %v1739
        %v1741 = vlaneseq
        %v1742 = vshrl.u32 %v1741, 7
        %v1743 = vsub.s32 %v1740, %v1742
        %v1744 = vrot.slane %v1737, %v1743
        %v1745 = vcombine.high %v1744, 0
        %v1746 = vcombine.low %v755, %v762
        %v1748 = vunpack.c.l.s4 1983009808
        %v1749 = vunpack.c.0.s8 %v1748
        %v1750 = vlaneseq
        %v1751 = vshrl.u32 %v1750, 7
        %v1752 = vsub.s32 %v1749, %v1751
        %v1753 = vrot.slane %v1746, %v1752
        %v1754 = vcombine.low %v763, %v764
        %v1756 = vunpack.c.l.s4 1983009808
        %v1757 = vunpack.c.0.s8 %v1756
        %v1758 = vlaneseq
        %v1759 = vshrl.u32 %v1758, 7
        %v1760 = vsub.s32 %v1757, %v1759
        %v1761 = vrot.slane %v1754, %v1760
        %v1762 = vcombine.low %v1753, %v1761
        %v1764 = vunpack.c.l.s4 1934713408
        %v1765 = vunpack.c.0.s8 %v1764
        %v1766 = vlaneseq
        %v1767 = vshrl.u32 %v1766, 7
        %v1768 = vsub.s32 %v1765, %v1767
        %v1769 = vrot.slane %v1762, %v1768
        %v1770 = vcombine.high %v1769, 0
        %v1773 = vpack.i.b16 %v1769, %v1744
        %v1774 = vshrl.u32 %v1744, 16
        %v1775 = vshrl.u32 %v1769, 16
        %v1776 = vpack.i.b16 %v1775, %v1774
        %v1779 = vpack.i.b16 %v1770, %v1745
        %v1780 = vshrl.u32 %v1745, 16
        %v1781 = vshrl.u32 %v1770, 16
        %v1782 = vpack.i.b16 %v1781, %v1780
        %v1784 = vsel %vm1245, %v1652, 0
        %v1787 = vsel %vm1249, %v1773, 0
        %1789 = vmatprep.subr.bf16.mxu0 0
        %1790 = vmatpush1.bf16.msra.mxu0 %v1787
        %1791 = vmatprep.subr.bf16.mxu0 0
        %1792 = vmatpush1.bf16.msra.mxu0 0
        %1793 = vmatprep.subr.bf16.mxu0 0
        %1794 = vmatpush1.bf16.msra.mxu0 0
        %1795 = vmatprep.subr.bf16.mxu0 0
        %1796 = vmatpush1.bf16.msra.mxu0 0
        %1797 = vmatprep.subr.bf16.mxu0 0
        %1798 = vmatpush1.bf16.msra.mxu0 0
        %1799 = vmatprep.subr.bf16.mxu0 0
        %1800 = vmatpush1.bf16.msra.mxu0 0
        %1801 = vmatprep.subr.bf16.mxu0 0
        %1802 = vmatpush1.bf16.msra.mxu0 0
        %1803 = vmatprep.subr.bf16.mxu0 0
        %1804 = vmatpush1.bf16.msra.mxu0 0
        %1805 = vmatprep.subr.bf16.mxu0 0
        %1806 = vmatpush1.bf16.msra.mxu0 0
        %1807 = vmatprep.subr.bf16.mxu0 0
        %1808 = vmatpush1.bf16.msra.mxu0 0
        %1809 = vmatprep.subr.bf16.mxu0 0
        %1810 = vmatpush1.bf16.msra.mxu0 0
        %1811 = vmatprep.subr.bf16.mxu0 0
        %1812 = vmatpush1.bf16.msra.mxu0 0
        %1813 = vmatprep.subr.bf16.mxu0 0
        %1814 = vmatpush1.bf16.msra.mxu0 0
        %1815 = vmatprep.subr.bf16.mxu0 0
        %1816 = vmatpush1.bf16.msra.mxu0 0
        %1817 = vmatprep.subr.bf16.mxu0 0
        %1818 = vmatpush1.bf16.msra.mxu0 0
        %1819 = vmatprep.subr.bf16.mxu0 0
        %1820 = vmatpush1.bf16.msra.mxu0 0
        %1821 = vmatprep.mubr.bf16.mxu0 0
        %1822 = vmatmul.mubr.bf16.gmra.mrb[0].mxu0 %v1784
        %v1823 = vpop.f32.mrb[0].mxu0
        %v1824 = vadd.f32 %v1717, %v1823
        %v1825 = vpop.f32.mrb[0].mxu0
        %v1826 = vpop.f32.mrb[0].mxu0
        %v1827 = vpop.f32.mrb[0].mxu0
        %1828 = vdwg.mxu0
        %v1830 = vsel %vm1245, %v1653, 0
        %v1833 = vsel %vm1249, %v1776, 0
        %1835 = vmatprep.subr.bf16.mxu0 0
        %1836 = vmatpush1.bf16.msra.mxu0 %v1833
        %1837 = vmatprep.subr.bf16.mxu0 0
        %1838 = vmatpush1.bf16.msra.mxu0 0
        %1839 = vmatprep.subr.bf16.mxu0 0
        %1840 = vmatpush1.bf16.msra.mxu0 0
        %1841 = vmatprep.subr.bf16.mxu0 0
        %1842 = vmatpush1.bf16.msra.mxu0 0
        %1843 = vmatprep.subr.bf16.mxu0 0
        %1844 = vmatpush1.bf16.msra.mxu0 0
        %1845 = vmatprep.subr.bf16.mxu0 0
        %1846 = vmatpush1.bf16.msra.mxu0 0
        %1847 = vmatprep.subr.bf16.mxu0 0
        %1848 = vmatpush1.bf16.msra.mxu0 0
        %1849 = vmatprep.subr.bf16.mxu0 0
        %1850 = vmatpush1.bf16.msra.mxu0 0
        %1851 = vmatprep.subr.bf16.mxu0 0
        %1852 = vmatpush1.bf16.msra.mxu0 0
        %1853 = vmatprep.subr.bf16.mxu0 0
        %1854 = vmatpush1.bf16.msra.mxu0 0
        %1855 = vmatprep.subr.bf16.mxu0 0
        %1856 = vmatpush1.bf16.msra.mxu0 0
        %1857 = vmatprep.subr.bf16.mxu0 0
        %1858 = vmatpush1.bf16.msra.mxu0 0
        %1859 = vmatprep.subr.bf16.mxu0 0
        %1860 = vmatpush1.bf16.msra.mxu0 0
        %1861 = vmatprep.subr.bf16.mxu0 0
        %1862 = vmatpush1.bf16.msra.mxu0 0
        %1863 = vmatprep.subr.bf16.mxu0 0
        %1864 = vmatpush1.bf16.msra.mxu0 0
        %1865 = vmatprep.subr.bf16.mxu0 0
        %1866 = vmatpush1.bf16.msra.mxu0 0
        %1867 = vmatprep.mubr.bf16.mxu0 0
        %1868 = vmatmul.mubr.bf16.gmra.mrb[0].mxu0 %v1830
        %v1869 = vpop.f32.mrb[0].mxu0
        %v1870 = vadd.f32 %v1718, %v1869
        %v1871 = vpop.f32.mrb[0].mxu0
        %v1872 = vpop.f32.mrb[0].mxu0
        %v1873 = vpop.f32.mrb[0].mxu0
        %1874 = vdwg.mxu0
        %v1876 = vsel %vm1245, %v1654, 0
        %v1879 = vsel %vm1249, %v1779, 0
        %1881 = vmatprep.subr.bf16.mxu0 0
        %1882 = vmatpush1.bf16.msra.mxu0 %v1879
        %1883 = vmatprep.subr.bf16.mxu0 0
        %1884 = vmatpush1.bf16.msra.mxu0 0
        %1885 = vmatprep.subr.bf16.mxu0 0
        %1886 = vmatpush1.bf16.msra.mxu0 0
        %1887 = vmatprep.subr.bf16.mxu0 0
        %1888 = vmatpush1.bf16.msra.mxu0 0
        %1889 = vmatprep.subr.bf16.mxu0 0
        %1890 = vmatpush1.bf16.msra.mxu0 0
        %1891 = vmatprep.subr.bf16.mxu0 0
        %1892 = vmatpush1.bf16.msra.mxu0 0
        %1893 = vmatprep.subr.bf16.mxu0 0
        %1894 = vmatpush1.bf16.msra.mxu0 0
        %1895 = vmatprep.subr.bf16.mxu0 0
        %1896 = vmatpush1.bf16.msra.mxu0 0
        %1897 = vmatprep.subr.bf16.mxu0 0
        %1898 = vmatpush1.bf16.msra.mxu0 0
        %1899 = vmatprep.subr.bf16.mxu0 0
        %1900 = vmatpush1.bf16.msra.mxu0 0
        %1901 = vmatprep.subr.bf16.mxu0 0
        %1902 = vmatpush1.bf16.msra.mxu0 0
        %1903 = vmatprep.subr.bf16.mxu0 0
        %1904 = vmatpush1.bf16.msra.mxu0 0
        %1905 = vmatprep.subr.bf16.mxu0 0
        %1906 = vmatpush1.bf16.msra.mxu0 0
        %1907 = vmatprep.subr.bf16.mxu0 0
        %1908 = vmatpush1.bf16.msra.mxu0 0
        %1909 = vmatprep.subr.bf16.mxu0 0
        %1910 = vmatpush1.bf16.msra.mxu0 0
        %1911 = vmatprep.subr.bf16.mxu0 0
        %1912 = vmatpush1.bf16.msra.mxu0 0
        %1913 = vmatprep.mubr.bf16.mxu0 0
        %1914 = vmatmul.mubr.bf16.gmra.mrb[0].mxu0 %v1876
        %v1915 = vpop.f32.mrb[0].mxu0
        %v1916 = vadd.f32 %v1719, %v1915
        %v1917 = vpop.f32.mrb[0].mxu0
        %v1918 = vpop.f32.mrb[0].mxu0
        %v1919 = vpop.f32.mrb[0].mxu0
        %1920 = vdwg.mxu0
        %v1922 = vsel %vm1245, %v1655, 0
        %v1925 = vsel %vm1249, %v1782, 0
        %1927 = vmatprep.subr.bf16.mxu0 0
        %1928 = vmatpush1.bf16.msra.mxu0 %v1925
        %1929 = vmatprep.subr.bf16.mxu0 0
        %1930 = vmatpush1.bf16.msra.mxu0 0
        %1931 = vmatprep.subr.bf16.mxu0 0
        %1932 = vmatpush1.bf16.msra.mxu0 0
        %1933 = vmatprep.subr.bf16.mxu0 0
        %1934 = vmatpush1.bf16.msra.mxu0 0
        %1935 = vmatprep.subr.bf16.mxu0 0
        %1936 = vmatpush1.bf16.msra.mxu0 0
        %1937 = vmatprep.subr.bf16.mxu0 0
        %1938 = vmatpush1.bf16.msra.mxu0 0
        %1939 = vmatprep.subr.bf16.mxu0 0
        %1940 = vmatpush1.bf16.msra.mxu0 0
        %1941 = vmatprep.subr.bf16.mxu0 0
        %1942 = vmatpush1.bf16.msra.mxu0 0
        %1943 = vmatprep.subr.bf16.mxu0 0
        %1944 = vmatpush1.bf16.msra.mxu0 0
        %1945 = vmatprep.subr.bf16.mxu0 0
        %1946 = vmatpush1.bf16.msra.mxu0 0
        %1947 = vmatprep.subr.bf16.mxu0 0
        %1948 = vmatpush1.bf16.msra.mxu0 0
        %1949 = vmatprep.subr.bf16.mxu0 0
        %1950 = vmatpush1.bf16.msra.mxu0 0
        %1951 = vmatprep.subr.bf16.mxu0 0
        %1952 = vmatpush1.bf16.msra.mxu0 0
        %1953 = vmatprep.subr.bf16.mxu0 0
        %1954 = vmatpush1.bf16.msra.mxu0 0
        %1955 = vmatprep.subr.bf16.mxu0 0
        %1956 = vmatpush1.bf16.msra.mxu0 0
        %1957 = vmatprep.subr.bf16.mxu0 0
        %1958 = vmatpush1.bf16.msra.mxu0 0
        %1959 = vmatprep.mubr.bf16.mxu0 0
        %1960 = vmatmul.mubr.bf16.gmra.mrb[0].mxu0 %v1922
        %v1961 = vpop.f32.mrb[0].mxu0
        %v1962 = vadd.f32 %v1720, %v1961
        %v1963 = vpop.f32.mrb[0].mxu0
        %v1964 = vpop.f32.mrb[0].mxu0
        %v1965 = vpop.f32.mrb[0].mxu0
        %1966 = vdwg.mxu0
        %v1967 = vrcp.pop %v1668
        %v1968 = vrcp.pop %v1669
        %v1969 = vrcp.pop %v1670
        %v1970 = vrcp.pop %v1671
        %v1971 = vmul.f32 %v1824, %v1967
        %v1972 = vmul.f32 %v1870, %v1968
        %v1973 = vmul.f32 %v1916, %v1969
        %v1974 = vmul.f32 %v1962, %v1970
        %v1975 = vcombine.low %v1971, %v1973
        %v1976 = vcombine.high %v1971, %v1973
        %v1978 = vunpack.c.l.s4 1983009808
        %v1979 = vunpack.c.0.s8 %v1978
        %v1980 = vlaneseq
        %v1981 = vshrl.u32 %v1980, 7
        %v1982 = vsub.s32 %v1979, %v1981
        %v1983 = vrot.slane %v1975, %v1982
        %v1985 = vunpack.c.l.s4 1983009808
        %v1986 = vunpack.c.0.s8 %v1985
        %v1987 = vlaneseq
        %v1988 = vshrl.u32 %v1987, 7
        %v1989 = vsub.s32 %v1986, %v1988
        %v1990 = vrot.slane %v1976, %v1989
        %v1991 = vcombine.low %v1972, %v1974
        %v1992 = vcombine.high %v1972, %v1974
        %v1994 = vunpack.c.l.s4 1983009808
        %v1995 = vunpack.c.0.s8 %v1994
        %v1996 = vlaneseq
        %v1997 = vshrl.u32 %v1996, 7
        %v1998 = vsub.s32 %v1995, %v1997
        %v1999 = vrot.slane %v1991, %v1998
        %v2001 = vunpack.c.l.s4 1983009808
        %v2002 = vunpack.c.0.s8 %v2001
        %v2003 = vlaneseq
        %v2004 = vshrl.u32 %v2003, 7
        %v2005 = vsub.s32 %v2002, %v2004
        %v2006 = vrot.slane %v1992, %v2005
        %v2007 = vcombine.low %v1983, %v1999
        %v2008 = vcombine.high %v1983, %v1999
        %v2010 = vunpack.c.l.s4 1934713408
        %v2011 = vunpack.c.0.s8 %v2010
        %v2012 = vlaneseq
        %v2013 = vshrl.u32 %v2012, 7
        %v2014 = vsub.s32 %v2011, %v2013
        %v2015 = vrot.slane %v2007, %v2014
        %v2017 = vunpack.c.l.s4 1934713408
        %v2018 = vunpack.c.0.s8 %v2017
        %v2019 = vlaneseq
        %v2020 = vshrl.u32 %v2019, 7
        %v2021 = vsub.s32 %v2018, %v2020
        %v2022 = vrot.slane %v2008, %v2021
        %v2023 = vcombine.low %v1990, %v2006
        %v2024 = vcombine.high %v1990, %v2006
        %v2026 = vunpack.c.l.s4 1934713408
        %v2027 = vunpack.c.0.s8 %v2026
        %v2028 = vlaneseq
        %v2029 = vshrl.u32 %v2028, 7
        %v2030 = vsub.s32 %v2027, %v2029
        %v2031 = vrot.slane %v2023, %v2030
        %v2033 = vunpack.c.l.s4 1934713408
        %v2034 = vunpack.c.0.s8 %v2033
        %v2035 = vlaneseq
        %v2036 = vshrl.u32 %v2035, 7
        %v2037 = vsub.s32 %v2034, %v2036
        %v2038 = vrot.slane %v2024, %v2037
        %v2039 = vcombine.high %v2015, 0.0
        %v2040 = vcombine.high %v2022, 0.0
        %v2041 = vcombine.high %v2031, 0.0
        %v2042 = vcombine.high %v2038, 0.0
        %v2043 = vcombine.low %v2015, %v2022
        %v2045 = vunpack.c.l.s4 1983009808
        %v2046 = vunpack.c.0.s8 %v2045
        %v2047 = vlaneseq
        %v2048 = vshrl.u32 %v2047, 7
        %v2049 = vsub.s32 %v2046, %v2048
        %v2050 = vrot.slane %v2043, %v2049
        %v2051 = vcombine.low %v2039, %v2040
        %v2053 = vunpack.c.l.s4 1983009808
        %v2054 = vunpack.c.0.s8 %v2053
        %v2055 = vlaneseq
        %v2056 = vshrl.u32 %v2055, 7
        %v2057 = vsub.s32 %v2054, %v2056
        %v2058 = vrot.slane %v2051, %v2057
        %v2059 = vcombine.low %v2031, %v2038
        %v2061 = vunpack.c.l.s4 1983009808
        %v2062 = vunpack.c.0.s8 %v2061
        %v2063 = vlaneseq
        %v2064 = vshrl.u32 %v2063, 7
        %v2065 = vsub.s32 %v2062, %v2064
        %v2066 = vrot.slane %v2059, %v2065
        %v2067 = vcombine.low %v2041, %v2042
        %v2069 = vunpack.c.l.s4 1983009808
        %v2070 = vunpack.c.0.s8 %v2069
        %v2071 = vlaneseq
        %v2072 = vshrl.u32 %v2071, 7
        %v2073 = vsub.s32 %v2070, %v2072
        %v2074 = vrot.slane %v2067, %v2073
        %v2075 = vcombine.low %v2050, %v2058
        %v2076 = vcombine.high %v2050, %v2058
        %v2078 = vunpack.c.l.s4 1934713408
        %v2079 = vunpack.c.0.s8 %v2078
        %v2080 = vlaneseq
        %v2081 = vshrl.u32 %v2080, 7
        %v2082 = vsub.s32 %v2079, %v2081
        %v2083 = vrot.slane %v2075, %v2082
        %v2085 = vunpack.c.l.s4 1934713408
        %v2086 = vunpack.c.0.s8 %v2085
        %v2087 = vlaneseq
        %v2088 = vshrl.u32 %v2087, 7
        %v2089 = vsub.s32 %v2086, %v2088
        %v2090 = vrot.slane %v2076, %v2089
        %v2091 = vcombine.low %v2066, %v2074
        %v2092 = vcombine.high %v2066, %v2074
        %v2094 = vunpack.c.l.s4 1934713408
        %v2095 = vunpack.c.0.s8 %v2094
        %v2096 = vlaneseq
        %v2097 = vshrl.u32 %v2096, 7
        %v2098 = vsub.s32 %v2095, %v2097
        %v2099 = vrot.slane %v2091, %v2098
        %v2101 = vunpack.c.l.s4 1934713408
        %v2102 = vunpack.c.0.s8 %v2101
        %v2103 = vlaneseq
        %v2104 = vshrl.u32 %v2103, 7
        %v2105 = vsub.s32 %v2102, %v2104
        %v2106 = vrot.slane %v2092, %v2105
        %v2107 = vcombine.low %v2083, %v2099
        %v2108 = vcombine.high %v2083, %v2099
        %v2109 = vcombine.low %v2090, %v2106
        %v2110 = vcombine.high %v2090, %v2106
        %2112 = vrot.lane.b32.xlu0 %v2108, 8
        %v2113 = vpop.permute.xlu0 %2112
        %2116 = vrot.lane.b32.xlu0 %v2109, 16
        %v2117 = vpop.permute.xlu0 %2116
        %2120 = vrot.lane.b32.xlu0 %v2110, 24
        %v2121 = vpop.permute.xlu0 %2120
        %v2123 = vsel %vm1245, %v2107, %v2113
        %vm2124 = vcmask 130048
        %v2125 = vsel %vm2124, %v2123, %v2117
        %vm2126 = vcmask 195584
        %v2127 = vsel %vm2126, %v2125, %v2121
        %v2128 = vpack.c.bf16 %v2127, %v2127
        %v2129 = vld [vmem:[#allocation11] sm:$0xf]
        %v2130 = vld [vmem:[#allocation11 + $0x4] sm:$0xf]
        %v2131 = vld [vmem:[#allocation11 + $0x8] sm:$0xf]
        %v2132 = vld [vmem:[#allocation11 + $0xc] sm:$0xf]
        %v2133 = vld [vmem:[%s436] sm:$0xf]
        %v2134 = vunpack.c.l.bf16 %v2133
        %v2139 = vunpack.c.l.b16 %v2129
        %v2140 = vunpack.c.l.b16 %v2130
        %v2141 = vunpack.c.l.b16 %v2131
        %v2142 = vunpack.c.l.b16 %v2132
        %v2143 = vpack.c.b16 %v2140, %v2139
        %v2144 = vpack.c.b16 %v2142, %v2141
        %vm2147 = vcmask 261120
        %v2149 = vsel %vm2147, %v2128, 0
        %2151 = vmatprep.subr.bf16.mxu0 0
        %2152 = vmatpush1.bf16.msra.mxu0 %v2143
        %2153 = vmatprep.subr.bf16.mxu0 0
        %2154 = vmatpush1.bf16.msra.mxu0 %v2144
        %2155 = vmatprep.subr.bf16.mxu0 0
        %2156 = vmatpush1.bf16.msra.mxu0 0
        %2157 = vmatprep.subr.bf16.mxu0 0
        %2158 = vmatpush1.bf16.msra.mxu0 0
        %2159 = vmatprep.subr.bf16.mxu0 0
        %2160 = vmatpush1.bf16.msra.mxu0 0
        %2161 = vmatprep.subr.bf16.mxu0 0
        %2162 = vmatpush1.bf16.msra.mxu0 0
        %2163 = vmatprep.subr.bf16.mxu0 0
        %2164 = vmatpush1.bf16.msra.mxu0 0
        %2165 = vmatprep.subr.bf16.mxu0 0
        %2166 = vmatpush1.bf16.msra.mxu0 0
        %2167 = vmatprep.subr.bf16.mxu0 0
        %2168 = vmatpush1.bf16.msra.mxu0 0
        %2169 = vmatprep.subr.bf16.mxu0 0
        %2170 = vmatpush1.bf16.msra.mxu0 0
        %2171 = vmatprep.subr.bf16.mxu0 0
        %2172 = vmatpush1.bf16.msra.mxu0 0
        %2173 = vmatprep.subr.bf16.mxu0 0
        %2174 = vmatpush1.bf16.msra.mxu0 0
        %2175 = vmatprep.subr.bf16.mxu0 0
        %2176 = vmatpush1.bf16.msra.mxu0 0
        %2177 = vmatprep.subr.bf16.mxu0 0
        %2178 = vmatpush1.bf16.msra.mxu0 0
        %2179 = vmatprep.subr.bf16.mxu0 0
        %2180 = vmatpush1.bf16.msra.mxu0 0
        %2181 = vmatprep.subr.bf16.mxu0 0
        %2182 = vmatpush1.bf16.msra.mxu0 0
        %2183 = vmatprep.mubr.bf16.mxu0 0
        %2184 = vmatmul.mubr.bf16.gmra.mrb[0].mxu0 %v2149
        %v2185 = vpop.f32.mrb[0].mxu0
        %v2186 = vadd.f32 %v2134, %v2185
        %v2187 = vpop.f32.mrb[0].mxu0
        %v2188 = vpop.f32.mrb[0].mxu0
        %v2189 = vpop.f32.mrb[0].mxu0
        %2190 = vdwg.mxu0
        %v2191 = vpack.c.bf16 %v2186, %v2186
        %vm2192 = vcmask 257024
        %2193 = vst.msk [vmem:[%s499] sm:$0xf] %vm2192, %v2191
        %s2194 = sand.u32 %s234, 1
        %s2195 = scalar_lea.sflag [#allocation4], %s2194
        %s2196 = sand.u32 %s234, 1
        %s2197 = smul.addr %s2196, 4
        %s2198 = scalar_lea.vmem [#allocation16], %s2197
        // Predicated region
        $region85: #{transformer_block_forward.13} parent=51 // pred_check
          %p2199 = pneg %p244
        $region86: #{transformer_block_forward.13} parent=51 // pred_check_branch
          %2201 = sbr.rel (%p2199) target = $region88
        $region87: #{transformer_block_forward.13} parent=51 // pred_region
          %s2203 = ssub.s32 64, 64
          %2204 = vsyncadd %s2195, %s2203
          %s2205 = smul.addr %s33, 64
          %s2206 = scalar_lea.hbm %s8, %s2205
          %s2208 = sshll.u32 %s2198, 4
          %s2209 = int_to_ptr.vmem [resolvable:$true] %s2208
          %2211 = dma.vmem_to_hbm [thread:$0]  %s2209, 64, %s2206, %s2195
        $region88: #{transformer_block_forward.13} parent=51 // pred_fallthru
          _
      $region52: #{transformer_block_forward.13} parent=5 // pred_fallthru
        _
      %p2212 = scmp.le.s32.totalorder 2, %s28
      // Predicated region
      $region89: #{transformer_block_forward.13} parent=5 // pred_check
        %p2213 = pneg %p2212
      $region90: #{transformer_block_forward.13} parent=5 // pred_check_branch
        %2215 = sbr.rel (%p2213) target = $region92
      $region91: #{transformer_block_forward.13} parent=5 // pred_region
        %s2216 = ssub.s32 %s28, 2
        // Predicated region
        $region93: #{transformer_block_forward.13} parent=91 // pred_check
          %p2217 = pneg %p250
        $region94: #{transformer_block_forward.13} parent=91 // pred_check_branch
          %2219 = sbr.rel (%p2217) target = $region96
        $region95: #{transformer_block_forward.13} parent=91 // pred_region
          %s2220 = sand.u32 %s235, 1
          %s2221 = scalar_lea.sflag [#allocation4], %s2220
          %s2222 = sand.u32 %s235, 1
          %s2223 = smul.addr %s2222, 4
          %s2224 = scalar_lea.vmem [#allocation16], %s2223
          %2225 = dma.done %s2221, 64
        $region96: #{transformer_block_forward.13} parent=91 // pred_fallthru
          _
      $region92: #{transformer_block_forward.13} parent=5 // pred_fallthru
        _
    $region6: #{transformer_block_forward.13} parent=1 // loop_footer
      %s32 = sadd.s32 1, %s28
    $region7: #{transformer_block_forward.13} parent=1 // loop_footer_branch
      %27 = sbr.rel target = $region3
    $region8: #{transformer_block_forward.13} parent=1 // loop_exit
      _
    %2226 = vsyncpa [#allocation3], 1
    %s2227 = scalar_lea.sflag [#allocation3], 1
    %2228 = vsyncpa %s2227, 1
    %2229 = vsyncpa [#allocation6], 1
    %s2230 = scalar_lea.sflag [#allocation6], 1
    %2231 = vsyncpa %s2230, 1
    %2232 = vsyncpa [#allocation9], 1
    %s2233 = scalar_lea.sflag [#allocation9], 1
    %2234 = vsyncpa %s2233, 1
    %2235 = vsyncpa [#allocation12], 1
    %2236 = vsyncpa [#allocation15], 1
    %2237 = vsyncpa [#allocation4], 1
    %s2238 = scalar_lea.sflag [#allocation4], 1
    %2239 = vsyncpa %s2238, 1

// kernel: transformer_block_forward.19
$region0: #{transformer_block_forward.19}
  #allocation0 [shape = 'u32[]', space=smem, size = 0x4, offset = 0x4, fixed_abs, tag = 'smem constant byte address 0x4 - core index']
  #allocation1 [shape = 'u32[144,128]{1,0:T(1,128)}', space=vmem, size = 0x12000, scoped, tag = 'internal scratch']
  %s0 = inlined_call_operand.hbm [shape: bf16[16,32], index: 0, kind: input, shape index: {}]
  %s1 = inlined_call_operand.hbm [shape: bf16[32,128], index: 1, kind: input, shape index: {}]
  %s2 = inlined_call_operand.hbm [shape: f32[1,128], index: 2, kind: input, shape index: {}]
  %s3 = inlined_call_operand.hbm [shape: bf16[128,32], index: 3, kind: input, shape index: {}]
  %s4 = inlined_call_operand.hbm [shape: f32[1,32], index: 4, kind: input, shape index: {}]
  %s5 = inlined_call_operand.hbm [shape: bf16[16,32], index: 5, kind: output, shape index: {}]
  %s6 = sld [smem:[#allocation0]]
  $region73: #{transformer_block_forward.19} parent=0
    _
  %s8 = ssub.s32 1, %s6
  %s9 = scalar_select 0, %s8, %s6
  $region1: #{transformer_block_forward.19} parent=0
    #allocation2 [shape = 'u8[4096]{0}', space=vmem, size = 0x1000, scoped, tag = 'input window, operand 0']
    #allocation3 [shape = 's32[2]{0}', space=sflag, size = 0x8, scoped, tag = 'scoped memory for transformer_block_forward.19']
    #allocation4 [shape = 's32[2]{0}', space=sflag, size = 0x8, scoped, tag = 'scoped memory for transformer_block_forward.19']
    #allocation5 [shape = 'u8[8192]{0}', space=vmem, size = 0x2000, scoped, tag = 'input window, operand 1, single buffered']
    #allocation6 [shape = 's32[1]{0}', space=sflag, size = 0x4, scoped, tag = 'scoped memory for transformer_block_forward.19']
    #allocation7 [shape = 'u8[512]{0}', space=vmem, size = 0x400, scoped, tag = 'input window, operand 2, single buffered']
    #allocation8 [shape = 'u8[32768]{0}', space=vmem, size = 0x8000, scoped, tag = 'input window, operand 3, single buffered']
    #allocation9 [shape = 's32[1]{0}', space=sflag, size = 0x4, scoped, tag = 'scoped memory for transformer_block_forward.19']
    #allocation10 [shape = 'u8[512]{0}', space=vmem, size = 0x400, scoped, tag = 'input window, operand 4, single buffered']
    #allocation11 [shape = 'u8[4096]{0}', space=vmem, size = 0x1000, scoped, tag = 'output window, operand 0']
    %10 = vsyncpa [#allocation3], 0
    %s11 = scalar_lea.sflag [#allocation3], 1
    %12 = vsyncpa %s11, 0
    %13 = vsyncpa [#allocation6], 0
    %14 = vsyncpa [#allocation9], 0
    %15 = vsyncpa [#allocation4], 0
    %s16 = scalar_lea.sflag [#allocation4], 1
    %17 = vsyncpa %s16, 0
    loop: start=0, step=1, limit=4
    $region2: #{transformer_block_forward.19} parent=1 // loop_pre_header
      _
    $region3: #{transformer_block_forward.19} parent=1 // loop_header
      %s19 = sphi 0, %s23
      %p20 = scmp.ge.s32.totalorder %s19, 4
      %s29 = sphi 0, %s31
      %s32 = sphi 0, %s29
      %s33 = sphi 0, %s32
      %s49 = sphi 0, %s33
      %s53 = sphi 0, %s53
      %s55 = sphi 0, %s53
      %s56 = sphi 0, %s55
      %s70 = sphi 0, %s56
      %s74 = sphi 0, %s74
      %s76 = sphi 0, %s74
      %s77 = sphi 0, %s76
      %s91 = sphi 0, %s77
      %s95 = sphi 0, %s95
      %s97 = sphi 0, %s95
      %s98 = sphi 0, %s97
      %s112 = sphi 0, %s98
      %s116 = sphi 0, %s116
      %s118 = sphi 0, %s116
      %s119 = sphi 0, %s118
      %s133 = sphi 0, %s119
      %s139 = sphi 0, %s141
      %s142 = sphi 0, %s139
      %s143 = sphi 0, %s142
      %s159 = sphi 0, %s143
    $region4: #{transformer_block_forward.19} parent=1 // loop_header_branch
      %22 = sbr.rel (%p20) target = $region8
    $region5: #{transformer_block_forward.19} parent=1 // loop_body
      %s24 = ssub.s32 %s19, 1
      %s25 = ssub.s32 %s19, 2
      %s26 = sadd.s32 %s19, 1
      %s27 = ssub.s32 %s19, %s26
      %p28 = scmp.eq.s32.totalorder %s27, 0
      %s30 = sadd.s32 %s29, 1
      %s31 = scalar_select %p28, %s29, %s30
      %p34 = pneg %p28
      %p35 = scmp.eq.s32.totalorder %s19, 1
      %p36 = por %p34, %p35
      %p37 = scmp.ne.s32.totalorder %s29, %s32
      %p38 = scmp.eq.s32.totalorder %s19, 0
      %p39 = por %p37, %p38
      %p40 = scmp.ne.s32.totalorder %s29, %s32
      %p41 = scmp.eq.s32.totalorder %s24, 1
      %p42 = por %p40, %p41
      %p43 = scmp.ne.s32.totalorder %s32, %s33
      %p44 = scmp.eq.s32.totalorder %s24, 0
      %p45 = por %p43, %p44
      %p46 = scmp.ne.s32.totalorder %s32, %s33
      %p47 = scmp.eq.s32.totalorder %s25, 1
      %p48 = por %p46, %p47
      %p50 = scmp.ne.s32.totalorder %s33, %s49
      %p51 = scmp.eq.s32.totalorder %s25, 0
      %p52 = por %p50, %p51
      %s54 = sadd.s32 %s53, 1
      %p57 = scmp.eq.s32.totalorder %s19, 1
      %p58 = scmp.ne.s32.totalorder %s53, %s55
      %p59 = scmp.eq.s32.totalorder %s19, 0
      %p60 = por %p58, %p59
      %p61 = scmp.ne.s32.totalorder %s53, %s55
      %p62 = scmp.eq.s32.totalorder %s24, 1
      %p63 = por %p61, %p62
      %p64 = scmp.ne.s32.totalorder %s55, %s56
      %p65 = scmp.eq.s32.totalorder %s24, 0
      %p66 = por %p64, %p65
      %p67 = scmp.ne.s32.totalorder %s55, %s56
      %p68 = scmp.eq.s32.totalorder %s25, 1
      %p69 = por %p67, %p68
      %p71 = scmp.ne.s32.totalorder %s56, %s70
      %p72 = scmp.eq.s32.totalorder %s25, 0
      %p73 = por %p71, %p72
      %s75 = sadd.s32 %s74, 1
      %p78 = scmp.eq.s32.totalorder %s19, 1
      %p79 = scmp.ne.s32.totalorder %s74, %s76
      %p80 = scmp.eq.s32.totalorder %s19, 0
      %p81 = por %p79, %p80
      %p82 = scmp.ne.s32.totalorder %s74, %s76
      %p83 = scmp.eq.s32.totalorder %s24, 1
      %p84 = por %p82, %p83
      %p85 = scmp.ne.s32.totalorder %s76, %s77
      %p86 = scmp.eq.s32.totalorder %s24, 0
      %p87 = por %p85, %p86
      %p88 = scmp.ne.s32.totalorder %s76, %s77
      %p89 = scmp.eq.s32.totalorder %s25, 1
      %p90 = por %p88, %p89
      %p92 = scmp.ne.s32.totalorder %s77, %s91
      %p93 = scmp.eq.s32.totalorder %s25, 0
      %p94 = por %p92, %p93
      %s96 = sadd.s32 %s95, 1
      %p99 = scmp.eq.s32.totalorder %s19, 1
      %p100 = scmp.ne.s32.totalorder %s95, %s97
      %p101 = scmp.eq.s32.totalorder %s19, 0
      %p102 = por %p100, %p101
      %p103 = scmp.ne.s32.totalorder %s95, %s97
      %p104 = scmp.eq.s32.totalorder %s24, 1
      %p105 = por %p103, %p104
      %p106 = scmp.ne.s32.totalorder %s97, %s98
      %p107 = scmp.eq.s32.totalorder %s24, 0
      %p108 = por %p106, %p107
      %p109 = scmp.ne.s32.totalorder %s97, %s98
      %p110 = scmp.eq.s32.totalorder %s25, 1
      %p111 = por %p109, %p110
      %p113 = scmp.ne.s32.totalorder %s98, %s112
      %p114 = scmp.eq.s32.totalorder %s25, 0
      %p115 = por %p113, %p114
      %s117 = sadd.s32 %s116, 1
      %p120 = scmp.eq.s32.totalorder %s19, 1
      %p121 = scmp.ne.s32.totalorder %s116, %s118
      %p122 = scmp.eq.s32.totalorder %s19, 0
      %p123 = por %p121, %p122
      %p124 = scmp.ne.s32.totalorder %s116, %s118
      %p125 = scmp.eq.s32.totalorder %s24, 1
      %p126 = por %p124, %p125
      %p127 = scmp.ne.s32.totalorder %s118, %s119
      %p128 = scmp.eq.s32.totalorder %s24, 0
      %p129 = por %p127, %p128
      %p130 = scmp.ne.s32.totalorder %s118, %s119
      %p131 = scmp.eq.s32.totalorder %s25, 1
      %p132 = por %p130, %p131
      %p134 = scmp.ne.s32.totalorder %s119, %s133
      %p135 = scmp.eq.s32.totalorder %s25, 0
      %p136 = por %p134, %p135
      %s137 = ssub.s32 %s19, %s26
      %p138 = scmp.eq.s32.totalorder %s137, 0
      %s140 = sadd.s32 %s139, 1
      %s141 = scalar_select %p138, %s139, %s140
      %p144 = pneg %p138
      %p145 = scmp.eq.s32.totalorder %s19, 1
      %p146 = por %p144, %p145
      %p147 = scmp.ne.s32.totalorder %s139, %s142
      %p148 = scmp.eq.s32.totalorder %s19, 0
      %p149 = por %p147, %p148
      %p150 = scmp.ne.s32.totalorder %s139, %s142
      %p151 = scmp.eq.s32.totalorder %s24, 1
      %p152 = por %p150, %p151
      %p153 = scmp.ne.s32.totalorder %s142, %s143
      %p154 = scmp.eq.s32.totalorder %s24, 0
      %p155 = por %p153, %p154
      %p156 = scmp.ne.s32.totalorder %s142, %s143
      %p157 = scmp.eq.s32.totalorder %s25, 1
      %p158 = por %p156, %p157
      %p160 = scmp.ne.s32.totalorder %s143, %s159
      %p161 = scmp.eq.s32.totalorder %s25, 0
      %p162 = por %p160, %p161
      %p163 = scmp.le.s32.totalorder 1, %s19
      %p164 = scmp.lt.s32.totalorder %s19, 3
      %p165 = pnand %p163, %p164
      %p166 = pneg %p165
      // Predicated region
      $region9: #{transformer_block_forward.19} parent=5 // pred_check
        _
      $region10: #{transformer_block_forward.19} parent=5 // pred_check_branch
        %168 = sbr.rel (%p165) target = $region12
      $region11: #{transformer_block_forward.19} parent=5 // pred_region
        %s169 = ssub.s32 %s19, 1
        // Predicated region
        $region13: #{transformer_block_forward.19} parent=11 // pred_check
          %p170 = pneg %p66
        $region14: #{transformer_block_forward.19} parent=11 // pred_check_branch
          %172 = sbr.rel (%p170) target = $region16
        $region15: #{transformer_block_forward.19} parent=11 // pred_region
          %s174 = ssub.s32 256, 256
          %175 = vsyncadd [#allocation6], %s174
          %s176 = sshll.u32 [#allocation5], 4
          %s177 = int_to_ptr.vmem [resolvable:$true] %s176
          %182 = dma.hbm_to_vmem [thread:$0]  %s1, 256, %s177, [#allocation6], 64, 64, 4
        $region16: #{transformer_block_forward.19} parent=11 // pred_fallthru
          _
        // Predicated region
        $region17: #{transformer_block_forward.19} parent=11 // pred_check
          %p183 = pneg %p87
        $region18: #{transformer_block_forward.19} parent=11 // pred_check_branch
          %185 = sbr.rel (%p183) target = $region20
        $region19: #{transformer_block_forward.19} parent=11 // pred_region
          %s187 = ssub.s32 16, 16
          %188 = vsyncadd [#allocation6], %s187
          %s190 = sshll.u32 [#allocation7], 4
          %s191 = int_to_ptr.vmem [resolvable:$true] %s190
          %193 = dma.hbm_to_vmem [thread:$0]  %s2, 16, %s191, [#allocation6]
        $region20: #{transformer_block_forward.19} parent=11 // pred_fallthru
          _
        // Predicated region
        $region21: #{transformer_block_forward.19} parent=11 // pred_check
          %p194 = pneg %p108
        $region22: #{transformer_block_forward.19} parent=11 // pred_check_branch
          %196 = sbr.rel (%p194) target = $region24
        $region23: #{transformer_block_forward.19} parent=11 // pred_region
          %s198 = ssub.s32 1024, 1024
          %199 = vsyncadd [#allocation9], %s198
          %s200 = sshll.u32 [#allocation8], 4
          %s201 = int_to_ptr.vmem [resolvable:$true] %s200
          %206 = dma.hbm_to_vmem [thread:$0]  %s3, 1024, %s201, [#allocation9], 64, 64, 4
        $region24: #{transformer_block_forward.19} parent=11 // pred_fallthru
          _
        // Predicated region
        $region25: #{transformer_block_forward.19} parent=11 // pred_check
          %p207 = pneg %p129
        $region26: #{transformer_block_forward.19} parent=11 // pred_check_branch
          %209 = sbr.rel (%p207) target = $region28
        $region27: #{transformer_block_forward.19} parent=11 // pred_region
          %s211 = ssub.s32 16, 16
          %212 = vsyncadd [#allocation9], %s211
          %s214 = sshll.u32 [#allocation10], 4
          %s215 = int_to_ptr.vmem [resolvable:$true] %s214
          %217 = dma.hbm_to_vmem [thread:$0]  %s4, 16, %s215, [#allocation9]
        $region28: #{transformer_block_forward.19} parent=11 // pred_fallthru
          _
      $region12: #{transformer_block_forward.19} parent=5 // pred_fallthru
        _
      %p218 = scmp.lt.s32.totalorder %s19, 2
      // Predicated region
      $region29: #{transformer_block_forward.19} parent=5 // pred_check
        %p219 = pneg %p218
      $region30: #{transformer_block_forward.19} parent=5 // pred_check_branch
        %221 = sbr.rel (%p219) target = $region32
      $region31: #{transformer_block_forward.19} parent=5 // pred_region
        // Predicated region
        $region33: #{transformer_block_forward.19} parent=31 // pred_check
          %p222 = pneg %p39
        $region34: #{transformer_block_forward.19} parent=31 // pred_check_branch
          %224 = sbr.rel (%p222) target = $region36
        $region35: #{transformer_block_forward.19} parent=31 // pred_region
          %s225 = sand.u32 %s29, 1
          %s226 = scalar_lea.sflag [#allocation3], %s225
          %s227 = sand.u32 %s29, 1
          %s228 = smul.addr %s227, 4
          %s229 = scalar_lea.vmem [#allocation2], %s228
          %s231 = ssub.s32 64, 64
          %232 = vsyncadd %s226, %s231
          %s233 = smul.addr %s19, 64
          %s234 = scalar_lea.hbm %s0, %s233
          %s236 = sshll.u32 %s229, 4
          %s237 = int_to_ptr.vmem [resolvable:$true] %s236
          %239 = dma.hbm_to_vmem [thread:$0]  %s234, 64, %s237, %s226
        $region36: #{transformer_block_forward.19} parent=31 // pred_fallthru
          _
      $region32: #{transformer_block_forward.19} parent=5 // pred_fallthru
        _
      %p240 = scmp.le.s32.totalorder 1, %s19
      %p241 = scmp.lt.s32.totalorder %s19, 3
      %p242 = pnand %p240, %p241
      %p243 = pneg %p242
      // Predicated region
      $region37: #{transformer_block_forward.19} parent=5 // pred_check
        _
      $region38: #{transformer_block_forward.19} parent=5 // pred_check_branch
        %245 = sbr.rel (%p242) target = $region40
      $region39: #{transformer_block_forward.19} parent=5 // pred_region
        %s246 = ssub.s32 %s19, 1
        %s247 = sand.u32 %s32, 1
        %s248 = scalar_lea.sflag [#allocation3], %s247
        %s249 = sand.u32 %s32, 1
        %s250 = smul.addr %s249, 4
        %s251 = scalar_lea.vmem [#allocation2], %s250
        // Predicated region
        $region41: #{transformer_block_forward.19} parent=39 // pred_check
          %p252 = pneg %p45
        $region42: #{transformer_block_forward.19} parent=39 // pred_check_branch
          %254 = sbr.rel (%p252) target = $region44
        $region43: #{transformer_block_forward.19} parent=39 // pred_region
          %255 = dma.done %s248, 64
        $region44: #{transformer_block_forward.19} parent=39 // pred_fallthru
          _
        // Predicated region
        $region45: #{transformer_block_forward.19} parent=39 // pred_check
          %p256 = pneg %p66
        $region46: #{transformer_block_forward.19} parent=39 // pred_check_branch
          %258 = sbr.rel (%p256) target = $region48
        $region47: #{transformer_block_forward.19} parent=39 // pred_region
          %259 = dma.done [#allocation6], 256
        $region48: #{transformer_block_forward.19} parent=39 // pred_fallthru
          _
        // Predicated region
        $region49: #{transformer_block_forward.19} parent=39 // pred_check
          %p260 = pneg %p87
        $region50: #{transformer_block_forward.19} parent=39 // pred_check_branch
          %262 = sbr.rel (%p260) target = $region52
        $region51: #{transformer_block_forward.19} parent=39 // pred_region
          %263 = dma.done [#allocation6], 16
        $region52: #{transformer_block_forward.19} parent=39 // pred_fallthru
          _
        // Predicated region
        $region53: #{transformer_block_forward.19} parent=39 // pred_check
          %p264 = pneg %p108
        $region54: #{transformer_block_forward.19} parent=39 // pred_check_branch
          %266 = sbr.rel (%p264) target = $region56
        $region55: #{transformer_block_forward.19} parent=39 // pred_region
          %267 = dma.done [#allocation9], 1024
        $region56: #{transformer_block_forward.19} parent=39 // pred_fallthru
          _
        // Predicated region
        $region57: #{transformer_block_forward.19} parent=39 // pred_check
          %p268 = pneg %p129
        $region58: #{transformer_block_forward.19} parent=39 // pred_check_branch
          %270 = sbr.rel (%p268) target = $region60
        $region59: #{transformer_block_forward.19} parent=39 // pred_region
          %271 = dma.done [#allocation9], 16
        $region60: #{transformer_block_forward.19} parent=39 // pred_fallthru
          _
        %s272 = sand.u32 %s32, 1
        %s273 = scalar_lea.sflag [#allocation3], %s272
        %s274 = sand.u32 %s32, 1
        %s275 = smul.addr %s274, 4
        %s276 = scalar_lea.vmem [#allocation2], %s275
        %p277 = pneg %p45
        %p278 = pneg %p42
        %p279 = pneg %p66
        %p280 = pneg %p63
        %p281 = pneg %p87
        %p282 = pneg %p84
        %p283 = pneg %p108
        %p284 = pneg %p105
        %p285 = pneg %p129
        %p286 = pneg %p126
        %p287 = pneg %p155
        %p288 = pneg %p152
        %s289 = sand.u32 %s142, 1
        %s290 = scalar_lea.sflag [#allocation4], %s289
        %s291 = sand.u32 %s142, 1
        %s292 = smul.addr %s291, 4
        %s293 = scalar_lea.vmem [#allocation11], %s292
        %v295 = vld [vmem:[%s251] sm:$0xf]
        %v296 = vunpack.c.l.bf16 %v295
        %v297 = vld [vmem:[#allocation5] sm:$0xf]
        %v298 = vld [vmem:[#allocation5 + $0x4] sm:$0xf]
        %v299 = vld [vmem:[#allocation5 + $0x8] sm:$0xf]
        %v300 = vld [vmem:[#allocation5 + $0xc] sm:$0xf]
        %v305 = vunpack.c.l.b16 %v297
        %v306 = vunpack.c.l.b16 %v298
        %v307 = vunpack.c.l.b16 %v299
        %v308 = vunpack.c.l.b16 %v300
        %v309 = vpack.c.b16 %v306, %v305
        %v310 = vpack.c.b16 %v308, %v307
        %vm313 = vcmask 261120
        %v315 = vsel %vm313, %v295, 0
        %317 = vmatprep.subr.bf16.mxu0 0
        %318 = vmatpush1.bf16.msra.mxu0 %v309
        %319 = vmatprep.subr.bf16.mxu0 0
        %320 = vmatpush1.bf16.msra.mxu0 %v310
        %321 = vmatprep.subr.bf16.mxu0 0
        %322 = vmatpush1.bf16.msra.mxu0 0
        %323 = vmatprep.subr.bf16.mxu0 0
        %324 = vmatpush1.bf16.msra.mxu0 0
        %325 = vmatprep.subr.bf16.mxu0 0
        %326 = vmatpush1.bf16.msra.mxu0 0
        %327 = vmatprep.subr.bf16.mxu0 0
        %328 = vmatpush1.bf16.msra.mxu0 0
        %329 = vmatprep.subr.bf16.mxu0 0
        %330 = vmatpush1.bf16.msra.mxu0 0
        %331 = vmatprep.subr.bf16.mxu0 0
        %332 = vmatpush1.bf16.msra.mxu0 0
        %333 = vmatprep.subr.bf16.mxu0 0
        %334 = vmatpush1.bf16.msra.mxu0 0
        %335 = vmatprep.subr.bf16.mxu0 0
        %336 = vmatpush1.bf16.msra.mxu0 0
        %337 = vmatprep.subr.bf16.mxu0 0
        %338 = vmatpush1.bf16.msra.mxu0 0
        %339 = vmatprep.subr.bf16.mxu0 0
        %340 = vmatpush1.bf16.msra.mxu0 0
        %341 = vmatprep.subr.bf16.mxu0 0
        %342 = vmatpush1.bf16.msra.mxu0 0
        %343 = vmatprep.subr.bf16.mxu0 0
        %344 = vmatpush1.bf16.msra.mxu0 0
        %345 = vmatprep.subr.bf16.mxu0 0
        %346 = vmatpush1.bf16.msra.mxu0 0
        %347 = vmatprep.subr.bf16.mxu0 0
        %348 = vmatpush1.bf16.msra.mxu0 0
        %349 = vmatprep.mubr.bf16.mxu0 0
        %350 = vmatmul.mubr.bf16.gmra.mrb[0].mxu0 %v315
        %v351 = vpop.f32.mrb[0].mxu0
        %v352 = vadd.f32 0.0, %v351
        %v353 = vpop.f32.mrb[0].mxu0
        %v354 = vpop.f32.mrb[0].mxu0
        %v355 = vpop.f32.mrb[0].mxu0
        %356 = vdwg.mxu0
        %v357 = vmul.f32 %v352, 0.5
        %v358 = vmul.f32 %v352, 0.70710677
        %v359 = verf.f32.pop %v358
        %v360 = vadd.f32 %v359, 1.0
        %v361 = vmul.f32 %v357, %v360
        %v362 = vld [vmem:[#allocation7] sm:$0x1]
        %363 = vadd.xlane.f32.xlu0 %v361
        %v364 = vpop.xlane.xlu0 %363
        %v365 = vrcp.pop 128.0
        %v366 = vmul.f32 %v364, %v365
        %v367 = vsub.f32 %v361, %v366
        %v368 = vmul.f32 %v367, %v367
        %369 = vadd.xlane.f32.xlu0 %v368
        %v370 = vpop.xlane.xlu0 %369
        %v371 = vmul.f32 %v370, %v365
        %v372 = vadd.f32 %v371, 1e-05
        %v373 = vrsqrt.pop %v372
        %v374 = vmul.f32 %v367, %v373
        %v376 = vlaneseq
        %v377 = vshrl.u32 %v376, 7
        %v378 = vsub.s32 0, %v377
        %v379 = vrot.slane %v362, %v378
        %v381 = vmul.f32 %v374, %v379
        %v382 = vpack.c.bf16 %v381, %v381
        %v383 = vld [vmem:[#allocation8] sm:$0xf]
        %v384 = vld [vmem:[#allocation8 + $0x4] sm:$0xf]
        %v385 = vld [vmem:[#allocation8 + $0x8] sm:$0xf]
        %v386 = vld [vmem:[#allocation8 + $0xc] sm:$0xf]
        %v387 = vld [vmem:[#allocation8 + $0x10] sm:$0xf]
        %v388 = vld [vmem:[#allocation8 + $0x14] sm:$0xf]
        %v389 = vld [vmem:[#allocation8 + $0x18] sm:$0xf]
        %v390 = vld [vmem:[#allocation8 + $0x1c] sm:$0xf]
        %v391 = vld [vmem:[#allocation8 + $0x20] sm:$0xf]
        %v392 = vld [vmem:[#allocation8 + $0x24] sm:$0xf]
        %v393 = vld [vmem:[#allocation8 + $0x28] sm:$0xf]
        %v394 = vld [vmem:[#allocation8 + $0x2c] sm:$0xf]
        %v395 = vld [vmem:[#allocation8 + $0x30] sm:$0xf]
        %v396 = vld [vmem:[#allocation8 + $0x34] sm:$0xf]
        %v397 = vld [vmem:[#allocation8 + $0x38] sm:$0xf]
        %v398 = vld [vmem:[#allocation8 + $0x3c] sm:$0xf]
        %v415 = vunpack.c.l.b16 %v383
        %v416 = vunpack.c.l.b16 %v384
        %v417 = vunpack.c.l.b16 %v385
        %v418 = vunpack.c.l.b16 %v386
        %v419 = vunpack.c.l.b16 %v387
        %v420 = vunpack.c.l.b16 %v388
        %v421 = vunpack.c.l.b16 %v389
        %v422 = vunpack.c.l.b16 %v390
        %v423 = vunpack.c.l.b16 %v391
        %v424 = vunpack.c.l.b16 %v392
        %v425 = vunpack.c.l.b16 %v393
        %v426 = vunpack.c.l.b16 %v394
        %v427 = vunpack.c.l.b16 %v395
        %v428 = vunpack.c.l.b16 %v396
        %v429 = vunpack.c.l.b16 %v397
        %v430 = vunpack.c.l.b16 %v398
        %v431 = vpack.c.b16 %v416, %v415
        %v432 = vpack.c.b16 %v418, %v417
        %v433 = vpack.c.b16 %v420, %v419
        %v434 = vpack.c.b16 %v422, %v421
        %v435 = vpack.c.b16 %v424, %v423
        %v436 = vpack.c.b16 %v426, %v425
        %v437 = vpack.c.b16 %v428, %v427
        %v438 = vpack.c.b16 %v430, %v429
        %447 = vmatprep.subr.bf16.mxu0 0
        %448 = vmatpush1.bf16.msra.mxu0 %v431
        %449 = vmatprep.subr.bf16.mxu0 0
        %450 = vmatpush1.bf16.msra.mxu0 %v432
        %451 = vmatprep.subr.bf16.mxu0 0
        %452 = vmatpush1.bf16.msra.mxu0 %v433
        %453 = vmatprep.subr.bf16.mxu0 0
        %454 = vmatpush1.bf16.msra.mxu0 %v434
        %455 = vmatprep.subr.bf16.mxu0 0
        %456 = vmatpush1.bf16.msra.mxu0 %v435
        %457 = vmatprep.subr.bf16.mxu0 0
        %458 = vmatpush1.bf16.msra.mxu0 %v436
        %459 = vmatprep.subr.bf16.mxu0 0
        %460 = vmatpush1.bf16.msra.mxu0 %v437
        %461 = vmatprep.subr.bf16.mxu0 0
        %462 = vmatpush1.bf16.msra.mxu0 %v438
        %463 = vmatprep.subr.bf16.mxu0 0
        %464 = vmatpush1.bf16.msra.mxu0 0
        %465 = vmatprep.subr.bf16.mxu0 0
        %466 = vmatpush1.bf16.msra.mxu0 0
        %467 = vmatprep.subr.bf16.mxu0 0
        %468 = vmatpush1.bf16.msra.mxu0 0
        %469 = vmatprep.subr.bf16.mxu0 0
        %470 = vmatpush1.bf16.msra.mxu0 0
        %471 = vmatprep.subr.bf16.mxu0 0
        %472 = vmatpush1.bf16.msra.mxu0 0
        %473 = vmatprep.subr.bf16.mxu0 0
        %474 = vmatpush1.bf16.msra.mxu0 0
        %475 = vmatprep.subr.bf16.mxu0 0
        %476 = vmatpush1.bf16.msra.mxu0 0
        %477 = vmatprep.subr.bf16.mxu0 0
        %478 = vmatpush1.bf16.msra.mxu0 0
        %479 = vmatprep.mubr.bf16.mxu0 0
        %480 = vmatmul.mubr.bf16.gmra.mrb[0].mxu0 %v382
        %v481 = vpop.f32.mrb[0].mxu0
        %v482 = vadd.f32 %v296, %v481
        %v483 = vpop.f32.mrb[0].mxu0
        %v484 = vpop.f32.mrb[0].mxu0
        %v485 = vpop.f32.mrb[0].mxu0
        %486 = vdwg.mxu0
        %v487 = vld [vmem:[#allocation10] sm:$0x1]
        %v488 = vsel %vm313, %v482, 0.0
        %489 = vadd.xlane.f32.xlu0 %v488
        %v490 = vpop.xlane.xlu0 %489
        %v491 = vrcp.pop 32.0
        %v492 = vmul.f32 %v490, %v491
        %v493 = vsub.f32 %v482, %v492
        %v494 = vmul.f32 %v493, %v493
        %v495 = vsel %vm313, %v494, 0.0
        %496 = vadd.xlane.f32.xlu0 %v495
        %v497 = vpop.xlane.xlu0 %496
        %v498 = vmul.f32 %v497, %v491
        %v499 = vadd.f32 %v498, 1e-05
        %v500 = vrsqrt.pop %v499
        %v501 = vmul.f32 %v493, %v500
        %v503 = vlaneseq
        %v504 = vshrl.u32 %v503, 7
        %v505 = vsub.s32 0, %v504
        %v506 = vrot.slane %v487, %v505
        %v508 = vmul.f32 %v501, %v506
        %v509 = vpack.c.bf16 %v508, %v508
        %vm510 = vcmask 257024
        %511 = vst.msk [vmem:[%s293] sm:$0xf] %vm510, %v509
        %s512 = sand.u32 %s142, 1
        %s513 = scalar_lea.sflag [#allocation4], %s512
        %s514 = sand.u32 %s142, 1
        %s515 = smul.addr %s514, 4
        %s516 = scalar_lea.vmem [#allocation11], %s515
        // Predicated region
        $region61: #{transformer_block_forward.19} parent=39 // pred_check
          %p517 = pneg %p152
        $region62: #{transformer_block_forward.19} parent=39 // pred_check_branch
          %519 = sbr.rel (%p517) target = $region64
        $region63: #{transformer_block_forward.19} parent=39 // pred_region
          %s521 = ssub.s32 64, 64
          %522 = vsyncadd %s513, %s521
          %s523 = smul.addr %s24, 64
          %s524 = scalar_lea.hbm %s5, %s523
          %s526 = sshll.u32 %s516, 4
          %s527 = int_to_ptr.vmem [resolvable:$true] %s526
          %529 = dma.vmem_to_hbm [thread:$0]  %s527, 64, %s524, %s513
        $region64: #{transformer_block_forward.19} parent=39 // pred_fallthru
          _
      $region40: #{transformer_block_forward.19} parent=5 // pred_fallthru
        _
      %p530 = scmp.le.s32.totalorder 2, %s19
      // Predicated region
      $region65: #{transformer_block_forward.19} parent=5 // pred_check
        %p531 = pneg %p530
      $region66: #{transformer_block_forward.19} parent=5 // pred_check_branch
        %533 = sbr.rel (%p531) target = $region68
      $region67: #{transformer_block_forward.19} parent=5 // pred_region
        %s534 = ssub.s32 %s19, 2
        // Predicated region
        $region69: #{transformer_block_forward.19} parent=67 // pred_check
          %p535 = pneg %p158
        $region70: #{transformer_block_forward.19} parent=67 // pred_check_branch
          %537 = sbr.rel (%p535) target = $region72
        $region71: #{transformer_block_forward.19} parent=67 // pred_region
          %s538 = sand.u32 %s143, 1
          %s539 = scalar_lea.sflag [#allocation4], %s538
          %s540 = sand.u32 %s143, 1
          %s541 = smul.addr %s540, 4
          %s542 = scalar_lea.vmem [#allocation11], %s541
          %543 = dma.done %s539, 64
        $region72: #{transformer_block_forward.19} parent=67 // pred_fallthru
          _
      $region68: #{transformer_block_forward.19} parent=5 // pred_fallthru
        _
    $region6: #{transformer_block_forward.19} parent=1 // loop_footer
      %s23 = sadd.s32 1, %s19
    $region7: #{transformer_block_forward.19} parent=1 // loop_footer_branch
      %18 = sbr.rel target = $region3
    $region8: #{transformer_block_forward.19} parent=1 // loop_exit
      _
    %544 = vsyncpa [#allocation3], 1
    %s545 = scalar_lea.sflag [#allocation3], 1
    %546 = vsyncpa %s545, 1
    %547 = vsyncpa [#allocation6], 1
    %548 = vsyncpa [#allocation9], 1
    %549 = vsyncpa [#allocation4], 1
    %s550 = scalar_lea.sflag [#allocation4], 1
    %551 = vsyncpa %s550, 1

// kernel: transformer_block_forward.14
$region0: #{transformer_block_forward.14}
  #allocation0 [shape = 'u32[]', space=smem, size = 0x4, offset = 0x4, fixed_abs, tag = 'smem constant byte address 0x4 - core index']
  #allocation1 [shape = 'u32[144,128]{1,0:T(1,128)}', space=vmem, size = 0x12000, scoped, tag = 'internal scratch']
  %s0 = inlined_call_operand.hbm [shape: bf16[16,32], index: 0, kind: input, shape index: {}]
  %s1 = inlined_call_operand.hbm [shape: bf16[16,32], index: 1, kind: input, shape index: {}]
  %s2 = inlined_call_operand.hbm [shape: f32[1,32], index: 2, kind: input, shape index: {}]
  %s3 = inlined_call_operand.hbm [shape: f32[1,32], index: 3, kind: input, shape index: {}]
  %s4 = inlined_call_operand.hbm [shape: bf16[32,32], index: 4, kind: input, shape index: {}]
  %s5 = inlined_call_operand.hbm [shape: bf16[32,32], index: 5, kind: input, shape index: {}]
  %s6 = inlined_call_operand.hbm [shape: bf16[32,128], index: 6, kind: input, shape index: {}]
  %s7 = inlined_call_operand.hbm [shape: f32[1,128], index: 7, kind: input, shape index: {}]
  %s8 = inlined_call_operand.hbm [shape: bf16[128,32], index: 8, kind: input, shape index: {}]
  %s9 = inlined_call_operand.hbm [shape: f32[1,32], index: 9, kind: input, shape index: {}]
  %s10 = inlined_call_operand.hbm [shape: bf16[16,32], index: 10, kind: output, shape index: {}]
  %s11 = sld [smem:[#allocation0]]
  $region113: #{transformer_block_forward.14} parent=0
    _
  %s13 = ssub.s32 1, %s11
  %s14 = scalar_select 0, %s13, %s11
  $region1: #{transformer_block_forward.14} parent=0
    #allocation2 [shape = 'u8[4096]{0}', space=vmem, size = 0x1000, scoped, tag = 'input window, operand 0']
    #allocation3 [shape = 's32[2]{0}', space=sflag, size = 0x8, scoped, tag = 'scoped memory for transformer_block_forward.14']
    #allocation4 [shape = 's32[2]{0}', space=sflag, size = 0x8, scoped, tag = 'scoped memory for transformer_block_forward.14']
    #allocation5 [shape = 'u8[4096]{0}', space=vmem, size = 0x1000, scoped, tag = 'input window, operand 1']
    #allocation6 [shape = 's32[2]{0}', space=sflag, size = 0x8, scoped, tag = 'scoped memory for transformer_block_forward.14']
    #allocation7 [shape = 'u8[512]{0}', space=vmem, size = 0x400, scoped, tag = 'input window, operand 2, single buffered']
    #allocation8 [shape = 'u8[512]{0}', space=vmem, size = 0x400, scoped, tag = 'input window, operand 3, single buffered']
    #allocation9 [shape = 's32[1]{0}', space=sflag, size = 0x4, scoped, tag = 'scoped memory for transformer_block_forward.14']
    #allocation10 [shape = 'u8[8192]{0}', space=vmem, size = 0x2000, scoped, tag = 'input window, operand 4, single buffered']
    #allocation11 [shape = 'u8[8192]{0}', space=vmem, size = 0x2000, scoped, tag = 'input window, operand 5, single buffered']
    #allocation12 [shape = 's32[1]{0}', space=sflag, size = 0x4, scoped, tag = 'scoped memory for transformer_block_forward.14']
    #allocation13 [shape = 'u8[8192]{0}', space=vmem, size = 0x2000, scoped, tag = 'input window, operand 6, single buffered']
    #allocation14 [shape = 'u8[512]{0}', space=vmem, size = 0x400, scoped, tag = 'input window, operand 7, single buffered']
    #allocation15 [shape = 's32[1]{0}', space=sflag, size = 0x4, scoped, tag = 'scoped memory for transformer_block_forward.14']
    #allocation16 [shape = 'u8[32768]{0}', space=vmem, size = 0x8000, scoped, tag = 'input window, operand 8, single buffered']
    #allocation17 [shape = 'u8[512]{0}', space=vmem, size = 0x400, scoped, tag = 'input window, operand 9, single buffered']
    #allocation18 [shape = 's32[1]{0}', space=sflag, size = 0x4, scoped, tag = 'scoped memory for transformer_block_forward.14']
    #allocation19 [shape = 'u8[4096]{0}', space=vmem, size = 0x1000, scoped, tag = 'output window, operand 0']
    %15 = vsyncpa [#allocation3], 0
    %s16 = scalar_lea.sflag [#allocation3], 1
    %17 = vsyncpa %s16, 0
    %18 = vsyncpa [#allocation6], 0
    %s19 = scalar_lea.sflag [#allocation6], 1
    %20 = vsyncpa %s19, 0
    %21 = vsyncpa [#allocation9], 0
    %22 = vsyncpa [#allocation12], 0
    %23 = vsyncpa [#allocation15], 0
    %24 = vsyncpa [#allocation18], 0
    %25 = vsyncpa [#allocation4], 0
    %s26 = scalar_lea.sflag [#allocation4], 1
    %27 = vsyncpa %s26, 0
    loop: start=0, step=1, limit=4
    $region2: #{transformer_block_forward.14} parent=1 // loop_pre_header
      _
    $region3: #{transformer_block_forward.14} parent=1 // loop_header
      %s29 = sphi 0, %s33
      %p30 = scmp.ge.s32.totalorder %s29, 4
      %s39 = sphi 0, %s41
      %s42 = sphi 0, %s39
      %s43 = sphi 0, %s42
      %s59 = sphi 0, %s43
      %s65 = sphi 0, %s67
      %s68 = sphi 0, %s65
      %s69 = sphi 0, %s68
      %s85 = sphi 0, %s69
      %s89 = sphi 0, %s89
      %s91 = sphi 0, %s89
      %s92 = sphi 0, %s91
      %s106 = sphi 0, %s92
      %s110 = sphi 0, %s110
      %s112 = sphi 0, %s110
      %s113 = sphi 0, %s112
      %s127 = sphi 0, %s113
      %s131 = sphi 0, %s131
      %s133 = sphi 0, %s131
      %s134 = sphi 0, %s133
      %s148 = sphi 0, %s134
      %s152 = sphi 0, %s152
      %s154 = sphi 0, %s152
      %s155 = sphi 0, %s154
      %s169 = sphi 0, %s155
      %s173 = sphi 0, %s173
      %s175 = sphi 0, %s173
      %s176 = sphi 0, %s175
      %s190 = sphi 0, %s176
      %s194 = sphi 0, %s194
      %s196 = sphi 0, %s194
      %s197 = sphi 0, %s196
      %s211 = sphi 0, %s197
      %s215 = sphi 0, %s215
      %s217 = sphi 0, %s215
      %s218 = sphi 0, %s217
      %s232 = sphi 0, %s218
      %s236 = sphi 0, %s236
      %s238 = sphi 0, %s236
      %s239 = sphi 0, %s238
      %s253 = sphi 0, %s239
      %s259 = sphi 0, %s261
      %s262 = sphi 0, %s259
      %s263 = sphi 0, %s262
      %s279 = sphi 0, %s263
    $region4: #{transformer_block_forward.14} parent=1 // loop_header_branch
      %32 = sbr.rel (%p30) target = $region8
    $region5: #{transformer_block_forward.14} parent=1 // loop_body
      %s34 = ssub.s32 %s29, 1
      %s35 = ssub.s32 %s29, 2
      %s36 = sadd.s32 %s29, 1
      %s37 = ssub.s32 %s29, %s36
      %p38 = scmp.eq.s32.totalorder %s37, 0
      %s40 = sadd.s32 %s39, 1
      %s41 = scalar_select %p38, %s39, %s40
      %p44 = pneg %p38
      %p45 = scmp.eq.s32.totalorder %s29, 1
      %p46 = por %p44, %p45
      %p47 = scmp.ne.s32.totalorder %s39, %s42
      %p48 = scmp.eq.s32.totalorder %s29, 0
      %p49 = por %p47, %p48
      %p50 = scmp.ne.s32.totalorder %s39, %s42
      %p51 = scmp.eq.s32.totalorder %s34, 1
      %p52 = por %p50, %p51
      %p53 = scmp.ne.s32.totalorder %s42, %s43
      %p54 = scmp.eq.s32.totalorder %s34, 0
      %p55 = por %p53, %p54
      %p56 = scmp.ne.s32.totalorder %s42, %s43
      %p57 = scmp.eq.s32.totalorder %s35, 1
      %p58 = por %p56, %p57
      %p60 = scmp.ne.s32.totalorder %s43, %s59
      %p61 = scmp.eq.s32.totalorder %s35, 0
      %p62 = por %p60, %p61
      %s63 = ssub.s32 %s29, %s36
      %p64 = scmp.eq.s32.totalorder %s63, 0
      %s66 = sadd.s32 %s65, 1
      %s67 = scalar_select %p64, %s65, %s66
      %p70 = pneg %p64
      %p71 = scmp.eq.s32.totalorder %s29, 1
      %p72 = por %p70, %p71
      %p73 = scmp.ne.s32.totalorder %s65, %s68
      %p74 = scmp.eq.s32.totalorder %s29, 0
      %p75 = por %p73, %p74
      %p76 = scmp.ne.s32.totalorder %s65, %s68
      %p77 = scmp.eq.s32.totalorder %s34, 1
      %p78 = por %p76, %p77
      %p79 = scmp.ne.s32.totalorder %s68, %s69
      %p80 = scmp.eq.s32.totalorder %s34, 0
      %p81 = por %p79, %p80
      %p82 = scmp.ne.s32.totalorder %s68, %s69
      %p83 = scmp.eq.s32.totalorder %s35, 1
      %p84 = por %p82, %p83
      %p86 = scmp.ne.s32.totalorder %s69, %s85
      %p87 = scmp.eq.s32.totalorder %s35, 0
      %p88 = por %p86, %p87
      %s90 = sadd.s32 %s89, 1
      %p93 = scmp.eq.s32.totalorder %s29, 1
      %p94 = scmp.ne.s32.totalorder %s89, %s91
      %p95 = scmp.eq.s32.totalorder %s29, 0
      %p96 = por %p94, %p95
      %p97 = scmp.ne.s32.totalorder %s89, %s91
      %p98 = scmp.eq.s32.totalorder %s34, 1
      %p99 = por %p97, %p98
      %p100 = scmp.ne.s32.totalorder %s91, %s92
      %p101 = scmp.eq.s32.totalorder %s34, 0
      %p102 = por %p100, %p101
      %p103 = scmp.ne.s32.totalorder %s91, %s92
      %p104 = scmp.eq.s32.totalorder %s35, 1
      %p105 = por %p103, %p104
      %p107 = scmp.ne.s32.totalorder %s92, %s106
      %p108 = scmp.eq.s32.totalorder %s35, 0
      %p109 = por %p107, %p108
      %s111 = sadd.s32 %s110, 1
      %p114 = scmp.eq.s32.totalorder %s29, 1
      %p115 = scmp.ne.s32.totalorder %s110, %s112
      %p116 = scmp.eq.s32.totalorder %s29, 0
      %p117 = por %p115, %p116
      %p118 = scmp.ne.s32.totalorder %s110, %s112
      %p119 = scmp.eq.s32.totalorder %s34, 1
      %p120 = por %p118, %p119
      %p121 = scmp.ne.s32.totalorder %s112, %s113
      %p122 = scmp.eq.s32.totalorder %s34, 0
      %p123 = por %p121, %p122
      %p124 = scmp.ne.s32.totalorder %s112, %s113
      %p125 = scmp.eq.s32.totalorder %s35, 1
      %p126 = por %p124, %p125
      %p128 = scmp.ne.s32.totalorder %s113, %s127
      %p129 = scmp.eq.s32.totalorder %s35, 0
      %p130 = por %p128, %p129
      %s132 = sadd.s32 %s131, 1
      %p135 = scmp.eq.s32.totalorder %s29, 1
      %p136 = scmp.ne.s32.totalorder %s131, %s133
      %p137 = scmp.eq.s32.totalorder %s29, 0
      %p138 = por %p136, %p137
      %p139 = scmp.ne.s32.totalorder %s131, %s133
      %p140 = scmp.eq.s32.totalorder %s34, 1
      %p141 = por %p139, %p140
      %p142 = scmp.ne.s32.totalorder %s133, %s134
      %p143 = scmp.eq.s32.totalorder %s34, 0
      %p144 = por %p142, %p143
      %p145 = scmp.ne.s32.totalorder %s133, %s134
      %p146 = scmp.eq.s32.totalorder %s35, 1
      %p147 = por %p145, %p146
      %p149 = scmp.ne.s32.totalorder %s134, %s148
      %p150 = scmp.eq.s32.totalorder %s35, 0
      %p151 = por %p149, %p150
      %s153 = sadd.s32 %s152, 1
      %p156 = scmp.eq.s32.totalorder %s29, 1
      %p157 = scmp.ne.s32.totalorder %s152, %s154
      %p158 = scmp.eq.s32.totalorder %s29, 0
      %p159 = por %p157, %p158
      %p160 = scmp.ne.s32.totalorder %s152, %s154
      %p161 = scmp.eq.s32.totalorder %s34, 1
      %p162 = por %p160, %p161
      %p163 = scmp.ne.s32.totalorder %s154, %s155
      %p164 = scmp.eq.s32.totalorder %s34, 0
      %p165 = por %p163, %p164
      %p166 = scmp.ne.s32.totalorder %s154, %s155
      %p167 = scmp.eq.s32.totalorder %s35, 1
      %p168 = por %p166, %p167
      %p170 = scmp.ne.s32.totalorder %s155, %s169
      %p171 = scmp.eq.s32.totalorder %s35, 0
      %p172 = por %p170, %p171
      %s174 = sadd.s32 %s173, 1
      %p177 = scmp.eq.s32.totalorder %s29, 1
      %p178 = scmp.ne.s32.totalorder %s173, %s175
      %p179 = scmp.eq.s32.totalorder %s29, 0
      %p180 = por %p178, %p179
      %p181 = scmp.ne.s32.totalorder %s173, %s175
      %p182 = scmp.eq.s32.totalorder %s34, 1
      %p183 = por %p181, %p182
      %p184 = scmp.ne.s32.totalorder %s175, %s176
      %p185 = scmp.eq.s32.totalorder %s34, 0
      %p186 = por %p184, %p185
      %p187 = scmp.ne.s32.totalorder %s175, %s176
      %p188 = scmp.eq.s32.totalorder %s35, 1
      %p189 = por %p187, %p188
      %p191 = scmp.ne.s32.totalorder %s176, %s190
      %p192 = scmp.eq.s32.totalorder %s35, 0
      %p193 = por %p191, %p192
      %s195 = sadd.s32 %s194, 1
      %p198 = scmp.eq.s32.totalorder %s29, 1
      %p199 = scmp.ne.s32.totalorder %s194, %s196
      %p200 = scmp.eq.s32.totalorder %s29, 0
      %p201 = por %p199, %p200
      %p202 = scmp.ne.s32.totalorder %s194, %s196
      %p203 = scmp.eq.s32.totalorder %s34, 1
      %p204 = por %p202, %p203
      %p205 = scmp.ne.s32.totalorder %s196, %s197
      %p206 = scmp.eq.s32.totalorder %s34, 0
      %p207 = por %p205, %p206
      %p208 = scmp.ne.s32.totalorder %s196, %s197
      %p209 = scmp.eq.s32.totalorder %s35, 1
      %p210 = por %p208, %p209
      %p212 = scmp.ne.s32.totalorder %s197, %s211
      %p213 = scmp.eq.s32.totalorder %s35, 0
      %p214 = por %p212, %p213
      %s216 = sadd.s32 %s215, 1
      %p219 = scmp.eq.s32.totalorder %s29, 1
      %p220 = scmp.ne.s32.totalorder %s215, %s217
      %p221 = scmp.eq.s32.totalorder %s29, 0
      %p222 = por %p220, %p221
      %p223 = scmp.ne.s32.totalorder %s215, %s217
      %p224 = scmp.eq.s32.totalorder %s34, 1
      %p225 = por %p223, %p224
      %p226 = scmp.ne.s32.totalorder %s217, %s218
      %p227 = scmp.eq.s32.totalorder %s34, 0
      %p228 = por %p226, %p227
      %p229 = scmp.ne.s32.totalorder %s217, %s218
      %p230 = scmp.eq.s32.totalorder %s35, 1
      %p231 = por %p229, %p230
      %p233 = scmp.ne.s32.totalorder %s218, %s232
      %p234 = scmp.eq.s32.totalorder %s35, 0
      %p235 = por %p233, %p234
      %s237 = sadd.s32 %s236, 1
      %p240 = scmp.eq.s32.totalorder %s29, 1
      %p241 = scmp.ne.s32.totalorder %s236, %s238
      %p242 = scmp.eq.s32.totalorder %s29, 0
      %p243 = por %p241, %p242
      %p244 = scmp.ne.s32.totalorder %s236, %s238
      %p245 = scmp.eq.s32.totalorder %s34, 1
      %p246 = por %p244, %p245
      %p247 = scmp.ne.s32.totalorder %s238, %s239
      %p248 = scmp.eq.s32.totalorder %s34, 0
      %p249 = por %p247, %p248
      %p250 = scmp.ne.s32.totalorder %s238, %s239
      %p251 = scmp.eq.s32.totalorder %s35, 1
      %p252 = por %p250, %p251
      %p254 = scmp.ne.s32.totalorder %s239, %s253
      %p255 = scmp.eq.s32.totalorder %s35, 0
      %p256 = por %p254, %p255
      %s257 = ssub.s32 %s29, %s36
      %p258 = scmp.eq.s32.totalorder %s257, 0
      %s260 = sadd.s32 %s259, 1
      %s261 = scalar_select %p258, %s259, %s260
      %p264 = pneg %p258
      %p265 = scmp.eq.s32.totalorder %s29, 1
      %p266 = por %p264, %p265
      %p267 = scmp.ne.s32.totalorder %s259, %s262
      %p268 = scmp.eq.s32.totalorder %s29, 0
      %p269 = por %p267, %p268
      %p270 = scmp.ne.s32.totalorder %s259, %s262
      %p271 = scmp.eq.s32.totalorder %s34, 1
      %p272 = por %p270, %p271
      %p273 = scmp.ne.s32.totalorder %s262, %s263
      %p274 = scmp.eq.s32.totalorder %s34, 0
      %p275 = por %p273, %p274
      %p276 = scmp.ne.s32.totalorder %s262, %s263
      %p277 = scmp.eq.s32.totalorder %s35, 1
      %p278 = por %p276, %p277
      %p280 = scmp.ne.s32.totalorder %s263, %s279
      %p281 = scmp.eq.s32.totalorder %s35, 0
      %p282 = por %p280, %p281
      %p283 = scmp.le.s32.totalorder 1, %s29
      %p284 = scmp.lt.s32.totalorder %s29, 3
      %p285 = pnand %p283, %p284
      %p286 = pneg %p285
      // Predicated region
      $region9: #{transformer_block_forward.14} parent=5 // pred_check
        _
      $region10: #{transformer_block_forward.14} parent=5 // pred_check_branch
        %288 = sbr.rel (%p285) target = $region12
      $region11: #{transformer_block_forward.14} parent=5 // pred_region
        %s289 = ssub.s32 %s29, 1
        // Predicated region
        $region13: #{transformer_block_forward.14} parent=11 // pred_check
          %p290 = pneg %p102
        $region14: #{transformer_block_forward.14} parent=11 // pred_check_branch
          %292 = sbr.rel (%p290) target = $region16
        $region15: #{transformer_block_forward.14} parent=11 // pred_region
          %s294 = ssub.s32 16, 16
          %295 = vsyncadd [#allocation6], %s294
          %s297 = sshll.u32 [#allocation7], 4
          %s298 = int_to_ptr.vmem [resolvable:$true] %s297
          %300 = dma.hbm_to_vmem [thread:$0]  %s2, 16, %s298, [#allocation6]
        $region16: #{transformer_block_forward.14} parent=11 // pred_fallthru
          _
        // Predicated region
        $region17: #{transformer_block_forward.14} parent=11 // pred_check
          %p301 = pneg %p123
        $region18: #{transformer_block_forward.14} parent=11 // pred_check_branch
          %303 = sbr.rel (%p301) target = $region20
        $region19: #{transformer_block_forward.14} parent=11 // pred_region
          %s305 = ssub.s32 16, 16
          %306 = vsyncadd [#allocation9], %s305
          %s308 = sshll.u32 [#allocation8], 4
          %s309 = int_to_ptr.vmem [resolvable:$true] %s308
          %311 = dma.hbm_to_vmem [thread:$0]  %s3, 16, %s309, [#allocation9]
        $region20: #{transformer_block_forward.14} parent=11 // pred_fallthru
          _
        // Predicated region
        $region21: #{transformer_block_forward.14} parent=11 // pred_check
          %p312 = pneg %p144
        $region22: #{transformer_block_forward.14} parent=11 // pred_check_branch
          %314 = sbr.rel (%p312) target = $region24
        $region23: #{transformer_block_forward.14} parent=11 // pred_region
          %s316 = ssub.s32 256, 256
          %317 = vsyncadd [#allocation9], %s316
          %s318 = sshll.u32 [#allocation10], 4
          %s319 = int_to_ptr.vmem [resolvable:$true] %s318
          %324 = dma.hbm_to_vmem [thread:$0]  %s4, 256, %s319, [#allocation9], 64, 64, 4
        $region24: #{transformer_block_forward.14} parent=11 // pred_fallthru
          _
        // Predicated region
        $region25: #{transformer_block_forward.14} parent=11 // pred_check
          %p325 = pneg %p165
        $region26: #{transformer_block_forward.14} parent=11 // pred_check_branch
          %327 = sbr.rel (%p325) target = $region28
        $region27: #{transformer_block_forward.14} parent=11 // pred_region
          %s329 = ssub.s32 256, 256
          %330 = vsyncadd [#allocation12], %s329
          %s331 = sshll.u32 [#allocation11], 4
          %s332 = int_to_ptr.vmem [resolvable:$true] %s331
          %337 = dma.hbm_to_vmem [thread:$0]  %s5, 256, %s332, [#allocation12], 64, 64, 4
        $region28: #{transformer_block_forward.14} parent=11 // pred_fallthru
          _
        // Predicated region
        $region29: #{transformer_block_forward.14} parent=11 // pred_check
          %p338 = pneg %p186
        $region30: #{transformer_block_forward.14} parent=11 // pred_check_branch
          %340 = sbr.rel (%p338) target = $region32
        $region31: #{transformer_block_forward.14} parent=11 // pred_region
          %s342 = ssub.s32 256, 256
          %343 = vsyncadd [#allocation12], %s342
          %s344 = sshll.u32 [#allocation13], 4
          %s345 = int_to_ptr.vmem [resolvable:$true] %s344
          %350 = dma.hbm_to_vmem [thread:$0]  %s6, 256, %s345, [#allocation12], 64, 64, 4
        $region32: #{transformer_block_forward.14} parent=11 // pred_fallthru
          _
        // Predicated region
        $region33: #{transformer_block_forward.14} parent=11 // pred_check
          %p351 = pneg %p207
        $region34: #{transformer_block_forward.14} parent=11 // pred_check_branch
          %353 = sbr.rel (%p351) target = $region36
        $region35: #{transformer_block_forward.14} parent=11 // pred_region
          %s355 = ssub.s32 16, 16
          %356 = vsyncadd [#allocation15], %s355
          %s358 = sshll.u32 [#allocation14], 4
          %s359 = int_to_ptr.vmem [resolvable:$true] %s358
          %361 = dma.hbm_to_vmem [thread:$0]  %s7, 16, %s359, [#allocation15]
        $region36: #{transformer_block_forward.14} parent=11 // pred_fallthru
          _
        // Predicated region
        $region37: #{transformer_block_forward.14} parent=11 // pred_check
          %p362 = pneg %p228
        $region38: #{transformer_block_forward.14} parent=11 // pred_check_branch
          %364 = sbr.rel (%p362) target = $region40
        $region39: #{transformer_block_forward.14} parent=11 // pred_region
          %s366 = ssub.s32 1024, 1024
          %367 = vsyncadd [#allocation15], %s366
          %s368 = sshll.u32 [#allocation16], 4
          %s369 = int_to_ptr.vmem [resolvable:$true] %s368
          %374 = dma.hbm_to_vmem [thread:$0]  %s8, 1024, %s369, [#allocation15], 64, 64, 4
        $region40: #{transformer_block_forward.14} parent=11 // pred_fallthru
          _
        // Predicated region
        $region41: #{transformer_block_forward.14} parent=11 // pred_check
          %p375 = pneg %p249
        $region42: #{transformer_block_forward.14} parent=11 // pred_check_branch
          %377 = sbr.rel (%p375) target = $region44
        $region43: #{transformer_block_forward.14} parent=11 // pred_region
          %s379 = ssub.s32 16, 16
          %380 = vsyncadd [#allocation18], %s379
          %s382 = sshll.u32 [#allocation17], 4
          %s383 = int_to_ptr.vmem [resolvable:$true] %s382
          %385 = dma.hbm_to_vmem [thread:$0]  %s9, 16, %s383, [#allocation18]
        $region44: #{transformer_block_forward.14} parent=11 // pred_fallthru
          _
      $region12: #{transformer_block_forward.14} parent=5 // pred_fallthru
        _
      %p386 = scmp.lt.s32.totalorder %s29, 2
      // Predicated region
      $region45: #{transformer_block_forward.14} parent=5 // pred_check
        %p387 = pneg %p386
      $region46: #{transformer_block_forward.14} parent=5 // pred_check_branch
        %389 = sbr.rel (%p387) target = $region48
      $region47: #{transformer_block_forward.14} parent=5 // pred_region
        // Predicated region
        $region49: #{transformer_block_forward.14} parent=47 // pred_check
          %p390 = pneg %p49
        $region50: #{transformer_block_forward.14} parent=47 // pred_check_branch
          %392 = sbr.rel (%p390) target = $region52
        $region51: #{transformer_block_forward.14} parent=47 // pred_region
          %s393 = sand.u32 %s39, 1
          %s394 = scalar_lea.sflag [#allocation3], %s393
          %s395 = sand.u32 %s39, 1
          %s396 = smul.addr %s395, 4
          %s397 = scalar_lea.vmem [#allocation2], %s396
          %s399 = ssub.s32 64, 64
          %400 = vsyncadd %s394, %s399
          %s401 = smul.addr %s29, 64
          %s402 = scalar_lea.hbm %s0, %s401
          %s404 = sshll.u32 %s397, 4
          %s405 = int_to_ptr.vmem [resolvable:$true] %s404
          %407 = dma.hbm_to_vmem [thread:$0]  %s402, 64, %s405, %s394
        $region52: #{transformer_block_forward.14} parent=47 // pred_fallthru
          _
        // Predicated region
        $region53: #{transformer_block_forward.14} parent=47 // pred_check
          %p408 = pneg %p75
        $region54: #{transformer_block_forward.14} parent=47 // pred_check_branch
          %410 = sbr.rel (%p408) target = $region56
        $region55: #{transformer_block_forward.14} parent=47 // pred_region
          %s411 = sand.u32 %s29, 1
          %s412 = scalar_lea.sflag [#allocation6], %s411
          %s413 = sand.u32 %s65, 1
          %s414 = smul.addr %s413, 4
          %s415 = scalar_lea.vmem [#allocation5], %s414
          %s417 = ssub.s32 64, 64
          %418 = vsyncadd %s412, %s417
          %s419 = smul.addr %s29, 64
          %s420 = scalar_lea.hbm %s1, %s419
          %s422 = sshll.u32 %s415, 4
          %s423 = int_to_ptr.vmem [resolvable:$true] %s422
          %425 = dma.hbm_to_vmem [thread:$0]  %s420, 64, %s423, %s412
        $region56: #{transformer_block_forward.14} parent=47 // pred_fallthru
          _
      $region48: #{transformer_block_forward.14} parent=5 // pred_fallthru
        _
      %p426 = scmp.le.s32.totalorder 1, %s29
      %p427 = scmp.lt.s32.totalorder %s29, 3
      %p428 = pnand %p426, %p427
      %p429 = pneg %p428
      // Predicated region
      $region57: #{transformer_block_forward.14} parent=5 // pred_check
        _
      $region58: #{transformer_block_forward.14} parent=5 // pred_check_branch
        %431 = sbr.rel (%p428) target = $region60
      $region59: #{transformer_block_forward.14} parent=5 // pred_region
        %s432 = ssub.s32 %s29, 1
        %s433 = sand.u32 %s42, 1
        %s434 = scalar_lea.sflag [#allocation3], %s433
        %s435 = sand.u32 %s42, 1
        %s436 = smul.addr %s435, 4
        %s437 = scalar_lea.vmem [#allocation2], %s436
        // Predicated region
        $region61: #{transformer_block_forward.14} parent=59 // pred_check
          %p438 = pneg %p55
        $region62: #{transformer_block_forward.14} parent=59 // pred_check_branch
          %440 = sbr.rel (%p438) target = $region64
        $region63: #{transformer_block_forward.14} parent=59 // pred_region
          %441 = dma.done %s434, 64
        $region64: #{transformer_block_forward.14} parent=59 // pred_fallthru
          _
        %s442 = sand.u32 %s34, 1
        %s443 = scalar_lea.sflag [#allocation6], %s442
        %s444 = sand.u32 %s68, 1
        %s445 = smul.addr %s444, 4
        %s446 = scalar_lea.vmem [#allocation5], %s445
        // Predicated region
        $region65: #{transformer_block_forward.14} parent=59 // pred_check
          %p447 = pneg %p81
        $region66: #{transformer_block_forward.14} parent=59 // pred_check_branch
          %449 = sbr.rel (%p447) target = $region68
        $region67: #{transformer_block_forward.14} parent=59 // pred_region
          %450 = dma.done %s443, 64
        $region68: #{transformer_block_forward.14} parent=59 // pred_fallthru
          _
        // Predicated region
        $region69: #{transformer_block_forward.14} parent=59 // pred_check
          %p451 = pneg %p102
        $region70: #{transformer_block_forward.14} parent=59 // pred_check_branch
          %453 = sbr.rel (%p451) target = $region72
        $region71: #{transformer_block_forward.14} parent=59 // pred_region
          %454 = dma.done [#allocation6], 16
        $region72: #{transformer_block_forward.14} parent=59 // pred_fallthru
          _
        // Predicated region
        $region73: #{transformer_block_forward.14} parent=59 // pred_check
          %p455 = pneg %p123
        $region74: #{transformer_block_forward.14} parent=59 // pred_check_branch
          %457 = sbr.rel (%p455) target = $region76
        $region75: #{transformer_block_forward.14} parent=59 // pred_region
          %458 = dma.done [#allocation9], 16
        $region76: #{transformer_block_forward.14} parent=59 // pred_fallthru
          _
        // Predicated region
        $region77: #{transformer_block_forward.14} parent=59 // pred_check
          %p459 = pneg %p144
        $region78: #{transformer_block_forward.14} parent=59 // pred_check_branch
          %461 = sbr.rel (%p459) target = $region80
        $region79: #{transformer_block_forward.14} parent=59 // pred_region
          %462 = dma.done [#allocation9], 256
        $region80: #{transformer_block_forward.14} parent=59 // pred_fallthru
          _
        // Predicated region
        $region81: #{transformer_block_forward.14} parent=59 // pred_check
          %p463 = pneg %p165
        $region82: #{transformer_block_forward.14} parent=59 // pred_check_branch
          %465 = sbr.rel (%p463) target = $region84
        $region83: #{transformer_block_forward.14} parent=59 // pred_region
          %466 = dma.done [#allocation12], 256
        $region84: #{transformer_block_forward.14} parent=59 // pred_fallthru
          _
        // Predicated region
        $region85: #{transformer_block_forward.14} parent=59 // pred_check
          %p467 = pneg %p186
        $region86: #{transformer_block_forward.14} parent=59 // pred_check_branch
          %469 = sbr.rel (%p467) target = $region88
        $region87: #{transformer_block_forward.14} parent=59 // pred_region
          %470 = dma.done [#allocation12], 256
        $region88: #{transformer_block_forward.14} parent=59 // pred_fallthru
          _
        // Predicated region
        $region89: #{transformer_block_forward.14} parent=59 // pred_check
          %p471 = pneg %p207
        $region90: #{transformer_block_forward.14} parent=59 // pred_check_branch
          %473 = sbr.rel (%p471) target = $region92
        $region91: #{transformer_block_forward.14} parent=59 // pred_region
          %474 = dma.done [#allocation15], 16
        $region92: #{transformer_block_forward.14} parent=59 // pred_fallthru
          _
        // Predicated region
        $region93: #{transformer_block_forward.14} parent=59 // pred_check
          %p475 = pneg %p228
        $region94: #{transformer_block_forward.14} parent=59 // pred_check_branch
          %477 = sbr.rel (%p475) target = $region96
        $region95: #{transformer_block_forward.14} parent=59 // pred_region
          %478 = dma.done [#allocation15], 1024
        $region96: #{transformer_block_forward.14} parent=59 // pred_fallthru
          _
        // Predicated region
        $region97: #{transformer_block_forward.14} parent=59 // pred_check
          %p479 = pneg %p249
        $region98: #{transformer_block_forward.14} parent=59 // pred_check_branch
          %481 = sbr.rel (%p479) target = $region100
        $region99: #{transformer_block_forward.14} parent=59 // pred_region
          %482 = dma.done [#allocation18], 16
        $region100: #{transformer_block_forward.14} parent=59 // pred_fallthru
          _
        %s483 = sand.u32 %s42, 1
        %s484 = scalar_lea.sflag [#allocation3], %s483
        %s485 = sand.u32 %s42, 1
        %s486 = smul.addr %s485, 4
        %s487 = scalar_lea.vmem [#allocation2], %s486
        %p488 = pneg %p55
        %p489 = pneg %p52
        %s490 = sand.u32 %s34, 1
        %s491 = scalar_lea.sflag [#allocation6], %s490
        %s492 = sand.u32 %s68, 1
        %s493 = smul.addr %s492, 4
        %s494 = scalar_lea.vmem [#allocation5], %s493
        %p495 = pneg %p81
        %p496 = pneg %p78
        %p497 = pneg %p102
        %p498 = pneg %p99
        %p499 = pneg %p123
        %p500 = pneg %p120
        %p501 = pneg %p144
        %p502 = pneg %p141
        %p503 = pneg %p165
        %p504 = pneg %p162
        %p505 = pneg %p186
        %p506 = pneg %p183
        %p507 = pneg %p207
        %p508 = pneg %p204
        %p509 = pneg %p228
        %p510 = pneg %p225
        %p511 = pneg %p249
        %p512 = pneg %p246
        %p513 = pneg %p275
        %p514 = pneg %p272
        %s515 = sand.u32 %s262, 1
        %s516 = scalar_lea.sflag [#allocation4], %s515
        %s517 = sand.u32 %s262, 1
        %s518 = smul.addr %s517, 4
        %s519 = scalar_lea.vmem [#allocation19], %s518
        %v521 = vld [vmem:[%s437] sm:$0xf]
        %v522 = vunpack.c.l.bf16 %v521
        %v523 = vld [vmem:[#allocation7] sm:$0x1]
        %vm524 = vcmask 261120
        %v525 = vsel %vm524, %v522, 0.0
        %526 = vadd.xlane.f32.xlu0 %v525
        %v527 = vpop.xlane.xlu0 %526
        %v528 = vrcp.pop 32.0
        %v529 = vmul.f32 %v527, %v528
        %v530 = vsub.f32 %v522, %v529
        %v531 = vmul.f32 %v530, %v530
        %v532 = vsel %vm524, %v531, 0.0
        %533 = vadd.xlane.f32.xlu0 %v532
        %v534 = vpop.xlane.xlu0 %533
        %v535 = vmul.f32 %v534, %v528
        %v536 = vadd.f32 %v535, 1e-05
        %v537 = vrsqrt.pop %v536
        %v538 = vmul.f32 %v530, %v537
        %v540 = vlaneseq
        %v541 = vshrl.u32 %v540, 7
        %v542 = vsub.s32 0, %v541
        %v543 = vrot.slane %v523, %v542
        %v545 = vmul.f32 %v538, %v543
        %v546 = vld [vmem:[%s446] sm:$0xf]
        %v547 = vunpack.c.l.bf16 %v546
        %v548 = vld [vmem:[#allocation8] sm:$0x1]
        %v549 = vsel %vm524, %v547, 0.0
        %550 = vadd.xlane.f32.xlu0 %v549
        %v551 = vpop.xlane.xlu0 %550
        %v552 = vmul.f32 %v551, %v528
        %v553 = vsub.f32 %v547, %v552
        %v554 = vmul.f32 %v553, %v553
        %v555 = vsel %vm524, %v554, 0.0
        %556 = vadd.xlane.f32.xlu0 %v555
        %v557 = vpop.xlane.xlu0 %556
        %v558 = vmul.f32 %v557, %v528
        %v559 = vadd.f32 %v558, 1e-05
        %v560 = vrsqrt.pop %v559
        %v561 = vmul.f32 %v553, %v560
        %v563 = vlaneseq
        %v564 = vshrl.u32 %v563, 7
        %v565 = vsub.s32 0, %v564
        %v566 = vrot.slane %v548, %v565
        %v568 = vmul.f32 %v561, %v566
        %v569 = vpack.c.bf16 %v568, %v568
        %v570 = vld [vmem:[#allocation10] sm:$0xf]
        %v571 = vld [vmem:[#allocation10 + $0x4] sm:$0xf]
        %v572 = vld [vmem:[#allocation10 + $0x8] sm:$0xf]
        %v573 = vld [vmem:[#allocation10 + $0xc] sm:$0xf]
        %v578 = vunpack.c.l.b16 %v570
        %v579 = vunpack.c.l.b16 %v571
        %v580 = vunpack.c.l.b16 %v572
        %v581 = vunpack.c.l.b16 %v573
        %v582 = vpack.c.b16 %v579, %v578
        %v583 = vpack.c.b16 %v581, %v580
        %v587 = vsel %vm524, %v569, 0
        %589 = vmatprep.subr.bf16.mxu0 0
        %590 = vmatpush1.bf16.msra.mxu0 %v582
        %591 = vmatprep.subr.bf16.mxu0 0
        %592 = vmatpush1.bf16.msra.mxu0 %v583
        %593 = vmatprep.subr.bf16.mxu0 0
        %594 = vmatpush1.bf16.msra.mxu0 0
        %595 = vmatprep.subr.bf16.mxu0 0
        %596 = vmatpush1.bf16.msra.mxu0 0
        %597 = vmatprep.subr.bf16.mxu0 0
        %598 = vmatpush1.bf16.msra.mxu0 0
        %599 = vmatprep.subr.bf16.mxu0 0
        %600 = vmatpush1.bf16.msra.mxu0 0
        %601 = vmatprep.subr.bf16.mxu0 0
        %602 = vmatpush1.bf16.msra.mxu0 0
        %603 = vmatprep.subr.bf16.mxu0 0
        %604 = vmatpush1.bf16.msra.mxu0 0
        %605 = vmatprep.subr.bf16.mxu0 0
        %606 = vmatpush1.bf16.msra.mxu0 0
        %607 = vmatprep.subr.bf16.mxu0 0
        %608 = vmatpush1.bf16.msra.mxu0 0
        %609 = vmatprep.subr.bf16.mxu0 0
        %610 = vmatpush1.bf16.msra.mxu0 0
        %611 = vmatprep.subr.bf16.mxu0 0
        %612 = vmatpush1.bf16.msra.mxu0 0
        %613 = vmatprep.subr.bf16.mxu0 0
        %614 = vmatpush1.bf16.msra.mxu0 0
        %615 = vmatprep.subr.bf16.mxu0 0
        %616 = vmatpush1.bf16.msra.mxu0 0
        %617 = vmatprep.subr.bf16.mxu0 0
        %618 = vmatpush1.bf16.msra.mxu0 0
        %619 = vmatprep.subr.bf16.mxu0 0
        %620 = vmatpush1.bf16.msra.mxu0 0
        %621 = vmatprep.mubr.bf16.mxu0 0
        %622 = vmatmul.mubr.bf16.gmra.mrb[0].mxu0 %v587
        %v623 = vpop.f32.mrb[0].mxu0
        %v624 = vadd.f32 0.0, %v623
        %v625 = vpop.f32.mrb[0].mxu0
        %v626 = vpop.f32.mrb[0].mxu0
        %v627 = vpop.f32.mrb[0].mxu0
        %628 = vdwg.mxu0
        %v629 = vld [vmem:[#allocation11] sm:$0xf]
        %v630 = vld [vmem:[#allocation11 + $0x4] sm:$0xf]
        %v631 = vld [vmem:[#allocation11 + $0x8] sm:$0xf]
        %v632 = vld [vmem:[#allocation11 + $0xc] sm:$0xf]
        %v637 = vunpack.c.l.b16 %v629
        %v638 = vunpack.c.l.b16 %v630
        %v639 = vunpack.c.l.b16 %v631
        %v640 = vunpack.c.l.b16 %v632
        %v641 = vpack.c.b16 %v638, %v637
        %v642 = vpack.c.b16 %v640, %v639
        %645 = vmatprep.subr.bf16.mxu0 0
        %646 = vmatpush1.bf16.msra.mxu0 %v641
        %647 = vmatprep.subr.bf16.mxu0 0
        %648 = vmatpush1.bf16.msra.mxu0 %v642
        %649 = vmatprep.subr.bf16.mxu0 0
        %650 = vmatpush1.bf16.msra.mxu0 0
        %651 = vmatprep.subr.bf16.mxu0 0
        %652 = vmatpush1.bf16.msra.mxu0 0
        %653 = vmatprep.subr.bf16.mxu0 0
        %654 = vmatpush1.bf16.msra.mxu0 0
        %655 = vmatprep.subr.bf16.mxu0 0
        %656 = vmatpush1.bf16.msra.mxu0 0
        %657 = vmatprep.subr.bf16.mxu0 0
        %658 = vmatpush1.bf16.msra.mxu0 0
        %659 = vmatprep.subr.bf16.mxu0 0
        %660 = vmatpush1.bf16.msra.mxu0 0
        %661 = vmatprep.subr.bf16.mxu0 0
        %662 = vmatpush1.bf16.msra.mxu0 0
        %663 = vmatprep.subr.bf16.mxu0 0
        %664 = vmatpush1.bf16.msra.mxu0 0
        %665 = vmatprep.subr.bf16.mxu0 0
        %666 = vmatpush1.bf16.msra.mxu0 0
        %667 = vmatprep.subr.bf16.mxu0 0
        %668 = vmatpush1.bf16.msra.mxu0 0
        %669 = vmatprep.subr.bf16.mxu0 0
        %670 = vmatpush1.bf16.msra.mxu0 0
        %671 = vmatprep.subr.bf16.mxu0 0
        %672 = vmatpush1.bf16.msra.mxu0 0
        %673 = vmatprep.subr.bf16.mxu0 0
        %674 = vmatpush1.bf16.msra.mxu0 0
        %675 = vmatprep.subr.bf16.mxu0 0
        %676 = vmatpush1.bf16.msra.mxu0 0
        %677 = vmatprep.mubr.bf16.mxu0 0
        %678 = vmatmul.mubr.bf16.gmra.mrb[0].mxu0 %v587
        %v679 = vpop.f32.mrb[0].mxu0
        %v680 = vadd.f32 0.0, %v679
        %v681 = vpop.f32.mrb[0].mxu0
        %v682 = vpop.f32.mrb[0].mxu0
        %v683 = vpop.f32.mrb[0].mxu0
        %684 = vdwg.mxu0
        %v685 = vmul.f32 %v545, %v624
        %v686 = vadd.f32 %v685, %v680
        %v687 = vadd.f32 %v686, %v522
        %v688 = vpack.c.bf16 %v687, %v687
        %v689 = vld [vmem:[#allocation13] sm:$0xf]
        %v690 = vld [vmem:[#allocation13 + $0x4] sm:$0xf]
        %v691 = vld [vmem:[#allocation13 + $0x8] sm:$0xf]
        %v692 = vld [vmem:[#allocation13 + $0xc] sm:$0xf]
        %v697 = vunpack.c.l.b16 %v689
        %v698 = vunpack.c.l.b16 %v690
        %v699 = vunpack.c.l.b16 %v691
        %v700 = vunpack.c.l.b16 %v692
        %v701 = vpack.c.b16 %v698, %v697
        %v702 = vpack.c.b16 %v700, %v699
        %v706 = vsel %vm524, %v688, 0
        %708 = vmatprep.subr.bf16.mxu0 0
        %709 = vmatpush1.bf16.msra.mxu0 %v701
        %710 = vmatprep.subr.bf16.mxu0 0
        %711 = vmatpush1.bf16.msra.mxu0 %v702
        %712 = vmatprep.subr.bf16.mxu0 0
        %713 = vmatpush1.bf16.msra.mxu0 0
        %714 = vmatprep.subr.bf16.mxu0 0
        %715 = vmatpush1.bf16.msra.mxu0 0
        %716 = vmatprep.subr.bf16.mxu0 0
        %717 = vmatpush1.bf16.msra.mxu0 0
        %718 = vmatprep.subr.bf16.mxu0 0
        %719 = vmatpush1.bf16.msra.mxu0 0
        %720 = vmatprep.subr.bf16.mxu0 0
        %721 = vmatpush1.bf16.msra.mxu0 0
        %722 = vmatprep.subr.bf16.mxu0 0
        %723 = vmatpush1.bf16.msra.mxu0 0
        %724 = vmatprep.subr.bf16.mxu0 0
        %725 = vmatpush1.bf16.msra.mxu0 0
        %726 = vmatprep.subr.bf16.mxu0 0
        %727 = vmatpush1.bf16.msra.mxu0 0
        %728 = vmatprep.subr.bf16.mxu0 0
        %729 = vmatpush1.bf16.msra.mxu0 0
        %730 = vmatprep.subr.bf16.mxu0 0
        %731 = vmatpush1.bf16.msra.mxu0 0
        %732 = vmatprep.subr.bf16.mxu0 0
        %733 = vmatpush1.bf16.msra.mxu0 0
        %734 = vmatprep.subr.bf16.mxu0 0
        %735 = vmatpush1.bf16.msra.mxu0 0
        %736 = vmatprep.subr.bf16.mxu0 0
        %737 = vmatpush1.bf16.msra.mxu0 0
        %738 = vmatprep.subr.bf16.mxu0 0
        %739 = vmatpush1.bf16.msra.mxu0 0
        %740 = vmatprep.mubr.bf16.mxu0 0
        %741 = vmatmul.mubr.bf16.gmra.mrb[0].mxu0 %v706
        %v742 = vpop.f32.mrb[0].mxu0
        %v743 = vadd.f32 0.0, %v742
        %v744 = vpop.f32.mrb[0].mxu0
        %v745 = vpop.f32.mrb[0].mxu0
        %v746 = vpop.f32.mrb[0].mxu0
        %747 = vdwg.mxu0
        %v748 = vmul.f32 %v743, 0.5
        %v749 = vmul.f32 %v743, 0.70710677
        %v750 = verf.f32.pop %v749
        %v751 = vadd.f32 %v750, 1.0
        %v752 = vmul.f32 %v748, %v751
        %v753 = vld [vmem:[#allocation14] sm:$0x1]
        %754 = vadd.xlane.f32.xlu0 %v752
        %v755 = vpop.xlane.xlu0 %754
        %v756 = vrcp.pop 128.0
        %v757 = vmul.f32 %v755, %v756
        %v758 = vsub.f32 %v752, %v757
        %v759 = vmul.f32 %v758, %v758
        %760 = vadd.xlane.f32.xlu0 %v759
        %v761 = vpop.xlane.xlu0 %760
        %v762 = vmul.f32 %v761, %v756
        %v763 = vadd.f32 %v762, 1e-05
        %v764 = vrsqrt.pop %v763
        %v765 = vmul.f32 %v758, %v764
        %v767 = vlaneseq
        %v768 = vshrl.u32 %v767, 7
        %v769 = vsub.s32 0, %v768
        %v770 = vrot.slane %v753, %v769
        %v772 = vmul.f32 %v765, %v770
        %v773 = vpack.c.bf16 %v772, %v772
        %v774 = vld [vmem:[#allocation16] sm:$0xf]
        %v775 = vld [vmem:[#allocation16 + $0x4] sm:$0xf]
        %v776 = vld [vmem:[#allocation16 + $0x8] sm:$0xf]
        %v777 = vld [vmem:[#allocation16 + $0xc] sm:$0xf]
        %v778 = vld [vmem:[#allocation16 + $0x10] sm:$0xf]
        %v779 = vld [vmem:[#allocation16 + $0x14] sm:$0xf]
        %v780 = vld [vmem:[#allocation16 + $0x18] sm:$0xf]
        %v781 = vld [vmem:[#allocation16 + $0x1c] sm:$0xf]
        %v782 = vld [vmem:[#allocation16 + $0x20] sm:$0xf]
        %v783 = vld [vmem:[#allocation16 + $0x24] sm:$0xf]
        %v784 = vld [vmem:[#allocation16 + $0x28] sm:$0xf]
        %v785 = vld [vmem:[#allocation16 + $0x2c] sm:$0xf]
        %v786 = vld [vmem:[#allocation16 + $0x30] sm:$0xf]
        %v787 = vld [vmem:[#allocation16 + $0x34] sm:$0xf]
        %v788 = vld [vmem:[#allocation16 + $0x38] sm:$0xf]
        %v789 = vld [vmem:[#allocation16 + $0x3c] sm:$0xf]
        %v806 = vunpack.c.l.b16 %v774
        %v807 = vunpack.c.l.b16 %v775
        %v808 = vunpack.c.l.b16 %v776
        %v809 = vunpack.c.l.b16 %v777
        %v810 = vunpack.c.l.b16 %v778
        %v811 = vunpack.c.l.b16 %v779
        %v812 = vunpack.c.l.b16 %v780
        %v813 = vunpack.c.l.b16 %v781
        %v814 = vunpack.c.l.b16 %v782
        %v815 = vunpack.c.l.b16 %v783
        %v816 = vunpack.c.l.b16 %v784
        %v817 = vunpack.c.l.b16 %v785
        %v818 = vunpack.c.l.b16 %v786
        %v819 = vunpack.c.l.b16 %v787
        %v820 = vunpack.c.l.b16 %v788
        %v821 = vunpack.c.l.b16 %v789
        %v822 = vpack.c.b16 %v807, %v806
        %v823 = vpack.c.b16 %v809, %v808
        %v824 = vpack.c.b16 %v811, %v810
        %v825 = vpack.c.b16 %v813, %v812
        %v826 = vpack.c.b16 %v815, %v814
        %v827 = vpack.c.b16 %v817, %v816
        %v828 = vpack.c.b16 %v819, %v818
        %v829 = vpack.c.b16 %v821, %v820
        %838 = vmatprep.subr.bf16.mxu0 0
        %839 = vmatpush1.bf16.msra.mxu0 %v822
        %840 = vmatprep.subr.bf16.mxu0 0
        %841 = vmatpush1.bf16.msra.mxu0 %v823
        %842 = vmatprep.subr.bf16.mxu0 0
        %843 = vmatpush1.bf16.msra.mxu0 %v824
        %844 = vmatprep.subr.bf16.mxu0 0
        %845 = vmatpush1.bf16.msra.mxu0 %v825
        %846 = vmatprep.subr.bf16.mxu0 0
        %847 = vmatpush1.bf16.msra.mxu0 %v826
        %848 = vmatprep.subr.bf16.mxu0 0
        %849 = vmatpush1.bf16.msra.mxu0 %v827
        %850 = vmatprep.subr.bf16.mxu0 0
        %851 = vmatpush1.bf16.msra.mxu0 %v828
        %852 = vmatprep.subr.bf16.mxu0 0
        %853 = vmatpush1.bf16.msra.mxu0 %v829
        %854 = vmatprep.subr.bf16.mxu0 0
        %855 = vmatpush1.bf16.msra.mxu0 0
        %856 = vmatprep.subr.bf16.mxu0 0
        %857 = vmatpush1.bf16.msra.mxu0 0
        %858 = vmatprep.subr.bf16.mxu0 0
        %859 = vmatpush1.bf16.msra.mxu0 0
        %860 = vmatprep.subr.bf16.mxu0 0
        %861 = vmatpush1.bf16.msra.mxu0 0
        %862 = vmatprep.subr.bf16.mxu0 0
        %863 = vmatpush1.bf16.msra.mxu0 0
        %864 = vmatprep.subr.bf16.mxu0 0
        %865 = vmatpush1.bf16.msra.mxu0 0
        %866 = vmatprep.subr.bf16.mxu0 0
        %867 = vmatpush1.bf16.msra.mxu0 0
        %868 = vmatprep.subr.bf16.mxu0 0
        %869 = vmatpush1.bf16.msra.mxu0 0
        %870 = vmatprep.mubr.bf16.mxu0 0
        %871 = vmatmul.mubr.bf16.gmra.mrb[0].mxu0 %v773
        %v872 = vpop.f32.mrb[0].mxu0
        %v873 = vadd.f32 %v687, %v872
        %v874 = vpop.f32.mrb[0].mxu0
        %v875 = vpop.f32.mrb[0].mxu0
        %v876 = vpop.f32.mrb[0].mxu0
        %877 = vdwg.mxu0
        %v878 = vld [vmem:[#allocation17] sm:$0x1]
        %v879 = vsel %vm524, %v873, 0.0
        %880 = vadd.xlane.f32.xlu0 %v879
        %v881 = vpop.xlane.xlu0 %880
        %v882 = vmul.f32 %v881, %v528
        %v883 = vsub.f32 %v873, %v882
        %v884 = vmul.f32 %v883, %v883
        %v885 = vsel %vm524, %v884, 0.0
        %886 = vadd.xlane.f32.xlu0 %v885
        %v887 = vpop.xlane.xlu0 %886
        %v888 = vmul.f32 %v887, %v528
        %v889 = vadd.f32 %v888, 1e-05
        %v890 = vrsqrt.pop %v889
        %v891 = vmul.f32 %v883, %v890
        %v893 = vlaneseq
        %v894 = vshrl.u32 %v893, 7
        %v895 = vsub.s32 0, %v894
        %v896 = vrot.slane %v878, %v895
        %v898 = vmul.f32 %v891, %v896
        %v899 = vpack.c.bf16 %v898, %v898
        %vm900 = vcmask 257024
        %901 = vst.msk [vmem:[%s519] sm:$0xf] %vm900, %v899
        %s902 = sand.u32 %s262, 1
        %s903 = scalar_lea.sflag [#allocation4], %s902
        %s904 = sand.u32 %s262, 1
        %s905 = smul.addr %s904, 4
        %s906 = scalar_lea.vmem [#allocation19], %s905
        // Predicated region
        $region101: #{transformer_block_forward.14} parent=59 // pred_check
          %p907 = pneg %p272
        $region102: #{transformer_block_forward.14} parent=59 // pred_check_branch
          %909 = sbr.rel (%p907) target = $region104
        $region103: #{transformer_block_forward.14} parent=59 // pred_region
          %s911 = ssub.s32 64, 64
          %912 = vsyncadd %s903, %s911
          %s913 = smul.addr %s34, 64
          %s914 = scalar_lea.hbm %s10, %s913
          %s916 = sshll.u32 %s906, 4
          %s917 = int_to_ptr.vmem [resolvable:$true] %s916
          %919 = dma.vmem_to_hbm [thread:$0]  %s917, 64, %s914, %s903
        $region104: #{transformer_block_forward.14} parent=59 // pred_fallthru
          _
      $region60: #{transformer_block_forward.14} parent=5 // pred_fallthru
        _
      %p920 = scmp.le.s32.totalorder 2, %s29
      // Predicated region
      $region105: #{transformer_block_forward.14} parent=5 // pred_check
        %p921 = pneg %p920
      $region106: #{transformer_block_forward.14} parent=5 // pred_check_branch
        %923 = sbr.rel (%p921) target = $region108
      $region107: #{transformer_block_forward.14} parent=5 // pred_region
        %s924 = ssub.s32 %s29, 2
        // Predicated region
        $region109: #{transformer_block_forward.14} parent=107 // pred_check
          %p925 = pneg %p278
        $region110: #{transformer_block_forward.14} parent=107 // pred_check_branch
          %927 = sbr.rel (%p925) target = $region112
        $region111: #{transformer_block_forward.14} parent=107 // pred_region
          %s928 = sand.u32 %s263, 1
          %s929 = scalar_lea.sflag [#allocation4], %s928
          %s930 = sand.u32 %s263, 1
          %s931 = smul.addr %s930, 4
          %s932 = scalar_lea.vmem [#allocation19], %s931
          %933 = dma.done %s929, 64
        $region112: #{transformer_block_forward.14} parent=107 // pred_fallthru
          _
      $region108: #{transformer_block_forward.14} parent=5 // pred_fallthru
        _
    $region6: #{transformer_block_forward.14} parent=1 // loop_footer
      %s33 = sadd.s32 1, %s29
    $region7: #{transformer_block_forward.14} parent=1 // loop_footer_branch
      %28 = sbr.rel target = $region3
    $region8: #{transformer_block_forward.14} parent=1 // loop_exit
      _
    %934 = vsyncpa [#allocation3], 1
    %s935 = scalar_lea.sflag [#allocation3], 1
    %936 = vsyncpa %s935, 1
    %937 = vsyncpa [#allocation6], 1
    %s938 = scalar_lea.sflag [#allocation6], 1
    %939 = vsyncpa %s938, 1
    %940 = vsyncpa [#allocation9], 1
    %941 = vsyncpa [#allocation12], 1
    %942 = vsyncpa [#allocation15], 1
    %943 = vsyncpa [#allocation18], 1
    %944 = vsyncpa [#allocation4], 1
    %s945 = scalar_lea.sflag [#allocation4], 1
    %946 = vsyncpa %s945, 1

</llo_original>
